<compile_context>
chip_gen: v7x
topology: tpu7x:2x2x1
jax: 0.10.0
libtpu: 0.0.40
codegen_flags: <defaults>
</compile_context>

<pallas_src>
import jax
import jax.numpy as jnp
import numpy as np
from jax.experimental import pallas as pl
from jax.experimental.pallas import tpu as pltpu

EPS = 1e-5


def _round_up(x, m):
    return (x + m - 1) // m * m


# ---------------------------------------------------------------------------
# Fused kernel: conv1 + BN + pool + ReLU + conv2 + BN + pool + ReLU + fc1 + fc2
# ---------------------------------------------------------------------------
def _fused_kernel(x_ref, w1_ref, b1_ref, w2_ref, b2_ref, fw1_ref, fb1_ref,
                  fw2_ref, fb2_ref, conv1_ref, conv2_ref, logits_ref):
    # x_ref:     (24, Bblk, 140) bf16  host im2col rows; t = g*6 + a encodes
    #            conv1 output row h1 = 4a + g (g = 2*(hp1%2) + (h1%2))
    # w1_ref:    (140, 768)  bf16  Toeplitz conv1 weights, cols (q, w_pool, c)
    # b1_ref:    (1, 384)    f32   folded conv1-bias + BN shift (tiled over w_pool)
    # w2_ref:    (1920, 512) bf16  Toeplitz conv2 weights, rows (kh, w_in, ci)
    # b2_ref:    (1, 256)    f32
    # fw1_ref:   (1024, 512) bf16  fc1 weights, PyTorch flatten absorbed (rows h,w,c)
    # fb1_ref:   (1, 512)    f32
    # fw2_ref:   (512, 128)  bf16  fc2 weights transposed, N padded 10 -> 128
    # fb2_ref:   (1, 128)    f32
    # conv1_ref: (2, 6, Bblk, 384) f32   pooled conv1, hp1 = 2a + r
    # conv2_ref: (4, Bblk, 256)    f32   pooled conv2, rows = hp2
    # logits_ref:(Bblk, 128)       f32
    bb = x_ref.shape[1]
    g6 = 6 * bb

    def mm(a, w):
        return jnp.dot(a, w, preferred_element_type=jnp.float32)

    # ---- conv1: one long-K (140) matmul over all 24 row-groups x Bblk samples
    lhs1 = jnp.concatenate([x_ref[t] for t in range(24)], axis=0)   # [24*bb, 140]
    c1 = mm(lhs1, w1_ref[...])                                      # [24*bb, 768] f32

    # H-pool: groups g=0,1 -> even pooled rows (hp1 = 2a); g=2,3 -> odd rows.
    pe = jnp.maximum(c1[0:g6], c1[g6:2 * g6])                       # [6*bb, 768]
    po = jnp.maximum(c1[2 * g6:3 * g6], c1[3 * g6:4 * g6])
    # W-pool (cols ordered (q, w_pool, c)) + folded bias + ReLU.
    b1 = b1_ref[...]
    pe = jnp.maximum(jnp.maximum(pe[:, 0:384], pe[:, 384:768]) + b1, 0.0)   # [6*bb, 384]
    po = jnp.maximum(jnp.maximum(po[:, 0:384], po[:, 384:768]) + b1, 0.0)
    for a in range(6):                                              # conv1 feature map out
        conv1_ref[0, a] = pe[a * bb:(a + 1) * bb]
        conv1_ref[1, a] = po[a * bb:(a + 1) * bb]

    # ---- conv2: long-K (5*384 = 1920) matmuls, samples stacked into M ----
    pe_b = pe.astype(jnp.bfloat16)
    po_b = po.astype(jnp.bfloat16)

    def slab(src, a):       # conv1-pooled rows a..a+3 (x Bblk samples), 384 lanes
        return src[a * bb:(a + 4) * bb]

    l_even = jnp.concatenate(
        [slab(pe_b, 0), slab(po_b, 0), slab(pe_b, 1), slab(po_b, 1), slab(pe_b, 2)],
        axis=1)                                                     # [4*bb, 1920]
    l_odd = jnp.concatenate(
        [slab(po_b, 0), slab(pe_b, 1), slab(po_b, 1), slab(pe_b, 2), slab(po_b, 2)],
        axis=1)
    c2e = mm(l_even, w2_ref[...])                                   # conv2 rows 0,2,4,6
    c2o = mm(l_odd, w2_ref[...])                                    # conv2 rows 1,3,5,7
    hp = jnp.maximum(c2e, c2o)                                      # H-pool  [4*bb, 512]
    act = jnp.maximum(jnp.maximum(hp[:, 0:256], hp[:, 256:512]) + b2_ref[...], 0.0)
    for h in range(4):                                              # conv2 feature map out
        conv2_ref[h] = act[h * bb:(h + 1) * bb]

    # ---- fc1 + ReLU + fc2, whole batch block in the M dimension ----
    act_b = act.astype(jnp.bfloat16)
    f_in = jnp.concatenate([act_b[h * bb:(h + 1) * bb] for h in range(4)], axis=1)  # [bb, 1024]
    f = jnp.maximum(mm(f_in, fw1_ref[...]) + fb1_ref[...], 0.0)     # [bb, 512]
    logits_ref[...] = mm(f.astype(jnp.bfloat16), fw2_ref[...]) + fb2_ref[...]


def _fused_forward(x_im2col, prep, *, bblk):
    Bp = x_im2col.shape[1]
    grid = (Bp // bblk,)
    kernel = pl.pallas_call(
        _fused_kernel,
        out_shape=(
            jax.ShapeDtypeStruct((2, 6, Bp, 384), jnp.float32),
            jax.ShapeDtypeStruct((4, Bp, 256), jnp.float32),
            jax.ShapeDtypeStruct((Bp, 128), jnp.float32),
        ),
        grid=grid,
        in_specs=[
            pl.BlockSpec((24, bblk, 140), lambda i: (0, i, 0)),
            pl.BlockSpec((140, 768), lambda i: (0, 0)),
            pl.BlockSpec((1, 384), lambda i: (0, 0)),
            pl.BlockSpec((1920, 512), lambda i: (0, 0)),
            pl.BlockSpec((1, 256), lambda i: (0, 0)),
            pl.BlockSpec((1024, 512), lambda i: (0, 0)),
            pl.BlockSpec((1, 512), lambda i: (0, 0)),
            pl.BlockSpec((512, 128), lambda i: (0, 0)),
            pl.BlockSpec((1, 128), lambda i: (0, 0)),
        ],
        out_specs=(
            pl.BlockSpec((2, 6, bblk, 384), lambda i: (0, 0, i, 0)),
            pl.BlockSpec((4, bblk, 256), lambda i: (0, i, 0)),
            pl.BlockSpec((bblk, 128), lambda i: (i, 0)),
        ),
        compiler_params=pltpu.CompilerParams(
            dimension_semantics=("parallel",),
            vmem_limit_bytes=32 * 1024 * 1024),
        cost_estimate=pl.CostEstimate(
            flops=2 * Bp * (24 * 140 * 768 + 8 * 1920 * 512 + 1024 * 512 + 512 * 128),
            transcendentals=0,
            bytes_accessed=(2 * (Bp * 24 * 140 + 140 * 768 + 1920 * 512 + 1024 * 512 + 512 * 128)
                            + 4 * Bp * (12 * 384 + 4 * 256 + 128))),
    )
    return kernel(x_im2col, prep["W1"], prep["b1"], prep["W2"], prep["b2"],
                  prep["Wfc1"], prep["bfc1"], prep["Wfc2"], prep["bfc2"])


# ---------------------------------------------------------------------------
# One-time parameter preparation (BN fold, Toeplitz expansion, flatten fold)
# ---------------------------------------------------------------------------
def prepare_params(p):
    s1 = p["bn1_gamma"] / jnp.sqrt(p["bn1_var"] + EPS)
    c1 = (p["conv1_b"] - p["bn1_mean"]) * s1 + p["bn1_beta"]
    s2 = p["bn2_gamma"] / jnp.sqrt(p["bn2_var"] + EPS)
    c2 = (p["conv2_b"] - p["bn2_mean"]) * s2 + p["bn2_beta"]

    # conv1 Toeplitz: [140 = (kh, w_in), 768 = (q, w_pool, c)], w_out = 2*w_pool + q
    w1e = p["conv1_w"][:, 0, :, :] * s1[:, None, None]              # [c, kh, kw]
    wt1 = jnp.transpose(w1e, (1, 2, 0))                             # [kh, kw, c]
    kw = jnp.arange(28)[:, None] - jnp.arange(24)[None, :]
    valid = (kw >= 0) & (kw <= 4)
    T1 = jnp.where(valid[None, :, :, None], wt1[:, jnp.clip(kw, 0, 4), :], 0.0)  # [5,28,24,32]
    order = jnp.concatenate([jnp.arange(0, 24, 2), jnp.arange(1, 24, 2)])
    W1 = T1[:, :, order, :].reshape(140, 768).astype(jnp.bfloat16)
    b1 = jnp.tile(c1, 12).reshape(1, 384)

    # conv2 Toeplitz: [1920 = (kh, w_in, ci), 512 = (q, w_pool, co)]
    w2e = p["conv2_w"] * s2[:, None, None, None]                    # [co, ci, kh, kw]
    wt2 = jnp.transpose(w2e, (2, 3, 1, 0))                          # [kh, kw, ci, co]
    kw2 = jnp.arange(12)[:, None] - jnp.arange(8)[None, :]
    valid2 = (kw2 >= 0) & (kw2 <= 4)
    T2 = jnp.where(valid2[None, :, :, None, None],
                   wt2[:, jnp.clip(kw2, 0, 4), :, :], 0.0)          # [5,12,8,32,64]
    order2 = jnp.concatenate([jnp.arange(0, 8, 2), jnp.arange(1, 8, 2)])
    T2 = T2[:, :, order2, :, :]
    W2 = jnp.transpose(T2, (0, 1, 3, 2, 4)).reshape(1920, 512).astype(jnp.bfloat16)
    b2 = jnp.tile(c2, 4).reshape(1, 256)

    # fc1: absorb PyTorch (C,H,W) flatten; rows ordered (h, w, c)
    Wfc1 = p["fc1_w"].reshape(512, 64, 4, 4)                        # [n, c, h, w]
    Wfc1 = jnp.transpose(Wfc1, (2, 3, 1, 0)).reshape(1024, 512).astype(jnp.bfloat16)
    bfc1 = p["fc1_b"].reshape(1, 512)

    # fc2: pre-transposed, N zero-padded 10 -> 128 for lane-dense stores
    Wfc2 = jnp.zeros((512, 128), jnp.bfloat16).at[:, :10].set(p["fc2_w"].T.astype(jnp.bfloat16))
    bfc2 = jnp.zeros((1, 128), jnp.float32).at[0, :10].set(p["fc2_b"])

    return dict(W1=W1, b1=b1, W2=W2, b2=b2,
                Wfc1=Wfc1, bfc1=bfc1, Wfc2=Wfc2, bfc2=bfc2)


# ---------------------------------------------------------------------------
# Parameter init (PyTorch-like), forward pass, pure-JAX reference
# ---------------------------------------------------------------------------
def _uniform(key, shape, bound):
    return jax.random.uniform(key, shape, jnp.float32, -bound, bound)


def init_params(key):
    ks = jax.random.split(key, 8)
    p = {}
    p["conv1_w"] = _uniform(ks[0], (32, 1, 5, 5), 1.0 / (1 * 5 * 5) ** 0.5)
    p["conv1_b"] = _uniform(ks[1], (32,), 1.0 / (1 * 5 * 5) ** 0.5)
    p["conv2_w"] = _uniform(ks[2], (64, 32, 5, 5), 1.0 / (32 * 5 * 5) ** 0.5)
    p["conv2_b"] = _uniform(ks[3], (64,), 1.0 / (32 * 5 * 5) ** 0.5)
    for name, c in (("bn1", 32), ("bn2", 64)):
        p[f"{name}_gamma"] = jnp.ones((c,), jnp.float32)
        p[f"{name}_beta"] = jnp.zeros((c,), jnp.float32)
        p[f"{name}_mean"] = jnp.zeros((c,), jnp.float32)
        p[f"{name}_var"] = jnp.ones((c,), jnp.float32)
    p["fc1_w"] = _uniform(ks[4], (512, 1024), 1.0 / 1024 ** 0.5)
    p["fc1_b"] = _uniform(ks[5], (512,), 1.0 / 1024 ** 0.5)
    p["fc2_w"] = _uniform(ks[6], (10, 512), 1.0 / 512 ** 0.5)
    p["fc2_b"] = _uniform(ks[7], (10,), 1.0 / 512 ** 0.5)
    return p


def net_large_margin_forward(prep, x_nchw, *, bblk=None):
    # TODO(synk): BatchNorm uses inference-mode running statistics (folded into
    # the weights/bias); PyTorch training-mode batch statistics are not reproduced.
    B = x_nchw.shape[0]
    if bblk is None:
        bblk = max(16, min(64, _round_up(B, 16)))
    Bp = _round_up(B, bblk)
    x = x_nchw.astype(jnp.float32).reshape(B, 28, 28)
    if Bp != B:
        x = jnp.pad(x, ((0, Bp - B), (0, 0), (0, 0)))

    # Host-side im2col for conv1 (K = 5*28 = 140): conv1 output row h1 = 4a + g,
    # grouped so the kernel's H-pool is a max of two contiguous row slabs.
    idx = (jnp.arange(4)[:, None, None] + 4 * jnp.arange(6)[None, :, None]
           + jnp.arange(5)[None, None, :])                           # [4, 6, 5] image-row index
    x1 = x[:, idx, :]                                                # [Bp, 4, 6, 5, 28]
    x1 = x1.transpose(1, 2, 0, 3, 4).reshape(24, Bp, 140).astype(jnp.bfloat16)

    conv1_k, conv2_k, logits = _fused_forward(x1, prep, bblk=bblk)

    # Reconstruct the PyTorch-layout (NCHW) feature maps the module returns.
    # TODO(synk): keep these in the kernel's channel-last layout if the consumer allows.
    c1 = conv1_k.reshape(2, 6, Bp, 12, 32).transpose(2, 4, 1, 0, 3).reshape(Bp, 32, 12, 12)[:B]
    c2 = conv2_k.reshape(4, Bp, 4, 64).transpose(1, 3, 0, 2)[:B]
    return logits[:B, :10], [c1, c2]


def reference_forward(params, x_nchw):
    hp = jax.lax.Precision.HIGHEST

    def block(x, w, b, gamma, beta, mean, var):
        y = jax.lax.conv_general_dilated(
            x, w, window_strides=(1, 1), padding="VALID",
            dimension_numbers=("NCHW", "OIHW", "NCHW"), precision=hp)
        y = y + b[None, :, None, None]
        y = (y - mean[None, :, None, None]) / jnp.sqrt(var + EPS)[None, :, None, None]
        y = y * gamma[None, :, None, None] + beta[None, :, None, None]
        y = jnp.maximum(y, 0.0)
        B, C, H, W = y.shape
        return y.reshape(B, C, H // 2, 2, W // 2, 2).max(axis=(3, 5))

    c1 = block(x_nchw.astype(jnp.float32), params["conv1_w"], params["conv1_b"],
               params["bn1_gamma"], params["bn1_beta"], params["bn1_mean"], params["bn1_var"])
    c2 = block(c1, params["conv2_w"], params["conv2_b"],
               params["bn2_gamma"], params["bn2_beta"], params["bn2_mean"], params["bn2_var"])
    f = c2.reshape(x_nchw.shape[0], -1)
    u = jnp.maximum(jnp.dot(f, params["fc1_w"].T, precision=hp) + params["fc1_b"], 0.0)
    logits = jnp.dot(u, params["fc2_w"].T, precision=hp) + params["fc2_b"]
    return logits, c1, c2


if __name__ == "__main__":
    key = jax.random.PRNGKey(0)
    pkey, xkey = jax.random.split(key)
    params = init_params(pkey)
    # fc1.in_features == 1024 == 64*4*4 forces a 1x28x28 input.
    x = jax.random.normal(xkey, (2, 1, 28, 28), dtype=jnp.float32)

    prep = prepare_params(params)
    fwd = jax.jit(net_large_margin_forward)
    logits, (conv1_out, conv2_out) = fwd(prep, x)
    jax.block_until_ready(logits)
    jax.block_until_ready(conv1_out)
    jax.block_until_ready(conv2_out)

    assert logits.shape == (2, 10)
    assert conv1_out.shape == (2, 32, 12, 12)
    assert conv2_out.shape == (2, 64, 4, 4)

    # Numerical check against a pure-JAX reference of the PyTorch forward
    # (tolerance covers the bf16 weight/activation cast in the kernel path).
    ref_logits, ref_c1, ref_c2 = reference_forward(params, x)
    np.testing.assert_allclose(np.asarray(conv1_out), np.asarray(ref_c1), atol=2e-2, rtol=2e-2)
    np.testing.assert_allclose(np.asarray(conv2_out), np.asarray(ref_c2), atol=2e-2, rtol=2e-2)
    np.testing.assert_allclose(np.asarray(logits), np.asarray(ref_logits), atol=2e-2, rtol=2e-2)

    print("KERNEL_OK")
</pallas_src>

<mosaic_0001>
module attributes {stable_mosaic.version = 11 : i64} {
  func.func @_fused_kernel(%arg0: i32, %arg1: memref<24x16x140xbf16, #tpu.memory_space<vmem>>, %arg2: memref<140x768xbf16, #tpu.memory_space<vmem>>, %arg3: memref<1x384xf32, #tpu.memory_space<vmem>>, %arg4: memref<1920x512xbf16, #tpu.memory_space<vmem>>, %arg5: memref<1x256xf32, #tpu.memory_space<vmem>>, %arg6: memref<1024x512xbf16, #tpu.memory_space<vmem>>, %arg7: memref<1x512xf32, #tpu.memory_space<vmem>>, %arg8: memref<512x128xbf16, #tpu.memory_space<vmem>>, %arg9: memref<1x128xf32, #tpu.memory_space<vmem>>, %arg10: memref<2x6x16x384xf32, #tpu.memory_space<vmem>>, %arg11: memref<4x16x256xf32, #tpu.memory_space<vmem>>, %arg12: memref<16x128xf32, #tpu.memory_space<vmem>>) attributes {dimension_semantics = [#tpu.dimension_semantics<parallel>], iteration_bounds = array<i64: 1>, scalar_prefetch = 0 : i64, scratch_operands = 0 : i64, tpu.core_type = #tpu.core_type<tc>, window_params = [{transform_indices = @transform_0, window_bounds = array<i64: 24, 16, 140>}, {pipeline_mode = #tpu.pipeline_mode<synchronous>, transform_indices = @transform_1, window_bounds = array<i64: 140, 768>}, {pipeline_mode = #tpu.pipeline_mode<synchronous>, transform_indices = @transform_2, window_bounds = array<i64: 1, 384>}, {pipeline_mode = #tpu.pipeline_mode<synchronous>, transform_indices = @transform_3, window_bounds = array<i64: 1920, 512>}, {pipeline_mode = #tpu.pipeline_mode<synchronous>, transform_indices = @transform_4, window_bounds = array<i64: 1, 256>}, {pipeline_mode = #tpu.pipeline_mode<synchronous>, transform_indices = @transform_5, window_bounds = array<i64: 1024, 512>}, {pipeline_mode = #tpu.pipeline_mode<synchronous>, transform_indices = @transform_6, window_bounds = array<i64: 1, 512>}, {pipeline_mode = #tpu.pipeline_mode<synchronous>, transform_indices = @transform_7, window_bounds = array<i64: 512, 128>}, {pipeline_mode = #tpu.pipeline_mode<synchronous>, transform_indices = @transform_8, window_bounds = array<i64: 1, 128>}, {transform_indices = @transform_9, window_bounds = array<i64: 2, 6, 16, 384>}, {transform_indices = @transform_10, window_bounds = array<i64: 4, 16, 256>}, {transform_indices = @transform_11, window_bounds = array<i64: 16, 128>}]} {
    %c0 = arith.constant 0 : index
    %c0_0 = arith.constant 0 : index
    %c0_1 = arith.constant 0 : index
    %0 = vector.load %arg1[%c0, %c0_0, %c0_1] : memref<24x16x140xbf16, #tpu.memory_space<vmem>>, vector<1x16x140xbf16>
    %1 = vector.shape_cast %0 : vector<1x16x140xbf16> to vector<16x140xbf16>
    %c1 = arith.constant 1 : index
    %c0_2 = arith.constant 0 : index
    %c0_3 = arith.constant 0 : index
    %2 = vector.load %arg1[%c1, %c0_2, %c0_3] : memref<24x16x140xbf16, #tpu.memory_space<vmem>>, vector<1x16x140xbf16>
    %3 = vector.shape_cast %2 : vector<1x16x140xbf16> to vector<16x140xbf16>
    %c2 = arith.constant 2 : index
    %c0_4 = arith.constant 0 : index
    %c0_5 = arith.constant 0 : index
    %4 = vector.load %arg1[%c2, %c0_4, %c0_5] : memref<24x16x140xbf16, #tpu.memory_space<vmem>>, vector<1x16x140xbf16>
    %5 = vector.shape_cast %4 : vector<1x16x140xbf16> to vector<16x140xbf16>
    %c3 = arith.constant 3 : index
    %c0_6 = arith.constant 0 : index
    %c0_7 = arith.constant 0 : index
    %6 = vector.load %arg1[%c3, %c0_6, %c0_7] : memref<24x16x140xbf16, #tpu.memory_space<vmem>>, vector<1x16x140xbf16>
    %7 = vector.shape_cast %6 : vector<1x16x140xbf16> to vector<16x140xbf16>
    %c4 = arith.constant 4 : index
    %c0_8 = arith.constant 0 : index
    %c0_9 = arith.constant 0 : index
    %8 = vector.load %arg1[%c4, %c0_8, %c0_9] : memref<24x16x140xbf16, #tpu.memory_space<vmem>>, vector<1x16x140xbf16>
    %9 = vector.shape_cast %8 : vector<1x16x140xbf16> to vector<16x140xbf16>
    %c5 = arith.constant 5 : index
    %c0_10 = arith.constant 0 : index
    %c0_11 = arith.constant 0 : index
    %10 = vector.load %arg1[%c5, %c0_10, %c0_11] : memref<24x16x140xbf16, #tpu.memory_space<vmem>>, vector<1x16x140xbf16>
    %11 = vector.shape_cast %10 : vector<1x16x140xbf16> to vector<16x140xbf16>
    %c6 = arith.constant 6 : index
    %c0_12 = arith.constant 0 : index
    %c0_13 = arith.constant 0 : index
    %12 = vector.load %arg1[%c6, %c0_12, %c0_13] : memref<24x16x140xbf16, #tpu.memory_space<vmem>>, vector<1x16x140xbf16>
    %13 = vector.shape_cast %12 : vector<1x16x140xbf16> to vector<16x140xbf16>
    %c7 = arith.constant 7 : index
    %c0_14 = arith.constant 0 : index
    %c0_15 = arith.constant 0 : index
    %14 = vector.load %arg1[%c7, %c0_14, %c0_15] : memref<24x16x140xbf16, #tpu.memory_space<vmem>>, vector<1x16x140xbf16>
    %15 = vector.shape_cast %14 : vector<1x16x140xbf16> to vector<16x140xbf16>
    %c8 = arith.constant 8 : index
    %c0_16 = arith.constant 0 : index
    %c0_17 = arith.constant 0 : index
    %16 = vector.load %arg1[%c8, %c0_16, %c0_17] : memref<24x16x140xbf16, #tpu.memory_space<vmem>>, vector<1x16x140xbf16>
    %17 = vector.shape_cast %16 : vector<1x16x140xbf16> to vector<16x140xbf16>
    %c9 = arith.constant 9 : index
    %c0_18 = arith.constant 0 : index
    %c0_19 = arith.constant 0 : index
    %18 = vector.load %arg1[%c9, %c0_18, %c0_19] : memref<24x16x140xbf16, #tpu.memory_space<vmem>>, vector<1x16x140xbf16>
    %19 = vector.shape_cast %18 : vector<1x16x140xbf16> to vector<16x140xbf16>
    %c10 = arith.constant 10 : index
    %c0_20 = arith.constant 0 : index
    %c0_21 = arith.constant 0 : index
    %20 = vector.load %arg1[%c10, %c0_20, %c0_21] : memref<24x16x140xbf16, #tpu.memory_space<vmem>>, vector<1x16x140xbf16>
    %21 = vector.shape_cast %20 : vector<1x16x140xbf16> to vector<16x140xbf16>
    %c11 = arith.constant 11 : index
    %c0_22 = arith.constant 0 : index
    %c0_23 = arith.constant 0 : index
    %22 = vector.load %arg1[%c11, %c0_22, %c0_23] : memref<24x16x140xbf16, #tpu.memory_space<vmem>>, vector<1x16x140xbf16>
    %23 = vector.shape_cast %22 : vector<1x16x140xbf16> to vector<16x140xbf16>
    %c12 = arith.constant 12 : index
    %c0_24 = arith.constant 0 : index
    %c0_25 = arith.constant 0 : index
    %24 = vector.load %arg1[%c12, %c0_24, %c0_25] : memref<24x16x140xbf16, #tpu.memory_space<vmem>>, vector<1x16x140xbf16>
    %25 = vector.shape_cast %24 : vector<1x16x140xbf16> to vector<16x140xbf16>
    %c13 = arith.constant 13 : index
    %c0_26 = arith.constant 0 : index
    %c0_27 = arith.constant 0 : index
    %26 = vector.load %arg1[%c13, %c0_26, %c0_27] : memref<24x16x140xbf16, #tpu.memory_space<vmem>>, vector<1x16x140xbf16>
    %27 = vector.shape_cast %26 : vector<1x16x140xbf16> to vector<16x140xbf16>
    %c14 = arith.constant 14 : index
    %c0_28 = arith.constant 0 : index
    %c0_29 = arith.constant 0 : index
    %28 = vector.load %arg1[%c14, %c0_28, %c0_29] : memref<24x16x140xbf16, #tpu.memory_space<vmem>>, vector<1x16x140xbf16>
    %29 = vector.shape_cast %28 : vector<1x16x140xbf16> to vector<16x140xbf16>
    %c15 = arith.constant 15 : index
    %c0_30 = arith.constant 0 : index
    %c0_31 = arith.constant 0 : index
    %30 = vector.load %arg1[%c15, %c0_30, %c0_31] : memref<24x16x140xbf16, #tpu.memory_space<vmem>>, vector<1x16x140xbf16>
    %31 = vector.shape_cast %30 : vector<1x16x140xbf16> to vector<16x140xbf16>
    %c16 = arith.constant 16 : index
    %c0_32 = arith.constant 0 : index
    %c0_33 = arith.constant 0 : index
    %32 = vector.load %arg1[%c16, %c0_32, %c0_33] : memref<24x16x140xbf16, #tpu.memory_space<vmem>>, vector<1x16x140xbf16>
    %33 = vector.shape_cast %32 : vector<1x16x140xbf16> to vector<16x140xbf16>
    %c17 = arith.constant 17 : index
    %c0_34 = arith.constant 0 : index
    %c0_35 = arith.constant 0 : index
    %34 = vector.load %arg1[%c17, %c0_34, %c0_35] : memref<24x16x140xbf16, #tpu.memory_space<vmem>>, vector<1x16x140xbf16>
    %35 = vector.shape_cast %34 : vector<1x16x140xbf16> to vector<16x140xbf16>
    %c18 = arith.constant 18 : index
    %c0_36 = arith.constant 0 : index
    %c0_37 = arith.constant 0 : index
    %36 = vector.load %arg1[%c18, %c0_36, %c0_37] : memref<24x16x140xbf16, #tpu.memory_space<vmem>>, vector<1x16x140xbf16>
    %37 = vector.shape_cast %36 : vector<1x16x140xbf16> to vector<16x140xbf16>
    %c19 = arith.constant 19 : index
    %c0_38 = arith.constant 0 : index
    %c0_39 = arith.constant 0 : index
    %38 = vector.load %arg1[%c19, %c0_38, %c0_39] : memref<24x16x140xbf16, #tpu.memory_space<vmem>>, vector<1x16x140xbf16>
    %39 = vector.shape_cast %38 : vector<1x16x140xbf16> to vector<16x140xbf16>
    %c20 = arith.constant 20 : index
    %c0_40 = arith.constant 0 : index
    %c0_41 = arith.constant 0 : index
    %40 = vector.load %arg1[%c20, %c0_40, %c0_41] : memref<24x16x140xbf16, #tpu.memory_space<vmem>>, vector<1x16x140xbf16>
    %41 = vector.shape_cast %40 : vector<1x16x140xbf16> to vector<16x140xbf16>
    %c21 = arith.constant 21 : index
    %c0_42 = arith.constant 0 : index
    %c0_43 = arith.constant 0 : index
    %42 = vector.load %arg1[%c21, %c0_42, %c0_43] : memref<24x16x140xbf16, #tpu.memory_space<vmem>>, vector<1x16x140xbf16>
    %43 = vector.shape_cast %42 : vector<1x16x140xbf16> to vector<16x140xbf16>
    %c22 = arith.constant 22 : index
    %c0_44 = arith.constant 0 : index
    %c0_45 = arith.constant 0 : index
    %44 = vector.load %arg1[%c22, %c0_44, %c0_45] : memref<24x16x140xbf16, #tpu.memory_space<vmem>>, vector<1x16x140xbf16>
    %45 = vector.shape_cast %44 : vector<1x16x140xbf16> to vector<16x140xbf16>
    %c23 = arith.constant 23 : index
    %c0_46 = arith.constant 0 : index
    %c0_47 = arith.constant 0 : index
    %46 = vector.load %arg1[%c23, %c0_46, %c0_47] : memref<24x16x140xbf16, #tpu.memory_space<vmem>>, vector<1x16x140xbf16>
    %47 = vector.shape_cast %46 : vector<1x16x140xbf16> to vector<16x140xbf16>
    %48 = tpu.concatenate %1, %3, %5, %7, %9, %11, %13, %15, %17, %19, %21, %23, %25, %27, %29, %31 in 0 : vector<16x140xbf16>, vector<16x140xbf16>, vector<16x140xbf16>, vector<16x140xbf16>, vector<16x140xbf16>, vector<16x140xbf16>, vector<16x140xbf16>, vector<16x140xbf16>, vector<16x140xbf16>, vector<16x140xbf16>, vector<16x140xbf16>, vector<16x140xbf16>, vector<16x140xbf16>, vector<16x140xbf16>, vector<16x140xbf16>, vector<16x140xbf16> -> vector<256x140xbf16>
    %49 = tpu.concatenate %33, %35, %37, %39, %41, %43, %45, %47 in 0 : vector<16x140xbf16>, vector<16x140xbf16>, vector<16x140xbf16>, vector<16x140xbf16>, vector<16x140xbf16>, vector<16x140xbf16>, vector<16x140xbf16>, vector<16x140xbf16> -> vector<128x140xbf16>
    %50 = tpu.concatenate %48, %49 in 0 : vector<256x140xbf16>, vector<128x140xbf16> -> vector<384x140xbf16>
    %c0_48 = arith.constant 0 : index
    %c0_49 = arith.constant 0 : index
    %51 = vector.load %arg2[%c0_48, %c0_49] : memref<140x768xbf16, #tpu.memory_space<vmem>>, vector<140x768xbf16>
    %cst = arith.constant dense<0.000000e+00> : vector<384x768xf32>
    %52 = tpu.matmul %50, %51, %cst {dimension_numbers = #tpu.dot_dimension_numbers<[1], [0], [0], [1], [0, 0, 1, 1], [], []>} : vector<384x140xbf16>, vector<140x768xbf16>, vector<384x768xf32> -> vector<384x768xf32>
    %53 = vector.extract_strided_slice %52 {offsets = [0, 0], sizes = [96, 768], strides = [1, 1]} : vector<384x768xf32> to vector<96x768xf32>
    %54 = vector.extract_strided_slice %52 {offsets = [96, 0], sizes = [96, 768], strides = [1, 1]} : vector<384x768xf32> to vector<96x768xf32>
    %55 = arith.maximumf %53, %54 : vector<96x768xf32>
    %56 = vector.extract_strided_slice %52 {offsets = [192, 0], sizes = [96, 768], strides = [1, 1]} : vector<384x768xf32> to vector<96x768xf32>
    %57 = vector.extract_strided_slice %52 {offsets = [288, 0], sizes = [96, 768], strides = [1, 1]} : vector<384x768xf32> to vector<96x768xf32>
    %58 = arith.maximumf %56, %57 : vector<96x768xf32>
    %c0_50 = arith.constant 0 : index
    %c0_51 = arith.constant 0 : index
    %59 = vector.load %arg3[%c0_50, %c0_51] : memref<1x384xf32, #tpu.memory_space<vmem>>, vector<1x384xf32>
    %60 = vector.extract_strided_slice %55 {offsets = [0, 0], sizes = [96, 384], strides = [1, 1]} : vector<96x768xf32> to vector<96x384xf32>
    %61 = vector.extract_strided_slice %55 {offsets = [0, 384], sizes = [96, 384], strides = [1, 1]} : vector<96x768xf32> to vector<96x384xf32>
    %62 = arith.maximumf %60, %61 : vector<96x384xf32>
    %63 = vector.broadcast %59 : vector<1x384xf32> to vector<96x384xf32>
    %64 = arith.addf %62, %63 : vector<96x384xf32>
    %cst_52 = arith.constant 0.000000e+00 : f32
    %65 = vector.broadcast %cst_52 : f32 to vector<96x384xf32>
    %66 = arith.maximumf %64, %65 : vector<96x384xf32>
    %67 = vector.extract_strided_slice %58 {offsets = [0, 0], sizes = [96, 384], strides = [1, 1]} : vector<96x768xf32> to vector<96x384xf32>
    %68 = vector.extract_strided_slice %58 {offsets = [0, 384], sizes = [96, 384], strides = [1, 1]} : vector<96x768xf32> to vector<96x384xf32>
    %69 = arith.maximumf %67, %68 : vector<96x384xf32>
    %70 = vector.broadcast %59 : vector<1x384xf32> to vector<96x384xf32>
    %71 = arith.addf %69, %70 : vector<96x384xf32>
    %cst_53 = arith.constant 0.000000e+00 : f32
    %72 = vector.broadcast %cst_53 : f32 to vector<96x384xf32>
    %73 = arith.maximumf %71, %72 : vector<96x384xf32>
    %74 = vector.extract_strided_slice %66 {offsets = [0, 0], sizes = [16, 384], strides = [1, 1]} : vector<96x384xf32> to vector<16x384xf32>
    %c0_54 = arith.constant 0 : index
    %c0_55 = arith.constant 0 : index
    %c0_56 = arith.constant 0 : index
    %c0_57 = arith.constant 0 : index
    %75 = vector.load %arg10[%c0_54, %c0_55, %c0_56, %c0_57] : memref<2x6x16x384xf32, #tpu.memory_space<vmem>>, vector<1x1x16x384xf32>
    %76 = vector.shape_cast %75 : vector<1x1x16x384xf32> to vector<16x384xf32>
    %77 = vector.shape_cast %74 : vector<16x384xf32> to vector<1x1x16x384xf32>
    tpu.vector_store %arg10[%c0_54, %c0_55, %c0_56, %c0_57], %77 {strides = array<i32>} : memref<2x6x16x384xf32, #tpu.memory_space<vmem>>, vector<1x1x16x384xf32>,
    %78 = vector.extract_strided_slice %73 {offsets = [0, 0], sizes = [16, 384], strides = [1, 1]} : vector<96x384xf32> to vector<16x384xf32>
    %c1_58 = arith.constant 1 : index
    %c0_59 = arith.constant 0 : index
    %c0_60 = arith.constant 0 : index
    %c0_61 = arith.constant 0 : index
    %79 = vector.load %arg10[%c1_58, %c0_59, %c0_60, %c0_61] : memref<2x6x16x384xf32, #tpu.memory_space<vmem>>, vector<1x1x16x384xf32>
    %80 = vector.shape_cast %79 : vector<1x1x16x384xf32> to vector<16x384xf32>
    %81 = vector.shape_cast %78 : vector<16x384xf32> to vector<1x1x16x384xf32>
    tpu.vector_store %arg10[%c1_58, %c0_59, %c0_60, %c0_61], %81 {strides = array<i32>} : memref<2x6x16x384xf32, #tpu.memory_space<vmem>>, vector<1x1x16x384xf32>,
    %82 = vector.extract_strided_slice %66 {offsets = [16, 0], sizes = [16, 384], strides = [1, 1]} : vector<96x384xf32> to vector<16x384xf32>
    %c0_62 = arith.constant 0 : index
    %c1_63 = arith.constant 1 : index
    %c0_64 = arith.constant 0 : index
    %c0_65 = arith.constant 0 : index
    %83 = vector.load %arg10[%c0_62, %c1_63, %c0_64, %c0_65] : memref<2x6x16x384xf32, #tpu.memory_space<vmem>>, vector<1x1x16x384xf32>
    %84 = vector.shape_cast %83 : vector<1x1x16x384xf32> to vector<16x384xf32>
    %85 = vector.shape_cast %82 : vector<16x384xf32> to vector<1x1x16x384xf32>
    tpu.vector_store %arg10[%c0_62, %c1_63, %c0_64, %c0_65], %85 {strides = array<i32>} : memref<2x6x16x384xf32, #tpu.memory_space<vmem>>, vector<1x1x16x384xf32>,
    %86 = vector.extract_strided_slice %73 {offsets = [16, 0], sizes = [16, 384], strides = [1, 1]} : vector<96x384xf32> to vector<16x384xf32>
    %c1_66 = arith.constant 1 : index
    %c1_67 = arith.constant 1 : index
    %c0_68 = arith.constant 0 : index
    %c0_69 = arith.constant 0 : index
    %87 = vector.load %arg10[%c1_66, %c1_67, %c0_68, %c0_69] : memref<2x6x16x384xf32, #tpu.memory_space<vmem>>, vector<1x1x16x384xf32>
    %88 = vector.shape_cast %87 : vector<1x1x16x384xf32> to vector<16x384xf32>
    %89 = vector.shape_cast %86 : vector<16x384xf32> to vector<1x1x16x384xf32>
    tpu.vector_store %arg10[%c1_66, %c1_67, %c0_68, %c0_69], %89 {strides = array<i32>} : memref<2x6x16x384xf32, #tpu.memory_space<vmem>>, vector<1x1x16x384xf32>,
    %90 = vector.extract_strided_slice %66 {offsets = [32, 0], sizes = [16, 384], strides = [1, 1]} : vector<96x384xf32> to vector<16x384xf32>
    %c0_70 = arith.constant 0 : index
    %c2_71 = arith.constant 2 : index
    %c0_72 = arith.constant 0 : index
    %c0_73 = arith.constant 0 : index
    %91 = vector.load %arg10[%c0_70, %c2_71, %c0_72, %c0_73] : memref<2x6x16x384xf32, #tpu.memory_space<vmem>>, vector<1x1x16x384xf32>
    %92 = vector.shape_cast %91 : vector<1x1x16x384xf32> to vector<16x384xf32>
    %93 = vector.shape_cast %90 : vector<16x384xf32> to vector<1x1x16x384xf32>
    tpu.vector_store %arg10[%c0_70, %c2_71, %c0_72, %c0_73], %93 {strides = array<i32>} : memref<2x6x16x384xf32, #tpu.memory_space<vmem>>, vector<1x1x16x384xf32>,
    %94 = vector.extract_strided_slice %73 {offsets = [32, 0], sizes = [16, 384], strides = [1, 1]} : vector<96x384xf32> to vector<16x384xf32>
    %c1_74 = arith.constant 1 : index
    %c2_75 = arith.constant 2 : index
    %c0_76 = arith.constant 0 : index
    %c0_77 = arith.constant 0 : index
    %95 = vector.load %arg10[%c1_74, %c2_75, %c0_76, %c0_77] : memref<2x6x16x384xf32, #tpu.memory_space<vmem>>, vector<1x1x16x384xf32>
    %96 = vector.shape_cast %95 : vector<1x1x16x384xf32> to vector<16x384xf32>
    %97 = vector.shape_cast %94 : vector<16x384xf32> to vector<1x1x16x384xf32>
    tpu.vector_store %arg10[%c1_74, %c2_75, %c0_76, %c0_77], %97 {strides = array<i32>} : memref<2x6x16x384xf32, #tpu.memory_space<vmem>>, vector<1x1x16x384xf32>,
    %98 = vector.extract_strided_slice %66 {offsets = [48, 0], sizes = [16, 384], strides = [1, 1]} : vector<96x384xf32> to vector<16x384xf32>
    %c0_78 = arith.constant 0 : index
    %c3_79 = arith.constant 3 : index
    %c0_80 = arith.constant 0 : index
    %c0_81 = arith.constant 0 : index
    %99 = vector.load %arg10[%c0_78, %c3_79, %c0_80, %c0_81] : memref<2x6x16x384xf32, #tpu.memory_space<vmem>>, vector<1x1x16x384xf32>
    %100 = vector.shape_cast %99 : vector<1x1x16x384xf32> to vector<16x384xf32>
    %101 = vector.shape_cast %98 : vector<16x384xf32> to vector<1x1x16x384xf32>
    tpu.vector_store %arg10[%c0_78, %c3_79, %c0_80, %c0_81], %101 {strides = array<i32>} : memref<2x6x16x384xf32, #tpu.memory_space<vmem>>, vector<1x1x16x384xf32>,
    %102 = vector.extract_strided_slice %73 {offsets = [48, 0], sizes = [16, 384], strides = [1, 1]} : vector<96x384xf32> to vector<16x384xf32>
    %c1_82 = arith.constant 1 : index
    %c3_83 = arith.constant 3 : index
    %c0_84 = arith.constant 0 : index
    %c0_85 = arith.constant 0 : index
    %103 = vector.load %arg10[%c1_82, %c3_83, %c0_84, %c0_85] : memref<2x6x16x384xf32, #tpu.memory_space<vmem>>, vector<1x1x16x384xf32>
    %104 = vector.shape_cast %103 : vector<1x1x16x384xf32> to vector<16x384xf32>
    %105 = vector.shape_cast %102 : vector<16x384xf32> to vector<1x1x16x384xf32>
    tpu.vector_store %arg10[%c1_82, %c3_83, %c0_84, %c0_85], %105 {strides = array<i32>} : memref<2x6x16x384xf32, #tpu.memory_space<vmem>>, vector<1x1x16x384xf32>,
    %106 = vector.extract_strided_slice %66 {offsets = [64, 0], sizes = [16, 384], strides = [1, 1]} : vector<96x384xf32> to vector<16x384xf32>
    %c0_86 = arith.constant 0 : index
    %c4_87 = arith.constant 4 : index
    %c0_88 = arith.constant 0 : index
    %c0_89 = arith.constant 0 : index
    %107 = vector.load %arg10[%c0_86, %c4_87, %c0_88, %c0_89] : memref<2x6x16x384xf32, #tpu.memory_space<vmem>>, vector<1x1x16x384xf32>
    %108 = vector.shape_cast %107 : vector<1x1x16x384xf32> to vector<16x384xf32>
    %109 = vector.shape_cast %106 : vector<16x384xf32> to vector<1x1x16x384xf32>
    tpu.vector_store %arg10[%c0_86, %c4_87, %c0_88, %c0_89], %109 {strides = array<i32>} : memref<2x6x16x384xf32, #tpu.memory_space<vmem>>, vector<1x1x16x384xf32>,
    %110 = vector.extract_strided_slice %73 {offsets = [64, 0], sizes = [16, 384], strides = [1, 1]} : vector<96x384xf32> to vector<16x384xf32>
    %c1_90 = arith.constant 1 : index
    %c4_91 = arith.constant 4 : index
    %c0_92 = arith.constant 0 : index
    %c0_93 = arith.constant 0 : index
    %111 = vector.load %arg10[%c1_90, %c4_91, %c0_92, %c0_93] : memref<2x6x16x384xf32, #tpu.memory_space<vmem>>, vector<1x1x16x384xf32>
    %112 = vector.shape_cast %111 : vector<1x1x16x384xf32> to vector<16x384xf32>
    %113 = vector.shape_cast %110 : vector<16x384xf32> to vector<1x1x16x384xf32>
    tpu.vector_store %arg10[%c1_90, %c4_91, %c0_92, %c0_93], %113 {strides = array<i32>} : memref<2x6x16x384xf32, #tpu.memory_space<vmem>>, vector<1x1x16x384xf32>,
    %114 = vector.extract_strided_slice %66 {offsets = [80, 0], sizes = [16, 384], strides = [1, 1]} : vector<96x384xf32> to vector<16x384xf32>
    %c0_94 = arith.constant 0 : index
    %c5_95 = arith.constant 5 : index
    %c0_96 = arith.constant 0 : index
    %c0_97 = arith.constant 0 : index
    %115 = vector.load %arg10[%c0_94, %c5_95, %c0_96, %c0_97] : memref<2x6x16x384xf32, #tpu.memory_space<vmem>>, vector<1x1x16x384xf32>
    %116 = vector.shape_cast %115 : vector<1x1x16x384xf32> to vector<16x384xf32>
    %117 = vector.shape_cast %114 : vector<16x384xf32> to vector<1x1x16x384xf32>
    tpu.vector_store %arg10[%c0_94, %c5_95, %c0_96, %c0_97], %117 {strides = array<i32>} : memref<2x6x16x384xf32, #tpu.memory_space<vmem>>, vector<1x1x16x384xf32>,
    %118 = vector.extract_strided_slice %73 {offsets = [80, 0], sizes = [16, 384], strides = [1, 1]} : vector<96x384xf32> to vector<16x384xf32>
    %c1_98 = arith.constant 1 : index
    %c5_99 = arith.constant 5 : index
    %c0_100 = arith.constant 0 : index
    %c0_101 = arith.constant 0 : index
    %119 = vector.load %arg10[%c1_98, %c5_99, %c0_100, %c0_101] : memref<2x6x16x384xf32, #tpu.memory_space<vmem>>, vector<1x1x16x384xf32>
    %120 = vector.shape_cast %119 : vector<1x1x16x384xf32> to vector<16x384xf32>
    %121 = vector.shape_cast %118 : vector<16x384xf32> to vector<1x1x16x384xf32>
    tpu.vector_store %arg10[%c1_98, %c5_99, %c0_100, %c0_101], %121 {strides = array<i32>} : memref<2x6x16x384xf32, #tpu.memory_space<vmem>>, vector<1x1x16x384xf32>,
    %122 = arith.truncf %66 : vector<96x384xf32> to vector<96x384xbf16>
    %123 = arith.truncf %73 : vector<96x384xf32> to vector<96x384xbf16>
    %124 = vector.extract_strided_slice %122 {offsets = [0, 0], sizes = [64, 384], strides = [1, 1]} : vector<96x384xbf16> to vector<64x384xbf16>
    %125 = vector.extract_strided_slice %123 {offsets = [0, 0], sizes = [64, 384], strides = [1, 1]} : vector<96x384xbf16> to vector<64x384xbf16>
    %126 = vector.extract_strided_slice %122 {offsets = [16, 0], sizes = [64, 384], strides = [1, 1]} : vector<96x384xbf16> to vector<64x384xbf16>
    %127 = vector.extract_strided_slice %123 {offsets = [16, 0], sizes = [64, 384], strides = [1, 1]} : vector<96x384xbf16> to vector<64x384xbf16>
    %128 = vector.extract_strided_slice %122 {offsets = [32, 0], sizes = [64, 384], strides = [1, 1]} : vector<96x384xbf16> to vector<64x384xbf16>
    %129 = tpu.concatenate %124, %125, %126, %127, %128 in 1 : vector<64x384xbf16>, vector<64x384xbf16>, vector<64x384xbf16>, vector<64x384xbf16>, vector<64x384xbf16> -> vector<64x1920xbf16>
    %130 = vector.extract_strided_slice %123 {offsets = [0, 0], sizes = [64, 384], strides = [1, 1]} : vector<96x384xbf16> to vector<64x384xbf16>
    %131 = vector.extract_strided_slice %122 {offsets = [16, 0], sizes = [64, 384], strides = [1, 1]} : vector<96x384xbf16> to vector<64x384xbf16>
    %132 = vector.extract_strided_slice %123 {offsets = [16, 0], sizes = [64, 384], strides = [1, 1]} : vector<96x384xbf16> to vector<64x384xbf16>
    %133 = vector.extract_strided_slice %122 {offsets = [32, 0], sizes = [64, 384], strides = [1, 1]} : vector<96x384xbf16> to vector<64x384xbf16>
    %134 = vector.extract_strided_slice %123 {offsets = [32, 0], sizes = [64, 384], strides = [1, 1]} : vector<96x384xbf16> to vector<64x384xbf16>
    %135 = tpu.concatenate %130, %131, %132, %133, %134 in 1 : vector<64x384xbf16>, vector<64x384xbf16>, vector<64x384xbf16>, vector<64x384xbf16>, vector<64x384xbf16> -> vector<64x1920xbf16>
    %c0_102 = arith.constant 0 : index
    %c0_103 = arith.constant 0 : index
    %136 = vector.load %arg4[%c0_102, %c0_103] : memref<1920x512xbf16, #tpu.memory_space<vmem>>, vector<1920x512xbf16>
    %cst_104 = arith.constant dense<0.000000e+00> : vector<64x512xf32>
    %137 = tpu.matmul %129, %136, %cst_104 {dimension_numbers = #tpu.dot_dimension_numbers<[1], [0], [0], [1], [0, 0, 1, 1], [], []>} : vector<64x1920xbf16>, vector<1920x512xbf16>, vector<64x512xf32> -> vector<64x512xf32>
    %c0_105 = arith.constant 0 : index
    %c0_106 = arith.constant 0 : index
    %138 = vector.load %arg4[%c0_105, %c0_106] : memref<1920x512xbf16, #tpu.memory_space<vmem>>, vector<1920x512xbf16>
    %cst_107 = arith.constant dense<0.000000e+00> : vector<64x512xf32>
    %139 = tpu.matmul %135, %138, %cst_107 {dimension_numbers = #tpu.dot_dimension_numbers<[1], [0], [0], [1], [0, 0, 1, 1], [], []>} : vector<64x1920xbf16>, vector<1920x512xbf16>, vector<64x512xf32> -> vector<64x512xf32>
    %140 = arith.maximumf %137, %139 : vector<64x512xf32>
    %141 = vector.extract_strided_slice %140 {offsets = [0, 0], sizes = [64, 256], strides = [1, 1]} : vector<64x512xf32> to vector<64x256xf32>
    %142 = vector.extract_strided_slice %140 {offsets = [0, 256], sizes = [64, 256], strides = [1, 1]} : vector<64x512xf32> to vector<64x256xf32>
    %143 = arith.maximumf %141, %142 : vector<64x256xf32>
    %c0_108 = arith.constant 0 : index
    %c0_109 = arith.constant 0 : index
    %144 = vector.load %arg5[%c0_108, %c0_109] : memref<1x256xf32, #tpu.memory_space<vmem>>, vector<1x256xf32>
    %145 = vector.broadcast %144 : vector<1x256xf32> to vector<64x256xf32>
    %146 = arith.addf %143, %145 : vector<64x256xf32>
    %cst_110 = arith.constant 0.000000e+00 : f32
    %147 = vector.broadcast %cst_110 : f32 to vector<64x256xf32>
    %148 = arith.maximumf %146, %147 : vector<64x256xf32>
    %149 = vector.extract_strided_slice %148 {offsets = [0, 0], sizes = [16, 256], strides = [1, 1]} : vector<64x256xf32> to vector<16x256xf32>
    %c0_111 = arith.constant 0 : index
    %c0_112 = arith.constant 0 : index
    %c0_113 = arith.constant 0 : index
    %150 = vector.load %arg11[%c0_111, %c0_112, %c0_113] : memref<4x16x256xf32, #tpu.memory_space<vmem>>, vector<1x16x256xf32>
    %151 = vector.shape_cast %150 : vector<1x16x256xf32> to vector<16x256xf32>
    %152 = vector.shape_cast %149 : vector<16x256xf32> to vector<1x16x256xf32>
    tpu.vector_store %arg11[%c0_111, %c0_112, %c0_113], %152 {strides = array<i32>} : memref<4x16x256xf32, #tpu.memory_space<vmem>>, vector<1x16x256xf32>,
    %153 = vector.extract_strided_slice %148 {offsets = [16, 0], sizes = [16, 256], strides = [1, 1]} : vector<64x256xf32> to vector<16x256xf32>
    %c1_114 = arith.constant 1 : index
    %c0_115 = arith.constant 0 : index
    %c0_116 = arith.constant 0 : index
    %154 = vector.load %arg11[%c1_114, %c0_115, %c0_116] : memref<4x16x256xf32, #tpu.memory_space<vmem>>, vector<1x16x256xf32>
    %155 = vector.shape_cast %154 : vector<1x16x256xf32> to vector<16x256xf32>
    %156 = vector.shape_cast %153 : vector<16x256xf32> to vector<1x16x256xf32>
    tpu.vector_store %arg11[%c1_114, %c0_115, %c0_116], %156 {strides = array<i32>} : memref<4x16x256xf32, #tpu.memory_space<vmem>>, vector<1x16x256xf32>,
    %157 = vector.extract_strided_slice %148 {offsets = [32, 0], sizes = [16, 256], strides = [1, 1]} : vector<64x256xf32> to vector<16x256xf32>
    %c2_117 = arith.constant 2 : index
    %c0_118 = arith.constant 0 : index
    %c0_119 = arith.constant 0 : index
    %158 = vector.load %arg11[%c2_117, %c0_118, %c0_119] : memref<4x16x256xf32, #tpu.memory_space<vmem>>, vector<1x16x256xf32>
    %159 = vector.shape_cast %158 : vector<1x16x256xf32> to vector<16x256xf32>
    %160 = vector.shape_cast %157 : vector<16x256xf32> to vector<1x16x256xf32>
    tpu.vector_store %arg11[%c2_117, %c0_118, %c0_119], %160 {strides = array<i32>} : memref<4x16x256xf32, #tpu.memory_space<vmem>>, vector<1x16x256xf32>,
    %161 = vector.extract_strided_slice %148 {offsets = [48, 0], sizes = [16, 256], strides = [1, 1]} : vector<64x256xf32> to vector<16x256xf32>
    %c3_120 = arith.constant 3 : index
    %c0_121 = arith.constant 0 : index
    %c0_122 = arith.constant 0 : index
    %162 = vector.load %arg11[%c3_120, %c0_121, %c0_122] : memref<4x16x256xf32, #tpu.memory_space<vmem>>, vector<1x16x256xf32>
    %163 = vector.shape_cast %162 : vector<1x16x256xf32> to vector<16x256xf32>
    %164 = vector.shape_cast %161 : vector<16x256xf32> to vector<1x16x256xf32>
    tpu.vector_store %arg11[%c3_120, %c0_121, %c0_122], %164 {strides = array<i32>} : memref<4x16x256xf32, #tpu.memory_space<vmem>>, vector<1x16x256xf32>,
    %165 = arith.truncf %148 : vector<64x256xf32> to vector<64x256xbf16>
    %166 = vector.extract_strided_slice %165 {offsets = [0, 0], sizes = [16, 256], strides = [1, 1]} : vector<64x256xbf16> to vector<16x256xbf16>
    %167 = vector.extract_strided_slice %165 {offsets = [16, 0], sizes = [16, 256], strides = [1, 1]} : vector<64x256xbf16> to vector<16x256xbf16>
    %168 = vector.extract_strided_slice %165 {offsets = [32, 0], sizes = [16, 256], strides = [1, 1]} : vector<64x256xbf16> to vector<16x256xbf16>
    %169 = vector.extract_strided_slice %165 {offsets = [48, 0], sizes = [16, 256], strides = [1, 1]} : vector<64x256xbf16> to vector<16x256xbf16>
    %170 = tpu.concatenate %166, %167, %168, %169 in 1 : vector<16x256xbf16>, vector<16x256xbf16>, vector<16x256xbf16>, vector<16x256xbf16> -> vector<16x1024xbf16>
    %c0_123 = arith.constant 0 : index
    %c0_124 = arith.constant 0 : index
    %171 = vector.load %arg6[%c0_123, %c0_124] : memref<1024x512xbf16, #tpu.memory_space<vmem>>, vector<1024x512xbf16>
    %cst_125 = arith.constant dense<0.000000e+00> : vector<16x512xf32>
    %172 = tpu.matmul %170, %171, %cst_125 {dimension_numbers = #tpu.dot_dimension_numbers<[1], [0], [0], [1], [0, 0, 1, 1], [], []>} : vector<16x1024xbf16>, vector<1024x512xbf16>, vector<16x512xf32> -> vector<16x512xf32>
    %c0_126 = arith.constant 0 : index
    %c0_127 = arith.constant 0 : index
    %173 = vector.load %arg7[%c0_126, %c0_127] : memref<1x512xf32, #tpu.memory_space<vmem>>, vector<1x512xf32>
    %174 = vector.broadcast %173 : vector<1x512xf32> to vector<16x512xf32>
    %175 = arith.addf %172, %174 : vector<16x512xf32>
    %cst_128 = arith.constant 0.000000e+00 : f32
    %176 = vector.broadcast %cst_128 : f32 to vector<16x512xf32>
    %177 = arith.maximumf %175, %176 : vector<16x512xf32>
    %178 = arith.truncf %177 : vector<16x512xf32> to vector<16x512xbf16>
    %c0_129 = arith.constant 0 : index
    %c0_130 = arith.constant 0 : index
    %179 = vector.load %arg8[%c0_129, %c0_130] : memref<512x128xbf16, #tpu.memory_space<vmem>>, vector<512x128xbf16>
    %cst_131 = arith.constant dense<0.000000e+00> : vector<16x128xf32>
    %180 = tpu.matmul %178, %179, %cst_131 {dimension_numbers = #tpu.dot_dimension_numbers<[1], [0], [0], [1], [0, 0, 1, 1], [], []>} : vector<16x512xbf16>, vector<512x128xbf16>, vector<16x128xf32> -> vector<16x128xf32>
    %c0_132 = arith.constant 0 : index
    %c0_133 = arith.constant 0 : index
    %181 = vector.load %arg9[%c0_132, %c0_133] : memref<1x128xf32, #tpu.memory_space<vmem>>, vector<1x128xf32>
    %182 = vector.broadcast %181 : vector<1x128xf32> to vector<16x128xf32>
    %183 = arith.addf %180, %182 : vector<16x128xf32>
    %c0_134 = arith.constant 0 : index
    %c0_135 = arith.constant 0 : index
    %184 = vector.load %arg12[%c0_134, %c0_135] : memref<16x128xf32, #tpu.memory_space<vmem>>, vector<16x128xf32>
    tpu.vector_store %arg12[%c0_134, %c0_135], %183 {strides = array<i32>} : memref<16x128xf32, #tpu.memory_space<vmem>>, vector<16x128xf32>,
    return
  }
  func.func @transform_0(%arg0: i32) -> (i32, i32, i32) {
    %c0_i32 = arith.constant 0 : i32
    %c0_i32_0 = arith.constant 0 : i32
    %c0_i32_1 = arith.constant 0 : i32
    return %c0_i32, %arg0, %c0_i32_0 : i32, i32, i32
  }
  func.func @transform_1(%arg0: i32) -> (i32, i32) {
    %c0_i32 = arith.constant 0 : i32
    %c0_i32_0 = arith.constant 0 : i32
    %c0_i32_1 = arith.constant 0 : i32
    return %c0_i32, %c0_i32_0 : i32, i32
  }
  func.func @transform_2(%arg0: i32) -> (i32, i32) {
    %c0_i32 = arith.constant 0 : i32
    %c0_i32_0 = arith.constant 0 : i32
    %c0_i32_1 = arith.constant 0 : i32
    return %c0_i32, %c0_i32_0 : i32, i32
  }
  func.func @transform_3(%arg0: i32) -> (i32, i32) {
    %c0_i32 = arith.constant 0 : i32
    %c0_i32_0 = arith.constant 0 : i32
    %c0_i32_1 = arith.constant 0 : i32
    return %c0_i32, %c0_i32_0 : i32, i32
  }
  func.func @transform_4(%arg0: i32) -> (i32, i32) {
    %c0_i32 = arith.constant 0 : i32
    %c0_i32_0 = arith.constant 0 : i32
    %c0_i32_1 = arith.constant 0 : i32
    return %c0_i32, %c0_i32_0 : i32, i32
  }
  func.func @transform_5(%arg0: i32) -> (i32, i32) {
    %c0_i32 = arith.constant 0 : i32
    %c0_i32_0 = arith.constant 0 : i32
    %c0_i32_1 = arith.constant 0 : i32
    return %c0_i32, %c0_i32_0 : i32, i32
  }
  func.func @transform_6(%arg0: i32) -> (i32, i32) {
    %c0_i32 = arith.constant 0 : i32
    %c0_i32_0 = arith.constant 0 : i32
    %c0_i32_1 = arith.constant 0 : i32
    return %c0_i32, %c0_i32_0 : i32, i32
  }
  func.func @transform_7(%arg0: i32) -> (i32, i32) {
    %c0_i32 = arith.constant 0 : i32
    %c0_i32_0 = arith.constant 0 : i32
    %c0_i32_1 = arith.constant 0 : i32
    return %c0_i32, %c0_i32_0 : i32, i32
  }
  func.func @transform_8(%arg0: i32) -> (i32, i32) {
    %c0_i32 = arith.constant 0 : i32
    %c0_i32_0 = arith.constant 0 : i32
    %c0_i32_1 = arith.constant 0 : i32
    return %c0_i32, %c0_i32_0 : i32, i32
  }
  func.func @transform_9(%arg0: i32) -> (i32, i32, i32, i32) {
    %c0_i32 = arith.constant 0 : i32
    %c0_i32_0 = arith.constant 0 : i32
    %c0_i32_1 = arith.constant 0 : i32
    %c0_i32_2 = arith.constant 0 : i32
    return %c0_i32, %c0_i32_0, %arg0, %c0_i32_1 : i32, i32, i32, i32
  }
  func.func @transform_10(%arg0: i32) -> (i32, i32, i32) {
    %c0_i32 = arith.constant 0 : i32
    %c0_i32_0 = arith.constant 0 : i32
    %c0_i32_1 = arith.constant 0 : i32
    return %c0_i32, %arg0, %c0_i32_0 : i32, i32, i32
  }
  func.func @transform_11(%arg0: i32) -> (i32, i32) {
    %c0_i32 = arith.constant 0 : i32
    %c0_i32_0 = arith.constant 0 : i32
    return %arg0, %c0_i32 : i32, i32
  }
}

</mosaic_0001>

<llo_original>
// kernel: net_large_margin_forward.1
$region0: #{net_large_margin_forward.1}
  #allocation0 [shape = 'u32[]', space=smem, size = 0x4, offset = 0x4, fixed_abs, tag = 'smem constant byte address 0x4 - core index']
  #allocation1 [shape = 'u32[144,128]{1,0:T(1,128)}', space=vmem, size = 0x12000, scoped, tag = 'internal scratch']
  %s0 = inlined_call_operand.vmem [shape: bf16[24,16,140], index: 0, kind: input, shape index: {}]
  %s1 = inlined_call_operand.hbm [shape: bf16[140,768], index: 1, kind: input, shape index: {}]
  %s2 = inlined_call_operand.vmem [shape: f32[1,384], index: 2, kind: input, shape index: {}]
  %s3 = inlined_call_operand.vmem [shape: bf16[1920,512], index: 3, kind: input, shape index: {}]
  %s4 = inlined_call_operand.vmem [shape: f32[1,256], index: 4, kind: input, shape index: {}]
  %s5 = inlined_call_operand.vmem [shape: bf16[1024,512], index: 5, kind: input, shape index: {}]
  %s6 = inlined_call_operand.vmem [shape: f32[1,512], index: 6, kind: input, shape index: {}]
  %s7 = inlined_call_operand.hbm [shape: bf16[512,128], index: 7, kind: input, shape index: {}]
  %s8 = inlined_call_operand.vmem [shape: f32[1,128], index: 8, kind: input, shape index: {}]
  %s9 = inlined_call_operand.vmem [shape: f32[2,6,16,384], index: 9, kind: output, shape index: {0}]
  %s10 = inlined_call_operand.vmem [shape: f32[4,16,256], index: 10, kind: output, shape index: {1}]
  %s11 = inlined_call_operand.vmem [shape: f32[16,128], index: 11, kind: output, shape index: {2}]
  %12 = xla_tuple %s9, %s10, %s11
  %s13 = sld [smem:[#allocation0]]
  $region70: #{net_large_margin_forward.1} parent=0
    _
  %s15 = ssub.s32 1, %s13
  %s16 = scalar_select 0, %s15, %s13
  $region1: #{net_large_margin_forward.1} parent=0
    #allocation2 [shape = 'u8[221184]{0}', space=vmem, size = 0x36000, scoped, tag = 'input window, operand 1, single buffered']
    #allocation3 [shape = 's32[1]{0}', space=sflag, size = 0x4, scoped, tag = 'scoped memory for net_large_margin_forward.1']
    #allocation4 [shape = 'u8[131072]{0}', space=vmem, size = 0x20000, scoped, tag = 'input window, operand 7, single buffered']
    #allocation5 [shape = 's32[1]{0}', space=sflag, size = 0x4, scoped, tag = 'scoped memory for net_large_margin_forward.1']
    %17 = vsyncpa [#allocation3], 0
    %18 = vsyncpa [#allocation5], 0
    // Predicated region
    $region2: #{net_large_margin_forward.1} parent=1 // pred_check
      _
    $region3: #{net_large_margin_forward.1} parent=1 // pred_check_branch
      %20 = sbr.rel (0) target = $region5
    $region4: #{net_large_margin_forward.1} parent=1 // pred_region
      _
    $region5: #{net_large_margin_forward.1} parent=1 // pred_fallthru
      _
    // Predicated region
    $region6: #{net_large_margin_forward.1} parent=1 // pred_check
      _
    $region7: #{net_large_margin_forward.1} parent=1 // pred_check_branch
      %22 = sbr.rel (0) target = $region9
    $region8: #{net_large_margin_forward.1} parent=1 // pred_region
      %s24 = ssub.s32 6912, 6912
      %25 = vsyncadd [#allocation3], %s24
      %s26 = sshll.u32 [#allocation2], 4
      %s27 = int_to_ptr.vmem [resolvable:$true] %s26
      %32 = dma.hbm_to_vmem [thread:$0]  %s1, 6912, %s27, [#allocation3], 384, 384, 24
    $region9: #{net_large_margin_forward.1} parent=1 // pred_fallthru
      _
    // Predicated region
    $region10: #{net_large_margin_forward.1} parent=1 // pred_check
      _
    $region11: #{net_large_margin_forward.1} parent=1 // pred_check_branch
      %34 = sbr.rel (0) target = $region13
    $region12: #{net_large_margin_forward.1} parent=1 // pred_region
      _
    $region13: #{net_large_margin_forward.1} parent=1 // pred_fallthru
      _
    // Predicated region
    $region14: #{net_large_margin_forward.1} parent=1 // pred_check
      _
    $region15: #{net_large_margin_forward.1} parent=1 // pred_check_branch
      %36 = sbr.rel (0) target = $region17
    $region16: #{net_large_margin_forward.1} parent=1 // pred_region
      _
    $region17: #{net_large_margin_forward.1} parent=1 // pred_fallthru
      _
    // Predicated region
    $region18: #{net_large_margin_forward.1} parent=1 // pred_check
      _
    $region19: #{net_large_margin_forward.1} parent=1 // pred_check_branch
      %38 = sbr.rel (0) target = $region21
    $region20: #{net_large_margin_forward.1} parent=1 // pred_region
      _
    $region21: #{net_large_margin_forward.1} parent=1 // pred_fallthru
      _
    // Predicated region
    $region22: #{net_large_margin_forward.1} parent=1 // pred_check
      _
    $region23: #{net_large_margin_forward.1} parent=1 // pred_check_branch
      %40 = sbr.rel (0) target = $region25
    $region24: #{net_large_margin_forward.1} parent=1 // pred_region
      _
    $region25: #{net_large_margin_forward.1} parent=1 // pred_fallthru
      _
    // Predicated region
    $region26: #{net_large_margin_forward.1} parent=1 // pred_check
      _
    $region27: #{net_large_margin_forward.1} parent=1 // pred_check_branch
      %42 = sbr.rel (0) target = $region29
    $region28: #{net_large_margin_forward.1} parent=1 // pred_region
      _
    $region29: #{net_large_margin_forward.1} parent=1 // pred_fallthru
      _
    // Predicated region
    $region30: #{net_large_margin_forward.1} parent=1 // pred_check
      _
    $region31: #{net_large_margin_forward.1} parent=1 // pred_check_branch
      %44 = sbr.rel (0) target = $region33
    $region32: #{net_large_margin_forward.1} parent=1 // pred_region
      %s46 = ssub.s32 4096, 4096
      %47 = vsyncadd [#allocation5], %s46
      %s48 = sshll.u32 [#allocation4], 4
      %s49 = int_to_ptr.vmem [resolvable:$true] %s48
      %54 = dma.hbm_to_vmem [thread:$0]  %s7, 4096, %s49, [#allocation5], 64, 64, 4
    $region33: #{net_large_margin_forward.1} parent=1 // pred_fallthru
      _
    // Predicated region
    $region34: #{net_large_margin_forward.1} parent=1 // pred_check
      _
    $region35: #{net_large_margin_forward.1} parent=1 // pred_check_branch
      %56 = sbr.rel (0) target = $region37
    $region36: #{net_large_margin_forward.1} parent=1 // pred_region
      _
    $region37: #{net_large_margin_forward.1} parent=1 // pred_fallthru
      _
    // Predicated region
    $region38: #{net_large_margin_forward.1} parent=1 // pred_check
      _
    $region39: #{net_large_margin_forward.1} parent=1 // pred_check_branch
      %58 = sbr.rel (0) target = $region41
    $region40: #{net_large_margin_forward.1} parent=1 // pred_region
      %59 = dma.done [#allocation3], 6912
    $region41: #{net_large_margin_forward.1} parent=1 // pred_fallthru
      _
    // Predicated region
    $region42: #{net_large_margin_forward.1} parent=1 // pred_check
      _
    $region43: #{net_large_margin_forward.1} parent=1 // pred_check_branch
      %61 = sbr.rel (0) target = $region45
    $region44: #{net_large_margin_forward.1} parent=1 // pred_region
      %62 = dma.done [#allocation5], 4096
    $region45: #{net_large_margin_forward.1} parent=1 // pred_fallthru
      _
    %v64 = vld [vmem:[%s0] sm:$0xff]
    %v65 = vld [vmem:[%s0 + $0x8] sm:$0xff]
    %s66 = scalar_lea.vmem %s0, 16
    %v67 = vld [vmem:[%s66] sm:$0xff]
    %v68 = vld [vmem:[%s66 + $0x8] sm:$0xff]
    %s69 = scalar_lea.vmem %s0, 32
    %v70 = vld [vmem:[%s69] sm:$0xff]
    %v71 = vld [vmem:[%s69 + $0x8] sm:$0xff]
    %s72 = scalar_lea.vmem %s0, 48
    %v73 = vld [vmem:[%s72] sm:$0xff]
    %v74 = vld [vmem:[%s72 + $0x8] sm:$0xff]
    %s75 = scalar_lea.vmem %s0, 64
    %v76 = vld [vmem:[%s75] sm:$0xff]
    %v77 = vld [vmem:[%s75 + $0x8] sm:$0xff]
    %s78 = scalar_lea.vmem %s0, 80
    %v79 = vld [vmem:[%s78] sm:$0xff]
    %v80 = vld [vmem:[%s78 + $0x8] sm:$0xff]
    %s81 = scalar_lea.vmem %s0, 96
    %v82 = vld [vmem:[%s81] sm:$0xff]
    %v83 = vld [vmem:[%s81 + $0x8] sm:$0xff]
    %s84 = scalar_lea.vmem %s0, 112
    %v85 = vld [vmem:[%s84] sm:$0xff]
    %v86 = vld [vmem:[%s84 + $0x8] sm:$0xff]
    %s87 = scalar_lea.vmem %s0, 128
    %v88 = vld [vmem:[%s87] sm:$0xff]
    %v89 = vld [vmem:[%s87 + $0x8] sm:$0xff]
    %s90 = scalar_lea.vmem %s0, 144
    %v91 = vld [vmem:[%s90] sm:$0xff]
    %v92 = vld [vmem:[%s90 + $0x8] sm:$0xff]
    %s93 = scalar_lea.vmem %s0, 160
    %v94 = vld [vmem:[%s93] sm:$0xff]
    %v95 = vld [vmem:[%s93 + $0x8] sm:$0xff]
    %s96 = scalar_lea.vmem %s0, 176
    %v97 = vld [vmem:[%s96] sm:$0xff]
    %v98 = vld [vmem:[%s96 + $0x8] sm:$0xff]
    %s99 = scalar_lea.vmem %s0, 192
    %v100 = vld [vmem:[%s99] sm:$0xff]
    %v101 = vld [vmem:[%s99 + $0x8] sm:$0xff]
    %s102 = scalar_lea.vmem %s0, 208
    %v103 = vld [vmem:[%s102] sm:$0xff]
    %v104 = vld [vmem:[%s102 + $0x8] sm:$0xff]
    %s105 = scalar_lea.vmem %s0, 224
    %v106 = vld [vmem:[%s105] sm:$0xff]
    %v107 = vld [vmem:[%s105 + $0x8] sm:$0xff]
    %s108 = scalar_lea.vmem %s0, 240
    %v109 = vld [vmem:[%s108] sm:$0xff]
    %v110 = vld [vmem:[%s108 + $0x8] sm:$0xff]
    %s111 = scalar_lea.vmem %s0, 256
    %v112 = vld [vmem:[%s111] sm:$0xff]
    %v113 = vld [vmem:[%s111 + $0x8] sm:$0xff]
    %s114 = scalar_lea.vmem %s0, 272
    %v115 = vld [vmem:[%s114] sm:$0xff]
    %v116 = vld [vmem:[%s114 + $0x8] sm:$0xff]
    %s117 = scalar_lea.vmem %s0, 288
    %v118 = vld [vmem:[%s117] sm:$0xff]
    %v119 = vld [vmem:[%s117 + $0x8] sm:$0xff]
    %s120 = scalar_lea.vmem %s0, 304
    %v121 = vld [vmem:[%s120] sm:$0xff]
    %v122 = vld [vmem:[%s120 + $0x8] sm:$0xff]
    %s123 = scalar_lea.vmem %s0, 320
    %v124 = vld [vmem:[%s123] sm:$0xff]
    %v125 = vld [vmem:[%s123 + $0x8] sm:$0xff]
    %s126 = scalar_lea.vmem %s0, 336
    %v127 = vld [vmem:[%s126] sm:$0xff]
    %v128 = vld [vmem:[%s126 + $0x8] sm:$0xff]
    %s129 = scalar_lea.vmem %s0, 352
    %v130 = vld [vmem:[%s129] sm:$0xff]
    %v131 = vld [vmem:[%s129 + $0x8] sm:$0xff]
    %s132 = scalar_lea.vmem %s0, 368
    %v133 = vld [vmem:[%s132] sm:$0xff]
    %v134 = vld [vmem:[%s132 + $0x8] sm:$0xff]
    %v137 = vunpack.c.l.b16 %v64
    %v138 = vunpack.c.h.b16 %v64
    %v139 = vunpack.c.l.b16 %v65
    %v140 = vunpack.c.h.b16 %v65
    %v141 = vpack.c.b16 %v139, %v137
    %v142 = vpack.c.b16 %v140, %v138
    %v146 = vunpack.c.l.b16 %v67
    %v147 = vunpack.c.h.b16 %v67
    %v148 = vunpack.c.l.b16 %v68
    %v149 = vunpack.c.h.b16 %v68
    %v150 = vpack.c.b16 %v148, %v146
    %v151 = vpack.c.b16 %v149, %v147
    %v155 = vunpack.c.l.b16 %v70
    %v156 = vunpack.c.h.b16 %v70
    %v157 = vunpack.c.l.b16 %v71
    %v158 = vunpack.c.h.b16 %v71
    %v159 = vpack.c.b16 %v157, %v155
    %v160 = vpack.c.b16 %v158, %v156
    %v164 = vunpack.c.l.b16 %v73
    %v165 = vunpack.c.h.b16 %v73
    %v166 = vunpack.c.l.b16 %v74
    %v167 = vunpack.c.h.b16 %v74
    %v168 = vpack.c.b16 %v166, %v164
    %v169 = vpack.c.b16 %v167, %v165
    %v173 = vunpack.c.l.b16 %v76
    %v174 = vunpack.c.h.b16 %v76
    %v175 = vunpack.c.l.b16 %v77
    %v176 = vunpack.c.h.b16 %v77
    %v177 = vpack.c.b16 %v175, %v173
    %v178 = vpack.c.b16 %v176, %v174
    %v182 = vunpack.c.l.b16 %v79
    %v183 = vunpack.c.h.b16 %v79
    %v184 = vunpack.c.l.b16 %v80
    %v185 = vunpack.c.h.b16 %v80
    %v186 = vpack.c.b16 %v184, %v182
    %v187 = vpack.c.b16 %v185, %v183
    %v191 = vunpack.c.l.b16 %v82
    %v192 = vunpack.c.h.b16 %v82
    %v193 = vunpack.c.l.b16 %v83
    %v194 = vunpack.c.h.b16 %v83
    %v195 = vpack.c.b16 %v193, %v191
    %v196 = vpack.c.b16 %v194, %v192
    %v200 = vunpack.c.l.b16 %v85
    %v201 = vunpack.c.h.b16 %v85
    %v202 = vunpack.c.l.b16 %v86
    %v203 = vunpack.c.h.b16 %v86
    %v204 = vpack.c.b16 %v202, %v200
    %v205 = vpack.c.b16 %v203, %v201
    %v209 = vunpack.c.l.b16 %v88
    %v210 = vunpack.c.h.b16 %v88
    %v211 = vunpack.c.l.b16 %v89
    %v212 = vunpack.c.h.b16 %v89
    %v213 = vpack.c.b16 %v211, %v209
    %v214 = vpack.c.b16 %v212, %v210
    %v218 = vunpack.c.l.b16 %v91
    %v219 = vunpack.c.h.b16 %v91
    %v220 = vunpack.c.l.b16 %v92
    %v221 = vunpack.c.h.b16 %v92
    %v222 = vpack.c.b16 %v220, %v218
    %v223 = vpack.c.b16 %v221, %v219
    %v227 = vunpack.c.l.b16 %v94
    %v228 = vunpack.c.h.b16 %v94
    %v229 = vunpack.c.l.b16 %v95
    %v230 = vunpack.c.h.b16 %v95
    %v231 = vpack.c.b16 %v229, %v227
    %v232 = vpack.c.b16 %v230, %v228
    %v236 = vunpack.c.l.b16 %v97
    %v237 = vunpack.c.h.b16 %v97
    %v238 = vunpack.c.l.b16 %v98
    %v239 = vunpack.c.h.b16 %v98
    %v240 = vpack.c.b16 %v238, %v236
    %v241 = vpack.c.b16 %v239, %v237
    %v245 = vunpack.c.l.b16 %v100
    %v246 = vunpack.c.h.b16 %v100
    %v247 = vunpack.c.l.b16 %v101
    %v248 = vunpack.c.h.b16 %v101
    %v249 = vpack.c.b16 %v247, %v245
    %v250 = vpack.c.b16 %v248, %v246
    %v254 = vunpack.c.l.b16 %v103
    %v255 = vunpack.c.h.b16 %v103
    %v256 = vunpack.c.l.b16 %v104
    %v257 = vunpack.c.h.b16 %v104
    %v258 = vpack.c.b16 %v256, %v254
    %v259 = vpack.c.b16 %v257, %v255
    %v263 = vunpack.c.l.b16 %v106
    %v264 = vunpack.c.h.b16 %v106
    %v265 = vunpack.c.l.b16 %v107
    %v266 = vunpack.c.h.b16 %v107
    %v267 = vpack.c.b16 %v265, %v263
    %v268 = vpack.c.b16 %v266, %v264
    %v272 = vunpack.c.l.b16 %v109
    %v273 = vunpack.c.h.b16 %v109
    %v274 = vunpack.c.l.b16 %v110
    %v275 = vunpack.c.h.b16 %v110
    %v276 = vpack.c.b16 %v274, %v272
    %v277 = vpack.c.b16 %v275, %v273
    %v281 = vunpack.c.l.b16 %v112
    %v282 = vunpack.c.h.b16 %v112
    %v283 = vunpack.c.l.b16 %v113
    %v284 = vunpack.c.h.b16 %v113
    %v285 = vpack.c.b16 %v283, %v281
    %v286 = vpack.c.b16 %v284, %v282
    %v290 = vunpack.c.l.b16 %v115
    %v291 = vunpack.c.h.b16 %v115
    %v292 = vunpack.c.l.b16 %v116
    %v293 = vunpack.c.h.b16 %v116
    %v294 = vpack.c.b16 %v292, %v290
    %v295 = vpack.c.b16 %v293, %v291
    %v299 = vunpack.c.l.b16 %v118
    %v300 = vunpack.c.h.b16 %v118
    %v301 = vunpack.c.l.b16 %v119
    %v302 = vunpack.c.h.b16 %v119
    %v303 = vpack.c.b16 %v301, %v299
    %v304 = vpack.c.b16 %v302, %v300
    %v308 = vunpack.c.l.b16 %v121
    %v309 = vunpack.c.h.b16 %v121
    %v310 = vunpack.c.l.b16 %v122
    %v311 = vunpack.c.h.b16 %v122
    %v312 = vpack.c.b16 %v310, %v308
    %v313 = vpack.c.b16 %v311, %v309
    %v317 = vunpack.c.l.b16 %v124
    %v318 = vunpack.c.h.b16 %v124
    %v319 = vunpack.c.l.b16 %v125
    %v320 = vunpack.c.h.b16 %v125
    %v321 = vpack.c.b16 %v319, %v317
    %v322 = vpack.c.b16 %v320, %v318
    %v326 = vunpack.c.l.b16 %v127
    %v327 = vunpack.c.h.b16 %v127
    %v328 = vunpack.c.l.b16 %v128
    %v329 = vunpack.c.h.b16 %v128
    %v330 = vpack.c.b16 %v328, %v326
    %v331 = vpack.c.b16 %v329, %v327
    %v335 = vunpack.c.l.b16 %v130
    %v336 = vunpack.c.h.b16 %v130
    %v337 = vunpack.c.l.b16 %v131
    %v338 = vunpack.c.h.b16 %v131
    %v339 = vpack.c.b16 %v337, %v335
    %v340 = vpack.c.b16 %v338, %v336
    %v344 = vunpack.c.l.b16 %v133
    %v345 = vunpack.c.h.b16 %v133
    %v346 = vunpack.c.l.b16 %v134
    %v347 = vunpack.c.h.b16 %v134
    %v348 = vpack.c.b16 %v346, %v344
    %v349 = vpack.c.b16 %v347, %v345
    %v351 = vld [vmem:[#allocation2] sm:$0xff]
    %v352 = vld [vmem:[#allocation2 + $0x8] sm:$0xff]
    %v353 = vld [vmem:[#allocation2 + $0x10] sm:$0xff]
    %v354 = vld [vmem:[#allocation2 + $0x18] sm:$0xff]
    %v355 = vld [vmem:[#allocation2 + $0x20] sm:$0xff]
    %v356 = vld [vmem:[#allocation2 + $0x28] sm:$0xff]
    %v357 = vld [vmem:[#allocation2 + $0x30] sm:$0xff]
    %v358 = vld [vmem:[#allocation2 + $0x38] sm:$0xff]
    %v359 = vld [vmem:[#allocation2 + $0x40] sm:$0xff]
    %v360 = vld [vmem:[#allocation2 + $0x48] sm:$0xff]
    %v361 = vld [vmem:[#allocation2 + $0x50] sm:$0xff]
    %v362 = vld [vmem:[#allocation2 + $0x58] sm:$0xff]
    %v363 = vld [vmem:[#allocation2 + $0x60] sm:$0xff]
    %v364 = vld [vmem:[#allocation2 + $0x68] sm:$0xff]
    %v365 = vld [vmem:[#allocation2 + $0x70] sm:$0xff]
    %v366 = vld [vmem:[#allocation2 + $0x78] sm:$0xff]
    %v367 = vld [vmem:[#allocation2 + $0x80] sm:$0xff]
    %v368 = vld [vmem:[#allocation2 + $0x88] sm:$0xff]
    %v369 = vld [vmem:[#allocation2 + $0x90] sm:$0xff]
    %v370 = vld [vmem:[#allocation2 + $0x98] sm:$0xff]
    %v371 = vld [vmem:[#allocation2 + $0xa0] sm:$0xff]
    %v372 = vld [vmem:[#allocation2 + $0xa8] sm:$0xff]
    %v373 = vld [vmem:[#allocation2 + $0xb0] sm:$0xff]
    %v374 = vld [vmem:[#allocation2 + $0xb8] sm:$0xff]
    %v375 = vld [vmem:[#allocation2 + $0xc0] sm:$0xff]
    %v376 = vld [vmem:[#allocation2 + $0xc8] sm:$0xff]
    %v377 = vld [vmem:[#allocation2 + $0xd0] sm:$0xff]
    %v378 = vld [vmem:[#allocation2 + $0xd8] sm:$0xff]
    %v379 = vld [vmem:[#allocation2 + $0xe0] sm:$0xff]
    %v380 = vld [vmem:[#allocation2 + $0xe8] sm:$0xff]
    %v381 = vld [vmem:[#allocation2 + $0xf0] sm:$0xff]
    %v382 = vld [vmem:[#allocation2 + $0xf8] sm:$0xff]
    %v383 = vld [vmem:[#allocation2 + $0x100] sm:$0xff]
    %v384 = vld [vmem:[#allocation2 + $0x108] sm:$0xff]
    %v385 = vld [vmem:[#allocation2 + $0x110] sm:$0xff]
    %v386 = vld [vmem:[#allocation2 + $0x118] sm:$0xff]
    %v387 = vld [vmem:[#allocation2 + $0x120] sm:$0xff]
    %v388 = vld [vmem:[#allocation2 + $0x128] sm:$0xff]
    %v389 = vld [vmem:[#allocation2 + $0x130] sm:$0xff]
    %v390 = vld [vmem:[#allocation2 + $0x138] sm:$0xff]
    %v391 = vld [vmem:[#allocation2 + $0x140] sm:$0xff]
    %v392 = vld [vmem:[#allocation2 + $0x148] sm:$0xff]
    %v393 = vld [vmem:[#allocation2 + $0x150] sm:$0xff]
    %v394 = vld [vmem:[#allocation2 + $0x158] sm:$0xff]
    %v395 = vld [vmem:[#allocation2 + $0x160] sm:$0xff]
    %v396 = vld [vmem:[#allocation2 + $0x168] sm:$0xff]
    %v397 = vld [vmem:[#allocation2 + $0x170] sm:$0xff]
    %v398 = vld [vmem:[#allocation2 + $0x178] sm:$0xff]
    %v399 = vld [vmem:[#allocation2 + $0x180] sm:$0xff]
    %v400 = vld [vmem:[#allocation2 + $0x188] sm:$0xff]
    %v401 = vld [vmem:[#allocation2 + $0x190] sm:$0xff]
    %v402 = vld [vmem:[#allocation2 + $0x198] sm:$0x33]
    %v403 = vld [vmem:[#allocation2 + $0x1a0] sm:$0x33]
    %v404 = vld [vmem:[#allocation2 + $0x1a8] sm:$0x33]
    %v459 = vunpack.c.l.b16 %v351
    %v460 = vunpack.c.h.b16 %v351
    %v461 = vunpack.c.l.b16 %v352
    %v462 = vunpack.c.h.b16 %v352
    %v463 = vunpack.c.l.b16 %v353
    %v464 = vunpack.c.h.b16 %v353
    %v465 = vunpack.c.l.b16 %v354
    %v466 = vunpack.c.h.b16 %v354
    %v467 = vunpack.c.l.b16 %v355
    %v468 = vunpack.c.h.b16 %v355
    %v469 = vunpack.c.l.b16 %v356
    %v470 = vunpack.c.h.b16 %v356
    %v471 = vunpack.c.l.b16 %v357
    %v472 = vunpack.c.h.b16 %v357
    %v473 = vunpack.c.l.b16 %v358
    %v474 = vunpack.c.h.b16 %v358
    %v475 = vunpack.c.l.b16 %v359
    %v476 = vunpack.c.h.b16 %v359
    %v477 = vunpack.c.l.b16 %v360
    %v478 = vunpack.c.h.b16 %v360
    %v479 = vunpack.c.l.b16 %v361
    %v480 = vunpack.c.h.b16 %v361
    %v481 = vunpack.c.l.b16 %v362
    %v482 = vunpack.c.h.b16 %v362
    %v483 = vunpack.c.l.b16 %v363
    %v484 = vunpack.c.h.b16 %v363
    %v485 = vunpack.c.l.b16 %v364
    %v486 = vunpack.c.h.b16 %v364
    %v487 = vunpack.c.l.b16 %v365
    %v488 = vunpack.c.h.b16 %v365
    %v489 = vunpack.c.l.b16 %v366
    %v490 = vunpack.c.h.b16 %v366
    %v491 = vunpack.c.l.b16 %v367
    %v492 = vunpack.c.h.b16 %v367
    %v493 = vunpack.c.l.b16 %v368
    %v494 = vunpack.c.h.b16 %v368
    %v495 = vunpack.c.l.b16 %v369
    %v496 = vunpack.c.h.b16 %v369
    %v497 = vunpack.c.l.b16 %v370
    %v498 = vunpack.c.h.b16 %v370
    %v499 = vunpack.c.l.b16 %v371
    %v500 = vunpack.c.h.b16 %v371
    %v501 = vunpack.c.l.b16 %v372
    %v502 = vunpack.c.h.b16 %v372
    %v503 = vunpack.c.l.b16 %v373
    %v504 = vunpack.c.h.b16 %v373
    %v505 = vunpack.c.l.b16 %v374
    %v506 = vunpack.c.h.b16 %v374
    %v507 = vunpack.c.l.b16 %v375
    %v508 = vunpack.c.h.b16 %v375
    %v509 = vunpack.c.l.b16 %v376
    %v510 = vunpack.c.h.b16 %v376
    %v511 = vunpack.c.l.b16 %v377
    %v512 = vunpack.c.h.b16 %v377
    %v513 = vunpack.c.l.b16 %v378
    %v514 = vunpack.c.h.b16 %v378
    %v515 = vunpack.c.l.b16 %v379
    %v516 = vunpack.c.h.b16 %v379
    %v517 = vunpack.c.l.b16 %v380
    %v518 = vunpack.c.h.b16 %v380
    %v519 = vunpack.c.l.b16 %v381
    %v520 = vunpack.c.h.b16 %v381
    %v521 = vunpack.c.l.b16 %v382
    %v522 = vunpack.c.h.b16 %v382
    %v523 = vunpack.c.l.b16 %v383
    %v524 = vunpack.c.h.b16 %v383
    %v525 = vunpack.c.l.b16 %v384
    %v526 = vunpack.c.h.b16 %v384
    %v527 = vunpack.c.l.b16 %v385
    %v528 = vunpack.c.h.b16 %v385
    %v529 = vunpack.c.l.b16 %v386
    %v530 = vunpack.c.h.b16 %v386
    %v531 = vunpack.c.l.b16 %v387
    %v532 = vunpack.c.h.b16 %v387
    %v533 = vunpack.c.l.b16 %v388
    %v534 = vunpack.c.h.b16 %v388
    %v535 = vunpack.c.l.b16 %v389
    %v536 = vunpack.c.h.b16 %v389
    %v537 = vunpack.c.l.b16 %v390
    %v538 = vunpack.c.h.b16 %v390
    %v539 = vunpack.c.l.b16 %v391
    %v540 = vunpack.c.h.b16 %v391
    %v541 = vunpack.c.l.b16 %v392
    %v542 = vunpack.c.h.b16 %v392
    %v543 = vunpack.c.l.b16 %v393
    %v544 = vunpack.c.h.b16 %v393
    %v545 = vunpack.c.l.b16 %v394
    %v546 = vunpack.c.h.b16 %v394
    %v547 = vunpack.c.l.b16 %v395
    %v548 = vunpack.c.h.b16 %v395
    %v549 = vunpack.c.l.b16 %v396
    %v550 = vunpack.c.h.b16 %v396
    %v551 = vunpack.c.l.b16 %v397
    %v552 = vunpack.c.h.b16 %v397
    %v553 = vunpack.c.l.b16 %v398
    %v554 = vunpack.c.h.b16 %v398
    %v555 = vunpack.c.l.b16 %v399
    %v556 = vunpack.c.h.b16 %v399
    %v557 = vunpack.c.l.b16 %v400
    %v558 = vunpack.c.h.b16 %v400
    %v559 = vunpack.c.l.b16 %v401
    %v560 = vunpack.c.h.b16 %v401
    %v561 = vunpack.c.l.b16 %v402
    %v562 = vunpack.c.h.b16 %v402
    %v563 = vunpack.c.l.b16 %v403
    %v564 = vunpack.c.h.b16 %v403
    %v565 = vunpack.c.l.b16 %v404
    %v566 = vunpack.c.h.b16 %v404
    %v567 = vpack.c.b16 %v465, %v459
    %v568 = vpack.c.b16 %v466, %v460
    %v569 = vpack.c.b16 %v467, %v461
    %v570 = vpack.c.b16 %v468, %v462
    %v571 = vpack.c.b16 %v469, %v463
    %v572 = vpack.c.b16 %v470, %v464
    %v573 = vpack.c.b16 %v477, %v471
    %v574 = vpack.c.b16 %v478, %v472
    %v575 = vpack.c.b16 %v479, %v473
    %v576 = vpack.c.b16 %v480, %v474
    %v577 = vpack.c.b16 %v481, %v475
    %v578 = vpack.c.b16 %v482, %v476
    %v579 = vpack.c.b16 %v489, %v483
    %v580 = vpack.c.b16 %v490, %v484
    %v581 = vpack.c.b16 %v491, %v485
    %v582 = vpack.c.b16 %v492, %v486
    %v583 = vpack.c.b16 %v493, %v487
    %v584 = vpack.c.b16 %v494, %v488
    %v585 = vpack.c.b16 %v501, %v495
    %v586 = vpack.c.b16 %v502, %v496
    %v587 = vpack.c.b16 %v503, %v497
    %v588 = vpack.c.b16 %v504, %v498
    %v589 = vpack.c.b16 %v505, %v499
    %v590 = vpack.c.b16 %v506, %v500
    %v591 = vpack.c.b16 %v513, %v507
    %v592 = vpack.c.b16 %v514, %v508
    %v593 = vpack.c.b16 %v515, %v509
    %v594 = vpack.c.b16 %v516, %v510
    %v595 = vpack.c.b16 %v517, %v511
    %v596 = vpack.c.b16 %v518, %v512
    %v597 = vpack.c.b16 %v525, %v519
    %v598 = vpack.c.b16 %v526, %v520
    %v599 = vpack.c.b16 %v527, %v521
    %v600 = vpack.c.b16 %v528, %v522
    %v601 = vpack.c.b16 %v529, %v523
    %v602 = vpack.c.b16 %v530, %v524
    %v603 = vpack.c.b16 %v537, %v531
    %v604 = vpack.c.b16 %v538, %v532
    %v605 = vpack.c.b16 %v539, %v533
    %v606 = vpack.c.b16 %v540, %v534
    %v607 = vpack.c.b16 %v541, %v535
    %v608 = vpack.c.b16 %v542, %v536
    %v609 = vpack.c.b16 %v549, %v543
    %v610 = vpack.c.b16 %v550, %v544
    %v611 = vpack.c.b16 %v551, %v545
    %v612 = vpack.c.b16 %v552, %v546
    %v613 = vpack.c.b16 %v553, %v547
    %v614 = vpack.c.b16 %v554, %v548
    %v615 = vpack.c.b16 %v561, %v555
    %v616 = vpack.c.b16 %v562, %v556
    %v617 = vpack.c.b16 %v563, %v557
    %v618 = vpack.c.b16 %v564, %v558
    %v619 = vpack.c.b16 %v565, %v559
    %v620 = vpack.c.b16 %v566, %v560
    %vm669 = vcmask 97280
    %v671 = vsel %vm669, %v142, 0
    %v674 = vsel %vm669, %v151, 0
    %v677 = vsel %vm669, %v160, 0
    %v680 = vsel %vm669, %v169, 0
    %v683 = vsel %vm669, %v178, 0
    %v686 = vsel %vm669, %v187, 0
    %v689 = vsel %vm669, %v196, 0
    %v692 = vsel %vm669, %v205, 0
    %v695 = vsel %vm669, %v214, 0
    %v698 = vsel %vm669, %v223, 0
    %v701 = vsel %vm669, %v232, 0
    %v704 = vsel %vm669, %v241, 0
    %v707 = vsel %vm669, %v250, 0
    %v710 = vsel %vm669, %v259, 0
    %v713 = vsel %vm669, %v268, 0
    %v716 = vsel %vm669, %v277, 0
    %v719 = vsel %vm669, %v286, 0
    %v722 = vsel %vm669, %v295, 0
    %v725 = vsel %vm669, %v304, 0
    %v728 = vsel %vm669, %v313, 0
    %v731 = vsel %vm669, %v322, 0
    %v734 = vsel %vm669, %v331, 0
    %v737 = vsel %vm669, %v340, 0
    %v740 = vsel %vm669, %v349, 0
    %vm742 = vcmask 1045504
    %v744 = vsel %vm742, %v615, 0
    %v747 = vsel %vm742, %v616, 0
    %v750 = vsel %vm742, %v617, 0
    %v753 = vsel %vm742, %v618, 0
    %v756 = vsel %vm742, %v619, 0
    %v759 = vsel %vm742, %v620, 0
    %761 = vmatprep.subr.bf16.mxu0 %v568
    %762 = vmatpush1.bf16.msra.mxu0 %v567
    %763 = vmatprep.subr.bf16.mxu0 %v574
    %764 = vmatpush1.bf16.msra.mxu0 %v573
    %765 = vmatprep.subr.bf16.mxu0 %v580
    %766 = vmatpush1.bf16.msra.mxu0 %v579
    %767 = vmatprep.subr.bf16.mxu0 %v586
    %768 = vmatpush1.bf16.msra.mxu0 %v585
    %769 = vmatprep.subr.bf16.mxu0 %v592
    %770 = vmatpush1.bf16.msra.mxu0 %v591
    %771 = vmatprep.subr.bf16.mxu0 %v598
    %772 = vmatpush1.bf16.msra.mxu0 %v597
    %773 = vmatprep.subr.bf16.mxu0 %v604
    %774 = vmatpush1.bf16.msra.mxu0 %v603
    %775 = vmatprep.subr.bf16.mxu0 %v610
    %776 = vmatpush1.bf16.msra.mxu0 %v609
    %777 = vmatprep.subr.bf16.mxu0 %v747
    %778 = vmatpush1.bf16.msra.mxu0 %v744
    %779 = vmatprep.subr.bf16.mxu0 0
    %780 = vmatpush1.bf16.msra.mxu0 0
    %781 = vmatprep.subr.bf16.mxu0 0
    %782 = vmatpush1.bf16.msra.mxu0 0
    %783 = vmatprep.subr.bf16.mxu0 0
    %784 = vmatpush1.bf16.msra.mxu0 0
    %785 = vmatprep.subr.bf16.mxu0 0
    %786 = vmatpush1.bf16.msra.mxu0 0
    %787 = vmatprep.subr.bf16.mxu0 0
    %788 = vmatpush1.bf16.msra.mxu0 0
    %789 = vmatprep.subr.bf16.mxu0 0
    %790 = vmatpush1.bf16.msra.mxu0 0
    %791 = vmatprep.subr.bf16.mxu0 0
    %792 = vmatpush1.bf16.msra.mxu0 0
    %793 = vmatprep.mubr.bf16.mxu0 %v671
    %794 = vmatmul.mubr.bf16.gmra.mrb[0].mxu0 %v141
    %v795 = vpop.f32.mrb[0].mxu0
    %v796 = vadd.f32 0.0, %v795
    %v797 = vpop.f32.mrb[0].mxu0
    %v798 = vadd.f32 0.0, %v797
    %v799 = vpop.f32.mrb[0].mxu0
    %v800 = vadd.f32 0.0, %v799
    %v801 = vpop.f32.mrb[0].mxu0
    %v802 = vadd.f32 0.0, %v801
    %803 = vmatprep.mubr.bf16.mxu0 %v674
    %804 = vmatmul.mubr.bf16.gmra.mrb[0].mxu0 %v150
    %v805 = vpop.f32.mrb[0].mxu0
    %v806 = vadd.f32 0.0, %v805
    %v807 = vpop.f32.mrb[0].mxu0
    %v808 = vadd.f32 0.0, %v807
    %v809 = vpop.f32.mrb[0].mxu0
    %v810 = vadd.f32 0.0, %v809
    %v811 = vpop.f32.mrb[0].mxu0
    %v812 = vadd.f32 0.0, %v811
    %813 = vmatprep.mubr.bf16.mxu0 %v677
    %814 = vmatmul.mubr.bf16.gmra.mrb[0].mxu0 %v159
    %v815 = vpop.f32.mrb[0].mxu0
    %v816 = vadd.f32 0.0, %v815
    %v817 = vpop.f32.mrb[0].mxu0
    %v818 = vadd.f32 0.0, %v817
    %v819 = vpop.f32.mrb[0].mxu0
    %v820 = vadd.f32 0.0, %v819
    %v821 = vpop.f32.mrb[0].mxu0
    %v822 = vadd.f32 0.0, %v821
    %823 = vmatprep.mubr.bf16.mxu0 %v680
    %824 = vmatmul.mubr.bf16.gmra.mrb[0].mxu0 %v168
    %v825 = vpop.f32.mrb[0].mxu0
    %v826 = vadd.f32 0.0, %v825
    %v827 = vpop.f32.mrb[0].mxu0
    %v828 = vadd.f32 0.0, %v827
    %v829 = vpop.f32.mrb[0].mxu0
    %v830 = vadd.f32 0.0, %v829
    %v831 = vpop.f32.mrb[0].mxu0
    %v832 = vadd.f32 0.0, %v831
    %833 = vmatprep.mubr.bf16.mxu0 %v683
    %834 = vmatmul.mubr.bf16.gmra.mrb[0].mxu0 %v177
    %v835 = vpop.f32.mrb[0].mxu0
    %v836 = vadd.f32 0.0, %v835
    %v837 = vpop.f32.mrb[0].mxu0
    %v838 = vadd.f32 0.0, %v837
    %v839 = vpop.f32.mrb[0].mxu0
    %v840 = vadd.f32 0.0, %v839
    %v841 = vpop.f32.mrb[0].mxu0
    %v842 = vadd.f32 0.0, %v841
    %843 = vmatprep.mubr.bf16.mxu0 %v686
    %844 = vmatmul.mubr.bf16.gmra.mrb[0].mxu0 %v186
    %v845 = vpop.f32.mrb[0].mxu0
    %v846 = vadd.f32 0.0, %v845
    %v847 = vpop.f32.mrb[0].mxu0
    %v848 = vadd.f32 0.0, %v847
    %v849 = vpop.f32.mrb[0].mxu0
    %v850 = vadd.f32 0.0, %v849
    %v851 = vpop.f32.mrb[0].mxu0
    %v852 = vadd.f32 0.0, %v851
    %853 = vmatprep.mubr.bf16.mxu0 %v689
    %854 = vmatmul.mubr.bf16.gmra.mrb[0].mxu0 %v195
    %v855 = vpop.f32.mrb[0].mxu0
    %v856 = vadd.f32 0.0, %v855
    %v857 = vpop.f32.mrb[0].mxu0
    %v858 = vadd.f32 0.0, %v857
    %v859 = vpop.f32.mrb[0].mxu0
    %v860 = vadd.f32 0.0, %v859
    %v861 = vpop.f32.mrb[0].mxu0
    %v862 = vadd.f32 0.0, %v861
    %863 = vmatprep.mubr.bf16.mxu0 %v692
    %864 = vmatmul.mubr.bf16.gmra.mrb[0].mxu0 %v204
    %v865 = vpop.f32.mrb[0].mxu0
    %v866 = vadd.f32 0.0, %v865
    %v867 = vpop.f32.mrb[0].mxu0
    %v868 = vadd.f32 0.0, %v867
    %v869 = vpop.f32.mrb[0].mxu0
    %v870 = vadd.f32 0.0, %v869
    %v871 = vpop.f32.mrb[0].mxu0
    %v872 = vadd.f32 0.0, %v871
    %873 = vmatprep.mubr.bf16.mxu0 %v695
    %874 = vmatmul.mubr.bf16.gmra.mrb[0].mxu0 %v213
    %v875 = vpop.f32.mrb[0].mxu0
    %v876 = vadd.f32 0.0, %v875
    %v877 = vpop.f32.mrb[0].mxu0
    %v878 = vadd.f32 0.0, %v877
    %v879 = vpop.f32.mrb[0].mxu0
    %v880 = vadd.f32 0.0, %v879
    %v881 = vpop.f32.mrb[0].mxu0
    %v882 = vadd.f32 0.0, %v881
    %883 = vmatprep.mubr.bf16.mxu0 %v698
    %884 = vmatmul.mubr.bf16.gmra.mrb[0].mxu0 %v222
    %v885 = vpop.f32.mrb[0].mxu0
    %v886 = vadd.f32 0.0, %v885
    %v887 = vpop.f32.mrb[0].mxu0
    %v888 = vadd.f32 0.0, %v887
    %v889 = vpop.f32.mrb[0].mxu0
    %v890 = vadd.f32 0.0, %v889
    %v891 = vpop.f32.mrb[0].mxu0
    %v892 = vadd.f32 0.0, %v891
    %893 = vmatprep.mubr.bf16.mxu0 %v701
    %894 = vmatmul.mubr.bf16.gmra.mrb[0].mxu0 %v231
    %v895 = vpop.f32.mrb[0].mxu0
    %v896 = vadd.f32 0.0, %v895
    %v897 = vpop.f32.mrb[0].mxu0
    %v898 = vadd.f32 0.0, %v897
    %v899 = vpop.f32.mrb[0].mxu0
    %v900 = vadd.f32 0.0, %v899
    %v901 = vpop.f32.mrb[0].mxu0
    %v902 = vadd.f32 0.0, %v901
    %903 = vmatprep.mubr.bf16.mxu0 %v704
    %904 = vmatmul.mubr.bf16.gmra.mrb[0].mxu0 %v240
    %v905 = vpop.f32.mrb[0].mxu0
    %v906 = vadd.f32 0.0, %v905
    %v907 = vpop.f32.mrb[0].mxu0
    %v908 = vadd.f32 0.0, %v907
    %v909 = vpop.f32.mrb[0].mxu0
    %v910 = vadd.f32 0.0, %v909
    %v911 = vpop.f32.mrb[0].mxu0
    %v912 = vadd.f32 0.0, %v911
    %913 = vmatprep.mubr.bf16.mxu0 %v707
    %914 = vmatmul.mubr.bf16.gmra.mrb[0].mxu0 %v249
    %v915 = vpop.f32.mrb[0].mxu0
    %v916 = vadd.f32 0.0, %v915
    %v917 = vpop.f32.mrb[0].mxu0
    %v918 = vadd.f32 0.0, %v917
    %v919 = vpop.f32.mrb[0].mxu0
    %v920 = vadd.f32 0.0, %v919
    %v921 = vpop.f32.mrb[0].mxu0
    %v922 = vadd.f32 0.0, %v921
    %923 = vmatprep.mubr.bf16.mxu0 %v710
    %924 = vmatmul.mubr.bf16.gmra.mrb[0].mxu0 %v258
    %v925 = vpop.f32.mrb[0].mxu0
    %v926 = vadd.f32 0.0, %v925
    %v927 = vpop.f32.mrb[0].mxu0
    %v928 = vadd.f32 0.0, %v927
    %v929 = vpop.f32.mrb[0].mxu0
    %v930 = vadd.f32 0.0, %v929
    %v931 = vpop.f32.mrb[0].mxu0
    %v932 = vadd.f32 0.0, %v931
    %933 = vmatprep.mubr.bf16.mxu0 %v713
    %934 = vmatmul.mubr.bf16.gmra.mrb[0].mxu0 %v267
    %v935 = vpop.f32.mrb[0].mxu0
    %v936 = vadd.f32 0.0, %v935
    %v937 = vpop.f32.mrb[0].mxu0
    %v938 = vadd.f32 0.0, %v937
    %v939 = vpop.f32.mrb[0].mxu0
    %v940 = vadd.f32 0.0, %v939
    %v941 = vpop.f32.mrb[0].mxu0
    %v942 = vadd.f32 0.0, %v941
    %943 = vmatprep.mubr.bf16.mxu0 %v716
    %944 = vmatmul.mubr.bf16.gmra.mrb[0].mxu0 %v276
    %v945 = vpop.f32.mrb[0].mxu0
    %v946 = vadd.f32 0.0, %v945
    %v947 = vpop.f32.mrb[0].mxu0
    %v948 = vadd.f32 0.0, %v947
    %v949 = vpop.f32.mrb[0].mxu0
    %v950 = vadd.f32 0.0, %v949
    %v951 = vpop.f32.mrb[0].mxu0
    %v952 = vadd.f32 0.0, %v951
    %953 = vmatprep.mubr.bf16.mxu0 %v719
    %954 = vmatmul.mubr.bf16.gmra.mrb[0].mxu0 %v285
    %v955 = vpop.f32.mrb[0].mxu0
    %v956 = vadd.f32 0.0, %v955
    %v957 = vpop.f32.mrb[0].mxu0
    %v958 = vadd.f32 0.0, %v957
    %v959 = vpop.f32.mrb[0].mxu0
    %v960 = vadd.f32 0.0, %v959
    %v961 = vpop.f32.mrb[0].mxu0
    %v962 = vadd.f32 0.0, %v961
    %963 = vmatprep.mubr.bf16.mxu0 %v722
    %964 = vmatmul.mubr.bf16.gmra.mrb[0].mxu0 %v294
    %v965 = vpop.f32.mrb[0].mxu0
    %v966 = vadd.f32 0.0, %v965
    %v967 = vpop.f32.mrb[0].mxu0
    %v968 = vadd.f32 0.0, %v967
    %v969 = vpop.f32.mrb[0].mxu0
    %v970 = vadd.f32 0.0, %v969
    %v971 = vpop.f32.mrb[0].mxu0
    %v972 = vadd.f32 0.0, %v971
    %973 = vmatprep.mubr.bf16.mxu0 %v725
    %974 = vmatmul.mubr.bf16.gmra.mrb[0].mxu0 %v303
    %v975 = vpop.f32.mrb[0].mxu0
    %v976 = vadd.f32 0.0, %v975
    %v977 = vpop.f32.mrb[0].mxu0
    %v978 = vadd.f32 0.0, %v977
    %v979 = vpop.f32.mrb[0].mxu0
    %v980 = vadd.f32 0.0, %v979
    %v981 = vpop.f32.mrb[0].mxu0
    %v982 = vadd.f32 0.0, %v981
    %983 = vmatprep.mubr.bf16.mxu0 %v728
    %984 = vmatmul.mubr.bf16.gmra.mrb[0].mxu0 %v312
    %v985 = vpop.f32.mrb[0].mxu0
    %v986 = vadd.f32 0.0, %v985
    %v987 = vpop.f32.mrb[0].mxu0
    %v988 = vadd.f32 0.0, %v987
    %v989 = vpop.f32.mrb[0].mxu0
    %v990 = vadd.f32 0.0, %v989
    %v991 = vpop.f32.mrb[0].mxu0
    %v992 = vadd.f32 0.0, %v991
    %993 = vmatprep.mubr.bf16.mxu0 %v731
    %994 = vmatmul.mubr.bf16.gmra.mrb[0].mxu0 %v321
    %v995 = vpop.f32.mrb[0].mxu0
    %v996 = vadd.f32 0.0, %v995
    %v997 = vpop.f32.mrb[0].mxu0
    %v998 = vadd.f32 0.0, %v997
    %v999 = vpop.f32.mrb[0].mxu0
    %v1000 = vadd.f32 0.0, %v999
    %v1001 = vpop.f32.mrb[0].mxu0
    %v1002 = vadd.f32 0.0, %v1001
    %1003 = vmatprep.mubr.bf16.mxu0 %v734
    %1004 = vmatmul.mubr.bf16.gmra.mrb[0].mxu0 %v330
    %v1005 = vpop.f32.mrb[0].mxu0
    %v1006 = vadd.f32 0.0, %v1005
    %v1007 = vpop.f32.mrb[0].mxu0
    %v1008 = vadd.f32 0.0, %v1007
    %v1009 = vpop.f32.mrb[0].mxu0
    %v1010 = vadd.f32 0.0, %v1009
    %v1011 = vpop.f32.mrb[0].mxu0
    %v1012 = vadd.f32 0.0, %v1011
    %1013 = vmatprep.mubr.bf16.mxu0 %v737
    %1014 = vmatmul.mubr.bf16.gmra.mrb[0].mxu0 %v339
    %v1015 = vpop.f32.mrb[0].mxu0
    %v1016 = vadd.f32 0.0, %v1015
    %v1017 = vpop.f32.mrb[0].mxu0
    %v1018 = vadd.f32 0.0, %v1017
    %v1019 = vpop.f32.mrb[0].mxu0
    %v1020 = vadd.f32 0.0, %v1019
    %v1021 = vpop.f32.mrb[0].mxu0
    %v1022 = vadd.f32 0.0, %v1021
    %1023 = vmatprep.mubr.bf16.mxu0 %v740
    %1024 = vmatmul.mubr.bf16.gmra.mrb[0].mxu0 %v348
    %v1025 = vpop.f32.mrb[0].mxu0
    %v1026 = vadd.f32 0.0, %v1025
    %v1027 = vpop.f32.mrb[0].mxu0
    %v1028 = vadd.f32 0.0, %v1027
    %v1029 = vpop.f32.mrb[0].mxu0
    %v1030 = vadd.f32 0.0, %v1029
    %v1031 = vpop.f32.mrb[0].mxu0
    %v1032 = vadd.f32 0.0, %v1031
    %1033 = vdwg.mxu0
    %1034 = vmatprep.subr.bf16.mxu0 %v570
    %1035 = vmatpush1.bf16.msra.mxu0 %v569
    %1036 = vmatprep.subr.bf16.mxu0 %v576
    %1037 = vmatpush1.bf16.msra.mxu0 %v575
    %1038 = vmatprep.subr.bf16.mxu0 %v582
    %1039 = vmatpush1.bf16.msra.mxu0 %v581
    %1040 = vmatprep.subr.bf16.mxu0 %v588
    %1041 = vmatpush1.bf16.msra.mxu0 %v587
    %1042 = vmatprep.subr.bf16.mxu0 %v594
    %1043 = vmatpush1.bf16.msra.mxu0 %v593
    %1044 = vmatprep.subr.bf16.mxu0 %v600
    %1045 = vmatpush1.bf16.msra.mxu0 %v599
    %1046 = vmatprep.subr.bf16.mxu0 %v606
    %1047 = vmatpush1.bf16.msra.mxu0 %v605
    %1048 = vmatprep.subr.bf16.mxu0 %v612
    %1049 = vmatpush1.bf16.msra.mxu0 %v611
    %1050 = vmatprep.subr.bf16.mxu0 %v753
    %1051 = vmatpush1.bf16.msra.mxu0 %v750
    %1052 = vmatprep.subr.bf16.mxu0 0
    %1053 = vmatpush1.bf16.msra.mxu0 0
    %1054 = vmatprep.subr.bf16.mxu0 0
    %1055 = vmatpush1.bf16.msra.mxu0 0
    %1056 = vmatprep.subr.bf16.mxu0 0
    %1057 = vmatpush1.bf16.msra.mxu0 0
    %1058 = vmatprep.subr.bf16.mxu0 0
    %1059 = vmatpush1.bf16.msra.mxu0 0
    %1060 = vmatprep.subr.bf16.mxu0 0
    %1061 = vmatpush1.bf16.msra.mxu0 0
    %1062 = vmatprep.subr.bf16.mxu0 0
    %1063 = vmatpush1.bf16.msra.mxu0 0
    %1064 = vmatprep.subr.bf16.mxu0 0
    %1065 = vmatpush1.bf16.msra.mxu0 0
    %1066 = vmatprep.mubr.bf16.mxu0 %v671
    %1067 = vmatmul.mubr.bf16.gmra.mrb[0].mxu0 %v141
    %v1068 = vpop.f32.mrb[0].mxu0
    %v1069 = vadd.f32 0.0, %v1068
    %v1070 = vpop.f32.mrb[0].mxu0
    %v1071 = vadd.f32 0.0, %v1070
    %v1072 = vpop.f32.mrb[0].mxu0
    %v1073 = vadd.f32 0.0, %v1072
    %v1074 = vpop.f32.mrb[0].mxu0
    %v1075 = vadd.f32 0.0, %v1074
    %1076 = vmatprep.mubr.bf16.mxu0 %v674
    %1077 = vmatmul.mubr.bf16.gmra.mrb[0].mxu0 %v150
    %v1078 = vpop.f32.mrb[0].mxu0
    %v1079 = vadd.f32 0.0, %v1078
    %v1080 = vpop.f32.mrb[0].mxu0
    %v1081 = vadd.f32 0.0, %v1080
    %v1082 = vpop.f32.mrb[0].mxu0
    %v1083 = vadd.f32 0.0, %v1082
    %v1084 = vpop.f32.mrb[0].mxu0
    %v1085 = vadd.f32 0.0, %v1084
    %1086 = vmatprep.mubr.bf16.mxu0 %v677
    %1087 = vmatmul.mubr.bf16.gmra.mrb[0].mxu0 %v159
    %v1088 = vpop.f32.mrb[0].mxu0
    %v1089 = vadd.f32 0.0, %v1088
    %v1090 = vpop.f32.mrb[0].mxu0
    %v1091 = vadd.f32 0.0, %v1090
    %v1092 = vpop.f32.mrb[0].mxu0
    %v1093 = vadd.f32 0.0, %v1092
    %v1094 = vpop.f32.mrb[0].mxu0
    %v1095 = vadd.f32 0.0, %v1094
    %1096 = vmatprep.mubr.bf16.mxu0 %v680
    %1097 = vmatmul.mubr.bf16.gmra.mrb[0].mxu0 %v168
    %v1098 = vpop.f32.mrb[0].mxu0
    %v1099 = vadd.f32 0.0, %v1098
    %v1100 = vpop.f32.mrb[0].mxu0
    %v1101 = vadd.f32 0.0, %v1100
    %v1102 = vpop.f32.mrb[0].mxu0
    %v1103 = vadd.f32 0.0, %v1102
    %v1104 = vpop.f32.mrb[0].mxu0
    %v1105 = vadd.f32 0.0, %v1104
    %1106 = vmatprep.mubr.bf16.mxu0 %v683
    %1107 = vmatmul.mubr.bf16.gmra.mrb[0].mxu0 %v177
    %v1108 = vpop.f32.mrb[0].mxu0
    %v1109 = vadd.f32 0.0, %v1108
    %v1110 = vpop.f32.mrb[0].mxu0
    %v1111 = vadd.f32 0.0, %v1110
    %v1112 = vpop.f32.mrb[0].mxu0
    %v1113 = vadd.f32 0.0, %v1112
    %v1114 = vpop.f32.mrb[0].mxu0
    %v1115 = vadd.f32 0.0, %v1114
    %1116 = vmatprep.mubr.bf16.mxu0 %v686
    %1117 = vmatmul.mubr.bf16.gmra.mrb[0].mxu0 %v186
    %v1118 = vpop.f32.mrb[0].mxu0
    %v1119 = vadd.f32 0.0, %v1118
    %v1120 = vpop.f32.mrb[0].mxu0
    %v1121 = vadd.f32 0.0, %v1120
    %v1122 = vpop.f32.mrb[0].mxu0
    %v1123 = vadd.f32 0.0, %v1122
    %v1124 = vpop.f32.mrb[0].mxu0
    %v1125 = vadd.f32 0.0, %v1124
    %1126 = vmatprep.mubr.bf16.mxu0 %v689
    %1127 = vmatmul.mubr.bf16.gmra.mrb[0].mxu0 %v195
    %v1128 = vpop.f32.mrb[0].mxu0
    %v1129 = vadd.f32 0.0, %v1128
    %v1130 = vpop.f32.mrb[0].mxu0
    %v1131 = vadd.f32 0.0, %v1130
    %v1132 = vpop.f32.mrb[0].mxu0
    %v1133 = vadd.f32 0.0, %v1132
    %v1134 = vpop.f32.mrb[0].mxu0
    %v1135 = vadd.f32 0.0, %v1134
    %1136 = vmatprep.mubr.bf16.mxu0 %v692
    %1137 = vmatmul.mubr.bf16.gmra.mrb[0].mxu0 %v204
    %v1138 = vpop.f32.mrb[0].mxu0
    %v1139 = vadd.f32 0.0, %v1138
    %v1140 = vpop.f32.mrb[0].mxu0
    %v1141 = vadd.f32 0.0, %v1140
    %v1142 = vpop.f32.mrb[0].mxu0
    %v1143 = vadd.f32 0.0, %v1142
    %v1144 = vpop.f32.mrb[0].mxu0
    %v1145 = vadd.f32 0.0, %v1144
    %1146 = vmatprep.mubr.bf16.mxu0 %v695
    %1147 = vmatmul.mubr.bf16.gmra.mrb[0].mxu0 %v213
    %v1148 = vpop.f32.mrb[0].mxu0
    %v1149 = vadd.f32 0.0, %v1148
    %v1150 = vpop.f32.mrb[0].mxu0
    %v1151 = vadd.f32 0.0, %v1150
    %v1152 = vpop.f32.mrb[0].mxu0
    %v1153 = vadd.f32 0.0, %v1152
    %v1154 = vpop.f32.mrb[0].mxu0
    %v1155 = vadd.f32 0.0, %v1154
    %1156 = vmatprep.mubr.bf16.mxu0 %v698
    %1157 = vmatmul.mubr.bf16.gmra.mrb[0].mxu0 %v222
    %v1158 = vpop.f32.mrb[0].mxu0
    %v1159 = vadd.f32 0.0, %v1158
    %v1160 = vpop.f32.mrb[0].mxu0
    %v1161 = vadd.f32 0.0, %v1160
    %v1162 = vpop.f32.mrb[0].mxu0
    %v1163 = vadd.f32 0.0, %v1162
    %v1164 = vpop.f32.mrb[0].mxu0
    %v1165 = vadd.f32 0.0, %v1164
    %1166 = vmatprep.mubr.bf16.mxu0 %v701
    %1167 = vmatmul.mubr.bf16.gmra.mrb[0].mxu0 %v231
    %v1168 = vpop.f32.mrb[0].mxu0
    %v1169 = vadd.f32 0.0, %v1168
    %v1170 = vpop.f32.mrb[0].mxu0
    %v1171 = vadd.f32 0.0, %v1170
    %v1172 = vpop.f32.mrb[0].mxu0
    %v1173 = vadd.f32 0.0, %v1172
    %v1174 = vpop.f32.mrb[0].mxu0
    %v1175 = vadd.f32 0.0, %v1174
    %1176 = vmatprep.mubr.bf16.mxu0 %v704
    %1177 = vmatmul.mubr.bf16.gmra.mrb[0].mxu0 %v240
    %v1178 = vpop.f32.mrb[0].mxu0
    %v1179 = vadd.f32 0.0, %v1178
    %v1180 = vpop.f32.mrb[0].mxu0
    %v1181 = vadd.f32 0.0, %v1180
    %v1182 = vpop.f32.mrb[0].mxu0
    %v1183 = vadd.f32 0.0, %v1182
    %v1184 = vpop.f32.mrb[0].mxu0
    %v1185 = vadd.f32 0.0, %v1184
    %1186 = vmatprep.mubr.bf16.mxu0 %v707
    %1187 = vmatmul.mubr.bf16.gmra.mrb[0].mxu0 %v249
    %v1188 = vpop.f32.mrb[0].mxu0
    %v1189 = vadd.f32 0.0, %v1188
    %v1190 = vpop.f32.mrb[0].mxu0
    %v1191 = vadd.f32 0.0, %v1190
    %v1192 = vpop.f32.mrb[0].mxu0
    %v1193 = vadd.f32 0.0, %v1192
    %v1194 = vpop.f32.mrb[0].mxu0
    %v1195 = vadd.f32 0.0, %v1194
    %1196 = vmatprep.mubr.bf16.mxu0 %v710
    %1197 = vmatmul.mubr.bf16.gmra.mrb[0].mxu0 %v258
    %v1198 = vpop.f32.mrb[0].mxu0
    %v1199 = vadd.f32 0.0, %v1198
    %v1200 = vpop.f32.mrb[0].mxu0
    %v1201 = vadd.f32 0.0, %v1200
    %v1202 = vpop.f32.mrb[0].mxu0
    %v1203 = vadd.f32 0.0, %v1202
    %v1204 = vpop.f32.mrb[0].mxu0
    %v1205 = vadd.f32 0.0, %v1204
    %1206 = vmatprep.mubr.bf16.mxu0 %v713
    %1207 = vmatmul.mubr.bf16.gmra.mrb[0].mxu0 %v267
    %v1208 = vpop.f32.mrb[0].mxu0
    %v1209 = vadd.f32 0.0, %v1208
    %v1210 = vpop.f32.mrb[0].mxu0
    %v1211 = vadd.f32 0.0, %v1210
    %v1212 = vpop.f32.mrb[0].mxu0
    %v1213 = vadd.f32 0.0, %v1212
    %v1214 = vpop.f32.mrb[0].mxu0
    %v1215 = vadd.f32 0.0, %v1214
    %1216 = vmatprep.mubr.bf16.mxu0 %v716
    %1217 = vmatmul.mubr.bf16.gmra.mrb[0].mxu0 %v276
    %v1218 = vpop.f32.mrb[0].mxu0
    %v1219 = vadd.f32 0.0, %v1218
    %v1220 = vpop.f32.mrb[0].mxu0
    %v1221 = vadd.f32 0.0, %v1220
    %v1222 = vpop.f32.mrb[0].mxu0
    %v1223 = vadd.f32 0.0, %v1222
    %v1224 = vpop.f32.mrb[0].mxu0
    %v1225 = vadd.f32 0.0, %v1224
    %1226 = vmatprep.mubr.bf16.mxu0 %v719
    %1227 = vmatmul.mubr.bf16.gmra.mrb[0].mxu0 %v285
    %v1228 = vpop.f32.mrb[0].mxu0
    %v1229 = vadd.f32 0.0, %v1228
    %v1230 = vpop.f32.mrb[0].mxu0
    %v1231 = vadd.f32 0.0, %v1230
    %v1232 = vpop.f32.mrb[0].mxu0
    %v1233 = vadd.f32 0.0, %v1232
    %v1234 = vpop.f32.mrb[0].mxu0
    %v1235 = vadd.f32 0.0, %v1234
    %1236 = vmatprep.mubr.bf16.mxu0 %v722
    %1237 = vmatmul.mubr.bf16.gmra.mrb[0].mxu0 %v294
    %v1238 = vpop.f32.mrb[0].mxu0
    %v1239 = vadd.f32 0.0, %v1238
    %v1240 = vpop.f32.mrb[0].mxu0
    %v1241 = vadd.f32 0.0, %v1240
    %v1242 = vpop.f32.mrb[0].mxu0
    %v1243 = vadd.f32 0.0, %v1242
    %v1244 = vpop.f32.mrb[0].mxu0
    %v1245 = vadd.f32 0.0, %v1244
    %1246 = vmatprep.mubr.bf16.mxu0 %v725
    %1247 = vmatmul.mubr.bf16.gmra.mrb[0].mxu0 %v303
    %v1248 = vpop.f32.mrb[0].mxu0
    %v1249 = vadd.f32 0.0, %v1248
    %v1250 = vpop.f32.mrb[0].mxu0
    %v1251 = vadd.f32 0.0, %v1250
    %v1252 = vpop.f32.mrb[0].mxu0
    %v1253 = vadd.f32 0.0, %v1252
    %v1254 = vpop.f32.mrb[0].mxu0
    %v1255 = vadd.f32 0.0, %v1254
    %1256 = vmatprep.mubr.bf16.mxu0 %v728
    %1257 = vmatmul.mubr.bf16.gmra.mrb[0].mxu0 %v312
    %v1258 = vpop.f32.mrb[0].mxu0
    %v1259 = vadd.f32 0.0, %v1258
    %v1260 = vpop.f32.mrb[0].mxu0
    %v1261 = vadd.f32 0.0, %v1260
    %v1262 = vpop.f32.mrb[0].mxu0
    %v1263 = vadd.f32 0.0, %v1262
    %v1264 = vpop.f32.mrb[0].mxu0
    %v1265 = vadd.f32 0.0, %v1264
    %1266 = vmatprep.mubr.bf16.mxu0 %v731
    %1267 = vmatmul.mubr.bf16.gmra.mrb[0].mxu0 %v321
    %v1268 = vpop.f32.mrb[0].mxu0
    %v1269 = vadd.f32 0.0, %v1268
    %v1270 = vpop.f32.mrb[0].mxu0
    %v1271 = vadd.f32 0.0, %v1270
    %v1272 = vpop.f32.mrb[0].mxu0
    %v1273 = vadd.f32 0.0, %v1272
    %v1274 = vpop.f32.mrb[0].mxu0
    %v1275 = vadd.f32 0.0, %v1274
    %1276 = vmatprep.mubr.bf16.mxu0 %v734
    %1277 = vmatmul.mubr.bf16.gmra.mrb[0].mxu0 %v330
    %v1278 = vpop.f32.mrb[0].mxu0
    %v1279 = vadd.f32 0.0, %v1278
    %v1280 = vpop.f32.mrb[0].mxu0
    %v1281 = vadd.f32 0.0, %v1280
    %v1282 = vpop.f32.mrb[0].mxu0
    %v1283 = vadd.f32 0.0, %v1282
    %v1284 = vpop.f32.mrb[0].mxu0
    %v1285 = vadd.f32 0.0, %v1284
    %1286 = vmatprep.mubr.bf16.mxu0 %v737
    %1287 = vmatmul.mubr.bf16.gmra.mrb[0].mxu0 %v339
    %v1288 = vpop.f32.mrb[0].mxu0
    %v1289 = vadd.f32 0.0, %v1288
    %v1290 = vpop.f32.mrb[0].mxu0
    %v1291 = vadd.f32 0.0, %v1290
    %v1292 = vpop.f32.mrb[0].mxu0
    %v1293 = vadd.f32 0.0, %v1292
    %v1294 = vpop.f32.mrb[0].mxu0
    %v1295 = vadd.f32 0.0, %v1294
    %1296 = vmatprep.mubr.bf16.mxu0 %v740
    %1297 = vmatmul.mubr.bf16.gmra.mrb[0].mxu0 %v348
    %v1298 = vpop.f32.mrb[0].mxu0
    %v1299 = vadd.f32 0.0, %v1298
    %v1300 = vpop.f32.mrb[0].mxu0
    %v1301 = vadd.f32 0.0, %v1300
    %v1302 = vpop.f32.mrb[0].mxu0
    %v1303 = vadd.f32 0.0, %v1302
    %v1304 = vpop.f32.mrb[0].mxu0
    %v1305 = vadd.f32 0.0, %v1304
    %1306 = vdwg.mxu0
    %1307 = vmatprep.subr.bf16.mxu0 %v572
    %1308 = vmatpush1.bf16.msra.mxu0 %v571
    %1309 = vmatprep.subr.bf16.mxu0 %v578
    %1310 = vmatpush1.bf16.msra.mxu0 %v577
    %1311 = vmatprep.subr.bf16.mxu0 %v584
    %1312 = vmatpush1.bf16.msra.mxu0 %v583
    %1313 = vmatprep.subr.bf16.mxu0 %v590
    %1314 = vmatpush1.bf16.msra.mxu0 %v589
    %1315 = vmatprep.subr.bf16.mxu0 %v596
    %1316 = vmatpush1.bf16.msra.mxu0 %v595
    %1317 = vmatprep.subr.bf16.mxu0 %v602
    %1318 = vmatpush1.bf16.msra.mxu0 %v601
    %1319 = vmatprep.subr.bf16.mxu0 %v608
    %1320 = vmatpush1.bf16.msra.mxu0 %v607
    %1321 = vmatprep.subr.bf16.mxu0 %v614
    %1322 = vmatpush1.bf16.msra.mxu0 %v613
    %1323 = vmatprep.subr.bf16.mxu0 %v759
    %1324 = vmatpush1.bf16.msra.mxu0 %v756
    %1325 = vmatprep.subr.bf16.mxu0 0
    %1326 = vmatpush1.bf16.msra.mxu0 0
    %1327 = vmatprep.subr.bf16.mxu0 0
    %1328 = vmatpush1.bf16.msra.mxu0 0
    %1329 = vmatprep.subr.bf16.mxu0 0
    %1330 = vmatpush1.bf16.msra.mxu0 0
    %1331 = vmatprep.subr.bf16.mxu0 0
    %1332 = vmatpush1.bf16.msra.mxu0 0
    %1333 = vmatprep.subr.bf16.mxu0 0
    %1334 = vmatpush1.bf16.msra.mxu0 0
    %1335 = vmatprep.subr.bf16.mxu0 0
    %1336 = vmatpush1.bf16.msra.mxu0 0
    %1337 = vmatprep.subr.bf16.mxu0 0
    %1338 = vmatpush1.bf16.msra.mxu0 0
    %1339 = vmatprep.mubr.bf16.mxu0 %v671
    %1340 = vmatmul.mubr.bf16.gmra.mrb[0].mxu0 %v141
    %v1341 = vpop.f32.mrb[0].mxu0
    %v1342 = vadd.f32 0.0, %v1341
    %v1343 = vpop.f32.mrb[0].mxu0
    %v1344 = vadd.f32 0.0, %v1343
    %v1345 = vpop.f32.mrb[0].mxu0
    %v1346 = vadd.f32 0.0, %v1345
    %v1347 = vpop.f32.mrb[0].mxu0
    %v1348 = vadd.f32 0.0, %v1347
    %1349 = vmatprep.mubr.bf16.mxu0 %v674
    %1350 = vmatmul.mubr.bf16.gmra.mrb[0].mxu0 %v150
    %v1351 = vpop.f32.mrb[0].mxu0
    %v1352 = vadd.f32 0.0, %v1351
    %v1353 = vpop.f32.mrb[0].mxu0
    %v1354 = vadd.f32 0.0, %v1353
    %v1355 = vpop.f32.mrb[0].mxu0
    %v1356 = vadd.f32 0.0, %v1355
    %v1357 = vpop.f32.mrb[0].mxu0
    %v1358 = vadd.f32 0.0, %v1357
    %1359 = vmatprep.mubr.bf16.mxu0 %v677
    %1360 = vmatmul.mubr.bf16.gmra.mrb[0].mxu0 %v159
    %v1361 = vpop.f32.mrb[0].mxu0
    %v1362 = vadd.f32 0.0, %v1361
    %v1363 = vpop.f32.mrb[0].mxu0
    %v1364 = vadd.f32 0.0, %v1363
    %v1365 = vpop.f32.mrb[0].mxu0
    %v1366 = vadd.f32 0.0, %v1365
    %v1367 = vpop.f32.mrb[0].mxu0
    %v1368 = vadd.f32 0.0, %v1367
    %1369 = vmatprep.mubr.bf16.mxu0 %v680
    %1370 = vmatmul.mubr.bf16.gmra.mrb[0].mxu0 %v168
    %v1371 = vpop.f32.mrb[0].mxu0
    %v1372 = vadd.f32 0.0, %v1371
    %v1373 = vpop.f32.mrb[0].mxu0
    %v1374 = vadd.f32 0.0, %v1373
    %v1375 = vpop.f32.mrb[0].mxu0
    %v1376 = vadd.f32 0.0, %v1375
    %v1377 = vpop.f32.mrb[0].mxu0
    %v1378 = vadd.f32 0.0, %v1377
    %1379 = vmatprep.mubr.bf16.mxu0 %v683
    %1380 = vmatmul.mubr.bf16.gmra.mrb[0].mxu0 %v177
    %v1381 = vpop.f32.mrb[0].mxu0
    %v1382 = vadd.f32 0.0, %v1381
    %v1383 = vpop.f32.mrb[0].mxu0
    %v1384 = vadd.f32 0.0, %v1383
    %v1385 = vpop.f32.mrb[0].mxu0
    %v1386 = vadd.f32 0.0, %v1385
    %v1387 = vpop.f32.mrb[0].mxu0
    %v1388 = vadd.f32 0.0, %v1387
    %1389 = vmatprep.mubr.bf16.mxu0 %v686
    %1390 = vmatmul.mubr.bf16.gmra.mrb[0].mxu0 %v186
    %v1391 = vpop.f32.mrb[0].mxu0
    %v1392 = vadd.f32 0.0, %v1391
    %v1393 = vpop.f32.mrb[0].mxu0
    %v1394 = vadd.f32 0.0, %v1393
    %v1395 = vpop.f32.mrb[0].mxu0
    %v1396 = vadd.f32 0.0, %v1395
    %v1397 = vpop.f32.mrb[0].mxu0
    %v1398 = vadd.f32 0.0, %v1397
    %1399 = vmatprep.mubr.bf16.mxu0 %v689
    %1400 = vmatmul.mubr.bf16.gmra.mrb[0].mxu0 %v195
    %v1401 = vpop.f32.mrb[0].mxu0
    %v1402 = vadd.f32 0.0, %v1401
    %v1403 = vpop.f32.mrb[0].mxu0
    %v1404 = vadd.f32 0.0, %v1403
    %v1405 = vpop.f32.mrb[0].mxu0
    %v1406 = vadd.f32 0.0, %v1405
    %v1407 = vpop.f32.mrb[0].mxu0
    %v1408 = vadd.f32 0.0, %v1407
    %1409 = vmatprep.mubr.bf16.mxu0 %v692
    %1410 = vmatmul.mubr.bf16.gmra.mrb[0].mxu0 %v204
    %v1411 = vpop.f32.mrb[0].mxu0
    %v1412 = vadd.f32 0.0, %v1411
    %v1413 = vpop.f32.mrb[0].mxu0
    %v1414 = vadd.f32 0.0, %v1413
    %v1415 = vpop.f32.mrb[0].mxu0
    %v1416 = vadd.f32 0.0, %v1415
    %v1417 = vpop.f32.mrb[0].mxu0
    %v1418 = vadd.f32 0.0, %v1417
    %1419 = vmatprep.mubr.bf16.mxu0 %v695
    %1420 = vmatmul.mubr.bf16.gmra.mrb[0].mxu0 %v213
    %v1421 = vpop.f32.mrb[0].mxu0
    %v1422 = vadd.f32 0.0, %v1421
    %v1423 = vpop.f32.mrb[0].mxu0
    %v1424 = vadd.f32 0.0, %v1423
    %v1425 = vpop.f32.mrb[0].mxu0
    %v1426 = vadd.f32 0.0, %v1425
    %v1427 = vpop.f32.mrb[0].mxu0
    %v1428 = vadd.f32 0.0, %v1427
    %1429 = vmatprep.mubr.bf16.mxu0 %v698
    %1430 = vmatmul.mubr.bf16.gmra.mrb[0].mxu0 %v222
    %v1431 = vpop.f32.mrb[0].mxu0
    %v1432 = vadd.f32 0.0, %v1431
    %v1433 = vpop.f32.mrb[0].mxu0
    %v1434 = vadd.f32 0.0, %v1433
    %v1435 = vpop.f32.mrb[0].mxu0
    %v1436 = vadd.f32 0.0, %v1435
    %v1437 = vpop.f32.mrb[0].mxu0
    %v1438 = vadd.f32 0.0, %v1437
    %1439 = vmatprep.mubr.bf16.mxu0 %v701
    %1440 = vmatmul.mubr.bf16.gmra.mrb[0].mxu0 %v231
    %v1441 = vpop.f32.mrb[0].mxu0
    %v1442 = vadd.f32 0.0, %v1441
    %v1443 = vpop.f32.mrb[0].mxu0
    %v1444 = vadd.f32 0.0, %v1443
    %v1445 = vpop.f32.mrb[0].mxu0
    %v1446 = vadd.f32 0.0, %v1445
    %v1447 = vpop.f32.mrb[0].mxu0
    %v1448 = vadd.f32 0.0, %v1447
    %1449 = vmatprep.mubr.bf16.mxu0 %v704
    %1450 = vmatmul.mubr.bf16.gmra.mrb[0].mxu0 %v240
    %v1451 = vpop.f32.mrb[0].mxu0
    %v1452 = vadd.f32 0.0, %v1451
    %v1453 = vpop.f32.mrb[0].mxu0
    %v1454 = vadd.f32 0.0, %v1453
    %v1455 = vpop.f32.mrb[0].mxu0
    %v1456 = vadd.f32 0.0, %v1455
    %v1457 = vpop.f32.mrb[0].mxu0
    %v1458 = vadd.f32 0.0, %v1457
    %1459 = vmatprep.mubr.bf16.mxu0 %v707
    %1460 = vmatmul.mubr.bf16.gmra.mrb[0].mxu0 %v249
    %v1461 = vpop.f32.mrb[0].mxu0
    %v1462 = vadd.f32 0.0, %v1461
    %v1463 = vpop.f32.mrb[0].mxu0
    %v1464 = vadd.f32 0.0, %v1463
    %v1465 = vpop.f32.mrb[0].mxu0
    %v1466 = vadd.f32 0.0, %v1465
    %v1467 = vpop.f32.mrb[0].mxu0
    %v1468 = vadd.f32 0.0, %v1467
    %1469 = vmatprep.mubr.bf16.mxu0 %v710
    %1470 = vmatmul.mubr.bf16.gmra.mrb[0].mxu0 %v258
    %v1471 = vpop.f32.mrb[0].mxu0
    %v1472 = vadd.f32 0.0, %v1471
    %v1473 = vpop.f32.mrb[0].mxu0
    %v1474 = vadd.f32 0.0, %v1473
    %v1475 = vpop.f32.mrb[0].mxu0
    %v1476 = vadd.f32 0.0, %v1475
    %v1477 = vpop.f32.mrb[0].mxu0
    %v1478 = vadd.f32 0.0, %v1477
    %1479 = vmatprep.mubr.bf16.mxu0 %v713
    %1480 = vmatmul.mubr.bf16.gmra.mrb[0].mxu0 %v267
    %v1481 = vpop.f32.mrb[0].mxu0
    %v1482 = vadd.f32 0.0, %v1481
    %v1483 = vpop.f32.mrb[0].mxu0
    %v1484 = vadd.f32 0.0, %v1483
    %v1485 = vpop.f32.mrb[0].mxu0
    %v1486 = vadd.f32 0.0, %v1485
    %v1487 = vpop.f32.mrb[0].mxu0
    %v1488 = vadd.f32 0.0, %v1487
    %1489 = vmatprep.mubr.bf16.mxu0 %v716
    %1490 = vmatmul.mubr.bf16.gmra.mrb[0].mxu0 %v276
    %v1491 = vpop.f32.mrb[0].mxu0
    %v1492 = vadd.f32 0.0, %v1491
    %v1493 = vpop.f32.mrb[0].mxu0
    %v1494 = vadd.f32 0.0, %v1493
    %v1495 = vpop.f32.mrb[0].mxu0
    %v1496 = vadd.f32 0.0, %v1495
    %v1497 = vpop.f32.mrb[0].mxu0
    %v1498 = vadd.f32 0.0, %v1497
    %1499 = vmatprep.mubr.bf16.mxu0 %v719
    %1500 = vmatmul.mubr.bf16.gmra.mrb[0].mxu0 %v285
    %v1501 = vpop.f32.mrb[0].mxu0
    %v1502 = vadd.f32 0.0, %v1501
    %v1503 = vpop.f32.mrb[0].mxu0
    %v1504 = vadd.f32 0.0, %v1503
    %v1505 = vpop.f32.mrb[0].mxu0
    %v1506 = vadd.f32 0.0, %v1505
    %v1507 = vpop.f32.mrb[0].mxu0
    %v1508 = vadd.f32 0.0, %v1507
    %1509 = vmatprep.mubr.bf16.mxu0 %v722
    %1510 = vmatmul.mubr.bf16.gmra.mrb[0].mxu0 %v294
    %v1511 = vpop.f32.mrb[0].mxu0
    %v1512 = vadd.f32 0.0, %v1511
    %v1513 = vpop.f32.mrb[0].mxu0
    %v1514 = vadd.f32 0.0, %v1513
    %v1515 = vpop.f32.mrb[0].mxu0
    %v1516 = vadd.f32 0.0, %v1515
    %v1517 = vpop.f32.mrb[0].mxu0
    %v1518 = vadd.f32 0.0, %v1517
    %1519 = vmatprep.mubr.bf16.mxu0 %v725
    %1520 = vmatmul.mubr.bf16.gmra.mrb[0].mxu0 %v303
    %v1521 = vpop.f32.mrb[0].mxu0
    %v1522 = vadd.f32 0.0, %v1521
    %v1523 = vpop.f32.mrb[0].mxu0
    %v1524 = vadd.f32 0.0, %v1523
    %v1525 = vpop.f32.mrb[0].mxu0
    %v1526 = vadd.f32 0.0, %v1525
    %v1527 = vpop.f32.mrb[0].mxu0
    %v1528 = vadd.f32 0.0, %v1527
    %1529 = vmatprep.mubr.bf16.mxu0 %v728
    %1530 = vmatmul.mubr.bf16.gmra.mrb[0].mxu0 %v312
    %v1531 = vpop.f32.mrb[0].mxu0
    %v1532 = vadd.f32 0.0, %v1531
    %v1533 = vpop.f32.mrb[0].mxu0
    %v1534 = vadd.f32 0.0, %v1533
    %v1535 = vpop.f32.mrb[0].mxu0
    %v1536 = vadd.f32 0.0, %v1535
    %v1537 = vpop.f32.mrb[0].mxu0
    %v1538 = vadd.f32 0.0, %v1537
    %1539 = vmatprep.mubr.bf16.mxu0 %v731
    %1540 = vmatmul.mubr.bf16.gmra.mrb[0].mxu0 %v321
    %v1541 = vpop.f32.mrb[0].mxu0
    %v1542 = vadd.f32 0.0, %v1541
    %v1543 = vpop.f32.mrb[0].mxu0
    %v1544 = vadd.f32 0.0, %v1543
    %v1545 = vpop.f32.mrb[0].mxu0
    %v1546 = vadd.f32 0.0, %v1545
    %v1547 = vpop.f32.mrb[0].mxu0
    %v1548 = vadd.f32 0.0, %v1547
    %1549 = vmatprep.mubr.bf16.mxu0 %v734
    %1550 = vmatmul.mubr.bf16.gmra.mrb[0].mxu0 %v330
    %v1551 = vpop.f32.mrb[0].mxu0
    %v1552 = vadd.f32 0.0, %v1551
    %v1553 = vpop.f32.mrb[0].mxu0
    %v1554 = vadd.f32 0.0, %v1553
    %v1555 = vpop.f32.mrb[0].mxu0
    %v1556 = vadd.f32 0.0, %v1555
    %v1557 = vpop.f32.mrb[0].mxu0
    %v1558 = vadd.f32 0.0, %v1557
    %1559 = vmatprep.mubr.bf16.mxu0 %v737
    %1560 = vmatmul.mubr.bf16.gmra.mrb[0].mxu0 %v339
    %v1561 = vpop.f32.mrb[0].mxu0
    %v1562 = vadd.f32 0.0, %v1561
    %v1563 = vpop.f32.mrb[0].mxu0
    %v1564 = vadd.f32 0.0, %v1563
    %v1565 = vpop.f32.mrb[0].mxu0
    %v1566 = vadd.f32 0.0, %v1565
    %v1567 = vpop.f32.mrb[0].mxu0
    %v1568 = vadd.f32 0.0, %v1567
    %1569 = vmatprep.mubr.bf16.mxu0 %v740
    %1570 = vmatmul.mubr.bf16.gmra.mrb[0].mxu0 %v348
    %v1571 = vpop.f32.mrb[0].mxu0
    %v1572 = vadd.f32 0.0, %v1571
    %v1573 = vpop.f32.mrb[0].mxu0
    %v1574 = vadd.f32 0.0, %v1573
    %v1575 = vpop.f32.mrb[0].mxu0
    %v1576 = vadd.f32 0.0, %v1575
    %v1577 = vpop.f32.mrb[0].mxu0
    %v1578 = vadd.f32 0.0, %v1577
    %1579 = vdwg.mxu0
    %v1580 = vmax.f32 %v796, %v856
    %v1581 = vmax.f32 %v798, %v858
    %v1582 = vmax.f32 %v1069, %v1129
    %v1583 = vmax.f32 %v1071, %v1131
    %v1584 = vmax.f32 %v1342, %v1402
    %v1585 = vmax.f32 %v1344, %v1404
    %v1586 = vmax.f32 %v800, %v860
    %v1587 = vmax.f32 %v802, %v862
    %v1588 = vmax.f32 %v1073, %v1133
    %v1589 = vmax.f32 %v1075, %v1135
    %v1590 = vmax.f32 %v1346, %v1406
    %v1591 = vmax.f32 %v1348, %v1408
    %v1592 = vmax.f32 %v806, %v866
    %v1593 = vmax.f32 %v808, %v868
    %v1594 = vmax.f32 %v1079, %v1139
    %v1595 = vmax.f32 %v1081, %v1141
    %v1596 = vmax.f32 %v1352, %v1412
    %v1597 = vmax.f32 %v1354, %v1414
    %v1598 = vmax.f32 %v810, %v870
    %v1599 = vmax.f32 %v812, %v872
    %v1600 = vmax.f32 %v1083, %v1143
    %v1601 = vmax.f32 %v1085, %v1145
    %v1602 = vmax.f32 %v1356, %v1416
    %v1603 = vmax.f32 %v1358, %v1418
    %v1604 = vmax.f32 %v816, %v876
    %v1605 = vmax.f32 %v818, %v878
    %v1606 = vmax.f32 %v1089, %v1149
    %v1607 = vmax.f32 %v1091, %v1151
    %v1608 = vmax.f32 %v1362, %v1422
    %v1609 = vmax.f32 %v1364, %v1424
    %v1610 = vmax.f32 %v820, %v880
    %v1611 = vmax.f32 %v822, %v882
    %v1612 = vmax.f32 %v1093, %v1153
    %v1613 = vmax.f32 %v1095, %v1155
    %v1614 = vmax.f32 %v1366, %v1426
    %v1615 = vmax.f32 %v1368, %v1428
    %v1616 = vmax.f32 %v826, %v886
    %v1617 = vmax.f32 %v828, %v888
    %v1618 = vmax.f32 %v1099, %v1159
    %v1619 = vmax.f32 %v1101, %v1161
    %v1620 = vmax.f32 %v1372, %v1432
    %v1621 = vmax.f32 %v1374, %v1434
    %v1622 = vmax.f32 %v830, %v890
    %v1623 = vmax.f32 %v832, %v892
    %v1624 = vmax.f32 %v1103, %v1163
    %v1625 = vmax.f32 %v1105, %v1165
    %v1626 = vmax.f32 %v1376, %v1436
    %v1627 = vmax.f32 %v1378, %v1438
    %v1628 = vmax.f32 %v836, %v896
    %v1629 = vmax.f32 %v838, %v898
    %v1630 = vmax.f32 %v1109, %v1169
    %v1631 = vmax.f32 %v1111, %v1171
    %v1632 = vmax.f32 %v1382, %v1442
    %v1633 = vmax.f32 %v1384, %v1444
    %v1634 = vmax.f32 %v840, %v900
    %v1635 = vmax.f32 %v842, %v902
    %v1636 = vmax.f32 %v1113, %v1173
    %v1637 = vmax.f32 %v1115, %v1175
    %v1638 = vmax.f32 %v1386, %v1446
    %v1639 = vmax.f32 %v1388, %v1448
    %v1640 = vmax.f32 %v846, %v906
    %v1641 = vmax.f32 %v848, %v908
    %v1642 = vmax.f32 %v1119, %v1179
    %v1643 = vmax.f32 %v1121, %v1181
    %v1644 = vmax.f32 %v1392, %v1452
    %v1645 = vmax.f32 %v1394, %v1454
    %v1646 = vmax.f32 %v850, %v910
    %v1647 = vmax.f32 %v852, %v912
    %v1648 = vmax.f32 %v1123, %v1183
    %v1649 = vmax.f32 %v1125, %v1185
    %v1650 = vmax.f32 %v1396, %v1456
    %v1651 = vmax.f32 %v1398, %v1458
    %v1652 = vmax.f32 %v916, %v976
    %v1653 = vmax.f32 %v918, %v978
    %v1654 = vmax.f32 %v1189, %v1249
    %v1655 = vmax.f32 %v1191, %v1251
    %v1656 = vmax.f32 %v1462, %v1522
    %v1657 = vmax.f32 %v1464, %v1524
    %v1658 = vmax.f32 %v920, %v980
    %v1659 = vmax.f32 %v922, %v982
    %v1660 = vmax.f32 %v1193, %v1253
    %v1661 = vmax.f32 %v1195, %v1255
    %v1662 = vmax.f32 %v1466, %v1526
    %v1663 = vmax.f32 %v1468, %v1528
    %v1664 = vmax.f32 %v926, %v986
    %v1665 = vmax.f32 %v928, %v988
    %v1666 = vmax.f32 %v1199, %v1259
    %v1667 = vmax.f32 %v1201, %v1261
    %v1668 = vmax.f32 %v1472, %v1532
    %v1669 = vmax.f32 %v1474, %v1534
    %v1670 = vmax.f32 %v930, %v990
    %v1671 = vmax.f32 %v932, %v992
    %v1672 = vmax.f32 %v1203, %v1263
    %v1673 = vmax.f32 %v1205, %v1265
    %v1674 = vmax.f32 %v1476, %v1536
    %v1675 = vmax.f32 %v1478, %v1538
    %v1676 = vmax.f32 %v936, %v996
    %v1677 = vmax.f32 %v938, %v998
    %v1678 = vmax.f32 %v1209, %v1269
    %v1679 = vmax.f32 %v1211, %v1271
    %v1680 = vmax.f32 %v1482, %v1542
    %v1681 = vmax.f32 %v1484, %v1544
    %v1682 = vmax.f32 %v940, %v1000
    %v1683 = vmax.f32 %v942, %v1002
    %v1684 = vmax.f32 %v1213, %v1273
    %v1685 = vmax.f32 %v1215, %v1275
    %v1686 = vmax.f32 %v1486, %v1546
    %v1687 = vmax.f32 %v1488, %v1548
    %v1688 = vmax.f32 %v946, %v1006
    %v1689 = vmax.f32 %v948, %v1008
    %v1690 = vmax.f32 %v1219, %v1279
    %v1691 = vmax.f32 %v1221, %v1281
    %v1692 = vmax.f32 %v1492, %v1552
    %v1693 = vmax.f32 %v1494, %v1554
    %v1694 = vmax.f32 %v950, %v1010
    %v1695 = vmax.f32 %v952, %v1012
    %v1696 = vmax.f32 %v1223, %v1283
    %v1697 = vmax.f32 %v1225, %v1285
    %v1698 = vmax.f32 %v1496, %v1556
    %v1699 = vmax.f32 %v1498, %v1558
    %v1700 = vmax.f32 %v956, %v1016
    %v1701 = vmax.f32 %v958, %v1018
    %v1702 = vmax.f32 %v1229, %v1289
    %v1703 = vmax.f32 %v1231, %v1291
    %v1704 = vmax.f32 %v1502, %v1562
    %v1705 = vmax.f32 %v1504, %v1564
    %v1706 = vmax.f32 %v960, %v1020
    %v1707 = vmax.f32 %v962, %v1022
    %v1708 = vmax.f32 %v1233, %v1293
    %v1709 = vmax.f32 %v1235, %v1295
    %v1710 = vmax.f32 %v1506, %v1566
    %v1711 = vmax.f32 %v1508, %v1568
    %v1712 = vmax.f32 %v966, %v1026
    %v1713 = vmax.f32 %v968, %v1028
    %v1714 = vmax.f32 %v1239, %v1299
    %v1715 = vmax.f32 %v1241, %v1301
    %v1716 = vmax.f32 %v1512, %v1572
    %v1717 = vmax.f32 %v1514, %v1574
    %v1718 = vmax.f32 %v970, %v1030
    %v1719 = vmax.f32 %v972, %v1032
    %v1720 = vmax.f32 %v1243, %v1303
    %v1721 = vmax.f32 %v1245, %v1305
    %v1722 = vmax.f32 %v1516, %v1576
    %v1723 = vmax.f32 %v1518, %v1578
    %v1724 = vld [vmem:[%s2] sm:$0x7]
    %v1725 = vmax.f32 %v1580, %v1583
    %v1726 = vmax.f32 %v1581, %v1584
    %v1727 = vmax.f32 %v1582, %v1585
    %v1728 = vmax.f32 %v1586, %v1589
    %v1729 = vmax.f32 %v1587, %v1590
    %v1730 = vmax.f32 %v1588, %v1591
    %v1731 = vmax.f32 %v1592, %v1595
    %v1732 = vmax.f32 %v1593, %v1596
    %v1733 = vmax.f32 %v1594, %v1597
    %v1734 = vmax.f32 %v1598, %v1601
    %v1735 = vmax.f32 %v1599, %v1602
    %v1736 = vmax.f32 %v1600, %v1603
    %v1737 = vmax.f32 %v1604, %v1607
    %v1738 = vmax.f32 %v1605, %v1608
    %v1739 = vmax.f32 %v1606, %v1609
    %v1740 = vmax.f32 %v1610, %v1613
    %v1741 = vmax.f32 %v1611, %v1614
    %v1742 = vmax.f32 %v1612, %v1615
    %v1743 = vmax.f32 %v1616, %v1619
    %v1744 = vmax.f32 %v1617, %v1620
    %v1745 = vmax.f32 %v1618, %v1621
    %v1746 = vmax.f32 %v1622, %v1625
    %v1747 = vmax.f32 %v1623, %v1626
    %v1748 = vmax.f32 %v1624, %v1627
    %v1749 = vmax.f32 %v1628, %v1631
    %v1750 = vmax.f32 %v1629, %v1632
    %v1751 = vmax.f32 %v1630, %v1633
    %v1752 = vmax.f32 %v1634, %v1637
    %v1753 = vmax.f32 %v1635, %v1638
    %v1754 = vmax.f32 %v1636, %v1639
    %v1755 = vmax.f32 %v1640, %v1643
    %v1756 = vmax.f32 %v1641, %v1644
    %v1757 = vmax.f32 %v1642, %v1645
    %v1758 = vmax.f32 %v1646, %v1649
    %v1759 = vmax.f32 %v1647, %v1650
    %v1760 = vmax.f32 %v1648, %v1651
    %v1762 = vlaneseq
    %v1763 = vshrl.u32 %v1762, 7
    %v1764 = vsub.s32 0, %v1763
    %v1765 = vrot.slane %v1724, %v1764
    %v1766 = vlaneseq
    %v1767 = vshrl.u32 %v1766, 7
    %v1768 = vsub.s32 1, %v1767
    %v1769 = vrot.slane %v1724, %v1768
    %v1770 = vlaneseq
    %v1771 = vshrl.u32 %v1770, 7
    %v1772 = vsub.s32 2, %v1771
    %v1773 = vrot.slane %v1724, %v1772
    %v1777 = vadd.f32 %v1725, %v1765
    %v1778 = vadd.f32 %v1726, %v1769
    %v1779 = vadd.f32 %v1727, %v1773
    %v1780 = vadd.f32 %v1728, %v1765
    %v1781 = vadd.f32 %v1729, %v1769
    %v1782 = vadd.f32 %v1730, %v1773
    %v1783 = vadd.f32 %v1731, %v1765
    %v1784 = vadd.f32 %v1732, %v1769
    %v1785 = vadd.f32 %v1733, %v1773
    %v1786 = vadd.f32 %v1734, %v1765
    %v1787 = vadd.f32 %v1735, %v1769
    %v1788 = vadd.f32 %v1736, %v1773
    %v1789 = vadd.f32 %v1737, %v1765
    %v1790 = vadd.f32 %v1738, %v1769
    %v1791 = vadd.f32 %v1739, %v1773
    %v1792 = vadd.f32 %v1740, %v1765
    %v1793 = vadd.f32 %v1741, %v1769
    %v1794 = vadd.f32 %v1742, %v1773
    %v1795 = vadd.f32 %v1743, %v1765
    %v1796 = vadd.f32 %v1744, %v1769
    %v1797 = vadd.f32 %v1745, %v1773
    %v1798 = vadd.f32 %v1746, %v1765
    %v1799 = vadd.f32 %v1747, %v1769
    %v1800 = vadd.f32 %v1748, %v1773
    %v1801 = vadd.f32 %v1749, %v1765
    %v1802 = vadd.f32 %v1750, %v1769
    %v1803 = vadd.f32 %v1751, %v1773
    %v1804 = vadd.f32 %v1752, %v1765
    %v1805 = vadd.f32 %v1753, %v1769
    %v1806 = vadd.f32 %v1754, %v1773
    %v1807 = vadd.f32 %v1755, %v1765
    %v1808 = vadd.f32 %v1756, %v1769
    %v1809 = vadd.f32 %v1757, %v1773
    %v1810 = vadd.f32 %v1758, %v1765
    %v1811 = vadd.f32 %v1759, %v1769
    %v1812 = vadd.f32 %v1760, %v1773
    %v1813 = vmax.f32 %v1777, 0.0
    %v1814 = vmax.f32 %v1778, 0.0
    %v1815 = vmax.f32 %v1779, 0.0
    %v1816 = vmax.f32 %v1780, 0.0
    %v1817 = vmax.f32 %v1781, 0.0
    %v1818 = vmax.f32 %v1782, 0.0
    %v1819 = vmax.f32 %v1783, 0.0
    %v1820 = vmax.f32 %v1784, 0.0
    %v1821 = vmax.f32 %v1785, 0.0
    %v1822 = vmax.f32 %v1786, 0.0
    %v1823 = vmax.f32 %v1787, 0.0
    %v1824 = vmax.f32 %v1788, 0.0
    %v1825 = vmax.f32 %v1789, 0.0
    %v1826 = vmax.f32 %v1790, 0.0
    %v1827 = vmax.f32 %v1791, 0.0
    %v1828 = vmax.f32 %v1792, 0.0
    %v1829 = vmax.f32 %v1793, 0.0
    %v1830 = vmax.f32 %v1794, 0.0
    %v1831 = vmax.f32 %v1795, 0.0
    %v1832 = vmax.f32 %v1796, 0.0
    %v1833 = vmax.f32 %v1797, 0.0
    %v1834 = vmax.f32 %v1798, 0.0
    %v1835 = vmax.f32 %v1799, 0.0
    %v1836 = vmax.f32 %v1800, 0.0
    %v1837 = vmax.f32 %v1801, 0.0
    %v1838 = vmax.f32 %v1802, 0.0
    %v1839 = vmax.f32 %v1803, 0.0
    %v1840 = vmax.f32 %v1804, 0.0
    %v1841 = vmax.f32 %v1805, 0.0
    %v1842 = vmax.f32 %v1806, 0.0
    %v1843 = vmax.f32 %v1807, 0.0
    %v1844 = vmax.f32 %v1808, 0.0
    %v1845 = vmax.f32 %v1809, 0.0
    %v1846 = vmax.f32 %v1810, 0.0
    %v1847 = vmax.f32 %v1811, 0.0
    %v1848 = vmax.f32 %v1812, 0.0
    %v1849 = vmax.f32 %v1652, %v1655
    %v1850 = vmax.f32 %v1653, %v1656
    %v1851 = vmax.f32 %v1654, %v1657
    %v1852 = vmax.f32 %v1658, %v1661
    %v1853 = vmax.f32 %v1659, %v1662
    %v1854 = vmax.f32 %v1660, %v1663
    %v1855 = vmax.f32 %v1664, %v1667
    %v1856 = vmax.f32 %v1665, %v1668
    %v1857 = vmax.f32 %v1666, %v1669
    %v1858 = vmax.f32 %v1670, %v1673
    %v1859 = vmax.f32 %v1671, %v1674
    %v1860 = vmax.f32 %v1672, %v1675
    %v1861 = vmax.f32 %v1676, %v1679
    %v1862 = vmax.f32 %v1677, %v1680
    %v1863 = vmax.f32 %v1678, %v1681
    %v1864 = vmax.f32 %v1682, %v1685
    %v1865 = vmax.f32 %v1683, %v1686
    %v1866 = vmax.f32 %v1684, %v1687
    %v1867 = vmax.f32 %v1688, %v1691
    %v1868 = vmax.f32 %v1689, %v1692
    %v1869 = vmax.f32 %v1690, %v1693
    %v1870 = vmax.f32 %v1694, %v1697
    %v1871 = vmax.f32 %v1695, %v1698
    %v1872 = vmax.f32 %v1696, %v1699
    %v1873 = vmax.f32 %v1700, %v1703
    %v1874 = vmax.f32 %v1701, %v1704
    %v1875 = vmax.f32 %v1702, %v1705
    %v1876 = vmax.f32 %v1706, %v1709
    %v1877 = vmax.f32 %v1707, %v1710
    %v1878 = vmax.f32 %v1708, %v1711
    %v1879 = vmax.f32 %v1712, %v1715
    %v1880 = vmax.f32 %v1713, %v1716
    %v1881 = vmax.f32 %v1714, %v1717
    %v1882 = vmax.f32 %v1718, %v1721
    %v1883 = vmax.f32 %v1719, %v1722
    %v1884 = vmax.f32 %v1720, %v1723
    %v1885 = vadd.f32 %v1849, %v1765
    %v1886 = vadd.f32 %v1850, %v1769
    %v1887 = vadd.f32 %v1851, %v1773
    %v1888 = vadd.f32 %v1852, %v1765
    %v1889 = vadd.f32 %v1853, %v1769
    %v1890 = vadd.f32 %v1854, %v1773
    %v1891 = vadd.f32 %v1855, %v1765
    %v1892 = vadd.f32 %v1856, %v1769
    %v1893 = vadd.f32 %v1857, %v1773
    %v1894 = vadd.f32 %v1858, %v1765
    %v1895 = vadd.f32 %v1859, %v1769
    %v1896 = vadd.f32 %v1860, %v1773
    %v1897 = vadd.f32 %v1861, %v1765
    %v1898 = vadd.f32 %v1862, %v1769
    %v1899 = vadd.f32 %v1863, %v1773
    %v1900 = vadd.f32 %v1864, %v1765
    %v1901 = vadd.f32 %v1865, %v1769
    %v1902 = vadd.f32 %v1866, %v1773
    %v1903 = vadd.f32 %v1867, %v1765
    %v1904 = vadd.f32 %v1868, %v1769
    %v1905 = vadd.f32 %v1869, %v1773
    %v1906 = vadd.f32 %v1870, %v1765
    %v1907 = vadd.f32 %v1871, %v1769
    %v1908 = vadd.f32 %v1872, %v1773
    %v1909 = vadd.f32 %v1873, %v1765
    %v1910 = vadd.f32 %v1874, %v1769
    %v1911 = vadd.f32 %v1875, %v1773
    %v1912 = vadd.f32 %v1876, %v1765
    %v1913 = vadd.f32 %v1877, %v1769
    %v1914 = vadd.f32 %v1878, %v1773
    %v1915 = vadd.f32 %v1879, %v1765
    %v1916 = vadd.f32 %v1880, %v1769
    %v1917 = vadd.f32 %v1881, %v1773
    %v1918 = vadd.f32 %v1882, %v1765
    %v1919 = vadd.f32 %v1883, %v1769
    %v1920 = vadd.f32 %v1884, %v1773
    %v1921 = vmax.f32 %v1885, 0.0
    %v1922 = vmax.f32 %v1886, 0.0
    %v1923 = vmax.f32 %v1887, 0.0
    %v1924 = vmax.f32 %v1888, 0.0
    %v1925 = vmax.f32 %v1889, 0.0
    %v1926 = vmax.f32 %v1890, 0.0
    %v1927 = vmax.f32 %v1891, 0.0
    %v1928 = vmax.f32 %v1892, 0.0
    %v1929 = vmax.f32 %v1893, 0.0
    %v1930 = vmax.f32 %v1894, 0.0
    %v1931 = vmax.f32 %v1895, 0.0
    %v1932 = vmax.f32 %v1896, 0.0
    %v1933 = vmax.f32 %v1897, 0.0
    %v1934 = vmax.f32 %v1898, 0.0
    %v1935 = vmax.f32 %v1899, 0.0
    %v1936 = vmax.f32 %v1900, 0.0
    %v1937 = vmax.f32 %v1901, 0.0
    %v1938 = vmax.f32 %v1902, 0.0
    %v1939 = vmax.f32 %v1903, 0.0
    %v1940 = vmax.f32 %v1904, 0.0
    %v1941 = vmax.f32 %v1905, 0.0
    %v1942 = vmax.f32 %v1906, 0.0
    %v1943 = vmax.f32 %v1907, 0.0
    %v1944 = vmax.f32 %v1908, 0.0
    %v1945 = vmax.f32 %v1909, 0.0
    %v1946 = vmax.f32 %v1910, 0.0
    %v1947 = vmax.f32 %v1911, 0.0
    %v1948 = vmax.f32 %v1912, 0.0
    %v1949 = vmax.f32 %v1913, 0.0
    %v1950 = vmax.f32 %v1914, 0.0
    %v1951 = vmax.f32 %v1915, 0.0
    %v1952 = vmax.f32 %v1916, 0.0
    %v1953 = vmax.f32 %v1917, 0.0
    %v1954 = vmax.f32 %v1918, 0.0
    %v1955 = vmax.f32 %v1919, 0.0
    %v1956 = vmax.f32 %v1920, 0.0
    %1957 = vst [vmem:[%s9] sm:$0xff] %v1813
    %1958 = vst [vmem:[%s9 + $0x8] sm:$0xff] %v1814
    %1959 = vst [vmem:[%s9 + $0x10] sm:$0xff] %v1815
    %1960 = vst [vmem:[%s9 + $0x18] sm:$0xff] %v1816
    %1961 = vst [vmem:[%s9 + $0x20] sm:$0xff] %v1817
    %1962 = vst [vmem:[%s9 + $0x28] sm:$0xff] %v1818
    %s1963 = scalar_lea.vmem %s9, 288
    %1964 = vst [vmem:[%s1963] sm:$0xff] %v1921
    %1965 = vst [vmem:[%s1963 + $0x8] sm:$0xff] %v1922
    %1966 = vst [vmem:[%s1963 + $0x10] sm:$0xff] %v1923
    %1967 = vst [vmem:[%s1963 + $0x18] sm:$0xff] %v1924
    %1968 = vst [vmem:[%s1963 + $0x20] sm:$0xff] %v1925
    %1969 = vst [vmem:[%s1963 + $0x28] sm:$0xff] %v1926
    %s1970 = scalar_lea.vmem %s9, 48
    %1971 = vst [vmem:[%s1970] sm:$0xff] %v1819
    %1972 = vst [vmem:[%s1970 + $0x8] sm:$0xff] %v1820
    %1973 = vst [vmem:[%s1970 + $0x10] sm:$0xff] %v1821
    %1974 = vst [vmem:[%s1970 + $0x18] sm:$0xff] %v1822
    %1975 = vst [vmem:[%s1970 + $0x20] sm:$0xff] %v1823
    %1976 = vst [vmem:[%s1970 + $0x28] sm:$0xff] %v1824
    %s1977 = scalar_lea.vmem %s9, 336
    %1978 = vst [vmem:[%s1977] sm:$0xff] %v1927
    %1979 = vst [vmem:[%s1977 + $0x8] sm:$0xff] %v1928
    %1980 = vst [vmem:[%s1977 + $0x10] sm:$0xff] %v1929
    %1981 = vst [vmem:[%s1977 + $0x18] sm:$0xff] %v1930
    %1982 = vst [vmem:[%s1977 + $0x20] sm:$0xff] %v1931
    %1983 = vst [vmem:[%s1977 + $0x28] sm:$0xff] %v1932
    %s1984 = scalar_lea.vmem %s9, 96
    %1985 = vst [vmem:[%s1984] sm:$0xff] %v1825
    %1986 = vst [vmem:[%s1984 + $0x8] sm:$0xff] %v1826
    %1987 = vst [vmem:[%s1984 + $0x10] sm:$0xff] %v1827
    %1988 = vst [vmem:[%s1984 + $0x18] sm:$0xff] %v1828
    %1989 = vst [vmem:[%s1984 + $0x20] sm:$0xff] %v1829
    %1990 = vst [vmem:[%s1984 + $0x28] sm:$0xff] %v1830
    %s1991 = scalar_lea.vmem %s9, 384
    %1992 = vst [vmem:[%s1991] sm:$0xff] %v1933
    %1993 = vst [vmem:[%s1991 + $0x8] sm:$0xff] %v1934
    %1994 = vst [vmem:[%s1991 + $0x10] sm:$0xff] %v1935
    %1995 = vst [vmem:[%s1991 + $0x18] sm:$0xff] %v1936
    %1996 = vst [vmem:[%s1991 + $0x20] sm:$0xff] %v1937
    %1997 = vst [vmem:[%s1991 + $0x28] sm:$0xff] %v1938
    %s1998 = scalar_lea.vmem %s9, 144
    %1999 = vst [vmem:[%s1998] sm:$0xff] %v1831
    %2000 = vst [vmem:[%s1998 + $0x8] sm:$0xff] %v1832
    %2001 = vst [vmem:[%s1998 + $0x10] sm:$0xff] %v1833
    %2002 = vst [vmem:[%s1998 + $0x18] sm:$0xff] %v1834
    %2003 = vst [vmem:[%s1998 + $0x20] sm:$0xff] %v1835
    %2004 = vst [vmem:[%s1998 + $0x28] sm:$0xff] %v1836
    %s2005 = scalar_lea.vmem %s9, 432
    %2006 = vst [vmem:[%s2005] sm:$0xff] %v1939
    %2007 = vst [vmem:[%s2005 + $0x8] sm:$0xff] %v1940
    %2008 = vst [vmem:[%s2005 + $0x10] sm:$0xff] %v1941
    %2009 = vst [vmem:[%s2005 + $0x18] sm:$0xff] %v1942
    %2010 = vst [vmem:[%s2005 + $0x20] sm:$0xff] %v1943
    %2011 = vst [vmem:[%s2005 + $0x28] sm:$0xff] %v1944
    %s2012 = scalar_lea.vmem %s9, 192
    %2013 = vst [vmem:[%s2012] sm:$0xff] %v1837
    %2014 = vst [vmem:[%s2012 + $0x8] sm:$0xff] %v1838
    %2015 = vst [vmem:[%s2012 + $0x10] sm:$0xff] %v1839
    %2016 = vst [vmem:[%s2012 + $0x18] sm:$0xff] %v1840
    %2017 = vst [vmem:[%s2012 + $0x20] sm:$0xff] %v1841
    %2018 = vst [vmem:[%s2012 + $0x28] sm:$0xff] %v1842
    %s2019 = scalar_lea.vmem %s9, 480
    %2020 = vst [vmem:[%s2019] sm:$0xff] %v1945
    %2021 = vst [vmem:[%s2019 + $0x8] sm:$0xff] %v1946
    %2022 = vst [vmem:[%s2019 + $0x10] sm:$0xff] %v1947
    %2023 = vst [vmem:[%s2019 + $0x18] sm:$0xff] %v1948
    %2024 = vst [vmem:[%s2019 + $0x20] sm:$0xff] %v1949
    %2025 = vst [vmem:[%s2019 + $0x28] sm:$0xff] %v1950
    %s2026 = scalar_lea.vmem %s9, 240
    %2027 = vst [vmem:[%s2026] sm:$0xff] %v1843
    %2028 = vst [vmem:[%s2026 + $0x8] sm:$0xff] %v1844
    %2029 = vst [vmem:[%s2026 + $0x10] sm:$0xff] %v1845
    %2030 = vst [vmem:[%s2026 + $0x18] sm:$0xff] %v1846
    %2031 = vst [vmem:[%s2026 + $0x20] sm:$0xff] %v1847
    %2032 = vst [vmem:[%s2026 + $0x28] sm:$0xff] %v1848
    %s2033 = scalar_lea.vmem %s9, 528
    %2034 = vst [vmem:[%s2033] sm:$0xff] %v1951
    %2035 = vst [vmem:[%s2033 + $0x8] sm:$0xff] %v1952
    %2036 = vst [vmem:[%s2033 + $0x10] sm:$0xff] %v1953
    %2037 = vst [vmem:[%s2033 + $0x18] sm:$0xff] %v1954
    %2038 = vst [vmem:[%s2033 + $0x20] sm:$0xff] %v1955
    %2039 = vst [vmem:[%s2033 + $0x28] sm:$0xff] %v1956
    %v2040 = vpack.c.bf16 %v1816, %v1813
    %v2041 = vpack.c.bf16 %v1817, %v1814
    %v2042 = vpack.c.bf16 %v1818, %v1815
    %v2043 = vpack.c.bf16 %v1822, %v1819
    %v2044 = vpack.c.bf16 %v1823, %v1820
    %v2045 = vpack.c.bf16 %v1824, %v1821
    %v2046 = vpack.c.bf16 %v1828, %v1825
    %v2047 = vpack.c.bf16 %v1829, %v1826
    %v2048 = vpack.c.bf16 %v1830, %v1827
    %v2049 = vpack.c.bf16 %v1834, %v1831
    %v2050 = vpack.c.bf16 %v1835, %v1832
    %v2051 = vpack.c.bf16 %v1836, %v1833
    %v2052 = vpack.c.bf16 %v1840, %v1837
    %v2053 = vpack.c.bf16 %v1841, %v1838
    %v2054 = vpack.c.bf16 %v1842, %v1839
    %v2055 = vpack.c.bf16 %v1846, %v1843
    %v2056 = vpack.c.bf16 %v1847, %v1844
    %v2057 = vpack.c.bf16 %v1848, %v1845
    %v2058 = vpack.c.bf16 %v1924, %v1921
    %v2059 = vpack.c.bf16 %v1925, %v1922
    %v2060 = vpack.c.bf16 %v1926, %v1923
    %v2061 = vpack.c.bf16 %v1930, %v1927
    %v2062 = vpack.c.bf16 %v1931, %v1928
    %v2063 = vpack.c.bf16 %v1932, %v1929
    %v2064 = vpack.c.bf16 %v1936, %v1933
    %v2065 = vpack.c.bf16 %v1937, %v1934
    %v2066 = vpack.c.bf16 %v1938, %v1935
    %v2067 = vpack.c.bf16 %v1942, %v1939
    %v2068 = vpack.c.bf16 %v1943, %v1940
    %v2069 = vpack.c.bf16 %v1944, %v1941
    %v2070 = vpack.c.bf16 %v1948, %v1945
    %v2071 = vpack.c.bf16 %v1949, %v1946
    %v2072 = vpack.c.bf16 %v1950, %v1947
    %v2073 = vpack.c.bf16 %v1954, %v1951
    %v2074 = vpack.c.bf16 %v1955, %v1952
    %v2075 = vpack.c.bf16 %v1956, %v1953
    %v2076 = vld [vmem:[%s3] sm:$0xff]
    %v2077 = vld [vmem:[%s3 + $0x8] sm:$0xff]
    %v2078 = vld [vmem:[%s3 + $0x10] sm:$0xff]
    %v2079 = vld [vmem:[%s3 + $0x18] sm:$0xff]
    %v2080 = vld [vmem:[%s3 + $0x20] sm:$0xff]
    %v2081 = vld [vmem:[%s3 + $0x28] sm:$0xff]
    %v2082 = vld [vmem:[%s3 + $0x30] sm:$0xff]
    %v2083 = vld [vmem:[%s3 + $0x38] sm:$0xff]
    %v2084 = vld [vmem:[%s3 + $0x40] sm:$0xff]
    %v2085 = vld [vmem:[%s3 + $0x48] sm:$0xff]
    %v2086 = vld [vmem:[%s3 + $0x50] sm:$0xff]
    %v2087 = vld [vmem:[%s3 + $0x58] sm:$0xff]
    %v2088 = vld [vmem:[%s3 + $0x60] sm:$0xff]
    %v2089 = vld [vmem:[%s3 + $0x68] sm:$0xff]
    %v2090 = vld [vmem:[%s3 + $0x70] sm:$0xff]
    %v2091 = vld [vmem:[%s3 + $0x78] sm:$0xff]
    %v2092 = vld [vmem:[%s3 + $0x80] sm:$0xff]
    %v2093 = vld [vmem:[%s3 + $0x88] sm:$0xff]
    %v2094 = vld [vmem:[%s3 + $0x90] sm:$0xff]
    %v2095 = vld [vmem:[%s3 + $0x98] sm:$0xff]
    %v2096 = vld [vmem:[%s3 + $0xa0] sm:$0xff]
    %v2097 = vld [vmem:[%s3 + $0xa8] sm:$0xff]
    %v2098 = vld [vmem:[%s3 + $0xb0] sm:$0xff]
    %v2099 = vld [vmem:[%s3 + $0xb8] sm:$0xff]
    %v2100 = vld [vmem:[%s3 + $0xc0] sm:$0xff]
    %v2101 = vld [vmem:[%s3 + $0xc8] sm:$0xff]
    %v2102 = vld [vmem:[%s3 + $0xd0] sm:$0xff]
    %v2103 = vld [vmem:[%s3 + $0xd8] sm:$0xff]
    %v2104 = vld [vmem:[%s3 + $0xe0] sm:$0xff]
    %v2105 = vld [vmem:[%s3 + $0xe8] sm:$0xff]
    %v2106 = vld [vmem:[%s3 + $0xf0] sm:$0xff]
    %v2107 = vld [vmem:[%s3 + $0xf8] sm:$0xff]
    %v2108 = vld [vmem:[%s3 + $0x100] sm:$0xff]
    %v2109 = vld [vmem:[%s3 + $0x108] sm:$0xff]
    %v2110 = vld [vmem:[%s3 + $0x110] sm:$0xff]
    %v2111 = vld [vmem:[%s3 + $0x118] sm:$0xff]
    %v2112 = vld [vmem:[%s3 + $0x120] sm:$0xff]
    %v2113 = vld [vmem:[%s3 + $0x128] sm:$0xff]
    %v2114 = vld [vmem:[%s3 + $0x130] sm:$0xff]
    %v2115 = vld [vmem:[%s3 + $0x138] sm:$0xff]
    %v2116 = vld [vmem:[%s3 + $0x140] sm:$0xff]
    %v2117 = vld [vmem:[%s3 + $0x148] sm:$0xff]
    %v2118 = vld [vmem:[%s3 + $0x150] sm:$0xff]
    %v2119 = vld [vmem:[%s3 + $0x158] sm:$0xff]
    %v2120 = vld [vmem:[%s3 + $0x160] sm:$0xff]
    %v2121 = vld [vmem:[%s3 + $0x168] sm:$0xff]
    %v2122 = vld [vmem:[%s3 + $0x170] sm:$0xff]
    %v2123 = vld [vmem:[%s3 + $0x178] sm:$0xff]
    %v2124 = vld [vmem:[%s3 + $0x180] sm:$0xff]
    %v2125 = vld [vmem:[%s3 + $0x188] sm:$0xff]
    %v2126 = vld [vmem:[%s3 + $0x190] sm:$0xff]
    %v2127 = vld [vmem:[%s3 + $0x198] sm:$0xff]
    %v2128 = vld [vmem:[%s3 + $0x1a0] sm:$0xff]
    %v2129 = vld [vmem:[%s3 + $0x1a8] sm:$0xff]
    %v2130 = vld [vmem:[%s3 + $0x1b0] sm:$0xff]
    %v2131 = vld [vmem:[%s3 + $0x1b8] sm:$0xff]
    %v2132 = vld [vmem:[%s3 + $0x1c0] sm:$0xff]
    %v2133 = vld [vmem:[%s3 + $0x1c8] sm:$0xff]
    %v2134 = vld [vmem:[%s3 + $0x1d0] sm:$0xff]
    %v2135 = vld [vmem:[%s3 + $0x1d8] sm:$0xff]
    %v2136 = vld [vmem:[%s3 + $0x1e0] sm:$0xff]
    %v2137 = vld [vmem:[%s3 + $0x1e8] sm:$0xff]
    %v2138 = vld [vmem:[%s3 + $0x1f0] sm:$0xff]
    %v2139 = vld [vmem:[%s3 + $0x1f8] sm:$0xff]
    %v2140 = vld [vmem:[%s3 + $0x200] sm:$0xff]
    %v2141 = vld [vmem:[%s3 + $0x208] sm:$0xff]
    %v2142 = vld [vmem:[%s3 + $0x210] sm:$0xff]
    %v2143 = vld [vmem:[%s3 + $0x218] sm:$0xff]
    %v2144 = vld [vmem:[%s3 + $0x220] sm:$0xff]
    %v2145 = vld [vmem:[%s3 + $0x228] sm:$0xff]
    %v2146 = vld [vmem:[%s3 + $0x230] sm:$0xff]
    %v2147 = vld [vmem:[%s3 + $0x238] sm:$0xff]
    %v2148 = vld [vmem:[%s3 + $0x240] sm:$0xff]
    %v2149 = vld [vmem:[%s3 + $0x248] sm:$0xff]
    %v2150 = vld [vmem:[%s3 + $0x250] sm:$0xff]
    %v2151 = vld [vmem:[%s3 + $0x258] sm:$0xff]
    %v2152 = vld [vmem:[%s3 + $0x260] sm:$0xff]
    %v2153 = vld [vmem:[%s3 + $0x268] sm:$0xff]
    %v2154 = vld [vmem:[%s3 + $0x270] sm:$0xff]
    %v2155 = vld [vmem:[%s3 + $0x278] sm:$0xff]
    %v2156 = vld [vmem:[%s3 + $0x280] sm:$0xff]
    %v2157 = vld [vmem:[%s3 + $0x288] sm:$0xff]
    %v2158 = vld [vmem:[%s3 + $0x290] sm:$0xff]
    %v2159 = vld [vmem:[%s3 + $0x298] sm:$0xff]
    %v2160 = vld [vmem:[%s3 + $0x2a0] sm:$0xff]
    %v2161 = vld [vmem:[%s3 + $0x2a8] sm:$0xff]
    %v2162 = vld [vmem:[%s3 + $0x2b0] sm:$0xff]
    %v2163 = vld [vmem:[%s3 + $0x2b8] sm:$0xff]
    %v2164 = vld [vmem:[%s3 + $0x2c0] sm:$0xff]
    %v2165 = vld [vmem:[%s3 + $0x2c8] sm:$0xff]
    %v2166 = vld [vmem:[%s3 + $0x2d0] sm:$0xff]
    %v2167 = vld [vmem:[%s3 + $0x2d8] sm:$0xff]
    %v2168 = vld [vmem:[%s3 + $0x2e0] sm:$0xff]
    %v2169 = vld [vmem:[%s3 + $0x2e8] sm:$0xff]
    %v2170 = vld [vmem:[%s3 + $0x2f0] sm:$0xff]
    %v2171 = vld [vmem:[%s3 + $0x2f8] sm:$0xff]
    %v2172 = vld [vmem:[%s3 + $0x300] sm:$0xff]
    %v2173 = vld [vmem:[%s3 + $0x308] sm:$0xff]
    %v2174 = vld [vmem:[%s3 + $0x310] sm:$0xff]
    %v2175 = vld [vmem:[%s3 + $0x318] sm:$0xff]
    %v2176 = vld [vmem:[%s3 + $0x320] sm:$0xff]
    %v2177 = vld [vmem:[%s3 + $0x328] sm:$0xff]
    %v2178 = vld [vmem:[%s3 + $0x330] sm:$0xff]
    %v2179 = vld [vmem:[%s3 + $0x338] sm:$0xff]
    %v2180 = vld [vmem:[%s3 + $0x340] sm:$0xff]
    %v2181 = vld [vmem:[%s3 + $0x348] sm:$0xff]
    %v2182 = vld [vmem:[%s3 + $0x350] sm:$0xff]
    %v2183 = vld [vmem:[%s3 + $0x358] sm:$0xff]
    %v2184 = vld [vmem:[%s3 + $0x360] sm:$0xff]
    %v2185 = vld [vmem:[%s3 + $0x368] sm:$0xff]
    %v2186 = vld [vmem:[%s3 + $0x370] sm:$0xff]
    %v2187 = vld [vmem:[%s3 + $0x378] sm:$0xff]
    %v2188 = vld [vmem:[%s3 + $0x380] sm:$0xff]
    %v2189 = vld [vmem:[%s3 + $0x388] sm:$0xff]
    %v2190 = vld [vmem:[%s3 + $0x390] sm:$0xff]
    %v2191 = vld [vmem:[%s3 + $0x398] sm:$0xff]
    %v2192 = vld [vmem:[%s3 + $0x3a0] sm:$0xff]
    %v2193 = vld [vmem:[%s3 + $0x3a8] sm:$0xff]
    %v2194 = vld [vmem:[%s3 + $0x3b0] sm:$0xff]
    %v2195 = vld [vmem:[%s3 + $0x3b8] sm:$0xff]
    %v2196 = vld [vmem:[%s3 + $0x3c0] sm:$0xff]
    %v2197 = vld [vmem:[%s3 + $0x3c8] sm:$0xff]
    %v2198 = vld [vmem:[%s3 + $0x3d0] sm:$0xff]
    %v2199 = vld [vmem:[%s3 + $0x3d8] sm:$0xff]
    %v2200 = vld [vmem:[%s3 + $0x3e0] sm:$0xff]
    %v2201 = vld [vmem:[%s3 + $0x3e8] sm:$0xff]
    %v2202 = vld [vmem:[%s3 + $0x3f0] sm:$0xff]
    %v2203 = vld [vmem:[%s3 + $0x3f8] sm:$0xff]
    %v2204 = vld [vmem:[%s3 + $0x400] sm:$0xff]
    %v2205 = vld [vmem:[%s3 + $0x408] sm:$0xff]
    %v2206 = vld [vmem:[%s3 + $0x410] sm:$0xff]
    %v2207 = vld [vmem:[%s3 + $0x418] sm:$0xff]
    %v2208 = vld [vmem:[%s3 + $0x420] sm:$0xff]
    %v2209 = vld [vmem:[%s3 + $0x428] sm:$0xff]
    %v2210 = vld [vmem:[%s3 + $0x430] sm:$0xff]
    %v2211 = vld [vmem:[%s3 + $0x438] sm:$0xff]
    %v2212 = vld [vmem:[%s3 + $0x440] sm:$0xff]
    %v2213 = vld [vmem:[%s3 + $0x448] sm:$0xff]
    %v2214 = vld [vmem:[%s3 + $0x450] sm:$0xff]
    %v2215 = vld [vmem:[%s3 + $0x458] sm:$0xff]
    %v2216 = vld [vmem:[%s3 + $0x460] sm:$0xff]
    %v2217 = vld [vmem:[%s3 + $0x468] sm:$0xff]
    %v2218 = vld [vmem:[%s3 + $0x470] sm:$0xff]
    %v2219 = vld [vmem:[%s3 + $0x478] sm:$0xff]
    %v2220 = vld [vmem:[%s3 + $0x480] sm:$0xff]
    %v2221 = vld [vmem:[%s3 + $0x488] sm:$0xff]
    %v2222 = vld [vmem:[%s3 + $0x490] sm:$0xff]
    %v2223 = vld [vmem:[%s3 + $0x498] sm:$0xff]
    %v2224 = vld [vmem:[%s3 + $0x4a0] sm:$0xff]
    %v2225 = vld [vmem:[%s3 + $0x4a8] sm:$0xff]
    %v2226 = vld [vmem:[%s3 + $0x4b0] sm:$0xff]
    %v2227 = vld [vmem:[%s3 + $0x4b8] sm:$0xff]
    %v2228 = vld [vmem:[%s3 + $0x4c0] sm:$0xff]
    %v2229 = vld [vmem:[%s3 + $0x4c8] sm:$0xff]
    %v2230 = vld [vmem:[%s3 + $0x4d0] sm:$0xff]
    %v2231 = vld [vmem:[%s3 + $0x4d8] sm:$0xff]
    %v2232 = vld [vmem:[%s3 + $0x4e0] sm:$0xff]
    %v2233 = vld [vmem:[%s3 + $0x4e8] sm:$0xff]
    %v2234 = vld [vmem:[%s3 + $0x4f0] sm:$0xff]
    %v2235 = vld [vmem:[%s3 + $0x4f8] sm:$0xff]
    %v2236 = vld [vmem:[%s3 + $0x500] sm:$0xff]
    %v2237 = vld [vmem:[%s3 + $0x508] sm:$0xff]
    %v2238 = vld [vmem:[%s3 + $0x510] sm:$0xff]
    %v2239 = vld [vmem:[%s3 + $0x518] sm:$0xff]
    %v2240 = vld [vmem:[%s3 + $0x520] sm:$0xff]
    %v2241 = vld [vmem:[%s3 + $0x528] sm:$0xff]
    %v2242 = vld [vmem:[%s3 + $0x530] sm:$0xff]
    %v2243 = vld [vmem:[%s3 + $0x538] sm:$0xff]
    %v2244 = vld [vmem:[%s3 + $0x540] sm:$0xff]
    %v2245 = vld [vmem:[%s3 + $0x548] sm:$0xff]
    %v2246 = vld [vmem:[%s3 + $0x550] sm:$0xff]
    %v2247 = vld [vmem:[%s3 + $0x558] sm:$0xff]
    %v2248 = vld [vmem:[%s3 + $0x560] sm:$0xff]
    %v2249 = vld [vmem:[%s3 + $0x568] sm:$0xff]
    %v2250 = vld [vmem:[%s3 + $0x570] sm:$0xff]
    %v2251 = vld [vmem:[%s3 + $0x578] sm:$0xff]
    %v2252 = vld [vmem:[%s3 + $0x580] sm:$0xff]
    %v2253 = vld [vmem:[%s3 + $0x588] sm:$0xff]
    %v2254 = vld [vmem:[%s3 + $0x590] sm:$0xff]
    %v2255 = vld [vmem:[%s3 + $0x598] sm:$0xff]
    %v2256 = vld [vmem:[%s3 + $0x5a0] sm:$0xff]
    %v2257 = vld [vmem:[%s3 + $0x5a8] sm:$0xff]
    %v2258 = vld [vmem:[%s3 + $0x5b0] sm:$0xff]
    %v2259 = vld [vmem:[%s3 + $0x5b8] sm:$0xff]
    %v2260 = vld [vmem:[%s3 + $0x5c0] sm:$0xff]
    %v2261 = vld [vmem:[%s3 + $0x5c8] sm:$0xff]
    %v2262 = vld [vmem:[%s3 + $0x5d0] sm:$0xff]
    %v2263 = vld [vmem:[%s3 + $0x5d8] sm:$0xff]
    %v2264 = vld [vmem:[%s3 + $0x5e0] sm:$0xff]
    %v2265 = vld [vmem:[%s3 + $0x5e8] sm:$0xff]
    %v2266 = vld [vmem:[%s3 + $0x5f0] sm:$0xff]
    %v2267 = vld [vmem:[%s3 + $0x5f8] sm:$0xff]
    %v2268 = vld [vmem:[%s3 + $0x600] sm:$0xff]
    %v2269 = vld [vmem:[%s3 + $0x608] sm:$0xff]
    %v2270 = vld [vmem:[%s3 + $0x610] sm:$0xff]
    %v2271 = vld [vmem:[%s3 + $0x618] sm:$0xff]
    %v2272 = vld [vmem:[%s3 + $0x620] sm:$0xff]
    %v2273 = vld [vmem:[%s3 + $0x628] sm:$0xff]
    %v2274 = vld [vmem:[%s3 + $0x630] sm:$0xff]
    %v2275 = vld [vmem:[%s3 + $0x638] sm:$0xff]
    %v2276 = vld [vmem:[%s3 + $0x640] sm:$0xff]
    %v2277 = vld [vmem:[%s3 + $0x648] sm:$0xff]
    %v2278 = vld [vmem:[%s3 + $0x650] sm:$0xff]
    %v2279 = vld [vmem:[%s3 + $0x658] sm:$0xff]
    %v2280 = vld [vmem:[%s3 + $0x660] sm:$0xff]
    %v2281 = vld [vmem:[%s3 + $0x668] sm:$0xff]
    %v2282 = vld [vmem:[%s3 + $0x670] sm:$0xff]
    %v2283 = vld [vmem:[%s3 + $0x678] sm:$0xff]
    %v2284 = vld [vmem:[%s3 + $0x680] sm:$0xff]
    %v2285 = vld [vmem:[%s3 + $0x688] sm:$0xff]
    %v2286 = vld [vmem:[%s3 + $0x690] sm:$0xff]
    %v2287 = vld [vmem:[%s3 + $0x698] sm:$0xff]
    %v2288 = vld [vmem:[%s3 + $0x6a0] sm:$0xff]
    %v2289 = vld [vmem:[%s3 + $0x6a8] sm:$0xff]
    %v2290 = vld [vmem:[%s3 + $0x6b0] sm:$0xff]
    %v2291 = vld [vmem:[%s3 + $0x6b8] sm:$0xff]
    %v2292 = vld [vmem:[%s3 + $0x6c0] sm:$0xff]
    %v2293 = vld [vmem:[%s3 + $0x6c8] sm:$0xff]
    %v2294 = vld [vmem:[%s3 + $0x6d0] sm:$0xff]
    %v2295 = vld [vmem:[%s3 + $0x6d8] sm:$0xff]
    %v2296 = vld [vmem:[%s3 + $0x6e0] sm:$0xff]
    %v2297 = vld [vmem:[%s3 + $0x6e8] sm:$0xff]
    %v2298 = vld [vmem:[%s3 + $0x6f0] sm:$0xff]
    %v2299 = vld [vmem:[%s3 + $0x6f8] sm:$0xff]
    %v2300 = vld [vmem:[%s3 + $0x700] sm:$0xff]
    %v2301 = vld [vmem:[%s3 + $0x708] sm:$0xff]
    %v2302 = vld [vmem:[%s3 + $0x710] sm:$0xff]
    %v2303 = vld [vmem:[%s3 + $0x718] sm:$0xff]
    %v2304 = vld [vmem:[%s3 + $0x720] sm:$0xff]
    %v2305 = vld [vmem:[%s3 + $0x728] sm:$0xff]
    %v2306 = vld [vmem:[%s3 + $0x730] sm:$0xff]
    %v2307 = vld [vmem:[%s3 + $0x738] sm:$0xff]
    %v2308 = vld [vmem:[%s3 + $0x740] sm:$0xff]
    %v2309 = vld [vmem:[%s3 + $0x748] sm:$0xff]
    %v2310 = vld [vmem:[%s3 + $0x750] sm:$0xff]
    %v2311 = vld [vmem:[%s3 + $0x758] sm:$0xff]
    %v2312 = vld [vmem:[%s3 + $0x760] sm:$0xff]
    %v2313 = vld [vmem:[%s3 + $0x768] sm:$0xff]
    %v2314 = vld [vmem:[%s3 + $0x770] sm:$0xff]
    %v2315 = vld [vmem:[%s3 + $0x778] sm:$0xff]
    %v2316 = vld [vmem:[%s3 + $0x780] sm:$0xff]
    %v2317 = vld [vmem:[%s3 + $0x788] sm:$0xff]
    %v2318 = vld [vmem:[%s3 + $0x790] sm:$0xff]
    %v2319 = vld [vmem:[%s3 + $0x798] sm:$0xff]
    %v2320 = vld [vmem:[%s3 + $0x7a0] sm:$0xff]
    %v2321 = vld [vmem:[%s3 + $0x7a8] sm:$0xff]
    %v2322 = vld [vmem:[%s3 + $0x7b0] sm:$0xff]
    %v2323 = vld [vmem:[%s3 + $0x7b8] sm:$0xff]
    %v2324 = vld [vmem:[%s3 + $0x7c0] sm:$0xff]
    %v2325 = vld [vmem:[%s3 + $0x7c8] sm:$0xff]
    %v2326 = vld [vmem:[%s3 + $0x7d0] sm:$0xff]
    %v2327 = vld [vmem:[%s3 + $0x7d8] sm:$0xff]
    %v2328 = vld [vmem:[%s3 + $0x7e0] sm:$0xff]
    %v2329 = vld [vmem:[%s3 + $0x7e8] sm:$0xff]
    %v2330 = vld [vmem:[%s3 + $0x7f0] sm:$0xff]
    %v2331 = vld [vmem:[%s3 + $0x7f8] sm:$0xff]
    %v2332 = vld [vmem:[%s3 + $0x800] sm:$0xff]
    %v2333 = vld [vmem:[%s3 + $0x808] sm:$0xff]
    %v2334 = vld [vmem:[%s3 + $0x810] sm:$0xff]
    %v2335 = vld [vmem:[%s3 + $0x818] sm:$0xff]
    %v2336 = vld [vmem:[%s3 + $0x820] sm:$0xff]
    %v2337 = vld [vmem:[%s3 + $0x828] sm:$0xff]
    %v2338 = vld [vmem:[%s3 + $0x830] sm:$0xff]
    %v2339 = vld [vmem:[%s3 + $0x838] sm:$0xff]
    %v2340 = vld [vmem:[%s3 + $0x840] sm:$0xff]
    %v2341 = vld [vmem:[%s3 + $0x848] sm:$0xff]
    %v2342 = vld [vmem:[%s3 + $0x850] sm:$0xff]
    %v2343 = vld [vmem:[%s3 + $0x858] sm:$0xff]
    %v2344 = vld [vmem:[%s3 + $0x860] sm:$0xff]
    %v2345 = vld [vmem:[%s3 + $0x868] sm:$0xff]
    %v2346 = vld [vmem:[%s3 + $0x870] sm:$0xff]
    %v2347 = vld [vmem:[%s3 + $0x878] sm:$0xff]
    %v2348 = vld [vmem:[%s3 + $0x880] sm:$0xff]
    %v2349 = vld [vmem:[%s3 + $0x888] sm:$0xff]
    %v2350 = vld [vmem:[%s3 + $0x890] sm:$0xff]
    %v2351 = vld [vmem:[%s3 + $0x898] sm:$0xff]
    %v2352 = vld [vmem:[%s3 + $0x8a0] sm:$0xff]
    %v2353 = vld [vmem:[%s3 + $0x8a8] sm:$0xff]
    %v2354 = vld [vmem:[%s3 + $0x8b0] sm:$0xff]
    %v2355 = vld [vmem:[%s3 + $0x8b8] sm:$0xff]
    %v2356 = vld [vmem:[%s3 + $0x8c0] sm:$0xff]
    %v2357 = vld [vmem:[%s3 + $0x8c8] sm:$0xff]
    %v2358 = vld [vmem:[%s3 + $0x8d0] sm:$0xff]
    %v2359 = vld [vmem:[%s3 + $0x8d8] sm:$0xff]
    %v2360 = vld [vmem:[%s3 + $0x8e0] sm:$0xff]
    %v2361 = vld [vmem:[%s3 + $0x8e8] sm:$0xff]
    %v2362 = vld [vmem:[%s3 + $0x8f0] sm:$0xff]
    %v2363 = vld [vmem:[%s3 + $0x8f8] sm:$0xff]
    %v2364 = vld [vmem:[%s3 + $0x900] sm:$0xff]
    %v2365 = vld [vmem:[%s3 + $0x908] sm:$0xff]
    %v2366 = vld [vmem:[%s3 + $0x910] sm:$0xff]
    %v2367 = vld [vmem:[%s3 + $0x918] sm:$0xff]
    %v2368 = vld [vmem:[%s3 + $0x920] sm:$0xff]
    %v2369 = vld [vmem:[%s3 + $0x928] sm:$0xff]
    %v2370 = vld [vmem:[%s3 + $0x930] sm:$0xff]
    %v2371 = vld [vmem:[%s3 + $0x938] sm:$0xff]
    %v2372 = vld [vmem:[%s3 + $0x940] sm:$0xff]
    %v2373 = vld [vmem:[%s3 + $0x948] sm:$0xff]
    %v2374 = vld [vmem:[%s3 + $0x950] sm:$0xff]
    %v2375 = vld [vmem:[%s3 + $0x958] sm:$0xff]
    %v2376 = vld [vmem:[%s3 + $0x960] sm:$0xff]
    %v2377 = vld [vmem:[%s3 + $0x968] sm:$0xff]
    %v2378 = vld [vmem:[%s3 + $0x970] sm:$0xff]
    %v2379 = vld [vmem:[%s3 + $0x978] sm:$0xff]
    %v2380 = vld [vmem:[%s3 + $0x980] sm:$0xff]
    %v2381 = vld [vmem:[%s3 + $0x988] sm:$0xff]
    %v2382 = vld [vmem:[%s3 + $0x990] sm:$0xff]
    %v2383 = vld [vmem:[%s3 + $0x998] sm:$0xff]
    %v2384 = vld [vmem:[%s3 + $0x9a0] sm:$0xff]
    %v2385 = vld [vmem:[%s3 + $0x9a8] sm:$0xff]
    %v2386 = vld [vmem:[%s3 + $0x9b0] sm:$0xff]
    %v2387 = vld [vmem:[%s3 + $0x9b8] sm:$0xff]
    %v2388 = vld [vmem:[%s3 + $0x9c0] sm:$0xff]
    %v2389 = vld [vmem:[%s3 + $0x9c8] sm:$0xff]
    %v2390 = vld [vmem:[%s3 + $0x9d0] sm:$0xff]
    %v2391 = vld [vmem:[%s3 + $0x9d8] sm:$0xff]
    %v2392 = vld [vmem:[%s3 + $0x9e0] sm:$0xff]
    %v2393 = vld [vmem:[%s3 + $0x9e8] sm:$0xff]
    %v2394 = vld [vmem:[%s3 + $0x9f0] sm:$0xff]
    %v2395 = vld [vmem:[%s3 + $0x9f8] sm:$0xff]
    %v2396 = vld [vmem:[%s3 + $0xa00] sm:$0xff]
    %v2397 = vld [vmem:[%s3 + $0xa08] sm:$0xff]
    %v2398 = vld [vmem:[%s3 + $0xa10] sm:$0xff]
    %v2399 = vld [vmem:[%s3 + $0xa18] sm:$0xff]
    %v2400 = vld [vmem:[%s3 + $0xa20] sm:$0xff]
    %v2401 = vld [vmem:[%s3 + $0xa28] sm:$0xff]
    %v2402 = vld [vmem:[%s3 + $0xa30] sm:$0xff]
    %v2403 = vld [vmem:[%s3 + $0xa38] sm:$0xff]
    %v2404 = vld [vmem:[%s3 + $0xa40] sm:$0xff]
    %v2405 = vld [vmem:[%s3 + $0xa48] sm:$0xff]
    %v2406 = vld [vmem:[%s3 + $0xa50] sm:$0xff]
    %v2407 = vld [vmem:[%s3 + $0xa58] sm:$0xff]
    %v2408 = vld [vmem:[%s3 + $0xa60] sm:$0xff]
    %v2409 = vld [vmem:[%s3 + $0xa68] sm:$0xff]
    %v2410 = vld [vmem:[%s3 + $0xa70] sm:$0xff]
    %v2411 = vld [vmem:[%s3 + $0xa78] sm:$0xff]
    %v2412 = vld [vmem:[%s3 + $0xa80] sm:$0xff]
    %v2413 = vld [vmem:[%s3 + $0xa88] sm:$0xff]
    %v2414 = vld [vmem:[%s3 + $0xa90] sm:$0xff]
    %v2415 = vld [vmem:[%s3 + $0xa98] sm:$0xff]
    %v2416 = vld [vmem:[%s3 + $0xaa0] sm:$0xff]
    %v2417 = vld [vmem:[%s3 + $0xaa8] sm:$0xff]
    %v2418 = vld [vmem:[%s3 + $0xab0] sm:$0xff]
    %v2419 = vld [vmem:[%s3 + $0xab8] sm:$0xff]
    %v2420 = vld [vmem:[%s3 + $0xac0] sm:$0xff]
    %v2421 = vld [vmem:[%s3 + $0xac8] sm:$0xff]
    %v2422 = vld [vmem:[%s3 + $0xad0] sm:$0xff]
    %v2423 = vld [vmem:[%s3 + $0xad8] sm:$0xff]
    %v2424 = vld [vmem:[%s3 + $0xae0] sm:$0xff]
    %v2425 = vld [vmem:[%s3 + $0xae8] sm:$0xff]
    %v2426 = vld [vmem:[%s3 + $0xaf0] sm:$0xff]
    %v2427 = vld [vmem:[%s3 + $0xaf8] sm:$0xff]
    %v2428 = vld [vmem:[%s3 + $0xb00] sm:$0xff]
    %v2429 = vld [vmem:[%s3 + $0xb08] sm:$0xff]
    %v2430 = vld [vmem:[%s3 + $0xb10] sm:$0xff]
    %v2431 = vld [vmem:[%s3 + $0xb18] sm:$0xff]
    %v2432 = vld [vmem:[%s3 + $0xb20] sm:$0xff]
    %v2433 = vld [vmem:[%s3 + $0xb28] sm:$0xff]
    %v2434 = vld [vmem:[%s3 + $0xb30] sm:$0xff]
    %v2435 = vld [vmem:[%s3 + $0xb38] sm:$0xff]
    %v2436 = vld [vmem:[%s3 + $0xb40] sm:$0xff]
    %v2437 = vld [vmem:[%s3 + $0xb48] sm:$0xff]
    %v2438 = vld [vmem:[%s3 + $0xb50] sm:$0xff]
    %v2439 = vld [vmem:[%s3 + $0xb58] sm:$0xff]
    %v2440 = vld [vmem:[%s3 + $0xb60] sm:$0xff]
    %v2441 = vld [vmem:[%s3 + $0xb68] sm:$0xff]
    %v2442 = vld [vmem:[%s3 + $0xb70] sm:$0xff]
    %v2443 = vld [vmem:[%s3 + $0xb78] sm:$0xff]
    %v2444 = vld [vmem:[%s3 + $0xb80] sm:$0xff]
    %v2445 = vld [vmem:[%s3 + $0xb88] sm:$0xff]
    %v2446 = vld [vmem:[%s3 + $0xb90] sm:$0xff]
    %v2447 = vld [vmem:[%s3 + $0xb98] sm:$0xff]
    %v2448 = vld [vmem:[%s3 + $0xba0] sm:$0xff]
    %v2449 = vld [vmem:[%s3 + $0xba8] sm:$0xff]
    %v2450 = vld [vmem:[%s3 + $0xbb0] sm:$0xff]
    %v2451 = vld [vmem:[%s3 + $0xbb8] sm:$0xff]
    %v2452 = vld [vmem:[%s3 + $0xbc0] sm:$0xff]
    %v2453 = vld [vmem:[%s3 + $0xbc8] sm:$0xff]
    %v2454 = vld [vmem:[%s3 + $0xbd0] sm:$0xff]
    %v2455 = vld [vmem:[%s3 + $0xbd8] sm:$0xff]
    %v2456 = vld [vmem:[%s3 + $0xbe0] sm:$0xff]
    %v2457 = vld [vmem:[%s3 + $0xbe8] sm:$0xff]
    %v2458 = vld [vmem:[%s3 + $0xbf0] sm:$0xff]
    %v2459 = vld [vmem:[%s3 + $0xbf8] sm:$0xff]
    %v2460 = vld [vmem:[%s3 + $0xc00] sm:$0xff]
    %v2461 = vld [vmem:[%s3 + $0xc08] sm:$0xff]
    %v2462 = vld [vmem:[%s3 + $0xc10] sm:$0xff]
    %v2463 = vld [vmem:[%s3 + $0xc18] sm:$0xff]
    %v2464 = vld [vmem:[%s3 + $0xc20] sm:$0xff]
    %v2465 = vld [vmem:[%s3 + $0xc28] sm:$0xff]
    %v2466 = vld [vmem:[%s3 + $0xc30] sm:$0xff]
    %v2467 = vld [vmem:[%s3 + $0xc38] sm:$0xff]
    %v2468 = vld [vmem:[%s3 + $0xc40] sm:$0xff]
    %v2469 = vld [vmem:[%s3 + $0xc48] sm:$0xff]
    %v2470 = vld [vmem:[%s3 + $0xc50] sm:$0xff]
    %v2471 = vld [vmem:[%s3 + $0xc58] sm:$0xff]
    %v2472 = vld [vmem:[%s3 + $0xc60] sm:$0xff]
    %v2473 = vld [vmem:[%s3 + $0xc68] sm:$0xff]
    %v2474 = vld [vmem:[%s3 + $0xc70] sm:$0xff]
    %v2475 = vld [vmem:[%s3 + $0xc78] sm:$0xff]
    %v2476 = vld [vmem:[%s3 + $0xc80] sm:$0xff]
    %v2477 = vld [vmem:[%s3 + $0xc88] sm:$0xff]
    %v2478 = vld [vmem:[%s3 + $0xc90] sm:$0xff]
    %v2479 = vld [vmem:[%s3 + $0xc98] sm:$0xff]
    %v2480 = vld [vmem:[%s3 + $0xca0] sm:$0xff]
    %v2481 = vld [vmem:[%s3 + $0xca8] sm:$0xff]
    %v2482 = vld [vmem:[%s3 + $0xcb0] sm:$0xff]
    %v2483 = vld [vmem:[%s3 + $0xcb8] sm:$0xff]
    %v2484 = vld [vmem:[%s3 + $0xcc0] sm:$0xff]
    %v2485 = vld [vmem:[%s3 + $0xcc8] sm:$0xff]
    %v2486 = vld [vmem:[%s3 + $0xcd0] sm:$0xff]
    %v2487 = vld [vmem:[%s3 + $0xcd8] sm:$0xff]
    %v2488 = vld [vmem:[%s3 + $0xce0] sm:$0xff]
    %v2489 = vld [vmem:[%s3 + $0xce8] sm:$0xff]
    %v2490 = vld [vmem:[%s3 + $0xcf0] sm:$0xff]
    %v2491 = vld [vmem:[%s3 + $0xcf8] sm:$0xff]
    %v2492 = vld [vmem:[%s3 + $0xd00] sm:$0xff]
    %v2493 = vld [vmem:[%s3 + $0xd08] sm:$0xff]
    %v2494 = vld [vmem:[%s3 + $0xd10] sm:$0xff]
    %v2495 = vld [vmem:[%s3 + $0xd18] sm:$0xff]
    %v2496 = vld [vmem:[%s3 + $0xd20] sm:$0xff]
    %v2497 = vld [vmem:[%s3 + $0xd28] sm:$0xff]
    %v2498 = vld [vmem:[%s3 + $0xd30] sm:$0xff]
    %v2499 = vld [vmem:[%s3 + $0xd38] sm:$0xff]
    %v2500 = vld [vmem:[%s3 + $0xd40] sm:$0xff]
    %v2501 = vld [vmem:[%s3 + $0xd48] sm:$0xff]
    %v2502 = vld [vmem:[%s3 + $0xd50] sm:$0xff]
    %v2503 = vld [vmem:[%s3 + $0xd58] sm:$0xff]
    %v2504 = vld [vmem:[%s3 + $0xd60] sm:$0xff]
    %v2505 = vld [vmem:[%s3 + $0xd68] sm:$0xff]
    %v2506 = vld [vmem:[%s3 + $0xd70] sm:$0xff]
    %v2507 = vld [vmem:[%s3 + $0xd78] sm:$0xff]
    %v2508 = vld [vmem:[%s3 + $0xd80] sm:$0xff]
    %v2509 = vld [vmem:[%s3 + $0xd88] sm:$0xff]
    %v2510 = vld [vmem:[%s3 + $0xd90] sm:$0xff]
    %v2511 = vld [vmem:[%s3 + $0xd98] sm:$0xff]
    %v2512 = vld [vmem:[%s3 + $0xda0] sm:$0xff]
    %v2513 = vld [vmem:[%s3 + $0xda8] sm:$0xff]
    %v2514 = vld [vmem:[%s3 + $0xdb0] sm:$0xff]
    %v2515 = vld [vmem:[%s3 + $0xdb8] sm:$0xff]
    %v2516 = vld [vmem:[%s3 + $0xdc0] sm:$0xff]
    %v2517 = vld [vmem:[%s3 + $0xdc8] sm:$0xff]
    %v2518 = vld [vmem:[%s3 + $0xdd0] sm:$0xff]
    %v2519 = vld [vmem:[%s3 + $0xdd8] sm:$0xff]
    %v2520 = vld [vmem:[%s3 + $0xde0] sm:$0xff]
    %v2521 = vld [vmem:[%s3 + $0xde8] sm:$0xff]
    %v2522 = vld [vmem:[%s3 + $0xdf0] sm:$0xff]
    %v2523 = vld [vmem:[%s3 + $0xdf8] sm:$0xff]
    %v2524 = vld [vmem:[%s3 + $0xe00] sm:$0xff]
    %v2525 = vld [vmem:[%s3 + $0xe08] sm:$0xff]
    %v2526 = vld [vmem:[%s3 + $0xe10] sm:$0xff]
    %v2527 = vld [vmem:[%s3 + $0xe18] sm:$0xff]
    %v2528 = vld [vmem:[%s3 + $0xe20] sm:$0xff]
    %v2529 = vld [vmem:[%s3 + $0xe28] sm:$0xff]
    %v2530 = vld [vmem:[%s3 + $0xe30] sm:$0xff]
    %v2531 = vld [vmem:[%s3 + $0xe38] sm:$0xff]
    %v2532 = vld [vmem:[%s3 + $0xe40] sm:$0xff]
    %v2533 = vld [vmem:[%s3 + $0xe48] sm:$0xff]
    %v2534 = vld [vmem:[%s3 + $0xe50] sm:$0xff]
    %v2535 = vld [vmem:[%s3 + $0xe58] sm:$0xff]
    %v2536 = vld [vmem:[%s3 + $0xe60] sm:$0xff]
    %v2537 = vld [vmem:[%s3 + $0xe68] sm:$0xff]
    %v2538 = vld [vmem:[%s3 + $0xe70] sm:$0xff]
    %v2539 = vld [vmem:[%s3 + $0xe78] sm:$0xff]
    %v2540 = vld [vmem:[%s3 + $0xe80] sm:$0xff]
    %v2541 = vld [vmem:[%s3 + $0xe88] sm:$0xff]
    %v2542 = vld [vmem:[%s3 + $0xe90] sm:$0xff]
    %v2543 = vld [vmem:[%s3 + $0xe98] sm:$0xff]
    %v2544 = vld [vmem:[%s3 + $0xea0] sm:$0xff]
    %v2545 = vld [vmem:[%s3 + $0xea8] sm:$0xff]
    %v2546 = vld [vmem:[%s3 + $0xeb0] sm:$0xff]
    %v2547 = vld [vmem:[%s3 + $0xeb8] sm:$0xff]
    %v2548 = vld [vmem:[%s3 + $0xec0] sm:$0xff]
    %v2549 = vld [vmem:[%s3 + $0xec8] sm:$0xff]
    %v2550 = vld [vmem:[%s3 + $0xed0] sm:$0xff]
    %v2551 = vld [vmem:[%s3 + $0xed8] sm:$0xff]
    %v2552 = vld [vmem:[%s3 + $0xee0] sm:$0xff]
    %v2553 = vld [vmem:[%s3 + $0xee8] sm:$0xff]
    %v2554 = vld [vmem:[%s3 + $0xef0] sm:$0xff]
    %v2555 = vld [vmem:[%s3 + $0xef8] sm:$0xff]
    %v3036 = vunpack.c.l.b16 %v2076
    %v3037 = vunpack.c.h.b16 %v2076
    %v3038 = vunpack.c.l.b16 %v2077
    %v3039 = vunpack.c.h.b16 %v2077
    %v3040 = vunpack.c.l.b16 %v2078
    %v3041 = vunpack.c.h.b16 %v2078
    %v3042 = vunpack.c.l.b16 %v2079
    %v3043 = vunpack.c.h.b16 %v2079
    %v3044 = vunpack.c.l.b16 %v2080
    %v3045 = vunpack.c.h.b16 %v2080
    %v3046 = vunpack.c.l.b16 %v2081
    %v3047 = vunpack.c.h.b16 %v2081
    %v3048 = vunpack.c.l.b16 %v2082
    %v3049 = vunpack.c.h.b16 %v2082
    %v3050 = vunpack.c.l.b16 %v2083
    %v3051 = vunpack.c.h.b16 %v2083
    %v3052 = vunpack.c.l.b16 %v2084
    %v3053 = vunpack.c.h.b16 %v2084
    %v3054 = vunpack.c.l.b16 %v2085
    %v3055 = vunpack.c.h.b16 %v2085
    %v3056 = vunpack.c.l.b16 %v2086
    %v3057 = vunpack.c.h.b16 %v2086
    %v3058 = vunpack.c.l.b16 %v2087
    %v3059 = vunpack.c.h.b16 %v2087
    %v3060 = vunpack.c.l.b16 %v2088
    %v3061 = vunpack.c.h.b16 %v2088
    %v3062 = vunpack.c.l.b16 %v2089
    %v3063 = vunpack.c.h.b16 %v2089
    %v3064 = vunpack.c.l.b16 %v2090
    %v3065 = vunpack.c.h.b16 %v2090
    %v3066 = vunpack.c.l.b16 %v2091
    %v3067 = vunpack.c.h.b16 %v2091
    %v3068 = vunpack.c.l.b16 %v2092
    %v3069 = vunpack.c.h.b16 %v2092
    %v3070 = vunpack.c.l.b16 %v2093
    %v3071 = vunpack.c.h.b16 %v2093
    %v3072 = vunpack.c.l.b16 %v2094
    %v3073 = vunpack.c.h.b16 %v2094
    %v3074 = vunpack.c.l.b16 %v2095
    %v3075 = vunpack.c.h.b16 %v2095
    %v3076 = vunpack.c.l.b16 %v2096
    %v3077 = vunpack.c.h.b16 %v2096
    %v3078 = vunpack.c.l.b16 %v2097
    %v3079 = vunpack.c.h.b16 %v2097
    %v3080 = vunpack.c.l.b16 %v2098
    %v3081 = vunpack.c.h.b16 %v2098
    %v3082 = vunpack.c.l.b16 %v2099
    %v3083 = vunpack.c.h.b16 %v2099
    %v3084 = vunpack.c.l.b16 %v2100
    %v3085 = vunpack.c.h.b16 %v2100
    %v3086 = vunpack.c.l.b16 %v2101
    %v3087 = vunpack.c.h.b16 %v2101
    %v3088 = vunpack.c.l.b16 %v2102
    %v3089 = vunpack.c.h.b16 %v2102
    %v3090 = vunpack.c.l.b16 %v2103
    %v3091 = vunpack.c.h.b16 %v2103
    %v3092 = vunpack.c.l.b16 %v2104
    %v3093 = vunpack.c.h.b16 %v2104
    %v3094 = vunpack.c.l.b16 %v2105
    %v3095 = vunpack.c.h.b16 %v2105
    %v3096 = vunpack.c.l.b16 %v2106
    %v3097 = vunpack.c.h.b16 %v2106
    %v3098 = vunpack.c.l.b16 %v2107
    %v3099 = vunpack.c.h.b16 %v2107
    %v3100 = vunpack.c.l.b16 %v2108
    %v3101 = vunpack.c.h.b16 %v2108
    %v3102 = vunpack.c.l.b16 %v2109
    %v3103 = vunpack.c.h.b16 %v2109
    %v3104 = vunpack.c.l.b16 %v2110
    %v3105 = vunpack.c.h.b16 %v2110
    %v3106 = vunpack.c.l.b16 %v2111
    %v3107 = vunpack.c.h.b16 %v2111
    %v3108 = vunpack.c.l.b16 %v2112
    %v3109 = vunpack.c.h.b16 %v2112
    %v3110 = vunpack.c.l.b16 %v2113
    %v3111 = vunpack.c.h.b16 %v2113
    %v3112 = vunpack.c.l.b16 %v2114
    %v3113 = vunpack.c.h.b16 %v2114
    %v3114 = vunpack.c.l.b16 %v2115
    %v3115 = vunpack.c.h.b16 %v2115
    %v3116 = vunpack.c.l.b16 %v2116
    %v3117 = vunpack.c.h.b16 %v2116
    %v3118 = vunpack.c.l.b16 %v2117
    %v3119 = vunpack.c.h.b16 %v2117
    %v3120 = vunpack.c.l.b16 %v2118
    %v3121 = vunpack.c.h.b16 %v2118
    %v3122 = vunpack.c.l.b16 %v2119
    %v3123 = vunpack.c.h.b16 %v2119
    %v3124 = vunpack.c.l.b16 %v2120
    %v3125 = vunpack.c.h.b16 %v2120
    %v3126 = vunpack.c.l.b16 %v2121
    %v3127 = vunpack.c.h.b16 %v2121
    %v3128 = vunpack.c.l.b16 %v2122
    %v3129 = vunpack.c.h.b16 %v2122
    %v3130 = vunpack.c.l.b16 %v2123
    %v3131 = vunpack.c.h.b16 %v2123
    %v3132 = vunpack.c.l.b16 %v2124
    %v3133 = vunpack.c.h.b16 %v2124
    %v3134 = vunpack.c.l.b16 %v2125
    %v3135 = vunpack.c.h.b16 %v2125
    %v3136 = vunpack.c.l.b16 %v2126
    %v3137 = vunpack.c.h.b16 %v2126
    %v3138 = vunpack.c.l.b16 %v2127
    %v3139 = vunpack.c.h.b16 %v2127
    %v3140 = vunpack.c.l.b16 %v2128
    %v3141 = vunpack.c.h.b16 %v2128
    %v3142 = vunpack.c.l.b16 %v2129
    %v3143 = vunpack.c.h.b16 %v2129
    %v3144 = vunpack.c.l.b16 %v2130
    %v3145 = vunpack.c.h.b16 %v2130
    %v3146 = vunpack.c.l.b16 %v2131
    %v3147 = vunpack.c.h.b16 %v2131
    %v3148 = vunpack.c.l.b16 %v2132
    %v3149 = vunpack.c.h.b16 %v2132
    %v3150 = vunpack.c.l.b16 %v2133
    %v3151 = vunpack.c.h.b16 %v2133
    %v3152 = vunpack.c.l.b16 %v2134
    %v3153 = vunpack.c.h.b16 %v2134
    %v3154 = vunpack.c.l.b16 %v2135
    %v3155 = vunpack.c.h.b16 %v2135
    %v3156 = vunpack.c.l.b16 %v2136
    %v3157 = vunpack.c.h.b16 %v2136
    %v3158 = vunpack.c.l.b16 %v2137
    %v3159 = vunpack.c.h.b16 %v2137
    %v3160 = vunpack.c.l.b16 %v2138
    %v3161 = vunpack.c.h.b16 %v2138
    %v3162 = vunpack.c.l.b16 %v2139
    %v3163 = vunpack.c.h.b16 %v2139
    %v3164 = vunpack.c.l.b16 %v2140
    %v3165 = vunpack.c.h.b16 %v2140
    %v3166 = vunpack.c.l.b16 %v2141
    %v3167 = vunpack.c.h.b16 %v2141
    %v3168 = vunpack.c.l.b16 %v2142
    %v3169 = vunpack.c.h.b16 %v2142
    %v3170 = vunpack.c.l.b16 %v2143
    %v3171 = vunpack.c.h.b16 %v2143
    %v3172 = vunpack.c.l.b16 %v2144
    %v3173 = vunpack.c.h.b16 %v2144
    %v3174 = vunpack.c.l.b16 %v2145
    %v3175 = vunpack.c.h.b16 %v2145
    %v3176 = vunpack.c.l.b16 %v2146
    %v3177 = vunpack.c.h.b16 %v2146
    %v3178 = vunpack.c.l.b16 %v2147
    %v3179 = vunpack.c.h.b16 %v2147
    %v3180 = vunpack.c.l.b16 %v2148
    %v3181 = vunpack.c.h.b16 %v2148
    %v3182 = vunpack.c.l.b16 %v2149
    %v3183 = vunpack.c.h.b16 %v2149
    %v3184 = vunpack.c.l.b16 %v2150
    %v3185 = vunpack.c.h.b16 %v2150
    %v3186 = vunpack.c.l.b16 %v2151
    %v3187 = vunpack.c.h.b16 %v2151
    %v3188 = vunpack.c.l.b16 %v2152
    %v3189 = vunpack.c.h.b16 %v2152
    %v3190 = vunpack.c.l.b16 %v2153
    %v3191 = vunpack.c.h.b16 %v2153
    %v3192 = vunpack.c.l.b16 %v2154
    %v3193 = vunpack.c.h.b16 %v2154
    %v3194 = vunpack.c.l.b16 %v2155
    %v3195 = vunpack.c.h.b16 %v2155
    %v3196 = vunpack.c.l.b16 %v2156
    %v3197 = vunpack.c.h.b16 %v2156
    %v3198 = vunpack.c.l.b16 %v2157
    %v3199 = vunpack.c.h.b16 %v2157
    %v3200 = vunpack.c.l.b16 %v2158
    %v3201 = vunpack.c.h.b16 %v2158
    %v3202 = vunpack.c.l.b16 %v2159
    %v3203 = vunpack.c.h.b16 %v2159
    %v3204 = vunpack.c.l.b16 %v2160
    %v3205 = vunpack.c.h.b16 %v2160
    %v3206 = vunpack.c.l.b16 %v2161
    %v3207 = vunpack.c.h.b16 %v2161
    %v3208 = vunpack.c.l.b16 %v2162
    %v3209 = vunpack.c.h.b16 %v2162
    %v3210 = vunpack.c.l.b16 %v2163
    %v3211 = vunpack.c.h.b16 %v2163
    %v3212 = vunpack.c.l.b16 %v2164
    %v3213 = vunpack.c.h.b16 %v2164
    %v3214 = vunpack.c.l.b16 %v2165
    %v3215 = vunpack.c.h.b16 %v2165
    %v3216 = vunpack.c.l.b16 %v2166
    %v3217 = vunpack.c.h.b16 %v2166
    %v3218 = vunpack.c.l.b16 %v2167
    %v3219 = vunpack.c.h.b16 %v2167
    %v3220 = vunpack.c.l.b16 %v2168
    %v3221 = vunpack.c.h.b16 %v2168
    %v3222 = vunpack.c.l.b16 %v2169
    %v3223 = vunpack.c.h.b16 %v2169
    %v3224 = vunpack.c.l.b16 %v2170
    %v3225 = vunpack.c.h.b16 %v2170
    %v3226 = vunpack.c.l.b16 %v2171
    %v3227 = vunpack.c.h.b16 %v2171
    %v3228 = vunpack.c.l.b16 %v2172
    %v3229 = vunpack.c.h.b16 %v2172
    %v3230 = vunpack.c.l.b16 %v2173
    %v3231 = vunpack.c.h.b16 %v2173
    %v3232 = vunpack.c.l.b16 %v2174
    %v3233 = vunpack.c.h.b16 %v2174
    %v3234 = vunpack.c.l.b16 %v2175
    %v3235 = vunpack.c.h.b16 %v2175
    %v3236 = vunpack.c.l.b16 %v2176
    %v3237 = vunpack.c.h.b16 %v2176
    %v3238 = vunpack.c.l.b16 %v2177
    %v3239 = vunpack.c.h.b16 %v2177
    %v3240 = vunpack.c.l.b16 %v2178
    %v3241 = vunpack.c.h.b16 %v2178
    %v3242 = vunpack.c.l.b16 %v2179
    %v3243 = vunpack.c.h.b16 %v2179
    %v3244 = vunpack.c.l.b16 %v2180
    %v3245 = vunpack.c.h.b16 %v2180
    %v3246 = vunpack.c.l.b16 %v2181
    %v3247 = vunpack.c.h.b16 %v2181
    %v3248 = vunpack.c.l.b16 %v2182
    %v3249 = vunpack.c.h.b16 %v2182
    %v3250 = vunpack.c.l.b16 %v2183
    %v3251 = vunpack.c.h.b16 %v2183
    %v3252 = vunpack.c.l.b16 %v2184
    %v3253 = vunpack.c.h.b16 %v2184
    %v3254 = vunpack.c.l.b16 %v2185
    %v3255 = vunpack.c.h.b16 %v2185
    %v3256 = vunpack.c.l.b16 %v2186
    %v3257 = vunpack.c.h.b16 %v2186
    %v3258 = vunpack.c.l.b16 %v2187
    %v3259 = vunpack.c.h.b16 %v2187
    %v3260 = vunpack.c.l.b16 %v2188
    %v3261 = vunpack.c.h.b16 %v2188
    %v3262 = vunpack.c.l.b16 %v2189
    %v3263 = vunpack.c.h.b16 %v2189
    %v3264 = vunpack.c.l.b16 %v2190
    %v3265 = vunpack.c.h.b16 %v2190
    %v3266 = vunpack.c.l.b16 %v2191
    %v3267 = vunpack.c.h.b16 %v2191
    %v3268 = vunpack.c.l.b16 %v2192
    %v3269 = vunpack.c.h.b16 %v2192
    %v3270 = vunpack.c.l.b16 %v2193
    %v3271 = vunpack.c.h.b16 %v2193
    %v3272 = vunpack.c.l.b16 %v2194
    %v3273 = vunpack.c.h.b16 %v2194
    %v3274 = vunpack.c.l.b16 %v2195
    %v3275 = vunpack.c.h.b16 %v2195
    %v3276 = vunpack.c.l.b16 %v2196
    %v3277 = vunpack.c.h.b16 %v2196
    %v3278 = vunpack.c.l.b16 %v2197
    %v3279 = vunpack.c.h.b16 %v2197
    %v3280 = vunpack.c.l.b16 %v2198
    %v3281 = vunpack.c.h.b16 %v2198
    %v3282 = vunpack.c.l.b16 %v2199
    %v3283 = vunpack.c.h.b16 %v2199
    %v3284 = vunpack.c.l.b16 %v2200
    %v3285 = vunpack.c.h.b16 %v2200
    %v3286 = vunpack.c.l.b16 %v2201
    %v3287 = vunpack.c.h.b16 %v2201
    %v3288 = vunpack.c.l.b16 %v2202
    %v3289 = vunpack.c.h.b16 %v2202
    %v3290 = vunpack.c.l.b16 %v2203
    %v3291 = vunpack.c.h.b16 %v2203
    %v3292 = vunpack.c.l.b16 %v2204
    %v3293 = vunpack.c.h.b16 %v2204
    %v3294 = vunpack.c.l.b16 %v2205
    %v3295 = vunpack.c.h.b16 %v2205
    %v3296 = vunpack.c.l.b16 %v2206
    %v3297 = vunpack.c.h.b16 %v2206
    %v3298 = vunpack.c.l.b16 %v2207
    %v3299 = vunpack.c.h.b16 %v2207
    %v3300 = vunpack.c.l.b16 %v2208
    %v3301 = vunpack.c.h.b16 %v2208
    %v3302 = vunpack.c.l.b16 %v2209
    %v3303 = vunpack.c.h.b16 %v2209
    %v3304 = vunpack.c.l.b16 %v2210
    %v3305 = vunpack.c.h.b16 %v2210
    %v3306 = vunpack.c.l.b16 %v2211
    %v3307 = vunpack.c.h.b16 %v2211
    %v3308 = vunpack.c.l.b16 %v2212
    %v3309 = vunpack.c.h.b16 %v2212
    %v3310 = vunpack.c.l.b16 %v2213
    %v3311 = vunpack.c.h.b16 %v2213
    %v3312 = vunpack.c.l.b16 %v2214
    %v3313 = vunpack.c.h.b16 %v2214
    %v3314 = vunpack.c.l.b16 %v2215
    %v3315 = vunpack.c.h.b16 %v2215
    %v3316 = vunpack.c.l.b16 %v2216
    %v3317 = vunpack.c.h.b16 %v2216
    %v3318 = vunpack.c.l.b16 %v2217
    %v3319 = vunpack.c.h.b16 %v2217
    %v3320 = vunpack.c.l.b16 %v2218
    %v3321 = vunpack.c.h.b16 %v2218
    %v3322 = vunpack.c.l.b16 %v2219
    %v3323 = vunpack.c.h.b16 %v2219
    %v3324 = vunpack.c.l.b16 %v2220
    %v3325 = vunpack.c.h.b16 %v2220
    %v3326 = vunpack.c.l.b16 %v2221
    %v3327 = vunpack.c.h.b16 %v2221
    %v3328 = vunpack.c.l.b16 %v2222
    %v3329 = vunpack.c.h.b16 %v2222
    %v3330 = vunpack.c.l.b16 %v2223
    %v3331 = vunpack.c.h.b16 %v2223
    %v3332 = vunpack.c.l.b16 %v2224
    %v3333 = vunpack.c.h.b16 %v2224
    %v3334 = vunpack.c.l.b16 %v2225
    %v3335 = vunpack.c.h.b16 %v2225
    %v3336 = vunpack.c.l.b16 %v2226
    %v3337 = vunpack.c.h.b16 %v2226
    %v3338 = vunpack.c.l.b16 %v2227
    %v3339 = vunpack.c.h.b16 %v2227
    %v3340 = vunpack.c.l.b16 %v2228
    %v3341 = vunpack.c.h.b16 %v2228
    %v3342 = vunpack.c.l.b16 %v2229
    %v3343 = vunpack.c.h.b16 %v2229
    %v3344 = vunpack.c.l.b16 %v2230
    %v3345 = vunpack.c.h.b16 %v2230
    %v3346 = vunpack.c.l.b16 %v2231
    %v3347 = vunpack.c.h.b16 %v2231
    %v3348 = vunpack.c.l.b16 %v2232
    %v3349 = vunpack.c.h.b16 %v2232
    %v3350 = vunpack.c.l.b16 %v2233
    %v3351 = vunpack.c.h.b16 %v2233
    %v3352 = vunpack.c.l.b16 %v2234
    %v3353 = vunpack.c.h.b16 %v2234
    %v3354 = vunpack.c.l.b16 %v2235
    %v3355 = vunpack.c.h.b16 %v2235
    %v3356 = vunpack.c.l.b16 %v2236
    %v3357 = vunpack.c.h.b16 %v2236
    %v3358 = vunpack.c.l.b16 %v2237
    %v3359 = vunpack.c.h.b16 %v2237
    %v3360 = vunpack.c.l.b16 %v2238
    %v3361 = vunpack.c.h.b16 %v2238
    %v3362 = vunpack.c.l.b16 %v2239
    %v3363 = vunpack.c.h.b16 %v2239
    %v3364 = vunpack.c.l.b16 %v2240
    %v3365 = vunpack.c.h.b16 %v2240
    %v3366 = vunpack.c.l.b16 %v2241
    %v3367 = vunpack.c.h.b16 %v2241
    %v3368 = vunpack.c.l.b16 %v2242
    %v3369 = vunpack.c.h.b16 %v2242
    %v3370 = vunpack.c.l.b16 %v2243
    %v3371 = vunpack.c.h.b16 %v2243
    %v3372 = vunpack.c.l.b16 %v2244
    %v3373 = vunpack.c.h.b16 %v2244
    %v3374 = vunpack.c.l.b16 %v2245
    %v3375 = vunpack.c.h.b16 %v2245
    %v3376 = vunpack.c.l.b16 %v2246
    %v3377 = vunpack.c.h.b16 %v2246
    %v3378 = vunpack.c.l.b16 %v2247
    %v3379 = vunpack.c.h.b16 %v2247
    %v3380 = vunpack.c.l.b16 %v2248
    %v3381 = vunpack.c.h.b16 %v2248
    %v3382 = vunpack.c.l.b16 %v2249
    %v3383 = vunpack.c.h.b16 %v2249
    %v3384 = vunpack.c.l.b16 %v2250
    %v3385 = vunpack.c.h.b16 %v2250
    %v3386 = vunpack.c.l.b16 %v2251
    %v3387 = vunpack.c.h.b16 %v2251
    %v3388 = vunpack.c.l.b16 %v2252
    %v3389 = vunpack.c.h.b16 %v2252
    %v3390 = vunpack.c.l.b16 %v2253
    %v3391 = vunpack.c.h.b16 %v2253
    %v3392 = vunpack.c.l.b16 %v2254
    %v3393 = vunpack.c.h.b16 %v2254
    %v3394 = vunpack.c.l.b16 %v2255
    %v3395 = vunpack.c.h.b16 %v2255
    %v3396 = vunpack.c.l.b16 %v2256
    %v3397 = vunpack.c.h.b16 %v2256
    %v3398 = vunpack.c.l.b16 %v2257
    %v3399 = vunpack.c.h.b16 %v2257
    %v3400 = vunpack.c.l.b16 %v2258
    %v3401 = vunpack.c.h.b16 %v2258
    %v3402 = vunpack.c.l.b16 %v2259
    %v3403 = vunpack.c.h.b16 %v2259
    %v3404 = vunpack.c.l.b16 %v2260
    %v3405 = vunpack.c.h.b16 %v2260
    %v3406 = vunpack.c.l.b16 %v2261
    %v3407 = vunpack.c.h.b16 %v2261
    %v3408 = vunpack.c.l.b16 %v2262
    %v3409 = vunpack.c.h.b16 %v2262
    %v3410 = vunpack.c.l.b16 %v2263
    %v3411 = vunpack.c.h.b16 %v2263
    %v3412 = vunpack.c.l.b16 %v2264
    %v3413 = vunpack.c.h.b16 %v2264
    %v3414 = vunpack.c.l.b16 %v2265
    %v3415 = vunpack.c.h.b16 %v2265
    %v3416 = vunpack.c.l.b16 %v2266
    %v3417 = vunpack.c.h.b16 %v2266
    %v3418 = vunpack.c.l.b16 %v2267
    %v3419 = vunpack.c.h.b16 %v2267
    %v3420 = vunpack.c.l.b16 %v2268
    %v3421 = vunpack.c.h.b16 %v2268
    %v3422 = vunpack.c.l.b16 %v2269
    %v3423 = vunpack.c.h.b16 %v2269
    %v3424 = vunpack.c.l.b16 %v2270
    %v3425 = vunpack.c.h.b16 %v2270
    %v3426 = vunpack.c.l.b16 %v2271
    %v3427 = vunpack.c.h.b16 %v2271
    %v3428 = vunpack.c.l.b16 %v2272
    %v3429 = vunpack.c.h.b16 %v2272
    %v3430 = vunpack.c.l.b16 %v2273
    %v3431 = vunpack.c.h.b16 %v2273
    %v3432 = vunpack.c.l.b16 %v2274
    %v3433 = vunpack.c.h.b16 %v2274
    %v3434 = vunpack.c.l.b16 %v2275
    %v3435 = vunpack.c.h.b16 %v2275
    %v3436 = vunpack.c.l.b16 %v2276
    %v3437 = vunpack.c.h.b16 %v2276
    %v3438 = vunpack.c.l.b16 %v2277
    %v3439 = vunpack.c.h.b16 %v2277
    %v3440 = vunpack.c.l.b16 %v2278
    %v3441 = vunpack.c.h.b16 %v2278
    %v3442 = vunpack.c.l.b16 %v2279
    %v3443 = vunpack.c.h.b16 %v2279
    %v3444 = vunpack.c.l.b16 %v2280
    %v3445 = vunpack.c.h.b16 %v2280
    %v3446 = vunpack.c.l.b16 %v2281
    %v3447 = vunpack.c.h.b16 %v2281
    %v3448 = vunpack.c.l.b16 %v2282
    %v3449 = vunpack.c.h.b16 %v2282
    %v3450 = vunpack.c.l.b16 %v2283
    %v3451 = vunpack.c.h.b16 %v2283
    %v3452 = vunpack.c.l.b16 %v2284
    %v3453 = vunpack.c.h.b16 %v2284
    %v3454 = vunpack.c.l.b16 %v2285
    %v3455 = vunpack.c.h.b16 %v2285
    %v3456 = vunpack.c.l.b16 %v2286
    %v3457 = vunpack.c.h.b16 %v2286
    %v3458 = vunpack.c.l.b16 %v2287
    %v3459 = vunpack.c.h.b16 %v2287
    %v3460 = vunpack.c.l.b16 %v2288
    %v3461 = vunpack.c.h.b16 %v2288
    %v3462 = vunpack.c.l.b16 %v2289
    %v3463 = vunpack.c.h.b16 %v2289
    %v3464 = vunpack.c.l.b16 %v2290
    %v3465 = vunpack.c.h.b16 %v2290
    %v3466 = vunpack.c.l.b16 %v2291
    %v3467 = vunpack.c.h.b16 %v2291
    %v3468 = vunpack.c.l.b16 %v2292
    %v3469 = vunpack.c.h.b16 %v2292
    %v3470 = vunpack.c.l.b16 %v2293
    %v3471 = vunpack.c.h.b16 %v2293
    %v3472 = vunpack.c.l.b16 %v2294
    %v3473 = vunpack.c.h.b16 %v2294
    %v3474 = vunpack.c.l.b16 %v2295
    %v3475 = vunpack.c.h.b16 %v2295
    %v3476 = vunpack.c.l.b16 %v2296
    %v3477 = vunpack.c.h.b16 %v2296
    %v3478 = vunpack.c.l.b16 %v2297
    %v3479 = vunpack.c.h.b16 %v2297
    %v3480 = vunpack.c.l.b16 %v2298
    %v3481 = vunpack.c.h.b16 %v2298
    %v3482 = vunpack.c.l.b16 %v2299
    %v3483 = vunpack.c.h.b16 %v2299
    %v3484 = vunpack.c.l.b16 %v2300
    %v3485 = vunpack.c.h.b16 %v2300
    %v3486 = vunpack.c.l.b16 %v2301
    %v3487 = vunpack.c.h.b16 %v2301
    %v3488 = vunpack.c.l.b16 %v2302
    %v3489 = vunpack.c.h.b16 %v2302
    %v3490 = vunpack.c.l.b16 %v2303
    %v3491 = vunpack.c.h.b16 %v2303
    %v3492 = vunpack.c.l.b16 %v2304
    %v3493 = vunpack.c.h.b16 %v2304
    %v3494 = vunpack.c.l.b16 %v2305
    %v3495 = vunpack.c.h.b16 %v2305
    %v3496 = vunpack.c.l.b16 %v2306
    %v3497 = vunpack.c.h.b16 %v2306
    %v3498 = vunpack.c.l.b16 %v2307
    %v3499 = vunpack.c.h.b16 %v2307
    %v3500 = vunpack.c.l.b16 %v2308
    %v3501 = vunpack.c.h.b16 %v2308
    %v3502 = vunpack.c.l.b16 %v2309
    %v3503 = vunpack.c.h.b16 %v2309
    %v3504 = vunpack.c.l.b16 %v2310
    %v3505 = vunpack.c.h.b16 %v2310
    %v3506 = vunpack.c.l.b16 %v2311
    %v3507 = vunpack.c.h.b16 %v2311
    %v3508 = vunpack.c.l.b16 %v2312
    %v3509 = vunpack.c.h.b16 %v2312
    %v3510 = vunpack.c.l.b16 %v2313
    %v3511 = vunpack.c.h.b16 %v2313
    %v3512 = vunpack.c.l.b16 %v2314
    %v3513 = vunpack.c.h.b16 %v2314
    %v3514 = vunpack.c.l.b16 %v2315
    %v3515 = vunpack.c.h.b16 %v2315
    %v3516 = vunpack.c.l.b16 %v2316
    %v3517 = vunpack.c.h.b16 %v2316
    %v3518 = vunpack.c.l.b16 %v2317
    %v3519 = vunpack.c.h.b16 %v2317
    %v3520 = vunpack.c.l.b16 %v2318
    %v3521 = vunpack.c.h.b16 %v2318
    %v3522 = vunpack.c.l.b16 %v2319
    %v3523 = vunpack.c.h.b16 %v2319
    %v3524 = vunpack.c.l.b16 %v2320
    %v3525 = vunpack.c.h.b16 %v2320
    %v3526 = vunpack.c.l.b16 %v2321
    %v3527 = vunpack.c.h.b16 %v2321
    %v3528 = vunpack.c.l.b16 %v2322
    %v3529 = vunpack.c.h.b16 %v2322
    %v3530 = vunpack.c.l.b16 %v2323
    %v3531 = vunpack.c.h.b16 %v2323
    %v3532 = vunpack.c.l.b16 %v2324
    %v3533 = vunpack.c.h.b16 %v2324
    %v3534 = vunpack.c.l.b16 %v2325
    %v3535 = vunpack.c.h.b16 %v2325
    %v3536 = vunpack.c.l.b16 %v2326
    %v3537 = vunpack.c.h.b16 %v2326
    %v3538 = vunpack.c.l.b16 %v2327
    %v3539 = vunpack.c.h.b16 %v2327
    %v3540 = vunpack.c.l.b16 %v2328
    %v3541 = vunpack.c.h.b16 %v2328
    %v3542 = vunpack.c.l.b16 %v2329
    %v3543 = vunpack.c.h.b16 %v2329
    %v3544 = vunpack.c.l.b16 %v2330
    %v3545 = vunpack.c.h.b16 %v2330
    %v3546 = vunpack.c.l.b16 %v2331
    %v3547 = vunpack.c.h.b16 %v2331
    %v3548 = vunpack.c.l.b16 %v2332
    %v3549 = vunpack.c.h.b16 %v2332
    %v3550 = vunpack.c.l.b16 %v2333
    %v3551 = vunpack.c.h.b16 %v2333
    %v3552 = vunpack.c.l.b16 %v2334
    %v3553 = vunpack.c.h.b16 %v2334
    %v3554 = vunpack.c.l.b16 %v2335
    %v3555 = vunpack.c.h.b16 %v2335
    %v3556 = vunpack.c.l.b16 %v2336
    %v3557 = vunpack.c.h.b16 %v2336
    %v3558 = vunpack.c.l.b16 %v2337
    %v3559 = vunpack.c.h.b16 %v2337
    %v3560 = vunpack.c.l.b16 %v2338
    %v3561 = vunpack.c.h.b16 %v2338
    %v3562 = vunpack.c.l.b16 %v2339
    %v3563 = vunpack.c.h.b16 %v2339
    %v3564 = vunpack.c.l.b16 %v2340
    %v3565 = vunpack.c.h.b16 %v2340
    %v3566 = vunpack.c.l.b16 %v2341
    %v3567 = vunpack.c.h.b16 %v2341
    %v3568 = vunpack.c.l.b16 %v2342
    %v3569 = vunpack.c.h.b16 %v2342
    %v3570 = vunpack.c.l.b16 %v2343
    %v3571 = vunpack.c.h.b16 %v2343
    %v3572 = vunpack.c.l.b16 %v2344
    %v3573 = vunpack.c.h.b16 %v2344
    %v3574 = vunpack.c.l.b16 %v2345
    %v3575 = vunpack.c.h.b16 %v2345
    %v3576 = vunpack.c.l.b16 %v2346
    %v3577 = vunpack.c.h.b16 %v2346
    %v3578 = vunpack.c.l.b16 %v2347
    %v3579 = vunpack.c.h.b16 %v2347
    %v3580 = vunpack.c.l.b16 %v2348
    %v3581 = vunpack.c.h.b16 %v2348
    %v3582 = vunpack.c.l.b16 %v2349
    %v3583 = vunpack.c.h.b16 %v2349
    %v3584 = vunpack.c.l.b16 %v2350
    %v3585 = vunpack.c.h.b16 %v2350
    %v3586 = vunpack.c.l.b16 %v2351
    %v3587 = vunpack.c.h.b16 %v2351
    %v3588 = vunpack.c.l.b16 %v2352
    %v3589 = vunpack.c.h.b16 %v2352
    %v3590 = vunpack.c.l.b16 %v2353
    %v3591 = vunpack.c.h.b16 %v2353
    %v3592 = vunpack.c.l.b16 %v2354
    %v3593 = vunpack.c.h.b16 %v2354
    %v3594 = vunpack.c.l.b16 %v2355
    %v3595 = vunpack.c.h.b16 %v2355
    %v3596 = vunpack.c.l.b16 %v2356
    %v3597 = vunpack.c.h.b16 %v2356
    %v3598 = vunpack.c.l.b16 %v2357
    %v3599 = vunpack.c.h.b16 %v2357
    %v3600 = vunpack.c.l.b16 %v2358
    %v3601 = vunpack.c.h.b16 %v2358
    %v3602 = vunpack.c.l.b16 %v2359
    %v3603 = vunpack.c.h.b16 %v2359
    %v3604 = vunpack.c.l.b16 %v2360
    %v3605 = vunpack.c.h.b16 %v2360
    %v3606 = vunpack.c.l.b16 %v2361
    %v3607 = vunpack.c.h.b16 %v2361
    %v3608 = vunpack.c.l.b16 %v2362
    %v3609 = vunpack.c.h.b16 %v2362
    %v3610 = vunpack.c.l.b16 %v2363
    %v3611 = vunpack.c.h.b16 %v2363
    %v3612 = vunpack.c.l.b16 %v2364
    %v3613 = vunpack.c.h.b16 %v2364
    %v3614 = vunpack.c.l.b16 %v2365
    %v3615 = vunpack.c.h.b16 %v2365
    %v3616 = vunpack.c.l.b16 %v2366
    %v3617 = vunpack.c.h.b16 %v2366
    %v3618 = vunpack.c.l.b16 %v2367
    %v3619 = vunpack.c.h.b16 %v2367
    %v3620 = vunpack.c.l.b16 %v2368
    %v3621 = vunpack.c.h.b16 %v2368
    %v3622 = vunpack.c.l.b16 %v2369
    %v3623 = vunpack.c.h.b16 %v2369
    %v3624 = vunpack.c.l.b16 %v2370
    %v3625 = vunpack.c.h.b16 %v2370
    %v3626 = vunpack.c.l.b16 %v2371
    %v3627 = vunpack.c.h.b16 %v2371
    %v3628 = vunpack.c.l.b16 %v2372
    %v3629 = vunpack.c.h.b16 %v2372
    %v3630 = vunpack.c.l.b16 %v2373
    %v3631 = vunpack.c.h.b16 %v2373
    %v3632 = vunpack.c.l.b16 %v2374
    %v3633 = vunpack.c.h.b16 %v2374
    %v3634 = vunpack.c.l.b16 %v2375
    %v3635 = vunpack.c.h.b16 %v2375
    %v3636 = vunpack.c.l.b16 %v2376
    %v3637 = vunpack.c.h.b16 %v2376
    %v3638 = vunpack.c.l.b16 %v2377
    %v3639 = vunpack.c.h.b16 %v2377
    %v3640 = vunpack.c.l.b16 %v2378
    %v3641 = vunpack.c.h.b16 %v2378
    %v3642 = vunpack.c.l.b16 %v2379
    %v3643 = vunpack.c.h.b16 %v2379
    %v3644 = vunpack.c.l.b16 %v2380
    %v3645 = vunpack.c.h.b16 %v2380
    %v3646 = vunpack.c.l.b16 %v2381
    %v3647 = vunpack.c.h.b16 %v2381
    %v3648 = vunpack.c.l.b16 %v2382
    %v3649 = vunpack.c.h.b16 %v2382
    %v3650 = vunpack.c.l.b16 %v2383
    %v3651 = vunpack.c.h.b16 %v2383
    %v3652 = vunpack.c.l.b16 %v2384
    %v3653 = vunpack.c.h.b16 %v2384
    %v3654 = vunpack.c.l.b16 %v2385
    %v3655 = vunpack.c.h.b16 %v2385
    %v3656 = vunpack.c.l.b16 %v2386
    %v3657 = vunpack.c.h.b16 %v2386
    %v3658 = vunpack.c.l.b16 %v2387
    %v3659 = vunpack.c.h.b16 %v2387
    %v3660 = vunpack.c.l.b16 %v2388
    %v3661 = vunpack.c.h.b16 %v2388
    %v3662 = vunpack.c.l.b16 %v2389
    %v3663 = vunpack.c.h.b16 %v2389
    %v3664 = vunpack.c.l.b16 %v2390
    %v3665 = vunpack.c.h.b16 %v2390
    %v3666 = vunpack.c.l.b16 %v2391
    %v3667 = vunpack.c.h.b16 %v2391
    %v3668 = vunpack.c.l.b16 %v2392
    %v3669 = vunpack.c.h.b16 %v2392
    %v3670 = vunpack.c.l.b16 %v2393
    %v3671 = vunpack.c.h.b16 %v2393
    %v3672 = vunpack.c.l.b16 %v2394
    %v3673 = vunpack.c.h.b16 %v2394
    %v3674 = vunpack.c.l.b16 %v2395
    %v3675 = vunpack.c.h.b16 %v2395
    %v3676 = vunpack.c.l.b16 %v2396
    %v3677 = vunpack.c.h.b16 %v2396
    %v3678 = vunpack.c.l.b16 %v2397
    %v3679 = vunpack.c.h.b16 %v2397
    %v3680 = vunpack.c.l.b16 %v2398
    %v3681 = vunpack.c.h.b16 %v2398
    %v3682 = vunpack.c.l.b16 %v2399
    %v3683 = vunpack.c.h.b16 %v2399
    %v3684 = vunpack.c.l.b16 %v2400
    %v3685 = vunpack.c.h.b16 %v2400
    %v3686 = vunpack.c.l.b16 %v2401
    %v3687 = vunpack.c.h.b16 %v2401
    %v3688 = vunpack.c.l.b16 %v2402
    %v3689 = vunpack.c.h.b16 %v2402
    %v3690 = vunpack.c.l.b16 %v2403
    %v3691 = vunpack.c.h.b16 %v2403
    %v3692 = vunpack.c.l.b16 %v2404
    %v3693 = vunpack.c.h.b16 %v2404
    %v3694 = vunpack.c.l.b16 %v2405
    %v3695 = vunpack.c.h.b16 %v2405
    %v3696 = vunpack.c.l.b16 %v2406
    %v3697 = vunpack.c.h.b16 %v2406
    %v3698 = vunpack.c.l.b16 %v2407
    %v3699 = vunpack.c.h.b16 %v2407
    %v3700 = vunpack.c.l.b16 %v2408
    %v3701 = vunpack.c.h.b16 %v2408
    %v3702 = vunpack.c.l.b16 %v2409
    %v3703 = vunpack.c.h.b16 %v2409
    %v3704 = vunpack.c.l.b16 %v2410
    %v3705 = vunpack.c.h.b16 %v2410
    %v3706 = vunpack.c.l.b16 %v2411
    %v3707 = vunpack.c.h.b16 %v2411
    %v3708 = vunpack.c.l.b16 %v2412
    %v3709 = vunpack.c.h.b16 %v2412
    %v3710 = vunpack.c.l.b16 %v2413
    %v3711 = vunpack.c.h.b16 %v2413
    %v3712 = vunpack.c.l.b16 %v2414
    %v3713 = vunpack.c.h.b16 %v2414
    %v3714 = vunpack.c.l.b16 %v2415
    %v3715 = vunpack.c.h.b16 %v2415
    %v3716 = vunpack.c.l.b16 %v2416
    %v3717 = vunpack.c.h.b16 %v2416
    %v3718 = vunpack.c.l.b16 %v2417
    %v3719 = vunpack.c.h.b16 %v2417
    %v3720 = vunpack.c.l.b16 %v2418
    %v3721 = vunpack.c.h.b16 %v2418
    %v3722 = vunpack.c.l.b16 %v2419
    %v3723 = vunpack.c.h.b16 %v2419
    %v3724 = vunpack.c.l.b16 %v2420
    %v3725 = vunpack.c.h.b16 %v2420
    %v3726 = vunpack.c.l.b16 %v2421
    %v3727 = vunpack.c.h.b16 %v2421
    %v3728 = vunpack.c.l.b16 %v2422
    %v3729 = vunpack.c.h.b16 %v2422
    %v3730 = vunpack.c.l.b16 %v2423
    %v3731 = vunpack.c.h.b16 %v2423
    %v3732 = vunpack.c.l.b16 %v2424
    %v3733 = vunpack.c.h.b16 %v2424
    %v3734 = vunpack.c.l.b16 %v2425
    %v3735 = vunpack.c.h.b16 %v2425
    %v3736 = vunpack.c.l.b16 %v2426
    %v3737 = vunpack.c.h.b16 %v2426
    %v3738 = vunpack.c.l.b16 %v2427
    %v3739 = vunpack.c.h.b16 %v2427
    %v3740 = vunpack.c.l.b16 %v2428
    %v3741 = vunpack.c.h.b16 %v2428
    %v3742 = vunpack.c.l.b16 %v2429
    %v3743 = vunpack.c.h.b16 %v2429
    %v3744 = vunpack.c.l.b16 %v2430
    %v3745 = vunpack.c.h.b16 %v2430
    %v3746 = vunpack.c.l.b16 %v2431
    %v3747 = vunpack.c.h.b16 %v2431
    %v3748 = vunpack.c.l.b16 %v2432
    %v3749 = vunpack.c.h.b16 %v2432
    %v3750 = vunpack.c.l.b16 %v2433
    %v3751 = vunpack.c.h.b16 %v2433
    %v3752 = vunpack.c.l.b16 %v2434
    %v3753 = vunpack.c.h.b16 %v2434
    %v3754 = vunpack.c.l.b16 %v2435
    %v3755 = vunpack.c.h.b16 %v2435
    %v3756 = vunpack.c.l.b16 %v2436
    %v3757 = vunpack.c.h.b16 %v2436
    %v3758 = vunpack.c.l.b16 %v2437
    %v3759 = vunpack.c.h.b16 %v2437
    %v3760 = vunpack.c.l.b16 %v2438
    %v3761 = vunpack.c.h.b16 %v2438
    %v3762 = vunpack.c.l.b16 %v2439
    %v3763 = vunpack.c.h.b16 %v2439
    %v3764 = vunpack.c.l.b16 %v2440
    %v3765 = vunpack.c.h.b16 %v2440
    %v3766 = vunpack.c.l.b16 %v2441
    %v3767 = vunpack.c.h.b16 %v2441
    %v3768 = vunpack.c.l.b16 %v2442
    %v3769 = vunpack.c.h.b16 %v2442
    %v3770 = vunpack.c.l.b16 %v2443
    %v3771 = vunpack.c.h.b16 %v2443
    %v3772 = vunpack.c.l.b16 %v2444
    %v3773 = vunpack.c.h.b16 %v2444
    %v3774 = vunpack.c.l.b16 %v2445
    %v3775 = vunpack.c.h.b16 %v2445
    %v3776 = vunpack.c.l.b16 %v2446
    %v3777 = vunpack.c.h.b16 %v2446
    %v3778 = vunpack.c.l.b16 %v2447
    %v3779 = vunpack.c.h.b16 %v2447
    %v3780 = vunpack.c.l.b16 %v2448
    %v3781 = vunpack.c.h.b16 %v2448
    %v3782 = vunpack.c.l.b16 %v2449
    %v3783 = vunpack.c.h.b16 %v2449
    %v3784 = vunpack.c.l.b16 %v2450
    %v3785 = vunpack.c.h.b16 %v2450
    %v3786 = vunpack.c.l.b16 %v2451
    %v3787 = vunpack.c.h.b16 %v2451
    %v3788 = vunpack.c.l.b16 %v2452
    %v3789 = vunpack.c.h.b16 %v2452
    %v3790 = vunpack.c.l.b16 %v2453
    %v3791 = vunpack.c.h.b16 %v2453
    %v3792 = vunpack.c.l.b16 %v2454
    %v3793 = vunpack.c.h.b16 %v2454
    %v3794 = vunpack.c.l.b16 %v2455
    %v3795 = vunpack.c.h.b16 %v2455
    %v3796 = vunpack.c.l.b16 %v2456
    %v3797 = vunpack.c.h.b16 %v2456
    %v3798 = vunpack.c.l.b16 %v2457
    %v3799 = vunpack.c.h.b16 %v2457
    %v3800 = vunpack.c.l.b16 %v2458
    %v3801 = vunpack.c.h.b16 %v2458
    %v3802 = vunpack.c.l.b16 %v2459
    %v3803 = vunpack.c.h.b16 %v2459
    %v3804 = vunpack.c.l.b16 %v2460
    %v3805 = vunpack.c.h.b16 %v2460
    %v3806 = vunpack.c.l.b16 %v2461
    %v3807 = vunpack.c.h.b16 %v2461
    %v3808 = vunpack.c.l.b16 %v2462
    %v3809 = vunpack.c.h.b16 %v2462
    %v3810 = vunpack.c.l.b16 %v2463
    %v3811 = vunpack.c.h.b16 %v2463
    %v3812 = vunpack.c.l.b16 %v2464
    %v3813 = vunpack.c.h.b16 %v2464
    %v3814 = vunpack.c.l.b16 %v2465
    %v3815 = vunpack.c.h.b16 %v2465
    %v3816 = vunpack.c.l.b16 %v2466
    %v3817 = vunpack.c.h.b16 %v2466
    %v3818 = vunpack.c.l.b16 %v2467
    %v3819 = vunpack.c.h.b16 %v2467
    %v3820 = vunpack.c.l.b16 %v2468
    %v3821 = vunpack.c.h.b16 %v2468
    %v3822 = vunpack.c.l.b16 %v2469
    %v3823 = vunpack.c.h.b16 %v2469
    %v3824 = vunpack.c.l.b16 %v2470
    %v3825 = vunpack.c.h.b16 %v2470
    %v3826 = vunpack.c.l.b16 %v2471
    %v3827 = vunpack.c.h.b16 %v2471
    %v3828 = vunpack.c.l.b16 %v2472
    %v3829 = vunpack.c.h.b16 %v2472
    %v3830 = vunpack.c.l.b16 %v2473
    %v3831 = vunpack.c.h.b16 %v2473
    %v3832 = vunpack.c.l.b16 %v2474
    %v3833 = vunpack.c.h.b16 %v2474
    %v3834 = vunpack.c.l.b16 %v2475
    %v3835 = vunpack.c.h.b16 %v2475
    %v3836 = vunpack.c.l.b16 %v2476
    %v3837 = vunpack.c.h.b16 %v2476
    %v3838 = vunpack.c.l.b16 %v2477
    %v3839 = vunpack.c.h.b16 %v2477
    %v3840 = vunpack.c.l.b16 %v2478
    %v3841 = vunpack.c.h.b16 %v2478
    %v3842 = vunpack.c.l.b16 %v2479
    %v3843 = vunpack.c.h.b16 %v2479
    %v3844 = vunpack.c.l.b16 %v2480
    %v3845 = vunpack.c.h.b16 %v2480
    %v3846 = vunpack.c.l.b16 %v2481
    %v3847 = vunpack.c.h.b16 %v2481
    %v3848 = vunpack.c.l.b16 %v2482
    %v3849 = vunpack.c.h.b16 %v2482
    %v3850 = vunpack.c.l.b16 %v2483
    %v3851 = vunpack.c.h.b16 %v2483
    %v3852 = vunpack.c.l.b16 %v2484
    %v3853 = vunpack.c.h.b16 %v2484
    %v3854 = vunpack.c.l.b16 %v2485
    %v3855 = vunpack.c.h.b16 %v2485
    %v3856 = vunpack.c.l.b16 %v2486
    %v3857 = vunpack.c.h.b16 %v2486
    %v3858 = vunpack.c.l.b16 %v2487
    %v3859 = vunpack.c.h.b16 %v2487
    %v3860 = vunpack.c.l.b16 %v2488
    %v3861 = vunpack.c.h.b16 %v2488
    %v3862 = vunpack.c.l.b16 %v2489
    %v3863 = vunpack.c.h.b16 %v2489
    %v3864 = vunpack.c.l.b16 %v2490
    %v3865 = vunpack.c.h.b16 %v2490
    %v3866 = vunpack.c.l.b16 %v2491
    %v3867 = vunpack.c.h.b16 %v2491
    %v3868 = vunpack.c.l.b16 %v2492
    %v3869 = vunpack.c.h.b16 %v2492
    %v3870 = vunpack.c.l.b16 %v2493
    %v3871 = vunpack.c.h.b16 %v2493
    %v3872 = vunpack.c.l.b16 %v2494
    %v3873 = vunpack.c.h.b16 %v2494
    %v3874 = vunpack.c.l.b16 %v2495
    %v3875 = vunpack.c.h.b16 %v2495
    %v3876 = vunpack.c.l.b16 %v2496
    %v3877 = vunpack.c.h.b16 %v2496
    %v3878 = vunpack.c.l.b16 %v2497
    %v3879 = vunpack.c.h.b16 %v2497
    %v3880 = vunpack.c.l.b16 %v2498
    %v3881 = vunpack.c.h.b16 %v2498
    %v3882 = vunpack.c.l.b16 %v2499
    %v3883 = vunpack.c.h.b16 %v2499
    %v3884 = vunpack.c.l.b16 %v2500
    %v3885 = vunpack.c.h.b16 %v2500
    %v3886 = vunpack.c.l.b16 %v2501
    %v3887 = vunpack.c.h.b16 %v2501
    %v3888 = vunpack.c.l.b16 %v2502
    %v3889 = vunpack.c.h.b16 %v2502
    %v3890 = vunpack.c.l.b16 %v2503
    %v3891 = vunpack.c.h.b16 %v2503
    %v3892 = vunpack.c.l.b16 %v2504
    %v3893 = vunpack.c.h.b16 %v2504
    %v3894 = vunpack.c.l.b16 %v2505
    %v3895 = vunpack.c.h.b16 %v2505
    %v3896 = vunpack.c.l.b16 %v2506
    %v3897 = vunpack.c.h.b16 %v2506
    %v3898 = vunpack.c.l.b16 %v2507
    %v3899 = vunpack.c.h.b16 %v2507
    %v3900 = vunpack.c.l.b16 %v2508
    %v3901 = vunpack.c.h.b16 %v2508
    %v3902 = vunpack.c.l.b16 %v2509
    %v3903 = vunpack.c.h.b16 %v2509
    %v3904 = vunpack.c.l.b16 %v2510
    %v3905 = vunpack.c.h.b16 %v2510
    %v3906 = vunpack.c.l.b16 %v2511
    %v3907 = vunpack.c.h.b16 %v2511
    %v3908 = vunpack.c.l.b16 %v2512
    %v3909 = vunpack.c.h.b16 %v2512
    %v3910 = vunpack.c.l.b16 %v2513
    %v3911 = vunpack.c.h.b16 %v2513
    %v3912 = vunpack.c.l.b16 %v2514
    %v3913 = vunpack.c.h.b16 %v2514
    %v3914 = vunpack.c.l.b16 %v2515
    %v3915 = vunpack.c.h.b16 %v2515
    %v3916 = vunpack.c.l.b16 %v2516
    %v3917 = vunpack.c.h.b16 %v2516
    %v3918 = vunpack.c.l.b16 %v2517
    %v3919 = vunpack.c.h.b16 %v2517
    %v3920 = vunpack.c.l.b16 %v2518
    %v3921 = vunpack.c.h.b16 %v2518
    %v3922 = vunpack.c.l.b16 %v2519
    %v3923 = vunpack.c.h.b16 %v2519
    %v3924 = vunpack.c.l.b16 %v2520
    %v3925 = vunpack.c.h.b16 %v2520
    %v3926 = vunpack.c.l.b16 %v2521
    %v3927 = vunpack.c.h.b16 %v2521
    %v3928 = vunpack.c.l.b16 %v2522
    %v3929 = vunpack.c.h.b16 %v2522
    %v3930 = vunpack.c.l.b16 %v2523
    %v3931 = vunpack.c.h.b16 %v2523
    %v3932 = vunpack.c.l.b16 %v2524
    %v3933 = vunpack.c.h.b16 %v2524
    %v3934 = vunpack.c.l.b16 %v2525
    %v3935 = vunpack.c.h.b16 %v2525
    %v3936 = vunpack.c.l.b16 %v2526
    %v3937 = vunpack.c.h.b16 %v2526
    %v3938 = vunpack.c.l.b16 %v2527
    %v3939 = vunpack.c.h.b16 %v2527
    %v3940 = vunpack.c.l.b16 %v2528
    %v3941 = vunpack.c.h.b16 %v2528
    %v3942 = vunpack.c.l.b16 %v2529
    %v3943 = vunpack.c.h.b16 %v2529
    %v3944 = vunpack.c.l.b16 %v2530
    %v3945 = vunpack.c.h.b16 %v2530
    %v3946 = vunpack.c.l.b16 %v2531
    %v3947 = vunpack.c.h.b16 %v2531
    %v3948 = vunpack.c.l.b16 %v2532
    %v3949 = vunpack.c.h.b16 %v2532
    %v3950 = vunpack.c.l.b16 %v2533
    %v3951 = vunpack.c.h.b16 %v2533
    %v3952 = vunpack.c.l.b16 %v2534
    %v3953 = vunpack.c.h.b16 %v2534
    %v3954 = vunpack.c.l.b16 %v2535
    %v3955 = vunpack.c.h.b16 %v2535
    %v3956 = vunpack.c.l.b16 %v2536
    %v3957 = vunpack.c.h.b16 %v2536
    %v3958 = vunpack.c.l.b16 %v2537
    %v3959 = vunpack.c.h.b16 %v2537
    %v3960 = vunpack.c.l.b16 %v2538
    %v3961 = vunpack.c.h.b16 %v2538
    %v3962 = vunpack.c.l.b16 %v2539
    %v3963 = vunpack.c.h.b16 %v2539
    %v3964 = vunpack.c.l.b16 %v2540
    %v3965 = vunpack.c.h.b16 %v2540
    %v3966 = vunpack.c.l.b16 %v2541
    %v3967 = vunpack.c.h.b16 %v2541
    %v3968 = vunpack.c.l.b16 %v2542
    %v3969 = vunpack.c.h.b16 %v2542
    %v3970 = vunpack.c.l.b16 %v2543
    %v3971 = vunpack.c.h.b16 %v2543
    %v3972 = vunpack.c.l.b16 %v2544
    %v3973 = vunpack.c.h.b16 %v2544
    %v3974 = vunpack.c.l.b16 %v2545
    %v3975 = vunpack.c.h.b16 %v2545
    %v3976 = vunpack.c.l.b16 %v2546
    %v3977 = vunpack.c.h.b16 %v2546
    %v3978 = vunpack.c.l.b16 %v2547
    %v3979 = vunpack.c.h.b16 %v2547
    %v3980 = vunpack.c.l.b16 %v2548
    %v3981 = vunpack.c.h.b16 %v2548
    %v3982 = vunpack.c.l.b16 %v2549
    %v3983 = vunpack.c.h.b16 %v2549
    %v3984 = vunpack.c.l.b16 %v2550
    %v3985 = vunpack.c.h.b16 %v2550
    %v3986 = vunpack.c.l.b16 %v2551
    %v3987 = vunpack.c.h.b16 %v2551
    %v3988 = vunpack.c.l.b16 %v2552
    %v3989 = vunpack.c.h.b16 %v2552
    %v3990 = vunpack.c.l.b16 %v2553
    %v3991 = vunpack.c.h.b16 %v2553
    %v3992 = vunpack.c.l.b16 %v2554
    %v3993 = vunpack.c.h.b16 %v2554
    %v3994 = vunpack.c.l.b16 %v2555
    %v3995 = vunpack.c.h.b16 %v2555
    %v3996 = vpack.c.b16 %v3040, %v3036
    %v3997 = vpack.c.b16 %v3041, %v3037
    %v3998 = vpack.c.b16 %v3042, %v3038
    %v3999 = vpack.c.b16 %v3043, %v3039
    %v4000 = vpack.c.b16 %v3048, %v3044
    %v4001 = vpack.c.b16 %v3049, %v3045
    %v4002 = vpack.c.b16 %v3050, %v3046
    %v4003 = vpack.c.b16 %v3051, %v3047
    %v4004 = vpack.c.b16 %v3056, %v3052
    %v4005 = vpack.c.b16 %v3057, %v3053
    %v4006 = vpack.c.b16 %v3058, %v3054
    %v4007 = vpack.c.b16 %v3059, %v3055
    %v4008 = vpack.c.b16 %v3064, %v3060
    %v4009 = vpack.c.b16 %v3065, %v3061
    %v4010 = vpack.c.b16 %v3066, %v3062
    %v4011 = vpack.c.b16 %v3067, %v3063
    %v4012 = vpack.c.b16 %v3072, %v3068
    %v4013 = vpack.c.b16 %v3073, %v3069
    %v4014 = vpack.c.b16 %v3074, %v3070
    %v4015 = vpack.c.b16 %v3075, %v3071
    %v4016 = vpack.c.b16 %v3080, %v3076
    %v4017 = vpack.c.b16 %v3081, %v3077
    %v4018 = vpack.c.b16 %v3082, %v3078
    %v4019 = vpack.c.b16 %v3083, %v3079
    %v4020 = vpack.c.b16 %v3088, %v3084
    %v4021 = vpack.c.b16 %v3089, %v3085
    %v4022 = vpack.c.b16 %v3090, %v3086
    %v4023 = vpack.c.b16 %v3091, %v3087
    %v4024 = vpack.c.b16 %v3096, %v3092
    %v4025 = vpack.c.b16 %v3097, %v3093
    %v4026 = vpack.c.b16 %v3098, %v3094
    %v4027 = vpack.c.b16 %v3099, %v3095
    %v4028 = vpack.c.b16 %v3104, %v3100
    %v4029 = vpack.c.b16 %v3105, %v3101
    %v4030 = vpack.c.b16 %v3106, %v3102
    %v4031 = vpack.c.b16 %v3107, %v3103
    %v4032 = vpack.c.b16 %v3112, %v3108
    %v4033 = vpack.c.b16 %v3113, %v3109
    %v4034 = vpack.c.b16 %v3114, %v3110
    %v4035 = vpack.c.b16 %v3115, %v3111
    %v4036 = vpack.c.b16 %v3120, %v3116
    %v4037 = vpack.c.b16 %v3121, %v3117
    %v4038 = vpack.c.b16 %v3122, %v3118
    %v4039 = vpack.c.b16 %v3123, %v3119
    %v4040 = vpack.c.b16 %v3128, %v3124
    %v4041 = vpack.c.b16 %v3129, %v3125
    %v4042 = vpack.c.b16 %v3130, %v3126
    %v4043 = vpack.c.b16 %v3131, %v3127
    %v4044 = vpack.c.b16 %v3136, %v3132
    %v4045 = vpack.c.b16 %v3137, %v3133
    %v4046 = vpack.c.b16 %v3138, %v3134
    %v4047 = vpack.c.b16 %v3139, %v3135
    %v4048 = vpack.c.b16 %v3144, %v3140
    %v4049 = vpack.c.b16 %v3145, %v3141
    %v4050 = vpack.c.b16 %v3146, %v3142
    %v4051 = vpack.c.b16 %v3147, %v3143
    %v4052 = vpack.c.b16 %v3152, %v3148
    %v4053 = vpack.c.b16 %v3153, %v3149
    %v4054 = vpack.c.b16 %v3154, %v3150
    %v4055 = vpack.c.b16 %v3155, %v3151
    %v4056 = vpack.c.b16 %v3160, %v3156
    %v4057 = vpack.c.b16 %v3161, %v3157
    %v4058 = vpack.c.b16 %v3162, %v3158
    %v4059 = vpack.c.b16 %v3163, %v3159
    %v4060 = vpack.c.b16 %v3168, %v3164
    %v4061 = vpack.c.b16 %v3169, %v3165
    %v4062 = vpack.c.b16 %v3170, %v3166
    %v4063 = vpack.c.b16 %v3171, %v3167
    %v4064 = vpack.c.b16 %v3176, %v3172
    %v4065 = vpack.c.b16 %v3177, %v3173
    %v4066 = vpack.c.b16 %v3178, %v3174
    %v4067 = vpack.c.b16 %v3179, %v3175
    %v4068 = vpack.c.b16 %v3184, %v3180
    %v4069 = vpack.c.b16 %v3185, %v3181
    %v4070 = vpack.c.b16 %v3186, %v3182
    %v4071 = vpack.c.b16 %v3187, %v3183
    %v4072 = vpack.c.b16 %v3192, %v3188
    %v4073 = vpack.c.b16 %v3193, %v3189
    %v4074 = vpack.c.b16 %v3194, %v3190
    %v4075 = vpack.c.b16 %v3195, %v3191
    %v4076 = vpack.c.b16 %v3200, %v3196
    %v4077 = vpack.c.b16 %v3201, %v3197
    %v4078 = vpack.c.b16 %v3202, %v3198
    %v4079 = vpack.c.b16 %v3203, %v3199
    %v4080 = vpack.c.b16 %v3208, %v3204
    %v4081 = vpack.c.b16 %v3209, %v3205
    %v4082 = vpack.c.b16 %v3210, %v3206
    %v4083 = vpack.c.b16 %v3211, %v3207
    %v4084 = vpack.c.b16 %v3216, %v3212
    %v4085 = vpack.c.b16 %v3217, %v3213
    %v4086 = vpack.c.b16 %v3218, %v3214
    %v4087 = vpack.c.b16 %v3219, %v3215
    %v4088 = vpack.c.b16 %v3224, %v3220
    %v4089 = vpack.c.b16 %v3225, %v3221
    %v4090 = vpack.c.b16 %v3226, %v3222
    %v4091 = vpack.c.b16 %v3227, %v3223
    %v4092 = vpack.c.b16 %v3232, %v3228
    %v4093 = vpack.c.b16 %v3233, %v3229
    %v4094 = vpack.c.b16 %v3234, %v3230
    %v4095 = vpack.c.b16 %v3235, %v3231
    %v4096 = vpack.c.b16 %v3240, %v3236
    %v4097 = vpack.c.b16 %v3241, %v3237
    %v4098 = vpack.c.b16 %v3242, %v3238
    %v4099 = vpack.c.b16 %v3243, %v3239
    %v4100 = vpack.c.b16 %v3248, %v3244
    %v4101 = vpack.c.b16 %v3249, %v3245
    %v4102 = vpack.c.b16 %v3250, %v3246
    %v4103 = vpack.c.b16 %v3251, %v3247
    %v4104 = vpack.c.b16 %v3256, %v3252
    %v4105 = vpack.c.b16 %v3257, %v3253
    %v4106 = vpack.c.b16 %v3258, %v3254
    %v4107 = vpack.c.b16 %v3259, %v3255
    %v4108 = vpack.c.b16 %v3264, %v3260
    %v4109 = vpack.c.b16 %v3265, %v3261
    %v4110 = vpack.c.b16 %v3266, %v3262
    %v4111 = vpack.c.b16 %v3267, %v3263
    %v4112 = vpack.c.b16 %v3272, %v3268
    %v4113 = vpack.c.b16 %v3273, %v3269
    %v4114 = vpack.c.b16 %v3274, %v3270
    %v4115 = vpack.c.b16 %v3275, %v3271
    %v4116 = vpack.c.b16 %v3280, %v3276
    %v4117 = vpack.c.b16 %v3281, %v3277
    %v4118 = vpack.c.b16 %v3282, %v3278
    %v4119 = vpack.c.b16 %v3283, %v3279
    %v4120 = vpack.c.b16 %v3288, %v3284
    %v4121 = vpack.c.b16 %v3289, %v3285
    %v4122 = vpack.c.b16 %v3290, %v3286
    %v4123 = vpack.c.b16 %v3291, %v3287
    %v4124 = vpack.c.b16 %v3296, %v3292
    %v4125 = vpack.c.b16 %v3297, %v3293
    %v4126 = vpack.c.b16 %v3298, %v3294
    %v4127 = vpack.c.b16 %v3299, %v3295
    %v4128 = vpack.c.b16 %v3304, %v3300
    %v4129 = vpack.c.b16 %v3305, %v3301
    %v4130 = vpack.c.b16 %v3306, %v3302
    %v4131 = vpack.c.b16 %v3307, %v3303
    %v4132 = vpack.c.b16 %v3312, %v3308
    %v4133 = vpack.c.b16 %v3313, %v3309
    %v4134 = vpack.c.b16 %v3314, %v3310
    %v4135 = vpack.c.b16 %v3315, %v3311
    %v4136 = vpack.c.b16 %v3320, %v3316
    %v4137 = vpack.c.b16 %v3321, %v3317
    %v4138 = vpack.c.b16 %v3322, %v3318
    %v4139 = vpack.c.b16 %v3323, %v3319
    %v4140 = vpack.c.b16 %v3328, %v3324
    %v4141 = vpack.c.b16 %v3329, %v3325
    %v4142 = vpack.c.b16 %v3330, %v3326
    %v4143 = vpack.c.b16 %v3331, %v3327
    %v4144 = vpack.c.b16 %v3336, %v3332
    %v4145 = vpack.c.b16 %v3337, %v3333
    %v4146 = vpack.c.b16 %v3338, %v3334
    %v4147 = vpack.c.b16 %v3339, %v3335
    %v4148 = vpack.c.b16 %v3344, %v3340
    %v4149 = vpack.c.b16 %v3345, %v3341
    %v4150 = vpack.c.b16 %v3346, %v3342
    %v4151 = vpack.c.b16 %v3347, %v3343
    %v4152 = vpack.c.b16 %v3352, %v3348
    %v4153 = vpack.c.b16 %v3353, %v3349
    %v4154 = vpack.c.b16 %v3354, %v3350
    %v4155 = vpack.c.b16 %v3355, %v3351
    %v4156 = vpack.c.b16 %v3360, %v3356
    %v4157 = vpack.c.b16 %v3361, %v3357
    %v4158 = vpack.c.b16 %v3362, %v3358
    %v4159 = vpack.c.b16 %v3363, %v3359
    %v4160 = vpack.c.b16 %v3368, %v3364
    %v4161 = vpack.c.b16 %v3369, %v3365
    %v4162 = vpack.c.b16 %v3370, %v3366
    %v4163 = vpack.c.b16 %v3371, %v3367
    %v4164 = vpack.c.b16 %v3376, %v3372
    %v4165 = vpack.c.b16 %v3377, %v3373
    %v4166 = vpack.c.b16 %v3378, %v3374
    %v4167 = vpack.c.b16 %v3379, %v3375
    %v4168 = vpack.c.b16 %v3384, %v3380
    %v4169 = vpack.c.b16 %v3385, %v3381
    %v4170 = vpack.c.b16 %v3386, %v3382
    %v4171 = vpack.c.b16 %v3387, %v3383
    %v4172 = vpack.c.b16 %v3392, %v3388
    %v4173 = vpack.c.b16 %v3393, %v3389
    %v4174 = vpack.c.b16 %v3394, %v3390
    %v4175 = vpack.c.b16 %v3395, %v3391
    %v4176 = vpack.c.b16 %v3400, %v3396
    %v4177 = vpack.c.b16 %v3401, %v3397
    %v4178 = vpack.c.b16 %v3402, %v3398
    %v4179 = vpack.c.b16 %v3403, %v3399
    %v4180 = vpack.c.b16 %v3408, %v3404
    %v4181 = vpack.c.b16 %v3409, %v3405
    %v4182 = vpack.c.b16 %v3410, %v3406
    %v4183 = vpack.c.b16 %v3411, %v3407
    %v4184 = vpack.c.b16 %v3416, %v3412
    %v4185 = vpack.c.b16 %v3417, %v3413
    %v4186 = vpack.c.b16 %v3418, %v3414
    %v4187 = vpack.c.b16 %v3419, %v3415
    %v4188 = vpack.c.b16 %v3424, %v3420
    %v4189 = vpack.c.b16 %v3425, %v3421
    %v4190 = vpack.c.b16 %v3426, %v3422
    %v4191 = vpack.c.b16 %v3427, %v3423
    %v4192 = vpack.c.b16 %v3432, %v3428
    %v4193 = vpack.c.b16 %v3433, %v3429
    %v4194 = vpack.c.b16 %v3434, %v3430
    %v4195 = vpack.c.b16 %v3435, %v3431
    %v4196 = vpack.c.b16 %v3440, %v3436
    %v4197 = vpack.c.b16 %v3441, %v3437
    %v4198 = vpack.c.b16 %v3442, %v3438
    %v4199 = vpack.c.b16 %v3443, %v3439
    %v4200 = vpack.c.b16 %v3448, %v3444
    %v4201 = vpack.c.b16 %v3449, %v3445
    %v4202 = vpack.c.b16 %v3450, %v3446
    %v4203 = vpack.c.b16 %v3451, %v3447
    %v4204 = vpack.c.b16 %v3456, %v3452
    %v4205 = vpack.c.b16 %v3457, %v3453
    %v4206 = vpack.c.b16 %v3458, %v3454
    %v4207 = vpack.c.b16 %v3459, %v3455
    %v4208 = vpack.c.b16 %v3464, %v3460
    %v4209 = vpack.c.b16 %v3465, %v3461
    %v4210 = vpack.c.b16 %v3466, %v3462
    %v4211 = vpack.c.b16 %v3467, %v3463
    %v4212 = vpack.c.b16 %v3472, %v3468
    %v4213 = vpack.c.b16 %v3473, %v3469
    %v4214 = vpack.c.b16 %v3474, %v3470
    %v4215 = vpack.c.b16 %v3475, %v3471
    %v4216 = vpack.c.b16 %v3480, %v3476
    %v4217 = vpack.c.b16 %v3481, %v3477
    %v4218 = vpack.c.b16 %v3482, %v3478
    %v4219 = vpack.c.b16 %v3483, %v3479
    %v4220 = vpack.c.b16 %v3488, %v3484
    %v4221 = vpack.c.b16 %v3489, %v3485
    %v4222 = vpack.c.b16 %v3490, %v3486
    %v4223 = vpack.c.b16 %v3491, %v3487
    %v4224 = vpack.c.b16 %v3496, %v3492
    %v4225 = vpack.c.b16 %v3497, %v3493
    %v4226 = vpack.c.b16 %v3498, %v3494
    %v4227 = vpack.c.b16 %v3499, %v3495
    %v4228 = vpack.c.b16 %v3504, %v3500
    %v4229 = vpack.c.b16 %v3505, %v3501
    %v4230 = vpack.c.b16 %v3506, %v3502
    %v4231 = vpack.c.b16 %v3507, %v3503
    %v4232 = vpack.c.b16 %v3512, %v3508
    %v4233 = vpack.c.b16 %v3513, %v3509
    %v4234 = vpack.c.b16 %v3514, %v3510
    %v4235 = vpack.c.b16 %v3515, %v3511
    %v4236 = vpack.c.b16 %v3520, %v3516
    %v4237 = vpack.c.b16 %v3521, %v3517
    %v4238 = vpack.c.b16 %v3522, %v3518
    %v4239 = vpack.c.b16 %v3523, %v3519
    %v4240 = vpack.c.b16 %v3528, %v3524
    %v4241 = vpack.c.b16 %v3529, %v3525
    %v4242 = vpack.c.b16 %v3530, %v3526
    %v4243 = vpack.c.b16 %v3531, %v3527
    %v4244 = vpack.c.b16 %v3536, %v3532
    %v4245 = vpack.c.b16 %v3537, %v3533
    %v4246 = vpack.c.b16 %v3538, %v3534
    %v4247 = vpack.c.b16 %v3539, %v3535
    %v4248 = vpack.c.b16 %v3544, %v3540
    %v4249 = vpack.c.b16 %v3545, %v3541
    %v4250 = vpack.c.b16 %v3546, %v3542
    %v4251 = vpack.c.b16 %v3547, %v3543
    %v4252 = vpack.c.b16 %v3552, %v3548
    %v4253 = vpack.c.b16 %v3553, %v3549
    %v4254 = vpack.c.b16 %v3554, %v3550
    %v4255 = vpack.c.b16 %v3555, %v3551
    %v4256 = vpack.c.b16 %v3560, %v3556
    %v4257 = vpack.c.b16 %v3561, %v3557
    %v4258 = vpack.c.b16 %v3562, %v3558
    %v4259 = vpack.c.b16 %v3563, %v3559
    %v4260 = vpack.c.b16 %v3568, %v3564
    %v4261 = vpack.c.b16 %v3569, %v3565
    %v4262 = vpack.c.b16 %v3570, %v3566
    %v4263 = vpack.c.b16 %v3571, %v3567
    %v4264 = vpack.c.b16 %v3576, %v3572
    %v4265 = vpack.c.b16 %v3577, %v3573
    %v4266 = vpack.c.b16 %v3578, %v3574
    %v4267 = vpack.c.b16 %v3579, %v3575
    %v4268 = vpack.c.b16 %v3584, %v3580
    %v4269 = vpack.c.b16 %v3585, %v3581
    %v4270 = vpack.c.b16 %v3586, %v3582
    %v4271 = vpack.c.b16 %v3587, %v3583
    %v4272 = vpack.c.b16 %v3592, %v3588
    %v4273 = vpack.c.b16 %v3593, %v3589
    %v4274 = vpack.c.b16 %v3594, %v3590
    %v4275 = vpack.c.b16 %v3595, %v3591
    %v4276 = vpack.c.b16 %v3600, %v3596
    %v4277 = vpack.c.b16 %v3601, %v3597
    %v4278 = vpack.c.b16 %v3602, %v3598
    %v4279 = vpack.c.b16 %v3603, %v3599
    %v4280 = vpack.c.b16 %v3608, %v3604
    %v4281 = vpack.c.b16 %v3609, %v3605
    %v4282 = vpack.c.b16 %v3610, %v3606
    %v4283 = vpack.c.b16 %v3611, %v3607
    %v4284 = vpack.c.b16 %v3616, %v3612
    %v4285 = vpack.c.b16 %v3617, %v3613
    %v4286 = vpack.c.b16 %v3618, %v3614
    %v4287 = vpack.c.b16 %v3619, %v3615
    %v4288 = vpack.c.b16 %v3624, %v3620
    %v4289 = vpack.c.b16 %v3625, %v3621
    %v4290 = vpack.c.b16 %v3626, %v3622
    %v4291 = vpack.c.b16 %v3627, %v3623
    %v4292 = vpack.c.b16 %v3632, %v3628
    %v4293 = vpack.c.b16 %v3633, %v3629
    %v4294 = vpack.c.b16 %v3634, %v3630
    %v4295 = vpack.c.b16 %v3635, %v3631
    %v4296 = vpack.c.b16 %v3640, %v3636
    %v4297 = vpack.c.b16 %v3641, %v3637
    %v4298 = vpack.c.b16 %v3642, %v3638
    %v4299 = vpack.c.b16 %v3643, %v3639
    %v4300 = vpack.c.b16 %v3648, %v3644
    %v4301 = vpack.c.b16 %v3649, %v3645
    %v4302 = vpack.c.b16 %v3650, %v3646
    %v4303 = vpack.c.b16 %v3651, %v3647
    %v4304 = vpack.c.b16 %v3656, %v3652
    %v4305 = vpack.c.b16 %v3657, %v3653
    %v4306 = vpack.c.b16 %v3658, %v3654
    %v4307 = vpack.c.b16 %v3659, %v3655
    %v4308 = vpack.c.b16 %v3664, %v3660
    %v4309 = vpack.c.b16 %v3665, %v3661
    %v4310 = vpack.c.b16 %v3666, %v3662
    %v4311 = vpack.c.b16 %v3667, %v3663
    %v4312 = vpack.c.b16 %v3672, %v3668
    %v4313 = vpack.c.b16 %v3673, %v3669
    %v4314 = vpack.c.b16 %v3674, %v3670
    %v4315 = vpack.c.b16 %v3675, %v3671
    %v4316 = vpack.c.b16 %v3680, %v3676
    %v4317 = vpack.c.b16 %v3681, %v3677
    %v4318 = vpack.c.b16 %v3682, %v3678
    %v4319 = vpack.c.b16 %v3683, %v3679
    %v4320 = vpack.c.b16 %v3688, %v3684
    %v4321 = vpack.c.b16 %v3689, %v3685
    %v4322 = vpack.c.b16 %v3690, %v3686
    %v4323 = vpack.c.b16 %v3691, %v3687
    %v4324 = vpack.c.b16 %v3696, %v3692
    %v4325 = vpack.c.b16 %v3697, %v3693
    %v4326 = vpack.c.b16 %v3698, %v3694
    %v4327 = vpack.c.b16 %v3699, %v3695
    %v4328 = vpack.c.b16 %v3704, %v3700
    %v4329 = vpack.c.b16 %v3705, %v3701
    %v4330 = vpack.c.b16 %v3706, %v3702
    %v4331 = vpack.c.b16 %v3707, %v3703
    %v4332 = vpack.c.b16 %v3712, %v3708
    %v4333 = vpack.c.b16 %v3713, %v3709
    %v4334 = vpack.c.b16 %v3714, %v3710
    %v4335 = vpack.c.b16 %v3715, %v3711
    %v4336 = vpack.c.b16 %v3720, %v3716
    %v4337 = vpack.c.b16 %v3721, %v3717
    %v4338 = vpack.c.b16 %v3722, %v3718
    %v4339 = vpack.c.b16 %v3723, %v3719
    %v4340 = vpack.c.b16 %v3728, %v3724
    %v4341 = vpack.c.b16 %v3729, %v3725
    %v4342 = vpack.c.b16 %v3730, %v3726
    %v4343 = vpack.c.b16 %v3731, %v3727
    %v4344 = vpack.c.b16 %v3736, %v3732
    %v4345 = vpack.c.b16 %v3737, %v3733
    %v4346 = vpack.c.b16 %v3738, %v3734
    %v4347 = vpack.c.b16 %v3739, %v3735
    %v4348 = vpack.c.b16 %v3744, %v3740
    %v4349 = vpack.c.b16 %v3745, %v3741
    %v4350 = vpack.c.b16 %v3746, %v3742
    %v4351 = vpack.c.b16 %v3747, %v3743
    %v4352 = vpack.c.b16 %v3752, %v3748
    %v4353 = vpack.c.b16 %v3753, %v3749
    %v4354 = vpack.c.b16 %v3754, %v3750
    %v4355 = vpack.c.b16 %v3755, %v3751
    %v4356 = vpack.c.b16 %v3760, %v3756
    %v4357 = vpack.c.b16 %v3761, %v3757
    %v4358 = vpack.c.b16 %v3762, %v3758
    %v4359 = vpack.c.b16 %v3763, %v3759
    %v4360 = vpack.c.b16 %v3768, %v3764
    %v4361 = vpack.c.b16 %v3769, %v3765
    %v4362 = vpack.c.b16 %v3770, %v3766
    %v4363 = vpack.c.b16 %v3771, %v3767
    %v4364 = vpack.c.b16 %v3776, %v3772
    %v4365 = vpack.c.b16 %v3777, %v3773
    %v4366 = vpack.c.b16 %v3778, %v3774
    %v4367 = vpack.c.b16 %v3779, %v3775
    %v4368 = vpack.c.b16 %v3784, %v3780
    %v4369 = vpack.c.b16 %v3785, %v3781
    %v4370 = vpack.c.b16 %v3786, %v3782
    %v4371 = vpack.c.b16 %v3787, %v3783
    %v4372 = vpack.c.b16 %v3792, %v3788
    %v4373 = vpack.c.b16 %v3793, %v3789
    %v4374 = vpack.c.b16 %v3794, %v3790
    %v4375 = vpack.c.b16 %v3795, %v3791
    %v4376 = vpack.c.b16 %v3800, %v3796
    %v4377 = vpack.c.b16 %v3801, %v3797
    %v4378 = vpack.c.b16 %v3802, %v3798
    %v4379 = vpack.c.b16 %v3803, %v3799
    %v4380 = vpack.c.b16 %v3808, %v3804
    %v4381 = vpack.c.b16 %v3809, %v3805
    %v4382 = vpack.c.b16 %v3810, %v3806
    %v4383 = vpack.c.b16 %v3811, %v3807
    %v4384 = vpack.c.b16 %v3816, %v3812
    %v4385 = vpack.c.b16 %v3817, %v3813
    %v4386 = vpack.c.b16 %v3818, %v3814
    %v4387 = vpack.c.b16 %v3819, %v3815
    %v4388 = vpack.c.b16 %v3824, %v3820
    %v4389 = vpack.c.b16 %v3825, %v3821
    %v4390 = vpack.c.b16 %v3826, %v3822
    %v4391 = vpack.c.b16 %v3827, %v3823
    %v4392 = vpack.c.b16 %v3832, %v3828
    %v4393 = vpack.c.b16 %v3833, %v3829
    %v4394 = vpack.c.b16 %v3834, %v3830
    %v4395 = vpack.c.b16 %v3835, %v3831
    %v4396 = vpack.c.b16 %v3840, %v3836
    %v4397 = vpack.c.b16 %v3841, %v3837
    %v4398 = vpack.c.b16 %v3842, %v3838
    %v4399 = vpack.c.b16 %v3843, %v3839
    %v4400 = vpack.c.b16 %v3848, %v3844
    %v4401 = vpack.c.b16 %v3849, %v3845
    %v4402 = vpack.c.b16 %v3850, %v3846
    %v4403 = vpack.c.b16 %v3851, %v3847
    %v4404 = vpack.c.b16 %v3856, %v3852
    %v4405 = vpack.c.b16 %v3857, %v3853
    %v4406 = vpack.c.b16 %v3858, %v3854
    %v4407 = vpack.c.b16 %v3859, %v3855
    %v4408 = vpack.c.b16 %v3864, %v3860
    %v4409 = vpack.c.b16 %v3865, %v3861
    %v4410 = vpack.c.b16 %v3866, %v3862
    %v4411 = vpack.c.b16 %v3867, %v3863
    %v4412 = vpack.c.b16 %v3872, %v3868
    %v4413 = vpack.c.b16 %v3873, %v3869
    %v4414 = vpack.c.b16 %v3874, %v3870
    %v4415 = vpack.c.b16 %v3875, %v3871
    %v4416 = vpack.c.b16 %v3880, %v3876
    %v4417 = vpack.c.b16 %v3881, %v3877
    %v4418 = vpack.c.b16 %v3882, %v3878
    %v4419 = vpack.c.b16 %v3883, %v3879
    %v4420 = vpack.c.b16 %v3888, %v3884
    %v4421 = vpack.c.b16 %v3889, %v3885
    %v4422 = vpack.c.b16 %v3890, %v3886
    %v4423 = vpack.c.b16 %v3891, %v3887
    %v4424 = vpack.c.b16 %v3896, %v3892
    %v4425 = vpack.c.b16 %v3897, %v3893
    %v4426 = vpack.c.b16 %v3898, %v3894
    %v4427 = vpack.c.b16 %v3899, %v3895
    %v4428 = vpack.c.b16 %v3904, %v3900
    %v4429 = vpack.c.b16 %v3905, %v3901
    %v4430 = vpack.c.b16 %v3906, %v3902
    %v4431 = vpack.c.b16 %v3907, %v3903
    %v4432 = vpack.c.b16 %v3912, %v3908
    %v4433 = vpack.c.b16 %v3913, %v3909
    %v4434 = vpack.c.b16 %v3914, %v3910
    %v4435 = vpack.c.b16 %v3915, %v3911
    %v4436 = vpack.c.b16 %v3920, %v3916
    %v4437 = vpack.c.b16 %v3921, %v3917
    %v4438 = vpack.c.b16 %v3922, %v3918
    %v4439 = vpack.c.b16 %v3923, %v3919
    %v4440 = vpack.c.b16 %v3928, %v3924
    %v4441 = vpack.c.b16 %v3929, %v3925
    %v4442 = vpack.c.b16 %v3930, %v3926
    %v4443 = vpack.c.b16 %v3931, %v3927
    %v4444 = vpack.c.b16 %v3936, %v3932
    %v4445 = vpack.c.b16 %v3937, %v3933
    %v4446 = vpack.c.b16 %v3938, %v3934
    %v4447 = vpack.c.b16 %v3939, %v3935
    %v4448 = vpack.c.b16 %v3944, %v3940
    %v4449 = vpack.c.b16 %v3945, %v3941
    %v4450 = vpack.c.b16 %v3946, %v3942
    %v4451 = vpack.c.b16 %v3947, %v3943
    %v4452 = vpack.c.b16 %v3952, %v3948
    %v4453 = vpack.c.b16 %v3953, %v3949
    %v4454 = vpack.c.b16 %v3954, %v3950
    %v4455 = vpack.c.b16 %v3955, %v3951
    %v4456 = vpack.c.b16 %v3960, %v3956
    %v4457 = vpack.c.b16 %v3961, %v3957
    %v4458 = vpack.c.b16 %v3962, %v3958
    %v4459 = vpack.c.b16 %v3963, %v3959
    %v4460 = vpack.c.b16 %v3968, %v3964
    %v4461 = vpack.c.b16 %v3969, %v3965
    %v4462 = vpack.c.b16 %v3970, %v3966
    %v4463 = vpack.c.b16 %v3971, %v3967
    %v4464 = vpack.c.b16 %v3976, %v3972
    %v4465 = vpack.c.b16 %v3977, %v3973
    %v4466 = vpack.c.b16 %v3978, %v3974
    %v4467 = vpack.c.b16 %v3979, %v3975
    %v4468 = vpack.c.b16 %v3984, %v3980
    %v4469 = vpack.c.b16 %v3985, %v3981
    %v4470 = vpack.c.b16 %v3986, %v3982
    %v4471 = vpack.c.b16 %v3987, %v3983
    %v4472 = vpack.c.b16 %v3992, %v3988
    %v4473 = vpack.c.b16 %v3993, %v3989
    %v4474 = vpack.c.b16 %v3994, %v3990
    %v4475 = vpack.c.b16 %v3995, %v3991
    %4956 = vmatprep.subr.bf16.mxu0 %v3997
    %4957 = vmatpush1.bf16.msra.mxu0 %v3996
    %4958 = vmatprep.subr.bf16.mxu0 %v4001
    %4959 = vmatpush1.bf16.msra.mxu0 %v4000
    %4960 = vmatprep.subr.bf16.mxu0 %v4005
    %4961 = vmatpush1.bf16.msra.mxu0 %v4004
    %4962 = vmatprep.subr.bf16.mxu0 %v4009
    %4963 = vmatpush1.bf16.msra.mxu0 %v4008
    %4964 = vmatprep.subr.bf16.mxu0 %v4013
    %4965 = vmatpush1.bf16.msra.mxu0 %v4012
    %4966 = vmatprep.subr.bf16.mxu0 %v4017
    %4967 = vmatpush1.bf16.msra.mxu0 %v4016
    %4968 = vmatprep.subr.bf16.mxu0 %v4021
    %4969 = vmatpush1.bf16.msra.mxu0 %v4020
    %4970 = vmatprep.subr.bf16.mxu0 %v4025
    %4971 = vmatpush1.bf16.msra.mxu0 %v4024
    %4972 = vmatprep.subr.bf16.mxu0 %v4029
    %4973 = vmatpush1.bf16.msra.mxu0 %v4028
    %4974 = vmatprep.subr.bf16.mxu0 %v4033
    %4975 = vmatpush1.bf16.msra.mxu0 %v4032
    %4976 = vmatprep.subr.bf16.mxu0 %v4037
    %4977 = vmatpush1.bf16.msra.mxu0 %v4036
    %4978 = vmatprep.subr.bf16.mxu0 %v4041
    %4979 = vmatpush1.bf16.msra.mxu0 %v4040
    %4980 = vmatprep.subr.bf16.mxu0 %v4045
    %4981 = vmatpush1.bf16.msra.mxu0 %v4044
    %4982 = vmatprep.subr.bf16.mxu0 %v4049
    %4983 = vmatpush1.bf16.msra.mxu0 %v4048
    %4984 = vmatprep.subr.bf16.mxu0 %v4053
    %4985 = vmatpush1.bf16.msra.mxu0 %v4052
    %4986 = vmatprep.subr.bf16.mxu0 %v4057
    %4987 = vmatpush1.bf16.msra.mxu0 %v4056
    %4988 = vmatprep.mubr.bf16.mxu0 %v2041
    %4989 = vmatmul.mubr.bf16.gmra.mrb[0].mxu0 %v2040
    %v4990 = vpop.f32.mrb[0].mxu0
    %v4991 = vadd.f32 0.0, %v4990
    %v4992 = vpop.f32.mrb[0].mxu0
    %v4993 = vadd.f32 0.0, %v4992
    %v4994 = vpop.f32.mrb[0].mxu0
    %v4995 = vadd.f32 0.0, %v4994
    %v4996 = vpop.f32.mrb[0].mxu0
    %v4997 = vadd.f32 0.0, %v4996
    %4998 = vmatprep.mubr.bf16.mxu0 %v2044
    %4999 = vmatmul.mubr.bf16.gmra.mrb[0].mxu0 %v2043
    %v5000 = vpop.f32.mrb[0].mxu0
    %v5001 = vadd.f32 0.0, %v5000
    %v5002 = vpop.f32.mrb[0].mxu0
    %v5003 = vadd.f32 0.0, %v5002
    %v5004 = vpop.f32.mrb[0].mxu0
    %v5005 = vadd.f32 0.0, %v5004
    %v5006 = vpop.f32.mrb[0].mxu0
    %v5007 = vadd.f32 0.0, %v5006
    %5008 = vmatprep.mubr.bf16.mxu0 %v2047
    %5009 = vmatmul.mubr.bf16.gmra.mrb[0].mxu0 %v2046
    %v5010 = vpop.f32.mrb[0].mxu0
    %v5011 = vadd.f32 0.0, %v5010
    %v5012 = vpop.f32.mrb[0].mxu0
    %v5013 = vadd.f32 0.0, %v5012
    %v5014 = vpop.f32.mrb[0].mxu0
    %v5015 = vadd.f32 0.0, %v5014
    %v5016 = vpop.f32.mrb[0].mxu0
    %v5017 = vadd.f32 0.0, %v5016
    %5018 = vmatprep.mubr.bf16.mxu0 %v2050
    %5019 = vmatmul.mubr.bf16.gmra.mrb[0].mxu0 %v2049
    %v5020 = vpop.f32.mrb[0].mxu0
    %v5021 = vadd.f32 0.0, %v5020
    %v5022 = vpop.f32.mrb[0].mxu0
    %v5023 = vadd.f32 0.0, %v5022
    %v5024 = vpop.f32.mrb[0].mxu0
    %v5025 = vadd.f32 0.0, %v5024
    %v5026 = vpop.f32.mrb[0].mxu0
    %v5027 = vadd.f32 0.0, %v5026
    %5028 = vdwg.mxu0
    %5029 = vmatprep.subr.bf16.mxu0 %v4061
    %5030 = vmatpush1.bf16.msra.mxu0 %v4060
    %5031 = vmatprep.subr.bf16.mxu0 %v4065
    %5032 = vmatpush1.bf16.msra.mxu0 %v4064
    %5033 = vmatprep.subr.bf16.mxu0 %v4069
    %5034 = vmatpush1.bf16.msra.mxu0 %v4068
    %5035 = vmatprep.subr.bf16.mxu0 %v4073
    %5036 = vmatpush1.bf16.msra.mxu0 %v4072
    %5037 = vmatprep.subr.bf16.mxu0 %v4077
    %5038 = vmatpush1.bf16.msra.mxu0 %v4076
    %5039 = vmatprep.subr.bf16.mxu0 %v4081
    %5040 = vmatpush1.bf16.msra.mxu0 %v4080
    %5041 = vmatprep.subr.bf16.mxu0 %v4085
    %5042 = vmatpush1.bf16.msra.mxu0 %v4084
    %5043 = vmatprep.subr.bf16.mxu0 %v4089
    %5044 = vmatpush1.bf16.msra.mxu0 %v4088
    %5045 = vmatprep.subr.bf16.mxu0 %v4093
    %5046 = vmatpush1.bf16.msra.mxu0 %v4092
    %5047 = vmatprep.subr.bf16.mxu0 %v4097
    %5048 = vmatpush1.bf16.msra.mxu0 %v4096
    %5049 = vmatprep.subr.bf16.mxu0 %v4101
    %5050 = vmatpush1.bf16.msra.mxu0 %v4100
    %5051 = vmatprep.subr.bf16.mxu0 %v4105
    %5052 = vmatpush1.bf16.msra.mxu0 %v4104
    %5053 = vmatprep.subr.bf16.mxu0 %v4109
    %5054 = vmatpush1.bf16.msra.mxu0 %v4108
    %5055 = vmatprep.subr.bf16.mxu0 %v4113
    %5056 = vmatpush1.bf16.msra.mxu0 %v4112
    %5057 = vmatprep.subr.bf16.mxu0 %v4117
    %5058 = vmatpush1.bf16.msra.mxu0 %v4116
    %5059 = vmatprep.subr.bf16.mxu0 %v4121
    %5060 = vmatpush1.bf16.msra.mxu0 %v4120
    %5061 = vmatprep.mubr.bf16.mxu0 %v2058
    %5062 = vmatmul.mubr.bf16.gmra.mrb[0].mxu0 %v2042
    %v5063 = vpop.f32.mrb[0].mxu0
    %v5064 = vadd.f32 %v4991, %v5063
    %v5065 = vpop.f32.mrb[0].mxu0
    %v5066 = vadd.f32 %v4993, %v5065
    %v5067 = vpop.f32.mrb[0].mxu0
    %v5068 = vadd.f32 %v4995, %v5067
    %v5069 = vpop.f32.mrb[0].mxu0
    %v5070 = vadd.f32 %v4997, %v5069
    %5071 = vmatprep.mubr.bf16.mxu0 %v2061
    %5072 = vmatmul.mubr.bf16.gmra.mrb[0].mxu0 %v2045
    %v5073 = vpop.f32.mrb[0].mxu0
    %v5074 = vadd.f32 %v5001, %v5073
    %v5075 = vpop.f32.mrb[0].mxu0
    %v5076 = vadd.f32 %v5003, %v5075
    %v5077 = vpop.f32.mrb[0].mxu0
    %v5078 = vadd.f32 %v5005, %v5077
    %v5079 = vpop.f32.mrb[0].mxu0
    %v5080 = vadd.f32 %v5007, %v5079
    %5081 = vmatprep.mubr.bf16.mxu0 %v2064
    %5082 = vmatmul.mubr.bf16.gmra.mrb[0].mxu0 %v2048
    %v5083 = vpop.f32.mrb[0].mxu0
    %v5084 = vadd.f32 %v5011, %v5083
    %v5085 = vpop.f32.mrb[0].mxu0
    %v5086 = vadd.f32 %v5013, %v5085
    %v5087 = vpop.f32.mrb[0].mxu0
    %v5088 = vadd.f32 %v5015, %v5087
    %v5089 = vpop.f32.mrb[0].mxu0
    %v5090 = vadd.f32 %v5017, %v5089
    %5091 = vmatprep.mubr.bf16.mxu0 %v2067
    %5092 = vmatmul.mubr.bf16.gmra.mrb[0].mxu0 %v2051
    %v5093 = vpop.f32.mrb[0].mxu0
    %v5094 = vadd.f32 %v5021, %v5093
    %v5095 = vpop.f32.mrb[0].mxu0
    %v5096 = vadd.f32 %v5023, %v5095
    %v5097 = vpop.f32.mrb[0].mxu0
    %v5098 = vadd.f32 %v5025, %v5097
    %v5099 = vpop.f32.mrb[0].mxu0
    %v5100 = vadd.f32 %v5027, %v5099
    %5101 = vdwg.mxu0
    %5102 = vmatprep.subr.bf16.mxu0 %v4125
    %5103 = vmatpush1.bf16.msra.mxu0 %v4124
    %5104 = vmatprep.subr.bf16.mxu0 %v4129
    %5105 = vmatpush1.bf16.msra.mxu0 %v4128
    %5106 = vmatprep.subr.bf16.mxu0 %v4133
    %5107 = vmatpush1.bf16.msra.mxu0 %v4132
    %5108 = vmatprep.subr.bf16.mxu0 %v4137
    %5109 = vmatpush1.bf16.msra.mxu0 %v4136
    %5110 = vmatprep.subr.bf16.mxu0 %v4141
    %5111 = vmatpush1.bf16.msra.mxu0 %v4140
    %5112 = vmatprep.subr.bf16.mxu0 %v4145
    %5113 = vmatpush1.bf16.msra.mxu0 %v4144
    %5114 = vmatprep.subr.bf16.mxu0 %v4149
    %5115 = vmatpush1.bf16.msra.mxu0 %v4148
    %5116 = vmatprep.subr.bf16.mxu0 %v4153
    %5117 = vmatpush1.bf16.msra.mxu0 %v4152
    %5118 = vmatprep.subr.bf16.mxu0 %v4157
    %5119 = vmatpush1.bf16.msra.mxu0 %v4156
    %5120 = vmatprep.subr.bf16.mxu0 %v4161
    %5121 = vmatpush1.bf16.msra.mxu0 %v4160
    %5122 = vmatprep.subr.bf16.mxu0 %v4165
    %5123 = vmatpush1.bf16.msra.mxu0 %v4164
    %5124 = vmatprep.subr.bf16.mxu0 %v4169
    %5125 = vmatpush1.bf16.msra.mxu0 %v4168
    %5126 = vmatprep.subr.bf16.mxu0 %v4173
    %5127 = vmatpush1.bf16.msra.mxu0 %v4172
    %5128 = vmatprep.subr.bf16.mxu0 %v4177
    %5129 = vmatpush1.bf16.msra.mxu0 %v4176
    %5130 = vmatprep.subr.bf16.mxu0 %v4181
    %5131 = vmatpush1.bf16.msra.mxu0 %v4180
    %5132 = vmatprep.subr.bf16.mxu0 %v4185
    %5133 = vmatpush1.bf16.msra.mxu0 %v4184
    %5134 = vmatprep.mubr.bf16.mxu0 %v2060
    %5135 = vmatmul.mubr.bf16.gmra.mrb[0].mxu0 %v2059
    %v5136 = vpop.f32.mrb[0].mxu0
    %v5137 = vadd.f32 %v5064, %v5136
    %v5138 = vpop.f32.mrb[0].mxu0
    %v5139 = vadd.f32 %v5066, %v5138
    %v5140 = vpop.f32.mrb[0].mxu0
    %v5141 = vadd.f32 %v5068, %v5140
    %v5142 = vpop.f32.mrb[0].mxu0
    %v5143 = vadd.f32 %v5070, %v5142
    %5144 = vmatprep.mubr.bf16.mxu0 %v2063
    %5145 = vmatmul.mubr.bf16.gmra.mrb[0].mxu0 %v2062
    %v5146 = vpop.f32.mrb[0].mxu0
    %v5147 = vadd.f32 %v5074, %v5146
    %v5148 = vpop.f32.mrb[0].mxu0
    %v5149 = vadd.f32 %v5076, %v5148
    %v5150 = vpop.f32.mrb[0].mxu0
    %v5151 = vadd.f32 %v5078, %v5150
    %v5152 = vpop.f32.mrb[0].mxu0
    %v5153 = vadd.f32 %v5080, %v5152
    %5154 = vmatprep.mubr.bf16.mxu0 %v2066
    %5155 = vmatmul.mubr.bf16.gmra.mrb[0].mxu0 %v2065
    %v5156 = vpop.f32.mrb[0].mxu0
    %v5157 = vadd.f32 %v5084, %v5156
    %v5158 = vpop.f32.mrb[0].mxu0
    %v5159 = vadd.f32 %v5086, %v5158
    %v5160 = vpop.f32.mrb[0].mxu0
    %v5161 = vadd.f32 %v5088, %v5160
    %v5162 = vpop.f32.mrb[0].mxu0
    %v5163 = vadd.f32 %v5090, %v5162
    %5164 = vmatprep.mubr.bf16.mxu0 %v2069
    %5165 = vmatmul.mubr.bf16.gmra.mrb[0].mxu0 %v2068
    %v5166 = vpop.f32.mrb[0].mxu0
    %v5167 = vadd.f32 %v5094, %v5166
    %v5168 = vpop.f32.mrb[0].mxu0
    %v5169 = vadd.f32 %v5096, %v5168
    %v5170 = vpop.f32.mrb[0].mxu0
    %v5171 = vadd.f32 %v5098, %v5170
    %v5172 = vpop.f32.mrb[0].mxu0
    %v5173 = vadd.f32 %v5100, %v5172
    %5174 = vdwg.mxu0
    %5175 = vmatprep.subr.bf16.mxu0 %v4189
    %5176 = vmatpush1.bf16.msra.mxu0 %v4188
    %5177 = vmatprep.subr.bf16.mxu0 %v4193
    %5178 = vmatpush1.bf16.msra.mxu0 %v4192
    %5179 = vmatprep.subr.bf16.mxu0 %v4197
    %5180 = vmatpush1.bf16.msra.mxu0 %v4196
    %5181 = vmatprep.subr.bf16.mxu0 %v4201
    %5182 = vmatpush1.bf16.msra.mxu0 %v4200
    %5183 = vmatprep.subr.bf16.mxu0 %v4205
    %5184 = vmatpush1.bf16.msra.mxu0 %v4204
    %5185 = vmatprep.subr.bf16.mxu0 %v4209
    %5186 = vmatpush1.bf16.msra.mxu0 %v4208
    %5187 = vmatprep.subr.bf16.mxu0 %v4213
    %5188 = vmatpush1.bf16.msra.mxu0 %v4212
    %5189 = vmatprep.subr.bf16.mxu0 %v4217
    %5190 = vmatpush1.bf16.msra.mxu0 %v4216
    %5191 = vmatprep.subr.bf16.mxu0 %v4221
    %5192 = vmatpush1.bf16.msra.mxu0 %v4220
    %5193 = vmatprep.subr.bf16.mxu0 %v4225
    %5194 = vmatpush1.bf16.msra.mxu0 %v4224
    %5195 = vmatprep.subr.bf16.mxu0 %v4229
    %5196 = vmatpush1.bf16.msra.mxu0 %v4228
    %5197 = vmatprep.subr.bf16.mxu0 %v4233
    %5198 = vmatpush1.bf16.msra.mxu0 %v4232
    %5199 = vmatprep.subr.bf16.mxu0 %v4237
    %5200 = vmatpush1.bf16.msra.mxu0 %v4236
    %5201 = vmatprep.subr.bf16.mxu0 %v4241
    %5202 = vmatpush1.bf16.msra.mxu0 %v4240
    %5203 = vmatprep.subr.bf16.mxu0 %v4245
    %5204 = vmatpush1.bf16.msra.mxu0 %v4244
    %5205 = vmatprep.subr.bf16.mxu0 %v4249
    %5206 = vmatpush1.bf16.msra.mxu0 %v4248
    %5207 = vmatprep.mubr.bf16.mxu0 %v2044
    %5208 = vmatmul.mubr.bf16.gmra.mrb[0].mxu0 %v2043
    %v5209 = vpop.f32.mrb[0].mxu0
    %v5210 = vadd.f32 %v5137, %v5209
    %v5211 = vpop.f32.mrb[0].mxu0
    %v5212 = vadd.f32 %v5139, %v5211
    %v5213 = vpop.f32.mrb[0].mxu0
    %v5214 = vadd.f32 %v5141, %v5213
    %v5215 = vpop.f32.mrb[0].mxu0
    %v5216 = vadd.f32 %v5143, %v5215
    %5217 = vmatprep.mubr.bf16.mxu0 %v2047
    %5218 = vmatmul.mubr.bf16.gmra.mrb[0].mxu0 %v2046
    %v5219 = vpop.f32.mrb[0].mxu0
    %v5220 = vadd.f32 %v5147, %v5219
    %v5221 = vpop.f32.mrb[0].mxu0
    %v5222 = vadd.f32 %v5149, %v5221
    %v5223 = vpop.f32.mrb[0].mxu0
    %v5224 = vadd.f32 %v5151, %v5223
    %v5225 = vpop.f32.mrb[0].mxu0
    %v5226 = vadd.f32 %v5153, %v5225
    %5227 = vmatprep.mubr.bf16.mxu0 %v2050
    %5228 = vmatmul.mubr.bf16.gmra.mrb[0].mxu0 %v2049
    %v5229 = vpop.f32.mrb[0].mxu0
    %v5230 = vadd.f32 %v5157, %v5229
    %v5231 = vpop.f32.mrb[0].mxu0
    %v5232 = vadd.f32 %v5159, %v5231
    %v5233 = vpop.f32.mrb[0].mxu0
    %v5234 = vadd.f32 %v5161, %v5233
    %v5235 = vpop.f32.mrb[0].mxu0
    %v5236 = vadd.f32 %v5163, %v5235
    %5237 = vmatprep.mubr.bf16.mxu0 %v2053
    %5238 = vmatmul.mubr.bf16.gmra.mrb[0].mxu0 %v2052
    %v5239 = vpop.f32.mrb[0].mxu0
    %v5240 = vadd.f32 %v5167, %v5239
    %v5241 = vpop.f32.mrb[0].mxu0
    %v5242 = vadd.f32 %v5169, %v5241
    %v5243 = vpop.f32.mrb[0].mxu0
    %v5244 = vadd.f32 %v5171, %v5243
    %v5245 = vpop.f32.mrb[0].mxu0
    %v5246 = vadd.f32 %v5173, %v5245
    %5247 = vdwg.mxu0
    %5248 = vmatprep.subr.bf16.mxu0 %v4253
    %5249 = vmatpush1.bf16.msra.mxu0 %v4252
    %5250 = vmatprep.subr.bf16.mxu0 %v4257
    %5251 = vmatpush1.bf16.msra.mxu0 %v4256
    %5252 = vmatprep.subr.bf16.mxu0 %v4261
    %5253 = vmatpush1.bf16.msra.mxu0 %v4260
    %5254 = vmatprep.subr.bf16.mxu0 %v4265
    %5255 = vmatpush1.bf16.msra.mxu0 %v4264
    %5256 = vmatprep.subr.bf16.mxu0 %v4269
    %5257 = vmatpush1.bf16.msra.mxu0 %v4268
    %5258 = vmatprep.subr.bf16.mxu0 %v4273
    %5259 = vmatpush1.bf16.msra.mxu0 %v4272
    %5260 = vmatprep.subr.bf16.mxu0 %v4277
    %5261 = vmatpush1.bf16.msra.mxu0 %v4276
    %5262 = vmatprep.subr.bf16.mxu0 %v4281
    %5263 = vmatpush1.bf16.msra.mxu0 %v4280
    %5264 = vmatprep.subr.bf16.mxu0 %v4285
    %5265 = vmatpush1.bf16.msra.mxu0 %v4284
    %5266 = vmatprep.subr.bf16.mxu0 %v4289
    %5267 = vmatpush1.bf16.msra.mxu0 %v4288
    %5268 = vmatprep.subr.bf16.mxu0 %v4293
    %5269 = vmatpush1.bf16.msra.mxu0 %v4292
    %5270 = vmatprep.subr.bf16.mxu0 %v4297
    %5271 = vmatpush1.bf16.msra.mxu0 %v4296
    %5272 = vmatprep.subr.bf16.mxu0 %v4301
    %5273 = vmatpush1.bf16.msra.mxu0 %v4300
    %5274 = vmatprep.subr.bf16.mxu0 %v4305
    %5275 = vmatpush1.bf16.msra.mxu0 %v4304
    %5276 = vmatprep.subr.bf16.mxu0 %v4309
    %5277 = vmatpush1.bf16.msra.mxu0 %v4308
    %5278 = vmatprep.subr.bf16.mxu0 %v4313
    %5279 = vmatpush1.bf16.msra.mxu0 %v4312
    %5280 = vmatprep.mubr.bf16.mxu0 %v2061
    %5281 = vmatmul.mubr.bf16.gmra.mrb[0].mxu0 %v2045
    %v5282 = vpop.f32.mrb[0].mxu0
    %v5283 = vadd.f32 %v5210, %v5282
    %v5284 = vpop.f32.mrb[0].mxu0
    %v5285 = vadd.f32 %v5212, %v5284
    %v5286 = vpop.f32.mrb[0].mxu0
    %v5287 = vadd.f32 %v5214, %v5286
    %v5288 = vpop.f32.mrb[0].mxu0
    %v5289 = vadd.f32 %v5216, %v5288
    %5290 = vmatprep.mubr.bf16.mxu0 %v2064
    %5291 = vmatmul.mubr.bf16.gmra.mrb[0].mxu0 %v2048
    %v5292 = vpop.f32.mrb[0].mxu0
    %v5293 = vadd.f32 %v5220, %v5292
    %v5294 = vpop.f32.mrb[0].mxu0
    %v5295 = vadd.f32 %v5222, %v5294
    %v5296 = vpop.f32.mrb[0].mxu0
    %v5297 = vadd.f32 %v5224, %v5296
    %v5298 = vpop.f32.mrb[0].mxu0
    %v5299 = vadd.f32 %v5226, %v5298
    %5300 = vmatprep.mubr.bf16.mxu0 %v2067
    %5301 = vmatmul.mubr.bf16.gmra.mrb[0].mxu0 %v2051
    %v5302 = vpop.f32.mrb[0].mxu0
    %v5303 = vadd.f32 %v5230, %v5302
    %v5304 = vpop.f32.mrb[0].mxu0
    %v5305 = vadd.f32 %v5232, %v5304
    %v5306 = vpop.f32.mrb[0].mxu0
    %v5307 = vadd.f32 %v5234, %v5306
    %v5308 = vpop.f32.mrb[0].mxu0
    %v5309 = vadd.f32 %v5236, %v5308
    %5310 = vmatprep.mubr.bf16.mxu0 %v2070
    %5311 = vmatmul.mubr.bf16.gmra.mrb[0].mxu0 %v2054
    %v5312 = vpop.f32.mrb[0].mxu0
    %v5313 = vadd.f32 %v5240, %v5312
    %v5314 = vpop.f32.mrb[0].mxu0
    %v5315 = vadd.f32 %v5242, %v5314
    %v5316 = vpop.f32.mrb[0].mxu0
    %v5317 = vadd.f32 %v5244, %v5316
    %v5318 = vpop.f32.mrb[0].mxu0
    %v5319 = vadd.f32 %v5246, %v5318
    %5320 = vdwg.mxu0
    %5321 = vmatprep.subr.bf16.mxu0 %v4317
    %5322 = vmatpush1.bf16.msra.mxu0 %v4316
    %5323 = vmatprep.subr.bf16.mxu0 %v4321
    %5324 = vmatpush1.bf16.msra.mxu0 %v4320
    %5325 = vmatprep.subr.bf16.mxu0 %v4325
    %5326 = vmatpush1.bf16.msra.mxu0 %v4324
    %5327 = vmatprep.subr.bf16.mxu0 %v4329
    %5328 = vmatpush1.bf16.msra.mxu0 %v4328
    %5329 = vmatprep.subr.bf16.mxu0 %v4333
    %5330 = vmatpush1.bf16.msra.mxu0 %v4332
    %5331 = vmatprep.subr.bf16.mxu0 %v4337
    %5332 = vmatpush1.bf16.msra.mxu0 %v4336
    %5333 = vmatprep.subr.bf16.mxu0 %v4341
    %5334 = vmatpush1.bf16.msra.mxu0 %v4340
    %5335 = vmatprep.subr.bf16.mxu0 %v4345
    %5336 = vmatpush1.bf16.msra.mxu0 %v4344
    %5337 = vmatprep.subr.bf16.mxu0 %v4349
    %5338 = vmatpush1.bf16.msra.mxu0 %v4348
    %5339 = vmatprep.subr.bf16.mxu0 %v4353
    %5340 = vmatpush1.bf16.msra.mxu0 %v4352
    %5341 = vmatprep.subr.bf16.mxu0 %v4357
    %5342 = vmatpush1.bf16.msra.mxu0 %v4356
    %5343 = vmatprep.subr.bf16.mxu0 %v4361
    %5344 = vmatpush1.bf16.msra.mxu0 %v4360
    %5345 = vmatprep.subr.bf16.mxu0 %v4365
    %5346 = vmatpush1.bf16.msra.mxu0 %v4364
    %5347 = vmatprep.subr.bf16.mxu0 %v4369
    %5348 = vmatpush1.bf16.msra.mxu0 %v4368
    %5349 = vmatprep.subr.bf16.mxu0 %v4373
    %5350 = vmatpush1.bf16.msra.mxu0 %v4372
    %5351 = vmatprep.subr.bf16.mxu0 %v4377
    %5352 = vmatpush1.bf16.msra.mxu0 %v4376
    %5353 = vmatprep.mubr.bf16.mxu0 %v2063
    %5354 = vmatmul.mubr.bf16.gmra.mrb[0].mxu0 %v2062
    %v5355 = vpop.f32.mrb[0].mxu0
    %v5356 = vadd.f32 %v5283, %v5355
    %v5357 = vpop.f32.mrb[0].mxu0
    %v5358 = vadd.f32 %v5285, %v5357
    %v5359 = vpop.f32.mrb[0].mxu0
    %v5360 = vadd.f32 %v5287, %v5359
    %v5361 = vpop.f32.mrb[0].mxu0
    %v5362 = vadd.f32 %v5289, %v5361
    %5363 = vmatprep.mubr.bf16.mxu0 %v2066
    %5364 = vmatmul.mubr.bf16.gmra.mrb[0].mxu0 %v2065
    %v5365 = vpop.f32.mrb[0].mxu0
    %v5366 = vadd.f32 %v5293, %v5365
    %v5367 = vpop.f32.mrb[0].mxu0
    %v5368 = vadd.f32 %v5295, %v5367
    %v5369 = vpop.f32.mrb[0].mxu0
    %v5370 = vadd.f32 %v5297, %v5369
    %v5371 = vpop.f32.mrb[0].mxu0
    %v5372 = vadd.f32 %v5299, %v5371
    %5373 = vmatprep.mubr.bf16.mxu0 %v2069
    %5374 = vmatmul.mubr.bf16.gmra.mrb[0].mxu0 %v2068
    %v5375 = vpop.f32.mrb[0].mxu0
    %v5376 = vadd.f32 %v5303, %v5375
    %v5377 = vpop.f32.mrb[0].mxu0
    %v5378 = vadd.f32 %v5305, %v5377
    %v5379 = vpop.f32.mrb[0].mxu0
    %v5380 = vadd.f32 %v5307, %v5379
    %v5381 = vpop.f32.mrb[0].mxu0
    %v5382 = vadd.f32 %v5309, %v5381
    %5383 = vmatprep.mubr.bf16.mxu0 %v2072
    %5384 = vmatmul.mubr.bf16.gmra.mrb[0].mxu0 %v2071
    %v5385 = vpop.f32.mrb[0].mxu0
    %v5386 = vadd.f32 %v5313, %v5385
    %v5387 = vpop.f32.mrb[0].mxu0
    %v5388 = vadd.f32 %v5315, %v5387
    %v5389 = vpop.f32.mrb[0].mxu0
    %v5390 = vadd.f32 %v5317, %v5389
    %v5391 = vpop.f32.mrb[0].mxu0
    %v5392 = vadd.f32 %v5319, %v5391
    %5393 = vdwg.mxu0
    %5394 = vmatprep.subr.bf16.mxu0 %v4381
    %5395 = vmatpush1.bf16.msra.mxu0 %v4380
    %5396 = vmatprep.subr.bf16.mxu0 %v4385
    %5397 = vmatpush1.bf16.msra.mxu0 %v4384
    %5398 = vmatprep.subr.bf16.mxu0 %v4389
    %5399 = vmatpush1.bf16.msra.mxu0 %v4388
    %5400 = vmatprep.subr.bf16.mxu0 %v4393
    %5401 = vmatpush1.bf16.msra.mxu0 %v4392
    %5402 = vmatprep.subr.bf16.mxu0 %v4397
    %5403 = vmatpush1.bf16.msra.mxu0 %v4396
    %5404 = vmatprep.subr.bf16.mxu0 %v4401
    %5405 = vmatpush1.bf16.msra.mxu0 %v4400
    %5406 = vmatprep.subr.bf16.mxu0 %v4405
    %5407 = vmatpush1.bf16.msra.mxu0 %v4404
    %5408 = vmatprep.subr.bf16.mxu0 %v4409
    %5409 = vmatpush1.bf16.msra.mxu0 %v4408
    %5410 = vmatprep.subr.bf16.mxu0 %v4413
    %5411 = vmatpush1.bf16.msra.mxu0 %v4412
    %5412 = vmatprep.subr.bf16.mxu0 %v4417
    %5413 = vmatpush1.bf16.msra.mxu0 %v4416
    %5414 = vmatprep.subr.bf16.mxu0 %v4421
    %5415 = vmatpush1.bf16.msra.mxu0 %v4420
    %5416 = vmatprep.subr.bf16.mxu0 %v4425
    %5417 = vmatpush1.bf16.msra.mxu0 %v4424
    %5418 = vmatprep.subr.bf16.mxu0 %v4429
    %5419 = vmatpush1.bf16.msra.mxu0 %v4428
    %5420 = vmatprep.subr.bf16.mxu0 %v4433
    %5421 = vmatpush1.bf16.msra.mxu0 %v4432
    %5422 = vmatprep.subr.bf16.mxu0 %v4437
    %5423 = vmatpush1.bf16.msra.mxu0 %v4436
    %5424 = vmatprep.subr.bf16.mxu0 %v4441
    %5425 = vmatpush1.bf16.msra.mxu0 %v4440
    %5426 = vmatprep.mubr.bf16.mxu0 %v2047
    %5427 = vmatmul.mubr.bf16.gmra.mrb[0].mxu0 %v2046
    %v5428 = vpop.f32.mrb[0].mxu0
    %v5429 = vadd.f32 %v5356, %v5428
    %v5430 = vpop.f32.mrb[0].mxu0
    %v5431 = vadd.f32 %v5358, %v5430
    %v5432 = vpop.f32.mrb[0].mxu0
    %v5433 = vadd.f32 %v5360, %v5432
    %v5434 = vpop.f32.mrb[0].mxu0
    %v5435 = vadd.f32 %v5362, %v5434
    %5436 = vmatprep.mubr.bf16.mxu0 %v2050
    %5437 = vmatmul.mubr.bf16.gmra.mrb[0].mxu0 %v2049
    %v5438 = vpop.f32.mrb[0].mxu0
    %v5439 = vadd.f32 %v5366, %v5438
    %v5440 = vpop.f32.mrb[0].mxu0
    %v5441 = vadd.f32 %v5368, %v5440
    %v5442 = vpop.f32.mrb[0].mxu0
    %v5443 = vadd.f32 %v5370, %v5442
    %v5444 = vpop.f32.mrb[0].mxu0
    %v5445 = vadd.f32 %v5372, %v5444
    %5446 = vmatprep.mubr.bf16.mxu0 %v2053
    %5447 = vmatmul.mubr.bf16.gmra.mrb[0].mxu0 %v2052
    %v5448 = vpop.f32.mrb[0].mxu0
    %v5449 = vadd.f32 %v5376, %v5448
    %v5450 = vpop.f32.mrb[0].mxu0
    %v5451 = vadd.f32 %v5378, %v5450
    %v5452 = vpop.f32.mrb[0].mxu0
    %v5453 = vadd.f32 %v5380, %v5452
    %v5454 = vpop.f32.mrb[0].mxu0
    %v5455 = vadd.f32 %v5382, %v5454
    %5456 = vmatprep.mubr.bf16.mxu0 %v2056
    %5457 = vmatmul.mubr.bf16.gmra.mrb[0].mxu0 %v2055
    %v5458 = vpop.f32.mrb[0].mxu0
    %v5459 = vadd.f32 %v5386, %v5458
    %v5460 = vpop.f32.mrb[0].mxu0
    %v5461 = vadd.f32 %v5388, %v5460
    %v5462 = vpop.f32.mrb[0].mxu0
    %v5463 = vadd.f32 %v5390, %v5462
    %v5464 = vpop.f32.mrb[0].mxu0
    %v5465 = vadd.f32 %v5392, %v5464
    %5466 = vdwg.mxu0
    %5467 = vmatprep.subr.bf16.mxu0 %v4445
    %5468 = vmatpush1.bf16.msra.mxu0 %v4444
    %5469 = vmatprep.subr.bf16.mxu0 %v4449
    %5470 = vmatpush1.bf16.msra.mxu0 %v4448
    %5471 = vmatprep.subr.bf16.mxu0 %v4453
    %5472 = vmatpush1.bf16.msra.mxu0 %v4452
    %5473 = vmatprep.subr.bf16.mxu0 %v4457
    %5474 = vmatpush1.bf16.msra.mxu0 %v4456
    %5475 = vmatprep.subr.bf16.mxu0 %v4461
    %5476 = vmatpush1.bf16.msra.mxu0 %v4460
    %5477 = vmatprep.subr.bf16.mxu0 %v4465
    %5478 = vmatpush1.bf16.msra.mxu0 %v4464
    %5479 = vmatprep.subr.bf16.mxu0 %v4469
    %5480 = vmatpush1.bf16.msra.mxu0 %v4468
    %5481 = vmatprep.subr.bf16.mxu0 %v4473
    %5482 = vmatpush1.bf16.msra.mxu0 %v4472
    %5483 = vmatprep.subr.bf16.mxu0 0
    %5484 = vmatpush1.bf16.msra.mxu0 0
    %5485 = vmatprep.subr.bf16.mxu0 0
    %5486 = vmatpush1.bf16.msra.mxu0 0
    %5487 = vmatprep.subr.bf16.mxu0 0
    %5488 = vmatpush1.bf16.msra.mxu0 0
    %5489 = vmatprep.subr.bf16.mxu0 0
    %5490 = vmatpush1.bf16.msra.mxu0 0
    %5491 = vmatprep.subr.bf16.mxu0 0
    %5492 = vmatpush1.bf16.msra.mxu0 0
    %5493 = vmatprep.subr.bf16.mxu0 0
    %5494 = vmatpush1.bf16.msra.mxu0 0
    %5495 = vmatprep.subr.bf16.mxu0 0
    %5496 = vmatpush1.bf16.msra.mxu0 0
    %5497 = vmatprep.subr.bf16.mxu0 0
    %5498 = vmatpush1.bf16.msra.mxu0 0
    %5499 = vmatprep.mubr.bf16.mxu0 0
    %5500 = vmatmul.mubr.bf16.gmra.mrb[0].mxu0 %v2048
    %v5501 = vpop.f32.mrb[0].mxu0
    %v5502 = vadd.f32 %v5429, %v5501
    %v5503 = vpop.f32.mrb[0].mxu0
    %v5504 = vadd.f32 %v5431, %v5503
    %v5505 = vpop.f32.mrb[0].mxu0
    %v5506 = vadd.f32 %v5433, %v5505
    %v5507 = vpop.f32.mrb[0].mxu0
    %v5508 = vadd.f32 %v5435, %v5507
    %5509 = vmatprep.mubr.bf16.mxu0 0
    %5510 = vmatmul.mubr.bf16.gmra.mrb[0].mxu0 %v2051
    %v5511 = vpop.f32.mrb[0].mxu0
    %v5512 = vadd.f32 %v5439, %v5511
    %v5513 = vpop.f32.mrb[0].mxu0
    %v5514 = vadd.f32 %v5441, %v5513
    %v5515 = vpop.f32.mrb[0].mxu0
    %v5516 = vadd.f32 %v5443, %v5515
    %v5517 = vpop.f32.mrb[0].mxu0
    %v5518 = vadd.f32 %v5445, %v5517
    %5519 = vmatprep.mubr.bf16.mxu0 0
    %5520 = vmatmul.mubr.bf16.gmra.mrb[0].mxu0 %v2054
    %v5521 = vpop.f32.mrb[0].mxu0
    %v5522 = vadd.f32 %v5449, %v5521
    %v5523 = vpop.f32.mrb[0].mxu0
    %v5524 = vadd.f32 %v5451, %v5523
    %v5525 = vpop.f32.mrb[0].mxu0
    %v5526 = vadd.f32 %v5453, %v5525
    %v5527 = vpop.f32.mrb[0].mxu0
    %v5528 = vadd.f32 %v5455, %v5527
    %5529 = vmatprep.mubr.bf16.mxu0 0
    %5530 = vmatmul.mubr.bf16.gmra.mrb[0].mxu0 %v2057
    %v5531 = vpop.f32.mrb[0].mxu0
    %v5532 = vadd.f32 %v5459, %v5531
    %v5533 = vpop.f32.mrb[0].mxu0
    %v5534 = vadd.f32 %v5461, %v5533
    %v5535 = vpop.f32.mrb[0].mxu0
    %v5536 = vadd.f32 %v5463, %v5535
    %v5537 = vpop.f32.mrb[0].mxu0
    %v5538 = vadd.f32 %v5465, %v5537
    %5539 = vdwg.mxu0
    %5540 = vmatprep.subr.bf16.mxu0 %v3999
    %5541 = vmatpush1.bf16.msra.mxu0 %v3998
    %5542 = vmatprep.subr.bf16.mxu0 %v4003
    %5543 = vmatpush1.bf16.msra.mxu0 %v4002
    %5544 = vmatprep.subr.bf16.mxu0 %v4007
    %5545 = vmatpush1.bf16.msra.mxu0 %v4006
    %5546 = vmatprep.subr.bf16.mxu0 %v4011
    %5547 = vmatpush1.bf16.msra.mxu0 %v4010
    %5548 = vmatprep.subr.bf16.mxu0 %v4015
    %5549 = vmatpush1.bf16.msra.mxu0 %v4014
    %5550 = vmatprep.subr.bf16.mxu0 %v4019
    %5551 = vmatpush1.bf16.msra.mxu0 %v4018
    %5552 = vmatprep.subr.bf16.mxu0 %v4023
    %5553 = vmatpush1.bf16.msra.mxu0 %v4022
    %5554 = vmatprep.subr.bf16.mxu0 %v4027
    %5555 = vmatpush1.bf16.msra.mxu0 %v4026
    %5556 = vmatprep.subr.bf16.mxu0 %v4031
    %5557 = vmatpush1.bf16.msra.mxu0 %v4030
    %5558 = vmatprep.subr.bf16.mxu0 %v4035
    %5559 = vmatpush1.bf16.msra.mxu0 %v4034
    %5560 = vmatprep.subr.bf16.mxu0 %v4039
    %5561 = vmatpush1.bf16.msra.mxu0 %v4038
    %5562 = vmatprep.subr.bf16.mxu0 %v4043
    %5563 = vmatpush1.bf16.msra.mxu0 %v4042
    %5564 = vmatprep.subr.bf16.mxu0 %v4047
    %5565 = vmatpush1.bf16.msra.mxu0 %v4046
    %5566 = vmatprep.subr.bf16.mxu0 %v4051
    %5567 = vmatpush1.bf16.msra.mxu0 %v4050
    %5568 = vmatprep.subr.bf16.mxu0 %v4055
    %5569 = vmatpush1.bf16.msra.mxu0 %v4054
    %5570 = vmatprep.subr.bf16.mxu0 %v4059
    %5571 = vmatpush1.bf16.msra.mxu0 %v4058
    %5572 = vmatprep.mubr.bf16.mxu0 %v2041
    %5573 = vmatmul.mubr.bf16.gmra.mrb[0].mxu0 %v2040
    %v5574 = vpop.f32.mrb[0].mxu0
    %v5575 = vadd.f32 0.0, %v5574
    %v5576 = vpop.f32.mrb[0].mxu0
    %v5577 = vadd.f32 0.0, %v5576
    %v5578 = vpop.f32.mrb[0].mxu0
    %v5579 = vadd.f32 0.0, %v5578
    %v5580 = vpop.f32.mrb[0].mxu0
    %v5581 = vadd.f32 0.0, %v5580
    %5582 = vmatprep.mubr.bf16.mxu0 %v2044
    %5583 = vmatmul.mubr.bf16.gmra.mrb[0].mxu0 %v2043
    %v5584 = vpop.f32.mrb[0].mxu0
    %v5585 = vadd.f32 0.0, %v5584
    %v5586 = vpop.f32.mrb[0].mxu0
    %v5587 = vadd.f32 0.0, %v5586
    %v5588 = vpop.f32.mrb[0].mxu0
    %v5589 = vadd.f32 0.0, %v5588
    %v5590 = vpop.f32.mrb[0].mxu0
    %v5591 = vadd.f32 0.0, %v5590
    %5592 = vmatprep.mubr.bf16.mxu0 %v2047
    %5593 = vmatmul.mubr.bf16.gmra.mrb[0].mxu0 %v2046
    %v5594 = vpop.f32.mrb[0].mxu0
    %v5595 = vadd.f32 0.0, %v5594
    %v5596 = vpop.f32.mrb[0].mxu0
    %v5597 = vadd.f32 0.0, %v5596
    %v5598 = vpop.f32.mrb[0].mxu0
    %v5599 = vadd.f32 0.0, %v5598
    %v5600 = vpop.f32.mrb[0].mxu0
    %v5601 = vadd.f32 0.0, %v5600
    %5602 = vmatprep.mubr.bf16.mxu0 %v2050
    %5603 = vmatmul.mubr.bf16.gmra.mrb[0].mxu0 %v2049
    %v5604 = vpop.f32.mrb[0].mxu0
    %v5605 = vadd.f32 0.0, %v5604
    %v5606 = vpop.f32.mrb[0].mxu0
    %v5607 = vadd.f32 0.0, %v5606
    %v5608 = vpop.f32.mrb[0].mxu0
    %v5609 = vadd.f32 0.0, %v5608
    %v5610 = vpop.f32.mrb[0].mxu0
    %v5611 = vadd.f32 0.0, %v5610
    %5612 = vdwg.mxu0
    %5613 = vmatprep.subr.bf16.mxu0 %v4063
    %5614 = vmatpush1.bf16.msra.mxu0 %v4062
    %5615 = vmatprep.subr.bf16.mxu0 %v4067
    %5616 = vmatpush1.bf16.msra.mxu0 %v4066
    %5617 = vmatprep.subr.bf16.mxu0 %v4071
    %5618 = vmatpush1.bf16.msra.mxu0 %v4070
    %5619 = vmatprep.subr.bf16.mxu0 %v4075
    %5620 = vmatpush1.bf16.msra.mxu0 %v4074
    %5621 = vmatprep.subr.bf16.mxu0 %v4079
    %5622 = vmatpush1.bf16.msra.mxu0 %v4078
    %5623 = vmatprep.subr.bf16.mxu0 %v4083
    %5624 = vmatpush1.bf16.msra.mxu0 %v4082
    %5625 = vmatprep.subr.bf16.mxu0 %v4087
    %5626 = vmatpush1.bf16.msra.mxu0 %v4086
    %5627 = vmatprep.subr.bf16.mxu0 %v4091
    %5628 = vmatpush1.bf16.msra.mxu0 %v4090
    %5629 = vmatprep.subr.bf16.mxu0 %v4095
    %5630 = vmatpush1.bf16.msra.mxu0 %v4094
    %5631 = vmatprep.subr.bf16.mxu0 %v4099
    %5632 = vmatpush1.bf16.msra.mxu0 %v4098
    %5633 = vmatprep.subr.bf16.mxu0 %v4103
    %5634 = vmatpush1.bf16.msra.mxu0 %v4102
    %5635 = vmatprep.subr.bf16.mxu0 %v4107
    %5636 = vmatpush1.bf16.msra.mxu0 %v4106
    %5637 = vmatprep.subr.bf16.mxu0 %v4111
    %5638 = vmatpush1.bf16.msra.mxu0 %v4110
    %5639 = vmatprep.subr.bf16.mxu0 %v4115
    %5640 = vmatpush1.bf16.msra.mxu0 %v4114
    %5641 = vmatprep.subr.bf16.mxu0 %v4119
    %5642 = vmatpush1.bf16.msra.mxu0 %v4118
    %5643 = vmatprep.subr.bf16.mxu0 %v4123
    %5644 = vmatpush1.bf16.msra.mxu0 %v4122
    %5645 = vmatprep.mubr.bf16.mxu0 %v2058
    %5646 = vmatmul.mubr.bf16.gmra.mrb[0].mxu0 %v2042
    %v5647 = vpop.f32.mrb[0].mxu0
    %v5648 = vadd.f32 %v5575, %v5647
    %v5649 = vpop.f32.mrb[0].mxu0
    %v5650 = vadd.f32 %v5577, %v5649
    %v5651 = vpop.f32.mrb[0].mxu0
    %v5652 = vadd.f32 %v5579, %v5651
    %v5653 = vpop.f32.mrb[0].mxu0
    %v5654 = vadd.f32 %v5581, %v5653
    %5655 = vmatprep.mubr.bf16.mxu0 %v2061
    %5656 = vmatmul.mubr.bf16.gmra.mrb[0].mxu0 %v2045
    %v5657 = vpop.f32.mrb[0].mxu0
    %v5658 = vadd.f32 %v5585, %v5657
    %v5659 = vpop.f32.mrb[0].mxu0
    %v5660 = vadd.f32 %v5587, %v5659
    %v5661 = vpop.f32.mrb[0].mxu0
    %v5662 = vadd.f32 %v5589, %v5661
    %v5663 = vpop.f32.mrb[0].mxu0
    %v5664 = vadd.f32 %v5591, %v5663
    %5665 = vmatprep.mubr.bf16.mxu0 %v2064
    %5666 = vmatmul.mubr.bf16.gmra.mrb[0].mxu0 %v2048
    %v5667 = vpop.f32.mrb[0].mxu0
    %v5668 = vadd.f32 %v5595, %v5667
    %v5669 = vpop.f32.mrb[0].mxu0
    %v5670 = vadd.f32 %v5597, %v5669
    %v5671 = vpop.f32.mrb[0].mxu0
    %v5672 = vadd.f32 %v5599, %v5671
    %v5673 = vpop.f32.mrb[0].mxu0
    %v5674 = vadd.f32 %v5601, %v5673
    %5675 = vmatprep.mubr.bf16.mxu0 %v2067
    %5676 = vmatmul.mubr.bf16.gmra.mrb[0].mxu0 %v2051
    %v5677 = vpop.f32.mrb[0].mxu0
    %v5678 = vadd.f32 %v5605, %v5677
    %v5679 = vpop.f32.mrb[0].mxu0
    %v5680 = vadd.f32 %v5607, %v5679
    %v5681 = vpop.f32.mrb[0].mxu0
    %v5682 = vadd.f32 %v5609, %v5681
    %v5683 = vpop.f32.mrb[0].mxu0
    %v5684 = vadd.f32 %v5611, %v5683
    %5685 = vdwg.mxu0
    %5686 = vmatprep.subr.bf16.mxu0 %v4127
    %5687 = vmatpush1.bf16.msra.mxu0 %v4126
    %5688 = vmatprep.subr.bf16.mxu0 %v4131
    %5689 = vmatpush1.bf16.msra.mxu0 %v4130
    %5690 = vmatprep.subr.bf16.mxu0 %v4135
    %5691 = vmatpush1.bf16.msra.mxu0 %v4134
    %5692 = vmatprep.subr.bf16.mxu0 %v4139
    %5693 = vmatpush1.bf16.msra.mxu0 %v4138
    %5694 = vmatprep.subr.bf16.mxu0 %v4143
    %5695 = vmatpush1.bf16.msra.mxu0 %v4142
    %5696 = vmatprep.subr.bf16.mxu0 %v4147
    %5697 = vmatpush1.bf16.msra.mxu0 %v4146
    %5698 = vmatprep.subr.bf16.mxu0 %v4151
    %5699 = vmatpush1.bf16.msra.mxu0 %v4150
    %5700 = vmatprep.subr.bf16.mxu0 %v4155
    %5701 = vmatpush1.bf16.msra.mxu0 %v4154
    %5702 = vmatprep.subr.bf16.mxu0 %v4159
    %5703 = vmatpush1.bf16.msra.mxu0 %v4158
    %5704 = vmatprep.subr.bf16.mxu0 %v4163
    %5705 = vmatpush1.bf16.msra.mxu0 %v4162
    %5706 = vmatprep.subr.bf16.mxu0 %v4167
    %5707 = vmatpush1.bf16.msra.mxu0 %v4166
    %5708 = vmatprep.subr.bf16.mxu0 %v4171
    %5709 = vmatpush1.bf16.msra.mxu0 %v4170
    %5710 = vmatprep.subr.bf16.mxu0 %v4175
    %5711 = vmatpush1.bf16.msra.mxu0 %v4174
    %5712 = vmatprep.subr.bf16.mxu0 %v4179
    %5713 = vmatpush1.bf16.msra.mxu0 %v4178
    %5714 = vmatprep.subr.bf16.mxu0 %v4183
    %5715 = vmatpush1.bf16.msra.mxu0 %v4182
    %5716 = vmatprep.subr.bf16.mxu0 %v4187
    %5717 = vmatpush1.bf16.msra.mxu0 %v4186
    %5718 = vmatprep.mubr.bf16.mxu0 %v2060
    %5719 = vmatmul.mubr.bf16.gmra.mrb[0].mxu0 %v2059
    %v5720 = vpop.f32.mrb[0].mxu0
    %v5721 = vadd.f32 %v5648, %v5720
    %v5722 = vpop.f32.mrb[0].mxu0
    %v5723 = vadd.f32 %v5650, %v5722
    %v5724 = vpop.f32.mrb[0].mxu0
    %v5725 = vadd.f32 %v5652, %v5724
    %v5726 = vpop.f32.mrb[0].mxu0
    %v5727 = vadd.f32 %v5654, %v5726
    %5728 = vmatprep.mubr.bf16.mxu0 %v2063
    %5729 = vmatmul.mubr.bf16.gmra.mrb[0].mxu0 %v2062
    %v5730 = vpop.f32.mrb[0].mxu0
    %v5731 = vadd.f32 %v5658, %v5730
    %v5732 = vpop.f32.mrb[0].mxu0
    %v5733 = vadd.f32 %v5660, %v5732
    %v5734 = vpop.f32.mrb[0].mxu0
    %v5735 = vadd.f32 %v5662, %v5734
    %v5736 = vpop.f32.mrb[0].mxu0
    %v5737 = vadd.f32 %v5664, %v5736
    %5738 = vmatprep.mubr.bf16.mxu0 %v2066
    %5739 = vmatmul.mubr.bf16.gmra.mrb[0].mxu0 %v2065
    %v5740 = vpop.f32.mrb[0].mxu0
    %v5741 = vadd.f32 %v5668, %v5740
    %v5742 = vpop.f32.mrb[0].mxu0
    %v5743 = vadd.f32 %v5670, %v5742
    %v5744 = vpop.f32.mrb[0].mxu0
    %v5745 = vadd.f32 %v5672, %v5744
    %v5746 = vpop.f32.mrb[0].mxu0
    %v5747 = vadd.f32 %v5674, %v5746
    %5748 = vmatprep.mubr.bf16.mxu0 %v2069
    %5749 = vmatmul.mubr.bf16.gmra.mrb[0].mxu0 %v2068
    %v5750 = vpop.f32.mrb[0].mxu0
    %v5751 = vadd.f32 %v5678, %v5750
    %v5752 = vpop.f32.mrb[0].mxu0
    %v5753 = vadd.f32 %v5680, %v5752
    %v5754 = vpop.f32.mrb[0].mxu0
    %v5755 = vadd.f32 %v5682, %v5754
    %v5756 = vpop.f32.mrb[0].mxu0
    %v5757 = vadd.f32 %v5684, %v5756
    %5758 = vdwg.mxu0
    %5759 = vmatprep.subr.bf16.mxu0 %v4191
    %5760 = vmatpush1.bf16.msra.mxu0 %v4190
    %5761 = vmatprep.subr.bf16.mxu0 %v4195
    %5762 = vmatpush1.bf16.msra.mxu0 %v4194
    %5763 = vmatprep.subr.bf16.mxu0 %v4199
    %5764 = vmatpush1.bf16.msra.mxu0 %v4198
    %5765 = vmatprep.subr.bf16.mxu0 %v4203
    %5766 = vmatpush1.bf16.msra.mxu0 %v4202
    %5767 = vmatprep.subr.bf16.mxu0 %v4207
    %5768 = vmatpush1.bf16.msra.mxu0 %v4206
    %5769 = vmatprep.subr.bf16.mxu0 %v4211
    %5770 = vmatpush1.bf16.msra.mxu0 %v4210
    %5771 = vmatprep.subr.bf16.mxu0 %v4215
    %5772 = vmatpush1.bf16.msra.mxu0 %v4214
    %5773 = vmatprep.subr.bf16.mxu0 %v4219
    %5774 = vmatpush1.bf16.msra.mxu0 %v4218
    %5775 = vmatprep.subr.bf16.mxu0 %v4223
    %5776 = vmatpush1.bf16.msra.mxu0 %v4222
    %5777 = vmatprep.subr.bf16.mxu0 %v4227
    %5778 = vmatpush1.bf16.msra.mxu0 %v4226
    %5779 = vmatprep.subr.bf16.mxu0 %v4231
    %5780 = vmatpush1.bf16.msra.mxu0 %v4230
    %5781 = vmatprep.subr.bf16.mxu0 %v4235
    %5782 = vmatpush1.bf16.msra.mxu0 %v4234
    %5783 = vmatprep.subr.bf16.mxu0 %v4239
    %5784 = vmatpush1.bf16.msra.mxu0 %v4238
    %5785 = vmatprep.subr.bf16.mxu0 %v4243
    %5786 = vmatpush1.bf16.msra.mxu0 %v4242
    %5787 = vmatprep.subr.bf16.mxu0 %v4247
    %5788 = vmatpush1.bf16.msra.mxu0 %v4246
    %5789 = vmatprep.subr.bf16.mxu0 %v4251
    %5790 = vmatpush1.bf16.msra.mxu0 %v4250
    %5791 = vmatprep.mubr.bf16.mxu0 %v2044
    %5792 = vmatmul.mubr.bf16.gmra.mrb[0].mxu0 %v2043
    %v5793 = vpop.f32.mrb[0].mxu0
    %v5794 = vadd.f32 %v5721, %v5793
    %v5795 = vpop.f32.mrb[0].mxu0
    %v5796 = vadd.f32 %v5723, %v5795
    %v5797 = vpop.f32.mrb[0].mxu0
    %v5798 = vadd.f32 %v5725, %v5797
    %v5799 = vpop.f32.mrb[0].mxu0
    %v5800 = vadd.f32 %v5727, %v5799
    %5801 = vmatprep.mubr.bf16.mxu0 %v2047
    %5802 = vmatmul.mubr.bf16.gmra.mrb[0].mxu0 %v2046
    %v5803 = vpop.f32.mrb[0].mxu0
    %v5804 = vadd.f32 %v5731, %v5803
    %v5805 = vpop.f32.mrb[0].mxu0
    %v5806 = vadd.f32 %v5733, %v5805
    %v5807 = vpop.f32.mrb[0].mxu0
    %v5808 = vadd.f32 %v5735, %v5807
    %v5809 = vpop.f32.mrb[0].mxu0
    %v5810 = vadd.f32 %v5737, %v5809
    %5811 = vmatprep.mubr.bf16.mxu0 %v2050
    %5812 = vmatmul.mubr.bf16.gmra.mrb[0].mxu0 %v2049
    %v5813 = vpop.f32.mrb[0].mxu0
    %v5814 = vadd.f32 %v5741, %v5813
    %v5815 = vpop.f32.mrb[0].mxu0
    %v5816 = vadd.f32 %v5743, %v5815
    %v5817 = vpop.f32.mrb[0].mxu0
    %v5818 = vadd.f32 %v5745, %v5817
    %v5819 = vpop.f32.mrb[0].mxu0
    %v5820 = vadd.f32 %v5747, %v5819
    %5821 = vmatprep.mubr.bf16.mxu0 %v2053
    %5822 = vmatmul.mubr.bf16.gmra.mrb[0].mxu0 %v2052
    %v5823 = vpop.f32.mrb[0].mxu0
    %v5824 = vadd.f32 %v5751, %v5823
    %v5825 = vpop.f32.mrb[0].mxu0
    %v5826 = vadd.f32 %v5753, %v5825
    %v5827 = vpop.f32.mrb[0].mxu0
    %v5828 = vadd.f32 %v5755, %v5827
    %v5829 = vpop.f32.mrb[0].mxu0
    %v5830 = vadd.f32 %v5757, %v5829
    %5831 = vdwg.mxu0
    %5832 = vmatprep.subr.bf16.mxu0 %v4255
    %5833 = vmatpush1.bf16.msra.mxu0 %v4254
    %5834 = vmatprep.subr.bf16.mxu0 %v4259
    %5835 = vmatpush1.bf16.msra.mxu0 %v4258
    %5836 = vmatprep.subr.bf16.mxu0 %v4263
    %5837 = vmatpush1.bf16.msra.mxu0 %v4262
    %5838 = vmatprep.subr.bf16.mxu0 %v4267
    %5839 = vmatpush1.bf16.msra.mxu0 %v4266
    %5840 = vmatprep.subr.bf16.mxu0 %v4271
    %5841 = vmatpush1.bf16.msra.mxu0 %v4270
    %5842 = vmatprep.subr.bf16.mxu0 %v4275
    %5843 = vmatpush1.bf16.msra.mxu0 %v4274
    %5844 = vmatprep.subr.bf16.mxu0 %v4279
    %5845 = vmatpush1.bf16.msra.mxu0 %v4278
    %5846 = vmatprep.subr.bf16.mxu0 %v4283
    %5847 = vmatpush1.bf16.msra.mxu0 %v4282
    %5848 = vmatprep.subr.bf16.mxu0 %v4287
    %5849 = vmatpush1.bf16.msra.mxu0 %v4286
    %5850 = vmatprep.subr.bf16.mxu0 %v4291
    %5851 = vmatpush1.bf16.msra.mxu0 %v4290
    %5852 = vmatprep.subr.bf16.mxu0 %v4295
    %5853 = vmatpush1.bf16.msra.mxu0 %v4294
    %5854 = vmatprep.subr.bf16.mxu0 %v4299
    %5855 = vmatpush1.bf16.msra.mxu0 %v4298
    %5856 = vmatprep.subr.bf16.mxu0 %v4303
    %5857 = vmatpush1.bf16.msra.mxu0 %v4302
    %5858 = vmatprep.subr.bf16.mxu0 %v4307
    %5859 = vmatpush1.bf16.msra.mxu0 %v4306
    %5860 = vmatprep.subr.bf16.mxu0 %v4311
    %5861 = vmatpush1.bf16.msra.mxu0 %v4310
    %5862 = vmatprep.subr.bf16.mxu0 %v4315
    %5863 = vmatpush1.bf16.msra.mxu0 %v4314
    %5864 = vmatprep.mubr.bf16.mxu0 %v2061
    %5865 = vmatmul.mubr.bf16.gmra.mrb[0].mxu0 %v2045
    %v5866 = vpop.f32.mrb[0].mxu0
    %v5867 = vadd.f32 %v5794, %v5866
    %v5868 = vpop.f32.mrb[0].mxu0
    %v5869 = vadd.f32 %v5796, %v5868
    %v5870 = vpop.f32.mrb[0].mxu0
    %v5871 = vadd.f32 %v5798, %v5870
    %v5872 = vpop.f32.mrb[0].mxu0
    %v5873 = vadd.f32 %v5800, %v5872
    %5874 = vmatprep.mubr.bf16.mxu0 %v2064
    %5875 = vmatmul.mubr.bf16.gmra.mrb[0].mxu0 %v2048
    %v5876 = vpop.f32.mrb[0].mxu0
    %v5877 = vadd.f32 %v5804, %v5876
    %v5878 = vpop.f32.mrb[0].mxu0
    %v5879 = vadd.f32 %v5806, %v5878
    %v5880 = vpop.f32.mrb[0].mxu0
    %v5881 = vadd.f32 %v5808, %v5880
    %v5882 = vpop.f32.mrb[0].mxu0
    %v5883 = vadd.f32 %v5810, %v5882
    %5884 = vmatprep.mubr.bf16.mxu0 %v2067
    %5885 = vmatmul.mubr.bf16.gmra.mrb[0].mxu0 %v2051
    %v5886 = vpop.f32.mrb[0].mxu0
    %v5887 = vadd.f32 %v5814, %v5886
    %v5888 = vpop.f32.mrb[0].mxu0
    %v5889 = vadd.f32 %v5816, %v5888
    %v5890 = vpop.f32.mrb[0].mxu0
    %v5891 = vadd.f32 %v5818, %v5890
    %v5892 = vpop.f32.mrb[0].mxu0
    %v5893 = vadd.f32 %v5820, %v5892
    %5894 = vmatprep.mubr.bf16.mxu0 %v2070
    %5895 = vmatmul.mubr.bf16.gmra.mrb[0].mxu0 %v2054
    %v5896 = vpop.f32.mrb[0].mxu0
    %v5897 = vadd.f32 %v5824, %v5896
    %v5898 = vpop.f32.mrb[0].mxu0
    %v5899 = vadd.f32 %v5826, %v5898
    %v5900 = vpop.f32.mrb[0].mxu0
    %v5901 = vadd.f32 %v5828, %v5900
    %v5902 = vpop.f32.mrb[0].mxu0
    %v5903 = vadd.f32 %v5830, %v5902
    %5904 = vdwg.mxu0
    %5905 = vmatprep.subr.bf16.mxu0 %v4319
    %5906 = vmatpush1.bf16.msra.mxu0 %v4318
    %5907 = vmatprep.subr.bf16.mxu0 %v4323
    %5908 = vmatpush1.bf16.msra.mxu0 %v4322
    %5909 = vmatprep.subr.bf16.mxu0 %v4327
    %5910 = vmatpush1.bf16.msra.mxu0 %v4326
    %5911 = vmatprep.subr.bf16.mxu0 %v4331
    %5912 = vmatpush1.bf16.msra.mxu0 %v4330
    %5913 = vmatprep.subr.bf16.mxu0 %v4335
    %5914 = vmatpush1.bf16.msra.mxu0 %v4334
    %5915 = vmatprep.subr.bf16.mxu0 %v4339
    %5916 = vmatpush1.bf16.msra.mxu0 %v4338
    %5917 = vmatprep.subr.bf16.mxu0 %v4343
    %5918 = vmatpush1.bf16.msra.mxu0 %v4342
    %5919 = vmatprep.subr.bf16.mxu0 %v4347
    %5920 = vmatpush1.bf16.msra.mxu0 %v4346
    %5921 = vmatprep.subr.bf16.mxu0 %v4351
    %5922 = vmatpush1.bf16.msra.mxu0 %v4350
    %5923 = vmatprep.subr.bf16.mxu0 %v4355
    %5924 = vmatpush1.bf16.msra.mxu0 %v4354
    %5925 = vmatprep.subr.bf16.mxu0 %v4359
    %5926 = vmatpush1.bf16.msra.mxu0 %v4358
    %5927 = vmatprep.subr.bf16.mxu0 %v4363
    %5928 = vmatpush1.bf16.msra.mxu0 %v4362
    %5929 = vmatprep.subr.bf16.mxu0 %v4367
    %5930 = vmatpush1.bf16.msra.mxu0 %v4366
    %5931 = vmatprep.subr.bf16.mxu0 %v4371
    %5932 = vmatpush1.bf16.msra.mxu0 %v4370
    %5933 = vmatprep.subr.bf16.mxu0 %v4375
    %5934 = vmatpush1.bf16.msra.mxu0 %v4374
    %5935 = vmatprep.subr.bf16.mxu0 %v4379
    %5936 = vmatpush1.bf16.msra.mxu0 %v4378
    %5937 = vmatprep.mubr.bf16.mxu0 %v2063
    %5938 = vmatmul.mubr.bf16.gmra.mrb[0].mxu0 %v2062
    %v5939 = vpop.f32.mrb[0].mxu0
    %v5940 = vadd.f32 %v5867, %v5939
    %v5941 = vpop.f32.mrb[0].mxu0
    %v5942 = vadd.f32 %v5869, %v5941
    %v5943 = vpop.f32.mrb[0].mxu0
    %v5944 = vadd.f32 %v5871, %v5943
    %v5945 = vpop.f32.mrb[0].mxu0
    %v5946 = vadd.f32 %v5873, %v5945
    %5947 = vmatprep.mubr.bf16.mxu0 %v2066
    %5948 = vmatmul.mubr.bf16.gmra.mrb[0].mxu0 %v2065
    %v5949 = vpop.f32.mrb[0].mxu0
    %v5950 = vadd.f32 %v5877, %v5949
    %v5951 = vpop.f32.mrb[0].mxu0
    %v5952 = vadd.f32 %v5879, %v5951
    %v5953 = vpop.f32.mrb[0].mxu0
    %v5954 = vadd.f32 %v5881, %v5953
    %v5955 = vpop.f32.mrb[0].mxu0
    %v5956 = vadd.f32 %v5883, %v5955
    %5957 = vmatprep.mubr.bf16.mxu0 %v2069
    %5958 = vmatmul.mubr.bf16.gmra.mrb[0].mxu0 %v2068
    %v5959 = vpop.f32.mrb[0].mxu0
    %v5960 = vadd.f32 %v5887, %v5959
    %v5961 = vpop.f32.mrb[0].mxu0
    %v5962 = vadd.f32 %v5889, %v5961
    %v5963 = vpop.f32.mrb[0].mxu0
    %v5964 = vadd.f32 %v5891, %v5963
    %v5965 = vpop.f32.mrb[0].mxu0
    %v5966 = vadd.f32 %v5893, %v5965
    %5967 = vmatprep.mubr.bf16.mxu0 %v2072
    %5968 = vmatmul.mubr.bf16.gmra.mrb[0].mxu0 %v2071
    %v5969 = vpop.f32.mrb[0].mxu0
    %v5970 = vadd.f32 %v5897, %v5969
    %v5971 = vpop.f32.mrb[0].mxu0
    %v5972 = vadd.f32 %v5899, %v5971
    %v5973 = vpop.f32.mrb[0].mxu0
    %v5974 = vadd.f32 %v5901, %v5973
    %v5975 = vpop.f32.mrb[0].mxu0
    %v5976 = vadd.f32 %v5903, %v5975
    %5977 = vdwg.mxu0
    %5978 = vmatprep.subr.bf16.mxu0 %v4383
    %5979 = vmatpush1.bf16.msra.mxu0 %v4382
    %5980 = vmatprep.subr.bf16.mxu0 %v4387
    %5981 = vmatpush1.bf16.msra.mxu0 %v4386
    %5982 = vmatprep.subr.bf16.mxu0 %v4391
    %5983 = vmatpush1.bf16.msra.mxu0 %v4390
    %5984 = vmatprep.subr.bf16.mxu0 %v4395
    %5985 = vmatpush1.bf16.msra.mxu0 %v4394
    %5986 = vmatprep.subr.bf16.mxu0 %v4399
    %5987 = vmatpush1.bf16.msra.mxu0 %v4398
    %5988 = vmatprep.subr.bf16.mxu0 %v4403
    %5989 = vmatpush1.bf16.msra.mxu0 %v4402
    %5990 = vmatprep.subr.bf16.mxu0 %v4407
    %5991 = vmatpush1.bf16.msra.mxu0 %v4406
    %5992 = vmatprep.subr.bf16.mxu0 %v4411
    %5993 = vmatpush1.bf16.msra.mxu0 %v4410
    %5994 = vmatprep.subr.bf16.mxu0 %v4415
    %5995 = vmatpush1.bf16.msra.mxu0 %v4414
    %5996 = vmatprep.subr.bf16.mxu0 %v4419
    %5997 = vmatpush1.bf16.msra.mxu0 %v4418
    %5998 = vmatprep.subr.bf16.mxu0 %v4423
    %5999 = vmatpush1.bf16.msra.mxu0 %v4422
    %6000 = vmatprep.subr.bf16.mxu0 %v4427
    %6001 = vmatpush1.bf16.msra.mxu0 %v4426
    %6002 = vmatprep.subr.bf16.mxu0 %v4431
    %6003 = vmatpush1.bf16.msra.mxu0 %v4430
    %6004 = vmatprep.subr.bf16.mxu0 %v4435
    %6005 = vmatpush1.bf16.msra.mxu0 %v4434
    %6006 = vmatprep.subr.bf16.mxu0 %v4439
    %6007 = vmatpush1.bf16.msra.mxu0 %v4438
    %6008 = vmatprep.subr.bf16.mxu0 %v4443
    %6009 = vmatpush1.bf16.msra.mxu0 %v4442
    %6010 = vmatprep.mubr.bf16.mxu0 %v2047
    %6011 = vmatmul.mubr.bf16.gmra.mrb[0].mxu0 %v2046
    %v6012 = vpop.f32.mrb[0].mxu0
    %v6013 = vadd.f32 %v5940, %v6012
    %v6014 = vpop.f32.mrb[0].mxu0
    %v6015 = vadd.f32 %v5942, %v6014
    %v6016 = vpop.f32.mrb[0].mxu0
    %v6017 = vadd.f32 %v5944, %v6016
    %v6018 = vpop.f32.mrb[0].mxu0
    %v6019 = vadd.f32 %v5946, %v6018
    %6020 = vmatprep.mubr.bf16.mxu0 %v2050
    %6021 = vmatmul.mubr.bf16.gmra.mrb[0].mxu0 %v2049
    %v6022 = vpop.f32.mrb[0].mxu0
    %v6023 = vadd.f32 %v5950, %v6022
    %v6024 = vpop.f32.mrb[0].mxu0
    %v6025 = vadd.f32 %v5952, %v6024
    %v6026 = vpop.f32.mrb[0].mxu0
    %v6027 = vadd.f32 %v5954, %v6026
    %v6028 = vpop.f32.mrb[0].mxu0
    %v6029 = vadd.f32 %v5956, %v6028
    %6030 = vmatprep.mubr.bf16.mxu0 %v2053
    %6031 = vmatmul.mubr.bf16.gmra.mrb[0].mxu0 %v2052
    %v6032 = vpop.f32.mrb[0].mxu0
    %v6033 = vadd.f32 %v5960, %v6032
    %v6034 = vpop.f32.mrb[0].mxu0
    %v6035 = vadd.f32 %v5962, %v6034
    %v6036 = vpop.f32.mrb[0].mxu0
    %v6037 = vadd.f32 %v5964, %v6036
    %v6038 = vpop.f32.mrb[0].mxu0
    %v6039 = vadd.f32 %v5966, %v6038
    %6040 = vmatprep.mubr.bf16.mxu0 %v2056
    %6041 = vmatmul.mubr.bf16.gmra.mrb[0].mxu0 %v2055
    %v6042 = vpop.f32.mrb[0].mxu0
    %v6043 = vadd.f32 %v5970, %v6042
    %v6044 = vpop.f32.mrb[0].mxu0
    %v6045 = vadd.f32 %v5972, %v6044
    %v6046 = vpop.f32.mrb[0].mxu0
    %v6047 = vadd.f32 %v5974, %v6046
    %v6048 = vpop.f32.mrb[0].mxu0
    %v6049 = vadd.f32 %v5976, %v6048
    %6050 = vdwg.mxu0
    %6051 = vmatprep.subr.bf16.mxu0 %v4447
    %6052 = vmatpush1.bf16.msra.mxu0 %v4446
    %6053 = vmatprep.subr.bf16.mxu0 %v4451
    %6054 = vmatpush1.bf16.msra.mxu0 %v4450
    %6055 = vmatprep.subr.bf16.mxu0 %v4455
    %6056 = vmatpush1.bf16.msra.mxu0 %v4454
    %6057 = vmatprep.subr.bf16.mxu0 %v4459
    %6058 = vmatpush1.bf16.msra.mxu0 %v4458
    %6059 = vmatprep.subr.bf16.mxu0 %v4463
    %6060 = vmatpush1.bf16.msra.mxu0 %v4462
    %6061 = vmatprep.subr.bf16.mxu0 %v4467
    %6062 = vmatpush1.bf16.msra.mxu0 %v4466
    %6063 = vmatprep.subr.bf16.mxu0 %v4471
    %6064 = vmatpush1.bf16.msra.mxu0 %v4470
    %6065 = vmatprep.subr.bf16.mxu0 %v4475
    %6066 = vmatpush1.bf16.msra.mxu0 %v4474
    %6067 = vmatprep.subr.bf16.mxu0 0
    %6068 = vmatpush1.bf16.msra.mxu0 0
    %6069 = vmatprep.subr.bf16.mxu0 0
    %6070 = vmatpush1.bf16.msra.mxu0 0
    %6071 = vmatprep.subr.bf16.mxu0 0
    %6072 = vmatpush1.bf16.msra.mxu0 0
    %6073 = vmatprep.subr.bf16.mxu0 0
    %6074 = vmatpush1.bf16.msra.mxu0 0
    %6075 = vmatprep.subr.bf16.mxu0 0
    %6076 = vmatpush1.bf16.msra.mxu0 0
    %6077 = vmatprep.subr.bf16.mxu0 0
    %6078 = vmatpush1.bf16.msra.mxu0 0
    %6079 = vmatprep.subr.bf16.mxu0 0
    %6080 = vmatpush1.bf16.msra.mxu0 0
    %6081 = vmatprep.subr.bf16.mxu0 0
    %6082 = vmatpush1.bf16.msra.mxu0 0
    %6083 = vmatprep.mubr.bf16.mxu0 0
    %6084 = vmatmul.mubr.bf16.gmra.mrb[0].mxu0 %v2048
    %v6085 = vpop.f32.mrb[0].mxu0
    %v6086 = vadd.f32 %v6013, %v6085
    %v6087 = vpop.f32.mrb[0].mxu0
    %v6088 = vadd.f32 %v6015, %v6087
    %v6089 = vpop.f32.mrb[0].mxu0
    %v6090 = vadd.f32 %v6017, %v6089
    %v6091 = vpop.f32.mrb[0].mxu0
    %v6092 = vadd.f32 %v6019, %v6091
    %6093 = vmatprep.mubr.bf16.mxu0 0
    %6094 = vmatmul.mubr.bf16.gmra.mrb[0].mxu0 %v2051
    %v6095 = vpop.f32.mrb[0].mxu0
    %v6096 = vadd.f32 %v6023, %v6095
    %v6097 = vpop.f32.mrb[0].mxu0
    %v6098 = vadd.f32 %v6025, %v6097
    %v6099 = vpop.f32.mrb[0].mxu0
    %v6100 = vadd.f32 %v6027, %v6099
    %v6101 = vpop.f32.mrb[0].mxu0
    %v6102 = vadd.f32 %v6029, %v6101
    %6103 = vmatprep.mubr.bf16.mxu0 0
    %6104 = vmatmul.mubr.bf16.gmra.mrb[0].mxu0 %v2054
    %v6105 = vpop.f32.mrb[0].mxu0
    %v6106 = vadd.f32 %v6033, %v6105
    %v6107 = vpop.f32.mrb[0].mxu0
    %v6108 = vadd.f32 %v6035, %v6107
    %v6109 = vpop.f32.mrb[0].mxu0
    %v6110 = vadd.f32 %v6037, %v6109
    %v6111 = vpop.f32.mrb[0].mxu0
    %v6112 = vadd.f32 %v6039, %v6111
    %6113 = vmatprep.mubr.bf16.mxu0 0
    %6114 = vmatmul.mubr.bf16.gmra.mrb[0].mxu0 %v2057
    %v6115 = vpop.f32.mrb[0].mxu0
    %v6116 = vadd.f32 %v6043, %v6115
    %v6117 = vpop.f32.mrb[0].mxu0
    %v6118 = vadd.f32 %v6045, %v6117
    %v6119 = vpop.f32.mrb[0].mxu0
    %v6120 = vadd.f32 %v6047, %v6119
    %v6121 = vpop.f32.mrb[0].mxu0
    %v6122 = vadd.f32 %v6049, %v6121
    %6123 = vdwg.mxu0
    %6124 = vmatprep.subr.bf16.mxu0 %v3997
    %6125 = vmatpush1.bf16.msra.mxu0 %v3996
    %6126 = vmatprep.subr.bf16.mxu0 %v4001
    %6127 = vmatpush1.bf16.msra.mxu0 %v4000
    %6128 = vmatprep.subr.bf16.mxu0 %v4005
    %6129 = vmatpush1.bf16.msra.mxu0 %v4004
    %6130 = vmatprep.subr.bf16.mxu0 %v4009
    %6131 = vmatpush1.bf16.msra.mxu0 %v4008
    %6132 = vmatprep.subr.bf16.mxu0 %v4013
    %6133 = vmatpush1.bf16.msra.mxu0 %v4012
    %6134 = vmatprep.subr.bf16.mxu0 %v4017
    %6135 = vmatpush1.bf16.msra.mxu0 %v4016
    %6136 = vmatprep.subr.bf16.mxu0 %v4021
    %6137 = vmatpush1.bf16.msra.mxu0 %v4020
    %6138 = vmatprep.subr.bf16.mxu0 %v4025
    %6139 = vmatpush1.bf16.msra.mxu0 %v4024
    %6140 = vmatprep.subr.bf16.mxu0 %v4029
    %6141 = vmatpush1.bf16.msra.mxu0 %v4028
    %6142 = vmatprep.subr.bf16.mxu0 %v4033
    %6143 = vmatpush1.bf16.msra.mxu0 %v4032
    %6144 = vmatprep.subr.bf16.mxu0 %v4037
    %6145 = vmatpush1.bf16.msra.mxu0 %v4036
    %6146 = vmatprep.subr.bf16.mxu0 %v4041
    %6147 = vmatpush1.bf16.msra.mxu0 %v4040
    %6148 = vmatprep.subr.bf16.mxu0 %v4045
    %6149 = vmatpush1.bf16.msra.mxu0 %v4044
    %6150 = vmatprep.subr.bf16.mxu0 %v4049
    %6151 = vmatpush1.bf16.msra.mxu0 %v4048
    %6152 = vmatprep.subr.bf16.mxu0 %v4053
    %6153 = vmatpush1.bf16.msra.mxu0 %v4052
    %6154 = vmatprep.subr.bf16.mxu0 %v4057
    %6155 = vmatpush1.bf16.msra.mxu0 %v4056
    %6156 = vmatprep.mubr.bf16.mxu0 %v2059
    %6157 = vmatmul.mubr.bf16.gmra.mrb[0].mxu0 %v2058
    %v6158 = vpop.f32.mrb[0].mxu0
    %v6159 = vadd.f32 0.0, %v6158
    %v6160 = vpop.f32.mrb[0].mxu0
    %v6161 = vadd.f32 0.0, %v6160
    %v6162 = vpop.f32.mrb[0].mxu0
    %v6163 = vadd.f32 0.0, %v6162
    %v6164 = vpop.f32.mrb[0].mxu0
    %v6165 = vadd.f32 0.0, %v6164
    %6166 = vmatprep.mubr.bf16.mxu0 %v2062
    %6167 = vmatmul.mubr.bf16.gmra.mrb[0].mxu0 %v2061
    %v6168 = vpop.f32.mrb[0].mxu0
    %v6169 = vadd.f32 0.0, %v6168
    %v6170 = vpop.f32.mrb[0].mxu0
    %v6171 = vadd.f32 0.0, %v6170
    %v6172 = vpop.f32.mrb[0].mxu0
    %v6173 = vadd.f32 0.0, %v6172
    %v6174 = vpop.f32.mrb[0].mxu0
    %v6175 = vadd.f32 0.0, %v6174
    %6176 = vmatprep.mubr.bf16.mxu0 %v2065
    %6177 = vmatmul.mubr.bf16.gmra.mrb[0].mxu0 %v2064
    %v6178 = vpop.f32.mrb[0].mxu0
    %v6179 = vadd.f32 0.0, %v6178
    %v6180 = vpop.f32.mrb[0].mxu0
    %v6181 = vadd.f32 0.0, %v6180
    %v6182 = vpop.f32.mrb[0].mxu0
    %v6183 = vadd.f32 0.0, %v6182
    %v6184 = vpop.f32.mrb[0].mxu0
    %v6185 = vadd.f32 0.0, %v6184
    %6186 = vmatprep.mubr.bf16.mxu0 %v2068
    %6187 = vmatmul.mubr.bf16.gmra.mrb[0].mxu0 %v2067
    %v6188 = vpop.f32.mrb[0].mxu0
    %v6189 = vadd.f32 0.0, %v6188
    %v6190 = vpop.f32.mrb[0].mxu0
    %v6191 = vadd.f32 0.0, %v6190
    %v6192 = vpop.f32.mrb[0].mxu0
    %v6193 = vadd.f32 0.0, %v6192
    %v6194 = vpop.f32.mrb[0].mxu0
    %v6195 = vadd.f32 0.0, %v6194
    %6196 = vdwg.mxu0
    %6197 = vmatprep.subr.bf16.mxu0 %v4061
    %6198 = vmatpush1.bf16.msra.mxu0 %v4060
    %6199 = vmatprep.subr.bf16.mxu0 %v4065
    %6200 = vmatpush1.bf16.msra.mxu0 %v4064
    %6201 = vmatprep.subr.bf16.mxu0 %v4069
    %6202 = vmatpush1.bf16.msra.mxu0 %v4068
    %6203 = vmatprep.subr.bf16.mxu0 %v4073
    %6204 = vmatpush1.bf16.msra.mxu0 %v4072
    %6205 = vmatprep.subr.bf16.mxu0 %v4077
    %6206 = vmatpush1.bf16.msra.mxu0 %v4076
    %6207 = vmatprep.subr.bf16.mxu0 %v4081
    %6208 = vmatpush1.bf16.msra.mxu0 %v4080
    %6209 = vmatprep.subr.bf16.mxu0 %v4085
    %6210 = vmatpush1.bf16.msra.mxu0 %v4084
    %6211 = vmatprep.subr.bf16.mxu0 %v4089
    %6212 = vmatpush1.bf16.msra.mxu0 %v4088
    %6213 = vmatprep.subr.bf16.mxu0 %v4093
    %6214 = vmatpush1.bf16.msra.mxu0 %v4092
    %6215 = vmatprep.subr.bf16.mxu0 %v4097
    %6216 = vmatpush1.bf16.msra.mxu0 %v4096
    %6217 = vmatprep.subr.bf16.mxu0 %v4101
    %6218 = vmatpush1.bf16.msra.mxu0 %v4100
    %6219 = vmatprep.subr.bf16.mxu0 %v4105
    %6220 = vmatpush1.bf16.msra.mxu0 %v4104
    %6221 = vmatprep.subr.bf16.mxu0 %v4109
    %6222 = vmatpush1.bf16.msra.mxu0 %v4108
    %6223 = vmatprep.subr.bf16.mxu0 %v4113
    %6224 = vmatpush1.bf16.msra.mxu0 %v4112
    %6225 = vmatprep.subr.bf16.mxu0 %v4117
    %6226 = vmatpush1.bf16.msra.mxu0 %v4116
    %6227 = vmatprep.subr.bf16.mxu0 %v4121
    %6228 = vmatpush1.bf16.msra.mxu0 %v4120
    %6229 = vmatprep.mubr.bf16.mxu0 %v2043
    %6230 = vmatmul.mubr.bf16.gmra.mrb[0].mxu0 %v2060
    %v6231 = vpop.f32.mrb[0].mxu0
    %v6232 = vadd.f32 %v6159, %v6231
    %v6233 = vpop.f32.mrb[0].mxu0
    %v6234 = vadd.f32 %v6161, %v6233
    %v6235 = vpop.f32.mrb[0].mxu0
    %v6236 = vadd.f32 %v6163, %v6235
    %v6237 = vpop.f32.mrb[0].mxu0
    %v6238 = vadd.f32 %v6165, %v6237
    %6239 = vmatprep.mubr.bf16.mxu0 %v2046
    %6240 = vmatmul.mubr.bf16.gmra.mrb[0].mxu0 %v2063
    %v6241 = vpop.f32.mrb[0].mxu0
    %v6242 = vadd.f32 %v6169, %v6241
    %v6243 = vpop.f32.mrb[0].mxu0
    %v6244 = vadd.f32 %v6171, %v6243
    %v6245 = vpop.f32.mrb[0].mxu0
    %v6246 = vadd.f32 %v6173, %v6245
    %v6247 = vpop.f32.mrb[0].mxu0
    %v6248 = vadd.f32 %v6175, %v6247
    %6249 = vmatprep.mubr.bf16.mxu0 %v2049
    %6250 = vmatmul.mubr.bf16.gmra.mrb[0].mxu0 %v2066
    %v6251 = vpop.f32.mrb[0].mxu0
    %v6252 = vadd.f32 %v6179, %v6251
    %v6253 = vpop.f32.mrb[0].mxu0
    %v6254 = vadd.f32 %v6181, %v6253
    %v6255 = vpop.f32.mrb[0].mxu0
    %v6256 = vadd.f32 %v6183, %v6255
    %v6257 = vpop.f32.mrb[0].mxu0
    %v6258 = vadd.f32 %v6185, %v6257
    %6259 = vmatprep.mubr.bf16.mxu0 %v2052
    %6260 = vmatmul.mubr.bf16.gmra.mrb[0].mxu0 %v2069
    %v6261 = vpop.f32.mrb[0].mxu0
    %v6262 = vadd.f32 %v6189, %v6261
    %v6263 = vpop.f32.mrb[0].mxu0
    %v6264 = vadd.f32 %v6191, %v6263
    %v6265 = vpop.f32.mrb[0].mxu0
    %v6266 = vadd.f32 %v6193, %v6265
    %v6267 = vpop.f32.mrb[0].mxu0
    %v6268 = vadd.f32 %v6195, %v6267
    %6269 = vdwg.mxu0
    %6270 = vmatprep.subr.bf16.mxu0 %v4125
    %6271 = vmatpush1.bf16.msra.mxu0 %v4124
    %6272 = vmatprep.subr.bf16.mxu0 %v4129
    %6273 = vmatpush1.bf16.msra.mxu0 %v4128
    %6274 = vmatprep.subr.bf16.mxu0 %v4133
    %6275 = vmatpush1.bf16.msra.mxu0 %v4132
    %6276 = vmatprep.subr.bf16.mxu0 %v4137
    %6277 = vmatpush1.bf16.msra.mxu0 %v4136
    %6278 = vmatprep.subr.bf16.mxu0 %v4141
    %6279 = vmatpush1.bf16.msra.mxu0 %v4140
    %6280 = vmatprep.subr.bf16.mxu0 %v4145
    %6281 = vmatpush1.bf16.msra.mxu0 %v4144
    %6282 = vmatprep.subr.bf16.mxu0 %v4149
    %6283 = vmatpush1.bf16.msra.mxu0 %v4148
    %6284 = vmatprep.subr.bf16.mxu0 %v4153
    %6285 = vmatpush1.bf16.msra.mxu0 %v4152
    %6286 = vmatprep.subr.bf16.mxu0 %v4157
    %6287 = vmatpush1.bf16.msra.mxu0 %v4156
    %6288 = vmatprep.subr.bf16.mxu0 %v4161
    %6289 = vmatpush1.bf16.msra.mxu0 %v4160
    %6290 = vmatprep.subr.bf16.mxu0 %v4165
    %6291 = vmatpush1.bf16.msra.mxu0 %v4164
    %6292 = vmatprep.subr.bf16.mxu0 %v4169
    %6293 = vmatpush1.bf16.msra.mxu0 %v4168
    %6294 = vmatprep.subr.bf16.mxu0 %v4173
    %6295 = vmatpush1.bf16.msra.mxu0 %v4172
    %6296 = vmatprep.subr.bf16.mxu0 %v4177
    %6297 = vmatpush1.bf16.msra.mxu0 %v4176
    %6298 = vmatprep.subr.bf16.mxu0 %v4181
    %6299 = vmatpush1.bf16.msra.mxu0 %v4180
    %6300 = vmatprep.subr.bf16.mxu0 %v4185
    %6301 = vmatpush1.bf16.msra.mxu0 %v4184
    %6302 = vmatprep.mubr.bf16.mxu0 %v2045
    %6303 = vmatmul.mubr.bf16.gmra.mrb[0].mxu0 %v2044
    %v6304 = vpop.f32.mrb[0].mxu0
    %v6305 = vadd.f32 %v6232, %v6304
    %v6306 = vpop.f32.mrb[0].mxu0
    %v6307 = vadd.f32 %v6234, %v6306
    %v6308 = vpop.f32.mrb[0].mxu0
    %v6309 = vadd.f32 %v6236, %v6308
    %v6310 = vpop.f32.mrb[0].mxu0
    %v6311 = vadd.f32 %v6238, %v6310
    %6312 = vmatprep.mubr.bf16.mxu0 %v2048
    %6313 = vmatmul.mubr.bf16.gmra.mrb[0].mxu0 %v2047
    %v6314 = vpop.f32.mrb[0].mxu0
    %v6315 = vadd.f32 %v6242, %v6314
    %v6316 = vpop.f32.mrb[0].mxu0
    %v6317 = vadd.f32 %v6244, %v6316
    %v6318 = vpop.f32.mrb[0].mxu0
    %v6319 = vadd.f32 %v6246, %v6318
    %v6320 = vpop.f32.mrb[0].mxu0
    %v6321 = vadd.f32 %v6248, %v6320
    %6322 = vmatprep.mubr.bf16.mxu0 %v2051
    %6323 = vmatmul.mubr.bf16.gmra.mrb[0].mxu0 %v2050
    %v6324 = vpop.f32.mrb[0].mxu0
    %v6325 = vadd.f32 %v6252, %v6324
    %v6326 = vpop.f32.mrb[0].mxu0
    %v6327 = vadd.f32 %v6254, %v6326
    %v6328 = vpop.f32.mrb[0].mxu0
    %v6329 = vadd.f32 %v6256, %v6328
    %v6330 = vpop.f32.mrb[0].mxu0
    %v6331 = vadd.f32 %v6258, %v6330
    %6332 = vmatprep.mubr.bf16.mxu0 %v2054
    %6333 = vmatmul.mubr.bf16.gmra.mrb[0].mxu0 %v2053
    %v6334 = vpop.f32.mrb[0].mxu0
    %v6335 = vadd.f32 %v6262, %v6334
    %v6336 = vpop.f32.mrb[0].mxu0
    %v6337 = vadd.f32 %v6264, %v6336
    %v6338 = vpop.f32.mrb[0].mxu0
    %v6339 = vadd.f32 %v6266, %v6338
    %v6340 = vpop.f32.mrb[0].mxu0
    %v6341 = vadd.f32 %v6268, %v6340
    %6342 = vdwg.mxu0
    %6343 = vmatprep.subr.bf16.mxu0 %v4189
    %6344 = vmatpush1.bf16.msra.mxu0 %v4188
    %6345 = vmatprep.subr.bf16.mxu0 %v4193
    %6346 = vmatpush1.bf16.msra.mxu0 %v4192
    %6347 = vmatprep.subr.bf16.mxu0 %v4197
    %6348 = vmatpush1.bf16.msra.mxu0 %v4196
    %6349 = vmatprep.subr.bf16.mxu0 %v4201
    %6350 = vmatpush1.bf16.msra.mxu0 %v4200
    %6351 = vmatprep.subr.bf16.mxu0 %v4205
    %6352 = vmatpush1.bf16.msra.mxu0 %v4204
    %6353 = vmatprep.subr.bf16.mxu0 %v4209
    %6354 = vmatpush1.bf16.msra.mxu0 %v4208
    %6355 = vmatprep.subr.bf16.mxu0 %v4213
    %6356 = vmatpush1.bf16.msra.mxu0 %v4212
    %6357 = vmatprep.subr.bf16.mxu0 %v4217
    %6358 = vmatpush1.bf16.msra.mxu0 %v4216
    %6359 = vmatprep.subr.bf16.mxu0 %v4221
    %6360 = vmatpush1.bf16.msra.mxu0 %v4220
    %6361 = vmatprep.subr.bf16.mxu0 %v4225
    %6362 = vmatpush1.bf16.msra.mxu0 %v4224
    %6363 = vmatprep.subr.bf16.mxu0 %v4229
    %6364 = vmatpush1.bf16.msra.mxu0 %v4228
    %6365 = vmatprep.subr.bf16.mxu0 %v4233
    %6366 = vmatpush1.bf16.msra.mxu0 %v4232
    %6367 = vmatprep.subr.bf16.mxu0 %v4237
    %6368 = vmatpush1.bf16.msra.mxu0 %v4236
    %6369 = vmatprep.subr.bf16.mxu0 %v4241
    %6370 = vmatpush1.bf16.msra.mxu0 %v4240
    %6371 = vmatprep.subr.bf16.mxu0 %v4245
    %6372 = vmatpush1.bf16.msra.mxu0 %v4244
    %6373 = vmatprep.subr.bf16.mxu0 %v4249
    %6374 = vmatpush1.bf16.msra.mxu0 %v4248
    %6375 = vmatprep.mubr.bf16.mxu0 %v2062
    %6376 = vmatmul.mubr.bf16.gmra.mrb[0].mxu0 %v2061
    %v6377 = vpop.f32.mrb[0].mxu0
    %v6378 = vadd.f32 %v6305, %v6377
    %v6379 = vpop.f32.mrb[0].mxu0
    %v6380 = vadd.f32 %v6307, %v6379
    %v6381 = vpop.f32.mrb[0].mxu0
    %v6382 = vadd.f32 %v6309, %v6381
    %v6383 = vpop.f32.mrb[0].mxu0
    %v6384 = vadd.f32 %v6311, %v6383
    %6385 = vmatprep.mubr.bf16.mxu0 %v2065
    %6386 = vmatmul.mubr.bf16.gmra.mrb[0].mxu0 %v2064
    %v6387 = vpop.f32.mrb[0].mxu0
    %v6388 = vadd.f32 %v6315, %v6387
    %v6389 = vpop.f32.mrb[0].mxu0
    %v6390 = vadd.f32 %v6317, %v6389
    %v6391 = vpop.f32.mrb[0].mxu0
    %v6392 = vadd.f32 %v6319, %v6391
    %v6393 = vpop.f32.mrb[0].mxu0
    %v6394 = vadd.f32 %v6321, %v6393
    %6395 = vmatprep.mubr.bf16.mxu0 %v2068
    %6396 = vmatmul.mubr.bf16.gmra.mrb[0].mxu0 %v2067
    %v6397 = vpop.f32.mrb[0].mxu0
    %v6398 = vadd.f32 %v6325, %v6397
    %v6399 = vpop.f32.mrb[0].mxu0
    %v6400 = vadd.f32 %v6327, %v6399
    %v6401 = vpop.f32.mrb[0].mxu0
    %v6402 = vadd.f32 %v6329, %v6401
    %v6403 = vpop.f32.mrb[0].mxu0
    %v6404 = vadd.f32 %v6331, %v6403
    %6405 = vmatprep.mubr.bf16.mxu0 %v2071
    %6406 = vmatmul.mubr.bf16.gmra.mrb[0].mxu0 %v2070
    %v6407 = vpop.f32.mrb[0].mxu0
    %v6408 = vadd.f32 %v6335, %v6407
    %v6409 = vpop.f32.mrb[0].mxu0
    %v6410 = vadd.f32 %v6337, %v6409
    %v6411 = vpop.f32.mrb[0].mxu0
    %v6412 = vadd.f32 %v6339, %v6411
    %v6413 = vpop.f32.mrb[0].mxu0
    %v6414 = vadd.f32 %v6341, %v6413
    %6415 = vdwg.mxu0
    %6416 = vmatprep.subr.bf16.mxu0 %v4253
    %6417 = vmatpush1.bf16.msra.mxu0 %v4252
    %6418 = vmatprep.subr.bf16.mxu0 %v4257
    %6419 = vmatpush1.bf16.msra.mxu0 %v4256
    %6420 = vmatprep.subr.bf16.mxu0 %v4261
    %6421 = vmatpush1.bf16.msra.mxu0 %v4260
    %6422 = vmatprep.subr.bf16.mxu0 %v4265
    %6423 = vmatpush1.bf16.msra.mxu0 %v4264
    %6424 = vmatprep.subr.bf16.mxu0 %v4269
    %6425 = vmatpush1.bf16.msra.mxu0 %v4268
    %6426 = vmatprep.subr.bf16.mxu0 %v4273
    %6427 = vmatpush1.bf16.msra.mxu0 %v4272
    %6428 = vmatprep.subr.bf16.mxu0 %v4277
    %6429 = vmatpush1.bf16.msra.mxu0 %v4276
    %6430 = vmatprep.subr.bf16.mxu0 %v4281
    %6431 = vmatpush1.bf16.msra.mxu0 %v4280
    %6432 = vmatprep.subr.bf16.mxu0 %v4285
    %6433 = vmatpush1.bf16.msra.mxu0 %v4284
    %6434 = vmatprep.subr.bf16.mxu0 %v4289
    %6435 = vmatpush1.bf16.msra.mxu0 %v4288
    %6436 = vmatprep.subr.bf16.mxu0 %v4293
    %6437 = vmatpush1.bf16.msra.mxu0 %v4292
    %6438 = vmatprep.subr.bf16.mxu0 %v4297
    %6439 = vmatpush1.bf16.msra.mxu0 %v4296
    %6440 = vmatprep.subr.bf16.mxu0 %v4301
    %6441 = vmatpush1.bf16.msra.mxu0 %v4300
    %6442 = vmatprep.subr.bf16.mxu0 %v4305
    %6443 = vmatpush1.bf16.msra.mxu0 %v4304
    %6444 = vmatprep.subr.bf16.mxu0 %v4309
    %6445 = vmatpush1.bf16.msra.mxu0 %v4308
    %6446 = vmatprep.subr.bf16.mxu0 %v4313
    %6447 = vmatpush1.bf16.msra.mxu0 %v4312
    %6448 = vmatprep.mubr.bf16.mxu0 %v2046
    %6449 = vmatmul.mubr.bf16.gmra.mrb[0].mxu0 %v2063
    %v6450 = vpop.f32.mrb[0].mxu0
    %v6451 = vadd.f32 %v6378, %v6450
    %v6452 = vpop.f32.mrb[0].mxu0
    %v6453 = vadd.f32 %v6380, %v6452
    %v6454 = vpop.f32.mrb[0].mxu0
    %v6455 = vadd.f32 %v6382, %v6454
    %v6456 = vpop.f32.mrb[0].mxu0
    %v6457 = vadd.f32 %v6384, %v6456
    %6458 = vmatprep.mubr.bf16.mxu0 %v2049
    %6459 = vmatmul.mubr.bf16.gmra.mrb[0].mxu0 %v2066
    %v6460 = vpop.f32.mrb[0].mxu0
    %v6461 = vadd.f32 %v6388, %v6460
    %v6462 = vpop.f32.mrb[0].mxu0
    %v6463 = vadd.f32 %v6390, %v6462
    %v6464 = vpop.f32.mrb[0].mxu0
    %v6465 = vadd.f32 %v6392, %v6464
    %v6466 = vpop.f32.mrb[0].mxu0
    %v6467 = vadd.f32 %v6394, %v6466
    %6468 = vmatprep.mubr.bf16.mxu0 %v2052
    %6469 = vmatmul.mubr.bf16.gmra.mrb[0].mxu0 %v2069
    %v6470 = vpop.f32.mrb[0].mxu0
    %v6471 = vadd.f32 %v6398, %v6470
    %v6472 = vpop.f32.mrb[0].mxu0
    %v6473 = vadd.f32 %v6400, %v6472
    %v6474 = vpop.f32.mrb[0].mxu0
    %v6475 = vadd.f32 %v6402, %v6474
    %v6476 = vpop.f32.mrb[0].mxu0
    %v6477 = vadd.f32 %v6404, %v6476
    %6478 = vmatprep.mubr.bf16.mxu0 %v2055
    %6479 = vmatmul.mubr.bf16.gmra.mrb[0].mxu0 %v2072
    %v6480 = vpop.f32.mrb[0].mxu0
    %v6481 = vadd.f32 %v6408, %v6480
    %v6482 = vpop.f32.mrb[0].mxu0
    %v6483 = vadd.f32 %v6410, %v6482
    %v6484 = vpop.f32.mrb[0].mxu0
    %v6485 = vadd.f32 %v6412, %v6484
    %v6486 = vpop.f32.mrb[0].mxu0
    %v6487 = vadd.f32 %v6414, %v6486
    %6488 = vdwg.mxu0
    %6489 = vmatprep.subr.bf16.mxu0 %v4317
    %6490 = vmatpush1.bf16.msra.mxu0 %v4316
    %6491 = vmatprep.subr.bf16.mxu0 %v4321
    %6492 = vmatpush1.bf16.msra.mxu0 %v4320
    %6493 = vmatprep.subr.bf16.mxu0 %v4325
    %6494 = vmatpush1.bf16.msra.mxu0 %v4324
    %6495 = vmatprep.subr.bf16.mxu0 %v4329
    %6496 = vmatpush1.bf16.msra.mxu0 %v4328
    %6497 = vmatprep.subr.bf16.mxu0 %v4333
    %6498 = vmatpush1.bf16.msra.mxu0 %v4332
    %6499 = vmatprep.subr.bf16.mxu0 %v4337
    %6500 = vmatpush1.bf16.msra.mxu0 %v4336
    %6501 = vmatprep.subr.bf16.mxu0 %v4341
    %6502 = vmatpush1.bf16.msra.mxu0 %v4340
    %6503 = vmatprep.subr.bf16.mxu0 %v4345
    %6504 = vmatpush1.bf16.msra.mxu0 %v4344
    %6505 = vmatprep.subr.bf16.mxu0 %v4349
    %6506 = vmatpush1.bf16.msra.mxu0 %v4348
    %6507 = vmatprep.subr.bf16.mxu0 %v4353
    %6508 = vmatpush1.bf16.msra.mxu0 %v4352
    %6509 = vmatprep.subr.bf16.mxu0 %v4357
    %6510 = vmatpush1.bf16.msra.mxu0 %v4356
    %6511 = vmatprep.subr.bf16.mxu0 %v4361
    %6512 = vmatpush1.bf16.msra.mxu0 %v4360
    %6513 = vmatprep.subr.bf16.mxu0 %v4365
    %6514 = vmatpush1.bf16.msra.mxu0 %v4364
    %6515 = vmatprep.subr.bf16.mxu0 %v4369
    %6516 = vmatpush1.bf16.msra.mxu0 %v4368
    %6517 = vmatprep.subr.bf16.mxu0 %v4373
    %6518 = vmatpush1.bf16.msra.mxu0 %v4372
    %6519 = vmatprep.subr.bf16.mxu0 %v4377
    %6520 = vmatpush1.bf16.msra.mxu0 %v4376
    %6521 = vmatprep.mubr.bf16.mxu0 %v2048
    %6522 = vmatmul.mubr.bf16.gmra.mrb[0].mxu0 %v2047
    %v6523 = vpop.f32.mrb[0].mxu0
    %v6524 = vadd.f32 %v6451, %v6523
    %v6525 = vpop.f32.mrb[0].mxu0
    %v6526 = vadd.f32 %v6453, %v6525
    %v6527 = vpop.f32.mrb[0].mxu0
    %v6528 = vadd.f32 %v6455, %v6527
    %v6529 = vpop.f32.mrb[0].mxu0
    %v6530 = vadd.f32 %v6457, %v6529
    %6531 = vmatprep.mubr.bf16.mxu0 %v2051
    %6532 = vmatmul.mubr.bf16.gmra.mrb[0].mxu0 %v2050
    %v6533 = vpop.f32.mrb[0].mxu0
    %v6534 = vadd.f32 %v6461, %v6533
    %v6535 = vpop.f32.mrb[0].mxu0
    %v6536 = vadd.f32 %v6463, %v6535
    %v6537 = vpop.f32.mrb[0].mxu0
    %v6538 = vadd.f32 %v6465, %v6537
    %v6539 = vpop.f32.mrb[0].mxu0
    %v6540 = vadd.f32 %v6467, %v6539
    %6541 = vmatprep.mubr.bf16.mxu0 %v2054
    %6542 = vmatmul.mubr.bf16.gmra.mrb[0].mxu0 %v2053
    %v6543 = vpop.f32.mrb[0].mxu0
    %v6544 = vadd.f32 %v6471, %v6543
    %v6545 = vpop.f32.mrb[0].mxu0
    %v6546 = vadd.f32 %v6473, %v6545
    %v6547 = vpop.f32.mrb[0].mxu0
    %v6548 = vadd.f32 %v6475, %v6547
    %v6549 = vpop.f32.mrb[0].mxu0
    %v6550 = vadd.f32 %v6477, %v6549
    %6551 = vmatprep.mubr.bf16.mxu0 %v2057
    %6552 = vmatmul.mubr.bf16.gmra.mrb[0].mxu0 %v2056
    %v6553 = vpop.f32.mrb[0].mxu0
    %v6554 = vadd.f32 %v6481, %v6553
    %v6555 = vpop.f32.mrb[0].mxu0
    %v6556 = vadd.f32 %v6483, %v6555
    %v6557 = vpop.f32.mrb[0].mxu0
    %v6558 = vadd.f32 %v6485, %v6557
    %v6559 = vpop.f32.mrb[0].mxu0
    %v6560 = vadd.f32 %v6487, %v6559
    %6561 = vdwg.mxu0
    %6562 = vmatprep.subr.bf16.mxu0 %v4381
    %6563 = vmatpush1.bf16.msra.mxu0 %v4380
    %6564 = vmatprep.subr.bf16.mxu0 %v4385
    %6565 = vmatpush1.bf16.msra.mxu0 %v4384
    %6566 = vmatprep.subr.bf16.mxu0 %v4389
    %6567 = vmatpush1.bf16.msra.mxu0 %v4388
    %6568 = vmatprep.subr.bf16.mxu0 %v4393
    %6569 = vmatpush1.bf16.msra.mxu0 %v4392
    %6570 = vmatprep.subr.bf16.mxu0 %v4397
    %6571 = vmatpush1.bf16.msra.mxu0 %v4396
    %6572 = vmatprep.subr.bf16.mxu0 %v4401
    %6573 = vmatpush1.bf16.msra.mxu0 %v4400
    %6574 = vmatprep.subr.bf16.mxu0 %v4405
    %6575 = vmatpush1.bf16.msra.mxu0 %v4404
    %6576 = vmatprep.subr.bf16.mxu0 %v4409
    %6577 = vmatpush1.bf16.msra.mxu0 %v4408
    %6578 = vmatprep.subr.bf16.mxu0 %v4413
    %6579 = vmatpush1.bf16.msra.mxu0 %v4412
    %6580 = vmatprep.subr.bf16.mxu0 %v4417
    %6581 = vmatpush1.bf16.msra.mxu0 %v4416
    %6582 = vmatprep.subr.bf16.mxu0 %v4421
    %6583 = vmatpush1.bf16.msra.mxu0 %v4420
    %6584 = vmatprep.subr.bf16.mxu0 %v4425
    %6585 = vmatpush1.bf16.msra.mxu0 %v4424
    %6586 = vmatprep.subr.bf16.mxu0 %v4429
    %6587 = vmatpush1.bf16.msra.mxu0 %v4428
    %6588 = vmatprep.subr.bf16.mxu0 %v4433
    %6589 = vmatpush1.bf16.msra.mxu0 %v4432
    %6590 = vmatprep.subr.bf16.mxu0 %v4437
    %6591 = vmatpush1.bf16.msra.mxu0 %v4436
    %6592 = vmatprep.subr.bf16.mxu0 %v4441
    %6593 = vmatpush1.bf16.msra.mxu0 %v4440
    %6594 = vmatprep.mubr.bf16.mxu0 %v2065
    %6595 = vmatmul.mubr.bf16.gmra.mrb[0].mxu0 %v2064
    %v6596 = vpop.f32.mrb[0].mxu0
    %v6597 = vadd.f32 %v6524, %v6596
    %v6598 = vpop.f32.mrb[0].mxu0
    %v6599 = vadd.f32 %v6526, %v6598
    %v6600 = vpop.f32.mrb[0].mxu0
    %v6601 = vadd.f32 %v6528, %v6600
    %v6602 = vpop.f32.mrb[0].mxu0
    %v6603 = vadd.f32 %v6530, %v6602
    %6604 = vmatprep.mubr.bf16.mxu0 %v2068
    %6605 = vmatmul.mubr.bf16.gmra.mrb[0].mxu0 %v2067
    %v6606 = vpop.f32.mrb[0].mxu0
    %v6607 = vadd.f32 %v6534, %v6606
    %v6608 = vpop.f32.mrb[0].mxu0
    %v6609 = vadd.f32 %v6536, %v6608
    %v6610 = vpop.f32.mrb[0].mxu0
    %v6611 = vadd.f32 %v6538, %v6610
    %v6612 = vpop.f32.mrb[0].mxu0
    %v6613 = vadd.f32 %v6540, %v6612
    %6614 = vmatprep.mubr.bf16.mxu0 %v2071
    %6615 = vmatmul.mubr.bf16.gmra.mrb[0].mxu0 %v2070
    %v6616 = vpop.f32.mrb[0].mxu0
    %v6617 = vadd.f32 %v6544, %v6616
    %v6618 = vpop.f32.mrb[0].mxu0
    %v6619 = vadd.f32 %v6546, %v6618
    %v6620 = vpop.f32.mrb[0].mxu0
    %v6621 = vadd.f32 %v6548, %v6620
    %v6622 = vpop.f32.mrb[0].mxu0
    %v6623 = vadd.f32 %v6550, %v6622
    %6624 = vmatprep.mubr.bf16.mxu0 %v2074
    %6625 = vmatmul.mubr.bf16.gmra.mrb[0].mxu0 %v2073
    %v6626 = vpop.f32.mrb[0].mxu0
    %v6627 = vadd.f32 %v6554, %v6626
    %v6628 = vpop.f32.mrb[0].mxu0
    %v6629 = vadd.f32 %v6556, %v6628
    %v6630 = vpop.f32.mrb[0].mxu0
    %v6631 = vadd.f32 %v6558, %v6630
    %v6632 = vpop.f32.mrb[0].mxu0
    %v6633 = vadd.f32 %v6560, %v6632
    %6634 = vdwg.mxu0
    %6635 = vmatprep.subr.bf16.mxu0 %v4445
    %6636 = vmatpush1.bf16.msra.mxu0 %v4444
    %6637 = vmatprep.subr.bf16.mxu0 %v4449
    %6638 = vmatpush1.bf16.msra.mxu0 %v4448
    %6639 = vmatprep.subr.bf16.mxu0 %v4453
    %6640 = vmatpush1.bf16.msra.mxu0 %v4452
    %6641 = vmatprep.subr.bf16.mxu0 %v4457
    %6642 = vmatpush1.bf16.msra.mxu0 %v4456
    %6643 = vmatprep.subr.bf16.mxu0 %v4461
    %6644 = vmatpush1.bf16.msra.mxu0 %v4460
    %6645 = vmatprep.subr.bf16.mxu0 %v4465
    %6646 = vmatpush1.bf16.msra.mxu0 %v4464
    %6647 = vmatprep.subr.bf16.mxu0 %v4469
    %6648 = vmatpush1.bf16.msra.mxu0 %v4468
    %6649 = vmatprep.subr.bf16.mxu0 %v4473
    %6650 = vmatpush1.bf16.msra.mxu0 %v4472
    %6651 = vmatprep.subr.bf16.mxu0 0
    %6652 = vmatpush1.bf16.msra.mxu0 0
    %6653 = vmatprep.subr.bf16.mxu0 0
    %6654 = vmatpush1.bf16.msra.mxu0 0
    %6655 = vmatprep.subr.bf16.mxu0 0
    %6656 = vmatpush1.bf16.msra.mxu0 0
    %6657 = vmatprep.subr.bf16.mxu0 0
    %6658 = vmatpush1.bf16.msra.mxu0 0
    %6659 = vmatprep.subr.bf16.mxu0 0
    %6660 = vmatpush1.bf16.msra.mxu0 0
    %6661 = vmatprep.subr.bf16.mxu0 0
    %6662 = vmatpush1.bf16.msra.mxu0 0
    %6663 = vmatprep.subr.bf16.mxu0 0
    %6664 = vmatpush1.bf16.msra.mxu0 0
    %6665 = vmatprep.subr.bf16.mxu0 0
    %6666 = vmatpush1.bf16.msra.mxu0 0
    %6667 = vmatprep.mubr.bf16.mxu0 0
    %6668 = vmatmul.mubr.bf16.gmra.mrb[0].mxu0 %v2066
    %v6669 = vpop.f32.mrb[0].mxu0
    %v6670 = vadd.f32 %v6597, %v6669
    %v6671 = vpop.f32.mrb[0].mxu0
    %v6672 = vadd.f32 %v6599, %v6671
    %v6673 = vpop.f32.mrb[0].mxu0
    %v6674 = vadd.f32 %v6601, %v6673
    %v6675 = vpop.f32.mrb[0].mxu0
    %v6676 = vadd.f32 %v6603, %v6675
    %6677 = vmatprep.mubr.bf16.mxu0 0
    %6678 = vmatmul.mubr.bf16.gmra.mrb[0].mxu0 %v2069
    %v6679 = vpop.f32.mrb[0].mxu0
    %v6680 = vadd.f32 %v6607, %v6679
    %v6681 = vpop.f32.mrb[0].mxu0
    %v6682 = vadd.f32 %v6609, %v6681
    %v6683 = vpop.f32.mrb[0].mxu0
    %v6684 = vadd.f32 %v6611, %v6683
    %v6685 = vpop.f32.mrb[0].mxu0
    %v6686 = vadd.f32 %v6613, %v6685
    %6687 = vmatprep.mubr.bf16.mxu0 0
    %6688 = vmatmul.mubr.bf16.gmra.mrb[0].mxu0 %v2072
    %v6689 = vpop.f32.mrb[0].mxu0
    %v6690 = vadd.f32 %v6617, %v6689
    %v6691 = vpop.f32.mrb[0].mxu0
    %v6692 = vadd.f32 %v6619, %v6691
    %v6693 = vpop.f32.mrb[0].mxu0
    %v6694 = vadd.f32 %v6621, %v6693
    %v6695 = vpop.f32.mrb[0].mxu0
    %v6696 = vadd.f32 %v6623, %v6695
    %6697 = vmatprep.mubr.bf16.mxu0 0
    %6698 = vmatmul.mubr.bf16.gmra.mrb[0].mxu0 %v2075
    %v6699 = vpop.f32.mrb[0].mxu0
    %v6700 = vadd.f32 %v6627, %v6699
    %v6701 = vpop.f32.mrb[0].mxu0
    %v6702 = vadd.f32 %v6629, %v6701
    %v6703 = vpop.f32.mrb[0].mxu0
    %v6704 = vadd.f32 %v6631, %v6703
    %v6705 = vpop.f32.mrb[0].mxu0
    %v6706 = vadd.f32 %v6633, %v6705
    %6707 = vdwg.mxu0
    %6708 = vmatprep.subr.bf16.mxu0 %v3999
    %6709 = vmatpush1.bf16.msra.mxu0 %v3998
    %6710 = vmatprep.subr.bf16.mxu0 %v4003
    %6711 = vmatpush1.bf16.msra.mxu0 %v4002
    %6712 = vmatprep.subr.bf16.mxu0 %v4007
    %6713 = vmatpush1.bf16.msra.mxu0 %v4006
    %6714 = vmatprep.subr.bf16.mxu0 %v4011
    %6715 = vmatpush1.bf16.msra.mxu0 %v4010
    %6716 = vmatprep.subr.bf16.mxu0 %v4015
    %6717 = vmatpush1.bf16.msra.mxu0 %v4014
    %6718 = vmatprep.subr.bf16.mxu0 %v4019
    %6719 = vmatpush1.bf16.msra.mxu0 %v4018
    %6720 = vmatprep.subr.bf16.mxu0 %v4023
    %6721 = vmatpush1.bf16.msra.mxu0 %v4022
    %6722 = vmatprep.subr.bf16.mxu0 %v4027
    %6723 = vmatpush1.bf16.msra.mxu0 %v4026
    %6724 = vmatprep.subr.bf16.mxu0 %v4031
    %6725 = vmatpush1.bf16.msra.mxu0 %v4030
    %6726 = vmatprep.subr.bf16.mxu0 %v4035
    %6727 = vmatpush1.bf16.msra.mxu0 %v4034
    %6728 = vmatprep.subr.bf16.mxu0 %v4039
    %6729 = vmatpush1.bf16.msra.mxu0 %v4038
    %6730 = vmatprep.subr.bf16.mxu0 %v4043
    %6731 = vmatpush1.bf16.msra.mxu0 %v4042
    %6732 = vmatprep.subr.bf16.mxu0 %v4047
    %6733 = vmatpush1.bf16.msra.mxu0 %v4046
    %6734 = vmatprep.subr.bf16.mxu0 %v4051
    %6735 = vmatpush1.bf16.msra.mxu0 %v4050
    %6736 = vmatprep.subr.bf16.mxu0 %v4055
    %6737 = vmatpush1.bf16.msra.mxu0 %v4054
    %6738 = vmatprep.subr.bf16.mxu0 %v4059
    %6739 = vmatpush1.bf16.msra.mxu0 %v4058
    %6740 = vmatprep.mubr.bf16.mxu0 %v2059
    %6741 = vmatmul.mubr.bf16.gmra.mrb[0].mxu0 %v2058
    %v6742 = vpop.f32.mrb[0].mxu0
    %v6743 = vadd.f32 0.0, %v6742
    %v6744 = vpop.f32.mrb[0].mxu0
    %v6745 = vadd.f32 0.0, %v6744
    %v6746 = vpop.f32.mrb[0].mxu0
    %v6747 = vadd.f32 0.0, %v6746
    %v6748 = vpop.f32.mrb[0].mxu0
    %v6749 = vadd.f32 0.0, %v6748
    %6750 = vmatprep.mubr.bf16.mxu0 %v2062
    %6751 = vmatmul.mubr.bf16.gmra.mrb[0].mxu0 %v2061
    %v6752 = vpop.f32.mrb[0].mxu0
    %v6753 = vadd.f32 0.0, %v6752
    %v6754 = vpop.f32.mrb[0].mxu0
    %v6755 = vadd.f32 0.0, %v6754
    %v6756 = vpop.f32.mrb[0].mxu0
    %v6757 = vadd.f32 0.0, %v6756
    %v6758 = vpop.f32.mrb[0].mxu0
    %v6759 = vadd.f32 0.0, %v6758
    %6760 = vmatprep.mubr.bf16.mxu0 %v2065
    %6761 = vmatmul.mubr.bf16.gmra.mrb[0].mxu0 %v2064
    %v6762 = vpop.f32.mrb[0].mxu0
    %v6763 = vadd.f32 0.0, %v6762
    %v6764 = vpop.f32.mrb[0].mxu0
    %v6765 = vadd.f32 0.0, %v6764
    %v6766 = vpop.f32.mrb[0].mxu0
    %v6767 = vadd.f32 0.0, %v6766
    %v6768 = vpop.f32.mrb[0].mxu0
    %v6769 = vadd.f32 0.0, %v6768
    %6770 = vmatprep.mubr.bf16.mxu0 %v2068
    %6771 = vmatmul.mubr.bf16.gmra.mrb[0].mxu0 %v2067
    %v6772 = vpop.f32.mrb[0].mxu0
    %v6773 = vadd.f32 0.0, %v6772
    %v6774 = vpop.f32.mrb[0].mxu0
    %v6775 = vadd.f32 0.0, %v6774
    %v6776 = vpop.f32.mrb[0].mxu0
    %v6777 = vadd.f32 0.0, %v6776
    %v6778 = vpop.f32.mrb[0].mxu0
    %v6779 = vadd.f32 0.0, %v6778
    %6780 = vdwg.mxu0
    %6781 = vmatprep.subr.bf16.mxu0 %v4063
    %6782 = vmatpush1.bf16.msra.mxu0 %v4062
    %6783 = vmatprep.subr.bf16.mxu0 %v4067
    %6784 = vmatpush1.bf16.msra.mxu0 %v4066
    %6785 = vmatprep.subr.bf16.mxu0 %v4071
    %6786 = vmatpush1.bf16.msra.mxu0 %v4070
    %6787 = vmatprep.subr.bf16.mxu0 %v4075
    %6788 = vmatpush1.bf16.msra.mxu0 %v4074
    %6789 = vmatprep.subr.bf16.mxu0 %v4079
    %6790 = vmatpush1.bf16.msra.mxu0 %v4078
    %6791 = vmatprep.subr.bf16.mxu0 %v4083
    %6792 = vmatpush1.bf16.msra.mxu0 %v4082
    %6793 = vmatprep.subr.bf16.mxu0 %v4087
    %6794 = vmatpush1.bf16.msra.mxu0 %v4086
    %6795 = vmatprep.subr.bf16.mxu0 %v4091
    %6796 = vmatpush1.bf16.msra.mxu0 %v4090
    %6797 = vmatprep.subr.bf16.mxu0 %v4095
    %6798 = vmatpush1.bf16.msra.mxu0 %v4094
    %6799 = vmatprep.subr.bf16.mxu0 %v4099
    %6800 = vmatpush1.bf16.msra.mxu0 %v4098
    %6801 = vmatprep.subr.bf16.mxu0 %v4103
    %6802 = vmatpush1.bf16.msra.mxu0 %v4102
    %6803 = vmatprep.subr.bf16.mxu0 %v4107
    %6804 = vmatpush1.bf16.msra.mxu0 %v4106
    %6805 = vmatprep.subr.bf16.mxu0 %v4111
    %6806 = vmatpush1.bf16.msra.mxu0 %v4110
    %6807 = vmatprep.subr.bf16.mxu0 %v4115
    %6808 = vmatpush1.bf16.msra.mxu0 %v4114
    %6809 = vmatprep.subr.bf16.mxu0 %v4119
    %6810 = vmatpush1.bf16.msra.mxu0 %v4118
    %6811 = vmatprep.subr.bf16.mxu0 %v4123
    %6812 = vmatpush1.bf16.msra.mxu0 %v4122
    %6813 = vmatprep.mubr.bf16.mxu0 %v2043
    %6814 = vmatmul.mubr.bf16.gmra.mrb[0].mxu0 %v2060
    %v6815 = vpop.f32.mrb[0].mxu0
    %v6816 = vadd.f32 %v6743, %v6815
    %v6817 = vpop.f32.mrb[0].mxu0
    %v6818 = vadd.f32 %v6745, %v6817
    %v6819 = vpop.f32.mrb[0].mxu0
    %v6820 = vadd.f32 %v6747, %v6819
    %v6821 = vpop.f32.mrb[0].mxu0
    %v6822 = vadd.f32 %v6749, %v6821
    %6823 = vmatprep.mubr.bf16.mxu0 %v2046
    %6824 = vmatmul.mubr.bf16.gmra.mrb[0].mxu0 %v2063
    %v6825 = vpop.f32.mrb[0].mxu0
    %v6826 = vadd.f32 %v6753, %v6825
    %v6827 = vpop.f32.mrb[0].mxu0
    %v6828 = vadd.f32 %v6755, %v6827
    %v6829 = vpop.f32.mrb[0].mxu0
    %v6830 = vadd.f32 %v6757, %v6829
    %v6831 = vpop.f32.mrb[0].mxu0
    %v6832 = vadd.f32 %v6759, %v6831
    %6833 = vmatprep.mubr.bf16.mxu0 %v2049
    %6834 = vmatmul.mubr.bf16.gmra.mrb[0].mxu0 %v2066
    %v6835 = vpop.f32.mrb[0].mxu0
    %v6836 = vadd.f32 %v6763, %v6835
    %v6837 = vpop.f32.mrb[0].mxu0
    %v6838 = vadd.f32 %v6765, %v6837
    %v6839 = vpop.f32.mrb[0].mxu0
    %v6840 = vadd.f32 %v6767, %v6839
    %v6841 = vpop.f32.mrb[0].mxu0
    %v6842 = vadd.f32 %v6769, %v6841
    %6843 = vmatprep.mubr.bf16.mxu0 %v2052
    %6844 = vmatmul.mubr.bf16.gmra.mrb[0].mxu0 %v2069
    %v6845 = vpop.f32.mrb[0].mxu0
    %v6846 = vadd.f32 %v6773, %v6845
    %v6847 = vpop.f32.mrb[0].mxu0
    %v6848 = vadd.f32 %v6775, %v6847
    %v6849 = vpop.f32.mrb[0].mxu0
    %v6850 = vadd.f32 %v6777, %v6849
    %v6851 = vpop.f32.mrb[0].mxu0
    %v6852 = vadd.f32 %v6779, %v6851
    %6853 = vdwg.mxu0
    %6854 = vmatprep.subr.bf16.mxu0 %v4127
    %6855 = vmatpush1.bf16.msra.mxu0 %v4126
    %6856 = vmatprep.subr.bf16.mxu0 %v4131
    %6857 = vmatpush1.bf16.msra.mxu0 %v4130
    %6858 = vmatprep.subr.bf16.mxu0 %v4135
    %6859 = vmatpush1.bf16.msra.mxu0 %v4134
    %6860 = vmatprep.subr.bf16.mxu0 %v4139
    %6861 = vmatpush1.bf16.msra.mxu0 %v4138
    %6862 = vmatprep.subr.bf16.mxu0 %v4143
    %6863 = vmatpush1.bf16.msra.mxu0 %v4142
    %6864 = vmatprep.subr.bf16.mxu0 %v4147
    %6865 = vmatpush1.bf16.msra.mxu0 %v4146
    %6866 = vmatprep.subr.bf16.mxu0 %v4151
    %6867 = vmatpush1.bf16.msra.mxu0 %v4150
    %6868 = vmatprep.subr.bf16.mxu0 %v4155
    %6869 = vmatpush1.bf16.msra.mxu0 %v4154
    %6870 = vmatprep.subr.bf16.mxu0 %v4159
    %6871 = vmatpush1.bf16.msra.mxu0 %v4158
    %6872 = vmatprep.subr.bf16.mxu0 %v4163
    %6873 = vmatpush1.bf16.msra.mxu0 %v4162
    %6874 = vmatprep.subr.bf16.mxu0 %v4167
    %6875 = vmatpush1.bf16.msra.mxu0 %v4166
    %6876 = vmatprep.subr.bf16.mxu0 %v4171
    %6877 = vmatpush1.bf16.msra.mxu0 %v4170
    %6878 = vmatprep.subr.bf16.mxu0 %v4175
    %6879 = vmatpush1.bf16.msra.mxu0 %v4174
    %6880 = vmatprep.subr.bf16.mxu0 %v4179
    %6881 = vmatpush1.bf16.msra.mxu0 %v4178
    %6882 = vmatprep.subr.bf16.mxu0 %v4183
    %6883 = vmatpush1.bf16.msra.mxu0 %v4182
    %6884 = vmatprep.subr.bf16.mxu0 %v4187
    %6885 = vmatpush1.bf16.msra.mxu0 %v4186
    %6886 = vmatprep.mubr.bf16.mxu0 %v2045
    %6887 = vmatmul.mubr.bf16.gmra.mrb[0].mxu0 %v2044
    %v6888 = vpop.f32.mrb[0].mxu0
    %v6889 = vadd.f32 %v6816, %v6888
    %v6890 = vpop.f32.mrb[0].mxu0
    %v6891 = vadd.f32 %v6818, %v6890
    %v6892 = vpop.f32.mrb[0].mxu0
    %v6893 = vadd.f32 %v6820, %v6892
    %v6894 = vpop.f32.mrb[0].mxu0
    %v6895 = vadd.f32 %v6822, %v6894
    %6896 = vmatprep.mubr.bf16.mxu0 %v2048
    %6897 = vmatmul.mubr.bf16.gmra.mrb[0].mxu0 %v2047
    %v6898 = vpop.f32.mrb[0].mxu0
    %v6899 = vadd.f32 %v6826, %v6898
    %v6900 = vpop.f32.mrb[0].mxu0
    %v6901 = vadd.f32 %v6828, %v6900
    %v6902 = vpop.f32.mrb[0].mxu0
    %v6903 = vadd.f32 %v6830, %v6902
    %v6904 = vpop.f32.mrb[0].mxu0
    %v6905 = vadd.f32 %v6832, %v6904
    %6906 = vmatprep.mubr.bf16.mxu0 %v2051
    %6907 = vmatmul.mubr.bf16.gmra.mrb[0].mxu0 %v2050
    %v6908 = vpop.f32.mrb[0].mxu0
    %v6909 = vadd.f32 %v6836, %v6908
    %v6910 = vpop.f32.mrb[0].mxu0
    %v6911 = vadd.f32 %v6838, %v6910
    %v6912 = vpop.f32.mrb[0].mxu0
    %v6913 = vadd.f32 %v6840, %v6912
    %v6914 = vpop.f32.mrb[0].mxu0
    %v6915 = vadd.f32 %v6842, %v6914
    %6916 = vmatprep.mubr.bf16.mxu0 %v2054
    %6917 = vmatmul.mubr.bf16.gmra.mrb[0].mxu0 %v2053
    %v6918 = vpop.f32.mrb[0].mxu0
    %v6919 = vadd.f32 %v6846, %v6918
    %v6920 = vpop.f32.mrb[0].mxu0
    %v6921 = vadd.f32 %v6848, %v6920
    %v6922 = vpop.f32.mrb[0].mxu0
    %v6923 = vadd.f32 %v6850, %v6922
    %v6924 = vpop.f32.mrb[0].mxu0
    %v6925 = vadd.f32 %v6852, %v6924
    %6926 = vdwg.mxu0
    %6927 = vmatprep.subr.bf16.mxu0 %v4191
    %6928 = vmatpush1.bf16.msra.mxu0 %v4190
    %6929 = vmatprep.subr.bf16.mxu0 %v4195
    %6930 = vmatpush1.bf16.msra.mxu0 %v4194
    %6931 = vmatprep.subr.bf16.mxu0 %v4199
    %6932 = vmatpush1.bf16.msra.mxu0 %v4198
    %6933 = vmatprep.subr.bf16.mxu0 %v4203
    %6934 = vmatpush1.bf16.msra.mxu0 %v4202
    %6935 = vmatprep.subr.bf16.mxu0 %v4207
    %6936 = vmatpush1.bf16.msra.mxu0 %v4206
    %6937 = vmatprep.subr.bf16.mxu0 %v4211
    %6938 = vmatpush1.bf16.msra.mxu0 %v4210
    %6939 = vmatprep.subr.bf16.mxu0 %v4215
    %6940 = vmatpush1.bf16.msra.mxu0 %v4214
    %6941 = vmatprep.subr.bf16.mxu0 %v4219
    %6942 = vmatpush1.bf16.msra.mxu0 %v4218
    %6943 = vmatprep.subr.bf16.mxu0 %v4223
    %6944 = vmatpush1.bf16.msra.mxu0 %v4222
    %6945 = vmatprep.subr.bf16.mxu0 %v4227
    %6946 = vmatpush1.bf16.msra.mxu0 %v4226
    %6947 = vmatprep.subr.bf16.mxu0 %v4231
    %6948 = vmatpush1.bf16.msra.mxu0 %v4230
    %6949 = vmatprep.subr.bf16.mxu0 %v4235
    %6950 = vmatpush1.bf16.msra.mxu0 %v4234
    %6951 = vmatprep.subr.bf16.mxu0 %v4239
    %6952 = vmatpush1.bf16.msra.mxu0 %v4238
    %6953 = vmatprep.subr.bf16.mxu0 %v4243
    %6954 = vmatpush1.bf16.msra.mxu0 %v4242
    %6955 = vmatprep.subr.bf16.mxu0 %v4247
    %6956 = vmatpush1.bf16.msra.mxu0 %v4246
    %6957 = vmatprep.subr.bf16.mxu0 %v4251
    %6958 = vmatpush1.bf16.msra.mxu0 %v4250
    %6959 = vmatprep.mubr.bf16.mxu0 %v2062
    %6960 = vmatmul.mubr.bf16.gmra.mrb[0].mxu0 %v2061
    %v6961 = vpop.f32.mrb[0].mxu0
    %v6962 = vadd.f32 %v6889, %v6961
    %v6963 = vpop.f32.mrb[0].mxu0
    %v6964 = vadd.f32 %v6891, %v6963
    %v6965 = vpop.f32.mrb[0].mxu0
    %v6966 = vadd.f32 %v6893, %v6965
    %v6967 = vpop.f32.mrb[0].mxu0
    %v6968 = vadd.f32 %v6895, %v6967
    %6969 = vmatprep.mubr.bf16.mxu0 %v2065
    %6970 = vmatmul.mubr.bf16.gmra.mrb[0].mxu0 %v2064
    %v6971 = vpop.f32.mrb[0].mxu0
    %v6972 = vadd.f32 %v6899, %v6971
    %v6973 = vpop.f32.mrb[0].mxu0
    %v6974 = vadd.f32 %v6901, %v6973
    %v6975 = vpop.f32.mrb[0].mxu0
    %v6976 = vadd.f32 %v6903, %v6975
    %v6977 = vpop.f32.mrb[0].mxu0
    %v6978 = vadd.f32 %v6905, %v6977
    %6979 = vmatprep.mubr.bf16.mxu0 %v2068
    %6980 = vmatmul.mubr.bf16.gmra.mrb[0].mxu0 %v2067
    %v6981 = vpop.f32.mrb[0].mxu0
    %v6982 = vadd.f32 %v6909, %v6981
    %v6983 = vpop.f32.mrb[0].mxu0
    %v6984 = vadd.f32 %v6911, %v6983
    %v6985 = vpop.f32.mrb[0].mxu0
    %v6986 = vadd.f32 %v6913, %v6985
    %v6987 = vpop.f32.mrb[0].mxu0
    %v6988 = vadd.f32 %v6915, %v6987
    %6989 = vmatprep.mubr.bf16.mxu0 %v2071
    %6990 = vmatmul.mubr.bf16.gmra.mrb[0].mxu0 %v2070
    %v6991 = vpop.f32.mrb[0].mxu0
    %v6992 = vadd.f32 %v6919, %v6991
    %v6993 = vpop.f32.mrb[0].mxu0
    %v6994 = vadd.f32 %v6921, %v6993
    %v6995 = vpop.f32.mrb[0].mxu0
    %v6996 = vadd.f32 %v6923, %v6995
    %v6997 = vpop.f32.mrb[0].mxu0
    %v6998 = vadd.f32 %v6925, %v6997
    %6999 = vdwg.mxu0
    %7000 = vmatprep.subr.bf16.mxu0 %v4255
    %7001 = vmatpush1.bf16.msra.mxu0 %v4254
    %7002 = vmatprep.subr.bf16.mxu0 %v4259
    %7003 = vmatpush1.bf16.msra.mxu0 %v4258
    %7004 = vmatprep.subr.bf16.mxu0 %v4263
    %7005 = vmatpush1.bf16.msra.mxu0 %v4262
    %7006 = vmatprep.subr.bf16.mxu0 %v4267
    %7007 = vmatpush1.bf16.msra.mxu0 %v4266
    %7008 = vmatprep.subr.bf16.mxu0 %v4271
    %7009 = vmatpush1.bf16.msra.mxu0 %v4270
    %7010 = vmatprep.subr.bf16.mxu0 %v4275
    %7011 = vmatpush1.bf16.msra.mxu0 %v4274
    %7012 = vmatprep.subr.bf16.mxu0 %v4279
    %7013 = vmatpush1.bf16.msra.mxu0 %v4278
    %7014 = vmatprep.subr.bf16.mxu0 %v4283
    %7015 = vmatpush1.bf16.msra.mxu0 %v4282
    %7016 = vmatprep.subr.bf16.mxu0 %v4287
    %7017 = vmatpush1.bf16.msra.mxu0 %v4286
    %7018 = vmatprep.subr.bf16.mxu0 %v4291
    %7019 = vmatpush1.bf16.msra.mxu0 %v4290
    %7020 = vmatprep.subr.bf16.mxu0 %v4295
    %7021 = vmatpush1.bf16.msra.mxu0 %v4294
    %7022 = vmatprep.subr.bf16.mxu0 %v4299
    %7023 = vmatpush1.bf16.msra.mxu0 %v4298
    %7024 = vmatprep.subr.bf16.mxu0 %v4303
    %7025 = vmatpush1.bf16.msra.mxu0 %v4302
    %7026 = vmatprep.subr.bf16.mxu0 %v4307
    %7027 = vmatpush1.bf16.msra.mxu0 %v4306
    %7028 = vmatprep.subr.bf16.mxu0 %v4311
    %7029 = vmatpush1.bf16.msra.mxu0 %v4310
    %7030 = vmatprep.subr.bf16.mxu0 %v4315
    %7031 = vmatpush1.bf16.msra.mxu0 %v4314
    %7032 = vmatprep.mubr.bf16.mxu0 %v2046
    %7033 = vmatmul.mubr.bf16.gmra.mrb[0].mxu0 %v2063
    %v7034 = vpop.f32.mrb[0].mxu0
    %v7035 = vadd.f32 %v6962, %v7034
    %v7036 = vpop.f32.mrb[0].mxu0
    %v7037 = vadd.f32 %v6964, %v7036
    %v7038 = vpop.f32.mrb[0].mxu0
    %v7039 = vadd.f32 %v6966, %v7038
    %v7040 = vpop.f32.mrb[0].mxu0
    %v7041 = vadd.f32 %v6968, %v7040
    %7042 = vmatprep.mubr.bf16.mxu0 %v2049
    %7043 = vmatmul.mubr.bf16.gmra.mrb[0].mxu0 %v2066
    %v7044 = vpop.f32.mrb[0].mxu0
    %v7045 = vadd.f32 %v6972, %v7044
    %v7046 = vpop.f32.mrb[0].mxu0
    %v7047 = vadd.f32 %v6974, %v7046
    %v7048 = vpop.f32.mrb[0].mxu0
    %v7049 = vadd.f32 %v6976, %v7048
    %v7050 = vpop.f32.mrb[0].mxu0
    %v7051 = vadd.f32 %v6978, %v7050
    %7052 = vmatprep.mubr.bf16.mxu0 %v2052
    %7053 = vmatmul.mubr.bf16.gmra.mrb[0].mxu0 %v2069
    %v7054 = vpop.f32.mrb[0].mxu0
    %v7055 = vadd.f32 %v6982, %v7054
    %v7056 = vpop.f32.mrb[0].mxu0
    %v7057 = vadd.f32 %v6984, %v7056
    %v7058 = vpop.f32.mrb[0].mxu0
    %v7059 = vadd.f32 %v6986, %v7058
    %v7060 = vpop.f32.mrb[0].mxu0
    %v7061 = vadd.f32 %v6988, %v7060
    %7062 = vmatprep.mubr.bf16.mxu0 %v2055
    %7063 = vmatmul.mubr.bf16.gmra.mrb[0].mxu0 %v2072
    %v7064 = vpop.f32.mrb[0].mxu0
    %v7065 = vadd.f32 %v6992, %v7064
    %v7066 = vpop.f32.mrb[0].mxu0
    %v7067 = vadd.f32 %v6994, %v7066
    %v7068 = vpop.f32.mrb[0].mxu0
    %v7069 = vadd.f32 %v6996, %v7068
    %v7070 = vpop.f32.mrb[0].mxu0
    %v7071 = vadd.f32 %v6998, %v7070
    %7072 = vdwg.mxu0
    %7073 = vmatprep.subr.bf16.mxu0 %v4319
    %7074 = vmatpush1.bf16.msra.mxu0 %v4318
    %7075 = vmatprep.subr.bf16.mxu0 %v4323
    %7076 = vmatpush1.bf16.msra.mxu0 %v4322
    %7077 = vmatprep.subr.bf16.mxu0 %v4327
    %7078 = vmatpush1.bf16.msra.mxu0 %v4326
    %7079 = vmatprep.subr.bf16.mxu0 %v4331
    %7080 = vmatpush1.bf16.msra.mxu0 %v4330
    %7081 = vmatprep.subr.bf16.mxu0 %v4335
    %7082 = vmatpush1.bf16.msra.mxu0 %v4334
    %7083 = vmatprep.subr.bf16.mxu0 %v4339
    %7084 = vmatpush1.bf16.msra.mxu0 %v4338
    %7085 = vmatprep.subr.bf16.mxu0 %v4343
    %7086 = vmatpush1.bf16.msra.mxu0 %v4342
    %7087 = vmatprep.subr.bf16.mxu0 %v4347
    %7088 = vmatpush1.bf16.msra.mxu0 %v4346
    %7089 = vmatprep.subr.bf16.mxu0 %v4351
    %7090 = vmatpush1.bf16.msra.mxu0 %v4350
    %7091 = vmatprep.subr.bf16.mxu0 %v4355
    %7092 = vmatpush1.bf16.msra.mxu0 %v4354
    %7093 = vmatprep.subr.bf16.mxu0 %v4359
    %7094 = vmatpush1.bf16.msra.mxu0 %v4358
    %7095 = vmatprep.subr.bf16.mxu0 %v4363
    %7096 = vmatpush1.bf16.msra.mxu0 %v4362
    %7097 = vmatprep.subr.bf16.mxu0 %v4367
    %7098 = vmatpush1.bf16.msra.mxu0 %v4366
    %7099 = vmatprep.subr.bf16.mxu0 %v4371
    %7100 = vmatpush1.bf16.msra.mxu0 %v4370
    %7101 = vmatprep.subr.bf16.mxu0 %v4375
    %7102 = vmatpush1.bf16.msra.mxu0 %v4374
    %7103 = vmatprep.subr.bf16.mxu0 %v4379
    %7104 = vmatpush1.bf16.msra.mxu0 %v4378
    %7105 = vmatprep.mubr.bf16.mxu0 %v2048
    %7106 = vmatmul.mubr.bf16.gmra.mrb[0].mxu0 %v2047
    %v7107 = vpop.f32.mrb[0].mxu0
    %v7108 = vadd.f32 %v7035, %v7107
    %v7109 = vpop.f32.mrb[0].mxu0
    %v7110 = vadd.f32 %v7037, %v7109
    %v7111 = vpop.f32.mrb[0].mxu0
    %v7112 = vadd.f32 %v7039, %v7111
    %v7113 = vpop.f32.mrb[0].mxu0
    %v7114 = vadd.f32 %v7041, %v7113
    %7115 = vmatprep.mubr.bf16.mxu0 %v2051
    %7116 = vmatmul.mubr.bf16.gmra.mrb[0].mxu0 %v2050
    %v7117 = vpop.f32.mrb[0].mxu0
    %v7118 = vadd.f32 %v7045, %v7117
    %v7119 = vpop.f32.mrb[0].mxu0
    %v7120 = vadd.f32 %v7047, %v7119
    %v7121 = vpop.f32.mrb[0].mxu0
    %v7122 = vadd.f32 %v7049, %v7121
    %v7123 = vpop.f32.mrb[0].mxu0
    %v7124 = vadd.f32 %v7051, %v7123
    %7125 = vmatprep.mubr.bf16.mxu0 %v2054
    %7126 = vmatmul.mubr.bf16.gmra.mrb[0].mxu0 %v2053
    %v7127 = vpop.f32.mrb[0].mxu0
    %v7128 = vadd.f32 %v7055, %v7127
    %v7129 = vpop.f32.mrb[0].mxu0
    %v7130 = vadd.f32 %v7057, %v7129
    %v7131 = vpop.f32.mrb[0].mxu0
    %v7132 = vadd.f32 %v7059, %v7131
    %v7133 = vpop.f32.mrb[0].mxu0
    %v7134 = vadd.f32 %v7061, %v7133
    %7135 = vmatprep.mubr.bf16.mxu0 %v2057
    %7136 = vmatmul.mubr.bf16.gmra.mrb[0].mxu0 %v2056
    %v7137 = vpop.f32.mrb[0].mxu0
    %v7138 = vadd.f32 %v7065, %v7137
    %v7139 = vpop.f32.mrb[0].mxu0
    %v7140 = vadd.f32 %v7067, %v7139
    %v7141 = vpop.f32.mrb[0].mxu0
    %v7142 = vadd.f32 %v7069, %v7141
    %v7143 = vpop.f32.mrb[0].mxu0
    %v7144 = vadd.f32 %v7071, %v7143
    %7145 = vdwg.mxu0
    %7146 = vmatprep.subr.bf16.mxu0 %v4383
    %7147 = vmatpush1.bf16.msra.mxu0 %v4382
    %7148 = vmatprep.subr.bf16.mxu0 %v4387
    %7149 = vmatpush1.bf16.msra.mxu0 %v4386
    %7150 = vmatprep.subr.bf16.mxu0 %v4391
    %7151 = vmatpush1.bf16.msra.mxu0 %v4390
    %7152 = vmatprep.subr.bf16.mxu0 %v4395
    %7153 = vmatpush1.bf16.msra.mxu0 %v4394
    %7154 = vmatprep.subr.bf16.mxu0 %v4399
    %7155 = vmatpush1.bf16.msra.mxu0 %v4398
    %7156 = vmatprep.subr.bf16.mxu0 %v4403
    %7157 = vmatpush1.bf16.msra.mxu0 %v4402
    %7158 = vmatprep.subr.bf16.mxu0 %v4407
    %7159 = vmatpush1.bf16.msra.mxu0 %v4406
    %7160 = vmatprep.subr.bf16.mxu0 %v4411
    %7161 = vmatpush1.bf16.msra.mxu0 %v4410
    %7162 = vmatprep.subr.bf16.mxu0 %v4415
    %7163 = vmatpush1.bf16.msra.mxu0 %v4414
    %7164 = vmatprep.subr.bf16.mxu0 %v4419
    %7165 = vmatpush1.bf16.msra.mxu0 %v4418
    %7166 = vmatprep.subr.bf16.mxu0 %v4423
    %7167 = vmatpush1.bf16.msra.mxu0 %v4422
    %7168 = vmatprep.subr.bf16.mxu0 %v4427
    %7169 = vmatpush1.bf16.msra.mxu0 %v4426
    %7170 = vmatprep.subr.bf16.mxu0 %v4431
    %7171 = vmatpush1.bf16.msra.mxu0 %v4430
    %7172 = vmatprep.subr.bf16.mxu0 %v4435
    %7173 = vmatpush1.bf16.msra.mxu0 %v4434
    %7174 = vmatprep.subr.bf16.mxu0 %v4439
    %7175 = vmatpush1.bf16.msra.mxu0 %v4438
    %7176 = vmatprep.subr.bf16.mxu0 %v4443
    %7177 = vmatpush1.bf16.msra.mxu0 %v4442
    %7178 = vmatprep.mubr.bf16.mxu0 %v2065
    %7179 = vmatmul.mubr.bf16.gmra.mrb[0].mxu0 %v2064
    %v7180 = vpop.f32.mrb[0].mxu0
    %v7181 = vadd.f32 %v7108, %v7180
    %v7182 = vpop.f32.mrb[0].mxu0
    %v7183 = vadd.f32 %v7110, %v7182
    %v7184 = vpop.f32.mrb[0].mxu0
    %v7185 = vadd.f32 %v7112, %v7184
    %v7186 = vpop.f32.mrb[0].mxu0
    %v7187 = vadd.f32 %v7114, %v7186
    %7188 = vmatprep.mubr.bf16.mxu0 %v2068
    %7189 = vmatmul.mubr.bf16.gmra.mrb[0].mxu0 %v2067
    %v7190 = vpop.f32.mrb[0].mxu0
    %v7191 = vadd.f32 %v7118, %v7190
    %v7192 = vpop.f32.mrb[0].mxu0
    %v7193 = vadd.f32 %v7120, %v7192
    %v7194 = vpop.f32.mrb[0].mxu0
    %v7195 = vadd.f32 %v7122, %v7194
    %v7196 = vpop.f32.mrb[0].mxu0
    %v7197 = vadd.f32 %v7124, %v7196
    %7198 = vmatprep.mubr.bf16.mxu0 %v2071
    %7199 = vmatmul.mubr.bf16.gmra.mrb[0].mxu0 %v2070
    %v7200 = vpop.f32.mrb[0].mxu0
    %v7201 = vadd.f32 %v7128, %v7200
    %v7202 = vpop.f32.mrb[0].mxu0
    %v7203 = vadd.f32 %v7130, %v7202
    %v7204 = vpop.f32.mrb[0].mxu0
    %v7205 = vadd.f32 %v7132, %v7204
    %v7206 = vpop.f32.mrb[0].mxu0
    %v7207 = vadd.f32 %v7134, %v7206
    %7208 = vmatprep.mubr.bf16.mxu0 %v2074
    %7209 = vmatmul.mubr.bf16.gmra.mrb[0].mxu0 %v2073
    %v7210 = vpop.f32.mrb[0].mxu0
    %v7211 = vadd.f32 %v7138, %v7210
    %v7212 = vpop.f32.mrb[0].mxu0
    %v7213 = vadd.f32 %v7140, %v7212
    %v7214 = vpop.f32.mrb[0].mxu0
    %v7215 = vadd.f32 %v7142, %v7214
    %v7216 = vpop.f32.mrb[0].mxu0
    %v7217 = vadd.f32 %v7144, %v7216
    %7218 = vdwg.mxu0
    %7219 = vmatprep.subr.bf16.mxu0 %v4447
    %7220 = vmatpush1.bf16.msra.mxu0 %v4446
    %7221 = vmatprep.subr.bf16.mxu0 %v4451
    %7222 = vmatpush1.bf16.msra.mxu0 %v4450
    %7223 = vmatprep.subr.bf16.mxu0 %v4455
    %7224 = vmatpush1.bf16.msra.mxu0 %v4454
    %7225 = vmatprep.subr.bf16.mxu0 %v4459
    %7226 = vmatpush1.bf16.msra.mxu0 %v4458
    %7227 = vmatprep.subr.bf16.mxu0 %v4463
    %7228 = vmatpush1.bf16.msra.mxu0 %v4462
    %7229 = vmatprep.subr.bf16.mxu0 %v4467
    %7230 = vmatpush1.bf16.msra.mxu0 %v4466
    %7231 = vmatprep.subr.bf16.mxu0 %v4471
    %7232 = vmatpush1.bf16.msra.mxu0 %v4470
    %7233 = vmatprep.subr.bf16.mxu0 %v4475
    %7234 = vmatpush1.bf16.msra.mxu0 %v4474
    %7235 = vmatprep.subr.bf16.mxu0 0
    %7236 = vmatpush1.bf16.msra.mxu0 0
    %7237 = vmatprep.subr.bf16.mxu0 0
    %7238 = vmatpush1.bf16.msra.mxu0 0
    %7239 = vmatprep.subr.bf16.mxu0 0
    %7240 = vmatpush1.bf16.msra.mxu0 0
    %7241 = vmatprep.subr.bf16.mxu0 0
    %7242 = vmatpush1.bf16.msra.mxu0 0
    %7243 = vmatprep.subr.bf16.mxu0 0
    %7244 = vmatpush1.bf16.msra.mxu0 0
    %7245 = vmatprep.subr.bf16.mxu0 0
    %7246 = vmatpush1.bf16.msra.mxu0 0
    %7247 = vmatprep.subr.bf16.mxu0 0
    %7248 = vmatpush1.bf16.msra.mxu0 0
    %7249 = vmatprep.subr.bf16.mxu0 0
    %7250 = vmatpush1.bf16.msra.mxu0 0
    %7251 = vmatprep.mubr.bf16.mxu0 0
    %7252 = vmatmul.mubr.bf16.gmra.mrb[0].mxu0 %v2066
    %v7253 = vpop.f32.mrb[0].mxu0
    %v7254 = vadd.f32 %v7181, %v7253
    %v7255 = vpop.f32.mrb[0].mxu0
    %v7256 = vadd.f32 %v7183, %v7255
    %v7257 = vpop.f32.mrb[0].mxu0
    %v7258 = vadd.f32 %v7185, %v7257
    %v7259 = vpop.f32.mrb[0].mxu0
    %v7260 = vadd.f32 %v7187, %v7259
    %7261 = vmatprep.mubr.bf16.mxu0 0
    %7262 = vmatmul.mubr.bf16.gmra.mrb[0].mxu0 %v2069
    %v7263 = vpop.f32.mrb[0].mxu0
    %v7264 = vadd.f32 %v7191, %v7263
    %v7265 = vpop.f32.mrb[0].mxu0
    %v7266 = vadd.f32 %v7193, %v7265
    %v7267 = vpop.f32.mrb[0].mxu0
    %v7268 = vadd.f32 %v7195, %v7267
    %v7269 = vpop.f32.mrb[0].mxu0
    %v7270 = vadd.f32 %v7197, %v7269
    %7271 = vmatprep.mubr.bf16.mxu0 0
    %7272 = vmatmul.mubr.bf16.gmra.mrb[0].mxu0 %v2072
    %v7273 = vpop.f32.mrb[0].mxu0
    %v7274 = vadd.f32 %v7201, %v7273
    %v7275 = vpop.f32.mrb[0].mxu0
    %v7276 = vadd.f32 %v7203, %v7275
    %v7277 = vpop.f32.mrb[0].mxu0
    %v7278 = vadd.f32 %v7205, %v7277
    %v7279 = vpop.f32.mrb[0].mxu0
    %v7280 = vadd.f32 %v7207, %v7279
    %7281 = vmatprep.mubr.bf16.mxu0 0
    %7282 = vmatmul.mubr.bf16.gmra.mrb[0].mxu0 %v2075
    %v7283 = vpop.f32.mrb[0].mxu0
    %v7284 = vadd.f32 %v7211, %v7283
    %v7285 = vpop.f32.mrb[0].mxu0
    %v7286 = vadd.f32 %v7213, %v7285
    %v7287 = vpop.f32.mrb[0].mxu0
    %v7288 = vadd.f32 %v7215, %v7287
    %v7289 = vpop.f32.mrb[0].mxu0
    %v7290 = vadd.f32 %v7217, %v7289
    %7291 = vdwg.mxu0
    %v7292 = vmax.f32 %v5502, %v6670
    %v7293 = vmax.f32 %v5504, %v6672
    %v7294 = vmax.f32 %v6086, %v7254
    %v7295 = vmax.f32 %v6088, %v7256
    %v7296 = vmax.f32 %v5506, %v6674
    %v7297 = vmax.f32 %v5508, %v6676
    %v7298 = vmax.f32 %v6090, %v7258
    %v7299 = vmax.f32 %v6092, %v7260
    %v7300 = vmax.f32 %v5512, %v6680
    %v7301 = vmax.f32 %v5514, %v6682
    %v7302 = vmax.f32 %v6096, %v7264
    %v7303 = vmax.f32 %v6098, %v7266
    %v7304 = vmax.f32 %v5516, %v6684
    %v7305 = vmax.f32 %v5518, %v6686
    %v7306 = vmax.f32 %v6100, %v7268
    %v7307 = vmax.f32 %v6102, %v7270
    %v7308 = vmax.f32 %v5522, %v6690
    %v7309 = vmax.f32 %v5524, %v6692
    %v7310 = vmax.f32 %v6106, %v7274
    %v7311 = vmax.f32 %v6108, %v7276
    %v7312 = vmax.f32 %v5526, %v6694
    %v7313 = vmax.f32 %v5528, %v6696
    %v7314 = vmax.f32 %v6110, %v7278
    %v7315 = vmax.f32 %v6112, %v7280
    %v7316 = vmax.f32 %v5532, %v6700
    %v7317 = vmax.f32 %v5534, %v6702
    %v7318 = vmax.f32 %v6116, %v7284
    %v7319 = vmax.f32 %v6118, %v7286
    %v7320 = vmax.f32 %v5536, %v6704
    %v7321 = vmax.f32 %v5538, %v6706
    %v7322 = vmax.f32 %v6120, %v7288
    %v7323 = vmax.f32 %v6122, %v7290
    %v7324 = vmax.f32 %v7292, %v7294
    %v7325 = vmax.f32 %v7293, %v7295
    %v7326 = vmax.f32 %v7296, %v7298
    %v7327 = vmax.f32 %v7297, %v7299
    %v7328 = vmax.f32 %v7300, %v7302
    %v7329 = vmax.f32 %v7301, %v7303
    %v7330 = vmax.f32 %v7304, %v7306
    %v7331 = vmax.f32 %v7305, %v7307
    %v7332 = vmax.f32 %v7308, %v7310
    %v7333 = vmax.f32 %v7309, %v7311
    %v7334 = vmax.f32 %v7312, %v7314
    %v7335 = vmax.f32 %v7313, %v7315
    %v7336 = vmax.f32 %v7316, %v7318
    %v7337 = vmax.f32 %v7317, %v7319
    %v7338 = vmax.f32 %v7320, %v7322
    %v7339 = vmax.f32 %v7321, %v7323
    %v7340 = vld [vmem:[%s4] sm:$0x3]
    %v7342 = vlaneseq
    %v7343 = vshrl.u32 %v7342, 7
    %v7344 = vsub.s32 0, %v7343
    %v7345 = vrot.slane %v7340, %v7344
    %v7346 = vlaneseq
    %v7347 = vshrl.u32 %v7346, 7
    %v7348 = vsub.s32 1, %v7347
    %v7349 = vrot.slane %v7340, %v7348
    %v7352 = vadd.f32 %v7324, %v7345
    %v7353 = vadd.f32 %v7325, %v7349
    %v7354 = vadd.f32 %v7326, %v7345
    %v7355 = vadd.f32 %v7327, %v7349
    %v7356 = vadd.f32 %v7328, %v7345
    %v7357 = vadd.f32 %v7329, %v7349
    %v7358 = vadd.f32 %v7330, %v7345
    %v7359 = vadd.f32 %v7331, %v7349
    %v7360 = vadd.f32 %v7332, %v7345
    %v7361 = vadd.f32 %v7333, %v7349
    %v7362 = vadd.f32 %v7334, %v7345
    %v7363 = vadd.f32 %v7335, %v7349
    %v7364 = vadd.f32 %v7336, %v7345
    %v7365 = vadd.f32 %v7337, %v7349
    %v7366 = vadd.f32 %v7338, %v7345
    %v7367 = vadd.f32 %v7339, %v7349
    %v7368 = vmax.f32 %v7352, 0.0
    %v7369 = vmax.f32 %v7353, 0.0
    %v7370 = vmax.f32 %v7354, 0.0
    %v7371 = vmax.f32 %v7355, 0.0
    %v7372 = vmax.f32 %v7356, 0.0
    %v7373 = vmax.f32 %v7357, 0.0
    %v7374 = vmax.f32 %v7358, 0.0
    %v7375 = vmax.f32 %v7359, 0.0
    %v7376 = vmax.f32 %v7360, 0.0
    %v7377 = vmax.f32 %v7361, 0.0
    %v7378 = vmax.f32 %v7362, 0.0
    %v7379 = vmax.f32 %v7363, 0.0
    %v7380 = vmax.f32 %v7364, 0.0
    %v7381 = vmax.f32 %v7365, 0.0
    %v7382 = vmax.f32 %v7366, 0.0
    %v7383 = vmax.f32 %v7367, 0.0
    %7384 = vst [vmem:[%s10] sm:$0xff] %v7368
    %7385 = vst [vmem:[%s10 + $0x8] sm:$0xff] %v7369
    %7386 = vst [vmem:[%s10 + $0x10] sm:$0xff] %v7370
    %7387 = vst [vmem:[%s10 + $0x18] sm:$0xff] %v7371
    %s7388 = scalar_lea.vmem %s10, 32
    %7389 = vst [vmem:[%s7388] sm:$0xff] %v7372
    %7390 = vst [vmem:[%s7388 + $0x8] sm:$0xff] %v7373
    %7391 = vst [vmem:[%s7388 + $0x10] sm:$0xff] %v7374
    %7392 = vst [vmem:[%s7388 + $0x18] sm:$0xff] %v7375
    %s7393 = scalar_lea.vmem %s10, 64
    %7394 = vst [vmem:[%s7393] sm:$0xff] %v7376
    %7395 = vst [vmem:[%s7393 + $0x8] sm:$0xff] %v7377
    %7396 = vst [vmem:[%s7393 + $0x10] sm:$0xff] %v7378
    %7397 = vst [vmem:[%s7393 + $0x18] sm:$0xff] %v7379
    %s7398 = scalar_lea.vmem %s10, 96
    %7399 = vst [vmem:[%s7398] sm:$0xff] %v7380
    %7400 = vst [vmem:[%s7398 + $0x8] sm:$0xff] %v7381
    %7401 = vst [vmem:[%s7398 + $0x10] sm:$0xff] %v7382
    %7402 = vst [vmem:[%s7398 + $0x18] sm:$0xff] %v7383
    %v7403 = vpack.c.bf16 %v7370, %v7368
    %v7404 = vpack.c.bf16 %v7371, %v7369
    %v7405 = vpack.c.bf16 %v7374, %v7372
    %v7406 = vpack.c.bf16 %v7375, %v7373
    %v7407 = vpack.c.bf16 %v7378, %v7376
    %v7408 = vpack.c.bf16 %v7379, %v7377
    %v7409 = vpack.c.bf16 %v7382, %v7380
    %v7410 = vpack.c.bf16 %v7383, %v7381
    %v7411 = vld [vmem:[%s5] sm:$0xff]
    %v7412 = vld [vmem:[%s5 + $0x8] sm:$0xff]
    %v7413 = vld [vmem:[%s5 + $0x10] sm:$0xff]
    %v7414 = vld [vmem:[%s5 + $0x18] sm:$0xff]
    %v7415 = vld [vmem:[%s5 + $0x20] sm:$0xff]
    %v7416 = vld [vmem:[%s5 + $0x28] sm:$0xff]
    %v7417 = vld [vmem:[%s5 + $0x30] sm:$0xff]
    %v7418 = vld [vmem:[%s5 + $0x38] sm:$0xff]
    %v7419 = vld [vmem:[%s5 + $0x40] sm:$0xff]
    %v7420 = vld [vmem:[%s5 + $0x48] sm:$0xff]
    %v7421 = vld [vmem:[%s5 + $0x50] sm:$0xff]
    %v7422 = vld [vmem:[%s5 + $0x58] sm:$0xff]
    %v7423 = vld [vmem:[%s5 + $0x60] sm:$0xff]
    %v7424 = vld [vmem:[%s5 + $0x68] sm:$0xff]
    %v7425 = vld [vmem:[%s5 + $0x70] sm:$0xff]
    %v7426 = vld [vmem:[%s5 + $0x78] sm:$0xff]
    %v7427 = vld [vmem:[%s5 + $0x80] sm:$0xff]
    %v7428 = vld [vmem:[%s5 + $0x88] sm:$0xff]
    %v7429 = vld [vmem:[%s5 + $0x90] sm:$0xff]
    %v7430 = vld [vmem:[%s5 + $0x98] sm:$0xff]
    %v7431 = vld [vmem:[%s5 + $0xa0] sm:$0xff]
    %v7432 = vld [vmem:[%s5 + $0xa8] sm:$0xff]
    %v7433 = vld [vmem:[%s5 + $0xb0] sm:$0xff]
    %v7434 = vld [vmem:[%s5 + $0xb8] sm:$0xff]
    %v7435 = vld [vmem:[%s5 + $0xc0] sm:$0xff]
    %v7436 = vld [vmem:[%s5 + $0xc8] sm:$0xff]
    %v7437 = vld [vmem:[%s5 + $0xd0] sm:$0xff]
    %v7438 = vld [vmem:[%s5 + $0xd8] sm:$0xff]
    %v7439 = vld [vmem:[%s5 + $0xe0] sm:$0xff]
    %v7440 = vld [vmem:[%s5 + $0xe8] sm:$0xff]
    %v7441 = vld [vmem:[%s5 + $0xf0] sm:$0xff]
    %v7442 = vld [vmem:[%s5 + $0xf8] sm:$0xff]
    %v7443 = vld [vmem:[%s5 + $0x100] sm:$0xff]
    %v7444 = vld [vmem:[%s5 + $0x108] sm:$0xff]
    %v7445 = vld [vmem:[%s5 + $0x110] sm:$0xff]
    %v7446 = vld [vmem:[%s5 + $0x118] sm:$0xff]
    %v7447 = vld [vmem:[%s5 + $0x120] sm:$0xff]
    %v7448 = vld [vmem:[%s5 + $0x128] sm:$0xff]
    %v7449 = vld [vmem:[%s5 + $0x130] sm:$0xff]
    %v7450 = vld [vmem:[%s5 + $0x138] sm:$0xff]
    %v7451 = vld [vmem:[%s5 + $0x140] sm:$0xff]
    %v7452 = vld [vmem:[%s5 + $0x148] sm:$0xff]
    %v7453 = vld [vmem:[%s5 + $0x150] sm:$0xff]
    %v7454 = vld [vmem:[%s5 + $0x158] sm:$0xff]
    %v7455 = vld [vmem:[%s5 + $0x160] sm:$0xff]
    %v7456 = vld [vmem:[%s5 + $0x168] sm:$0xff]
    %v7457 = vld [vmem:[%s5 + $0x170] sm:$0xff]
    %v7458 = vld [vmem:[%s5 + $0x178] sm:$0xff]
    %v7459 = vld [vmem:[%s5 + $0x180] sm:$0xff]
    %v7460 = vld [vmem:[%s5 + $0x188] sm:$0xff]
    %v7461 = vld [vmem:[%s5 + $0x190] sm:$0xff]
    %v7462 = vld [vmem:[%s5 + $0x198] sm:$0xff]
    %v7463 = vld [vmem:[%s5 + $0x1a0] sm:$0xff]
    %v7464 = vld [vmem:[%s5 + $0x1a8] sm:$0xff]
    %v7465 = vld [vmem:[%s5 + $0x1b0] sm:$0xff]
    %v7466 = vld [vmem:[%s5 + $0x1b8] sm:$0xff]
    %v7467 = vld [vmem:[%s5 + $0x1c0] sm:$0xff]
    %v7468 = vld [vmem:[%s5 + $0x1c8] sm:$0xff]
    %v7469 = vld [vmem:[%s5 + $0x1d0] sm:$0xff]
    %v7470 = vld [vmem:[%s5 + $0x1d8] sm:$0xff]
    %v7471 = vld [vmem:[%s5 + $0x1e0] sm:$0xff]
    %v7472 = vld [vmem:[%s5 + $0x1e8] sm:$0xff]
    %v7473 = vld [vmem:[%s5 + $0x1f0] sm:$0xff]
    %v7474 = vld [vmem:[%s5 + $0x1f8] sm:$0xff]
    %v7475 = vld [vmem:[%s5 + $0x200] sm:$0xff]
    %v7476 = vld [vmem:[%s5 + $0x208] sm:$0xff]
    %v7477 = vld [vmem:[%s5 + $0x210] sm:$0xff]
    %v7478 = vld [vmem:[%s5 + $0x218] sm:$0xff]
    %v7479 = vld [vmem:[%s5 + $0x220] sm:$0xff]
    %v7480 = vld [vmem:[%s5 + $0x228] sm:$0xff]
    %v7481 = vld [vmem:[%s5 + $0x230] sm:$0xff]
    %v7482 = vld [vmem:[%s5 + $0x238] sm:$0xff]
    %v7483 = vld [vmem:[%s5 + $0x240] sm:$0xff]
    %v7484 = vld [vmem:[%s5 + $0x248] sm:$0xff]
    %v7485 = vld [vmem:[%s5 + $0x250] sm:$0xff]
    %v7486 = vld [vmem:[%s5 + $0x258] sm:$0xff]
    %v7487 = vld [vmem:[%s5 + $0x260] sm:$0xff]
    %v7488 = vld [vmem:[%s5 + $0x268] sm:$0xff]
    %v7489 = vld [vmem:[%s5 + $0x270] sm:$0xff]
    %v7490 = vld [vmem:[%s5 + $0x278] sm:$0xff]
    %v7491 = vld [vmem:[%s5 + $0x280] sm:$0xff]
    %v7492 = vld [vmem:[%s5 + $0x288] sm:$0xff]
    %v7493 = vld [vmem:[%s5 + $0x290] sm:$0xff]
    %v7494 = vld [vmem:[%s5 + $0x298] sm:$0xff]
    %v7495 = vld [vmem:[%s5 + $0x2a0] sm:$0xff]
    %v7496 = vld [vmem:[%s5 + $0x2a8] sm:$0xff]
    %v7497 = vld [vmem:[%s5 + $0x2b0] sm:$0xff]
    %v7498 = vld [vmem:[%s5 + $0x2b8] sm:$0xff]
    %v7499 = vld [vmem:[%s5 + $0x2c0] sm:$0xff]
    %v7500 = vld [vmem:[%s5 + $0x2c8] sm:$0xff]
    %v7501 = vld [vmem:[%s5 + $0x2d0] sm:$0xff]
    %v7502 = vld [vmem:[%s5 + $0x2d8] sm:$0xff]
    %v7503 = vld [vmem:[%s5 + $0x2e0] sm:$0xff]
    %v7504 = vld [vmem:[%s5 + $0x2e8] sm:$0xff]
    %v7505 = vld [vmem:[%s5 + $0x2f0] sm:$0xff]
    %v7506 = vld [vmem:[%s5 + $0x2f8] sm:$0xff]
    %v7507 = vld [vmem:[%s5 + $0x300] sm:$0xff]
    %v7508 = vld [vmem:[%s5 + $0x308] sm:$0xff]
    %v7509 = vld [vmem:[%s5 + $0x310] sm:$0xff]
    %v7510 = vld [vmem:[%s5 + $0x318] sm:$0xff]
    %v7511 = vld [vmem:[%s5 + $0x320] sm:$0xff]
    %v7512 = vld [vmem:[%s5 + $0x328] sm:$0xff]
    %v7513 = vld [vmem:[%s5 + $0x330] sm:$0xff]
    %v7514 = vld [vmem:[%s5 + $0x338] sm:$0xff]
    %v7515 = vld [vmem:[%s5 + $0x340] sm:$0xff]
    %v7516 = vld [vmem:[%s5 + $0x348] sm:$0xff]
    %v7517 = vld [vmem:[%s5 + $0x350] sm:$0xff]
    %v7518 = vld [vmem:[%s5 + $0x358] sm:$0xff]
    %v7519 = vld [vmem:[%s5 + $0x360] sm:$0xff]
    %v7520 = vld [vmem:[%s5 + $0x368] sm:$0xff]
    %v7521 = vld [vmem:[%s5 + $0x370] sm:$0xff]
    %v7522 = vld [vmem:[%s5 + $0x378] sm:$0xff]
    %v7523 = vld [vmem:[%s5 + $0x380] sm:$0xff]
    %v7524 = vld [vmem:[%s5 + $0x388] sm:$0xff]
    %v7525 = vld [vmem:[%s5 + $0x390] sm:$0xff]
    %v7526 = vld [vmem:[%s5 + $0x398] sm:$0xff]
    %v7527 = vld [vmem:[%s5 + $0x3a0] sm:$0xff]
    %v7528 = vld [vmem:[%s5 + $0x3a8] sm:$0xff]
    %v7529 = vld [vmem:[%s5 + $0x3b0] sm:$0xff]
    %v7530 = vld [vmem:[%s5 + $0x3b8] sm:$0xff]
    %v7531 = vld [vmem:[%s5 + $0x3c0] sm:$0xff]
    %v7532 = vld [vmem:[%s5 + $0x3c8] sm:$0xff]
    %v7533 = vld [vmem:[%s5 + $0x3d0] sm:$0xff]
    %v7534 = vld [vmem:[%s5 + $0x3d8] sm:$0xff]
    %v7535 = vld [vmem:[%s5 + $0x3e0] sm:$0xff]
    %v7536 = vld [vmem:[%s5 + $0x3e8] sm:$0xff]
    %v7537 = vld [vmem:[%s5 + $0x3f0] sm:$0xff]
    %v7538 = vld [vmem:[%s5 + $0x3f8] sm:$0xff]
    %v7539 = vld [vmem:[%s5 + $0x400] sm:$0xff]
    %v7540 = vld [vmem:[%s5 + $0x408] sm:$0xff]
    %v7541 = vld [vmem:[%s5 + $0x410] sm:$0xff]
    %v7542 = vld [vmem:[%s5 + $0x418] sm:$0xff]
    %v7543 = vld [vmem:[%s5 + $0x420] sm:$0xff]
    %v7544 = vld [vmem:[%s5 + $0x428] sm:$0xff]
    %v7545 = vld [vmem:[%s5 + $0x430] sm:$0xff]
    %v7546 = vld [vmem:[%s5 + $0x438] sm:$0xff]
    %v7547 = vld [vmem:[%s5 + $0x440] sm:$0xff]
    %v7548 = vld [vmem:[%s5 + $0x448] sm:$0xff]
    %v7549 = vld [vmem:[%s5 + $0x450] sm:$0xff]
    %v7550 = vld [vmem:[%s5 + $0x458] sm:$0xff]
    %v7551 = vld [vmem:[%s5 + $0x460] sm:$0xff]
    %v7552 = vld [vmem:[%s5 + $0x468] sm:$0xff]
    %v7553 = vld [vmem:[%s5 + $0x470] sm:$0xff]
    %v7554 = vld [vmem:[%s5 + $0x478] sm:$0xff]
    %v7555 = vld [vmem:[%s5 + $0x480] sm:$0xff]
    %v7556 = vld [vmem:[%s5 + $0x488] sm:$0xff]
    %v7557 = vld [vmem:[%s5 + $0x490] sm:$0xff]
    %v7558 = vld [vmem:[%s5 + $0x498] sm:$0xff]
    %v7559 = vld [vmem:[%s5 + $0x4a0] sm:$0xff]
    %v7560 = vld [vmem:[%s5 + $0x4a8] sm:$0xff]
    %v7561 = vld [vmem:[%s5 + $0x4b0] sm:$0xff]
    %v7562 = vld [vmem:[%s5 + $0x4b8] sm:$0xff]
    %v7563 = vld [vmem:[%s5 + $0x4c0] sm:$0xff]
    %v7564 = vld [vmem:[%s5 + $0x4c8] sm:$0xff]
    %v7565 = vld [vmem:[%s5 + $0x4d0] sm:$0xff]
    %v7566 = vld [vmem:[%s5 + $0x4d8] sm:$0xff]
    %v7567 = vld [vmem:[%s5 + $0x4e0] sm:$0xff]
    %v7568 = vld [vmem:[%s5 + $0x4e8] sm:$0xff]
    %v7569 = vld [vmem:[%s5 + $0x4f0] sm:$0xff]
    %v7570 = vld [vmem:[%s5 + $0x4f8] sm:$0xff]
    %v7571 = vld [vmem:[%s5 + $0x500] sm:$0xff]
    %v7572 = vld [vmem:[%s5 + $0x508] sm:$0xff]
    %v7573 = vld [vmem:[%s5 + $0x510] sm:$0xff]
    %v7574 = vld [vmem:[%s5 + $0x518] sm:$0xff]
    %v7575 = vld [vmem:[%s5 + $0x520] sm:$0xff]
    %v7576 = vld [vmem:[%s5 + $0x528] sm:$0xff]
    %v7577 = vld [vmem:[%s5 + $0x530] sm:$0xff]
    %v7578 = vld [vmem:[%s5 + $0x538] sm:$0xff]
    %v7579 = vld [vmem:[%s5 + $0x540] sm:$0xff]
    %v7580 = vld [vmem:[%s5 + $0x548] sm:$0xff]
    %v7581 = vld [vmem:[%s5 + $0x550] sm:$0xff]
    %v7582 = vld [vmem:[%s5 + $0x558] sm:$0xff]
    %v7583 = vld [vmem:[%s5 + $0x560] sm:$0xff]
    %v7584 = vld [vmem:[%s5 + $0x568] sm:$0xff]
    %v7585 = vld [vmem:[%s5 + $0x570] sm:$0xff]
    %v7586 = vld [vmem:[%s5 + $0x578] sm:$0xff]
    %v7587 = vld [vmem:[%s5 + $0x580] sm:$0xff]
    %v7588 = vld [vmem:[%s5 + $0x588] sm:$0xff]
    %v7589 = vld [vmem:[%s5 + $0x590] sm:$0xff]
    %v7590 = vld [vmem:[%s5 + $0x598] sm:$0xff]
    %v7591 = vld [vmem:[%s5 + $0x5a0] sm:$0xff]
    %v7592 = vld [vmem:[%s5 + $0x5a8] sm:$0xff]
    %v7593 = vld [vmem:[%s5 + $0x5b0] sm:$0xff]
    %v7594 = vld [vmem:[%s5 + $0x5b8] sm:$0xff]
    %v7595 = vld [vmem:[%s5 + $0x5c0] sm:$0xff]
    %v7596 = vld [vmem:[%s5 + $0x5c8] sm:$0xff]
    %v7597 = vld [vmem:[%s5 + $0x5d0] sm:$0xff]
    %v7598 = vld [vmem:[%s5 + $0x5d8] sm:$0xff]
    %v7599 = vld [vmem:[%s5 + $0x5e0] sm:$0xff]
    %v7600 = vld [vmem:[%s5 + $0x5e8] sm:$0xff]
    %v7601 = vld [vmem:[%s5 + $0x5f0] sm:$0xff]
    %v7602 = vld [vmem:[%s5 + $0x5f8] sm:$0xff]
    %v7603 = vld [vmem:[%s5 + $0x600] sm:$0xff]
    %v7604 = vld [vmem:[%s5 + $0x608] sm:$0xff]
    %v7605 = vld [vmem:[%s5 + $0x610] sm:$0xff]
    %v7606 = vld [vmem:[%s5 + $0x618] sm:$0xff]
    %v7607 = vld [vmem:[%s5 + $0x620] sm:$0xff]
    %v7608 = vld [vmem:[%s5 + $0x628] sm:$0xff]
    %v7609 = vld [vmem:[%s5 + $0x630] sm:$0xff]
    %v7610 = vld [vmem:[%s5 + $0x638] sm:$0xff]
    %v7611 = vld [vmem:[%s5 + $0x640] sm:$0xff]
    %v7612 = vld [vmem:[%s5 + $0x648] sm:$0xff]
    %v7613 = vld [vmem:[%s5 + $0x650] sm:$0xff]
    %v7614 = vld [vmem:[%s5 + $0x658] sm:$0xff]
    %v7615 = vld [vmem:[%s5 + $0x660] sm:$0xff]
    %v7616 = vld [vmem:[%s5 + $0x668] sm:$0xff]
    %v7617 = vld [vmem:[%s5 + $0x670] sm:$0xff]
    %v7618 = vld [vmem:[%s5 + $0x678] sm:$0xff]
    %v7619 = vld [vmem:[%s5 + $0x680] sm:$0xff]
    %v7620 = vld [vmem:[%s5 + $0x688] sm:$0xff]
    %v7621 = vld [vmem:[%s5 + $0x690] sm:$0xff]
    %v7622 = vld [vmem:[%s5 + $0x698] sm:$0xff]
    %v7623 = vld [vmem:[%s5 + $0x6a0] sm:$0xff]
    %v7624 = vld [vmem:[%s5 + $0x6a8] sm:$0xff]
    %v7625 = vld [vmem:[%s5 + $0x6b0] sm:$0xff]
    %v7626 = vld [vmem:[%s5 + $0x6b8] sm:$0xff]
    %v7627 = vld [vmem:[%s5 + $0x6c0] sm:$0xff]
    %v7628 = vld [vmem:[%s5 + $0x6c8] sm:$0xff]
    %v7629 = vld [vmem:[%s5 + $0x6d0] sm:$0xff]
    %v7630 = vld [vmem:[%s5 + $0x6d8] sm:$0xff]
    %v7631 = vld [vmem:[%s5 + $0x6e0] sm:$0xff]
    %v7632 = vld [vmem:[%s5 + $0x6e8] sm:$0xff]
    %v7633 = vld [vmem:[%s5 + $0x6f0] sm:$0xff]
    %v7634 = vld [vmem:[%s5 + $0x6f8] sm:$0xff]
    %v7635 = vld [vmem:[%s5 + $0x700] sm:$0xff]
    %v7636 = vld [vmem:[%s5 + $0x708] sm:$0xff]
    %v7637 = vld [vmem:[%s5 + $0x710] sm:$0xff]
    %v7638 = vld [vmem:[%s5 + $0x718] sm:$0xff]
    %v7639 = vld [vmem:[%s5 + $0x720] sm:$0xff]
    %v7640 = vld [vmem:[%s5 + $0x728] sm:$0xff]
    %v7641 = vld [vmem:[%s5 + $0x730] sm:$0xff]
    %v7642 = vld [vmem:[%s5 + $0x738] sm:$0xff]
    %v7643 = vld [vmem:[%s5 + $0x740] sm:$0xff]
    %v7644 = vld [vmem:[%s5 + $0x748] sm:$0xff]
    %v7645 = vld [vmem:[%s5 + $0x750] sm:$0xff]
    %v7646 = vld [vmem:[%s5 + $0x758] sm:$0xff]
    %v7647 = vld [vmem:[%s5 + $0x760] sm:$0xff]
    %v7648 = vld [vmem:[%s5 + $0x768] sm:$0xff]
    %v7649 = vld [vmem:[%s5 + $0x770] sm:$0xff]
    %v7650 = vld [vmem:[%s5 + $0x778] sm:$0xff]
    %v7651 = vld [vmem:[%s5 + $0x780] sm:$0xff]
    %v7652 = vld [vmem:[%s5 + $0x788] sm:$0xff]
    %v7653 = vld [vmem:[%s5 + $0x790] sm:$0xff]
    %v7654 = vld [vmem:[%s5 + $0x798] sm:$0xff]
    %v7655 = vld [vmem:[%s5 + $0x7a0] sm:$0xff]
    %v7656 = vld [vmem:[%s5 + $0x7a8] sm:$0xff]
    %v7657 = vld [vmem:[%s5 + $0x7b0] sm:$0xff]
    %v7658 = vld [vmem:[%s5 + $0x7b8] sm:$0xff]
    %v7659 = vld [vmem:[%s5 + $0x7c0] sm:$0xff]
    %v7660 = vld [vmem:[%s5 + $0x7c8] sm:$0xff]
    %v7661 = vld [vmem:[%s5 + $0x7d0] sm:$0xff]
    %v7662 = vld [vmem:[%s5 + $0x7d8] sm:$0xff]
    %v7663 = vld [vmem:[%s5 + $0x7e0] sm:$0xff]
    %v7664 = vld [vmem:[%s5 + $0x7e8] sm:$0xff]
    %v7665 = vld [vmem:[%s5 + $0x7f0] sm:$0xff]
    %v7666 = vld [vmem:[%s5 + $0x7f8] sm:$0xff]
    %v7667 = vld [vmem:[%s6] sm:$0xf]
    %v7669 = vlaneseq
    %v7670 = vshrl.u32 %v7669, 7
    %v7671 = vsub.s32 0, %v7670
    %v7672 = vrot.slane %v7667, %v7671
    %v7673 = vlaneseq
    %v7674 = vshrl.u32 %v7673, 7
    %v7675 = vsub.s32 1, %v7674
    %v7676 = vrot.slane %v7667, %v7675
    %v7677 = vlaneseq
    %v7678 = vshrl.u32 %v7677, 7
    %v7679 = vsub.s32 2, %v7678
    %v7680 = vrot.slane %v7667, %v7679
    %v7681 = vlaneseq
    %v7682 = vshrl.u32 %v7681, 7
    %v7683 = vsub.s32 3, %v7682
    %v7684 = vrot.slane %v7667, %v7683
    %v7945 = vunpack.c.l.b16 %v7411
    %v7946 = vunpack.c.h.b16 %v7411
    %v7947 = vunpack.c.l.b16 %v7412
    %v7948 = vunpack.c.h.b16 %v7412
    %v7949 = vunpack.c.l.b16 %v7413
    %v7950 = vunpack.c.h.b16 %v7413
    %v7951 = vunpack.c.l.b16 %v7414
    %v7952 = vunpack.c.h.b16 %v7414
    %v7953 = vunpack.c.l.b16 %v7415
    %v7954 = vunpack.c.h.b16 %v7415
    %v7955 = vunpack.c.l.b16 %v7416
    %v7956 = vunpack.c.h.b16 %v7416
    %v7957 = vunpack.c.l.b16 %v7417
    %v7958 = vunpack.c.h.b16 %v7417
    %v7959 = vunpack.c.l.b16 %v7418
    %v7960 = vunpack.c.h.b16 %v7418
    %v7961 = vunpack.c.l.b16 %v7419
    %v7962 = vunpack.c.h.b16 %v7419
    %v7963 = vunpack.c.l.b16 %v7420
    %v7964 = vunpack.c.h.b16 %v7420
    %v7965 = vunpack.c.l.b16 %v7421
    %v7966 = vunpack.c.h.b16 %v7421
    %v7967 = vunpack.c.l.b16 %v7422
    %v7968 = vunpack.c.h.b16 %v7422
    %v7969 = vunpack.c.l.b16 %v7423
    %v7970 = vunpack.c.h.b16 %v7423
    %v7971 = vunpack.c.l.b16 %v7424
    %v7972 = vunpack.c.h.b16 %v7424
    %v7973 = vunpack.c.l.b16 %v7425
    %v7974 = vunpack.c.h.b16 %v7425
    %v7975 = vunpack.c.l.b16 %v7426
    %v7976 = vunpack.c.h.b16 %v7426
    %v7977 = vunpack.c.l.b16 %v7427
    %v7978 = vunpack.c.h.b16 %v7427
    %v7979 = vunpack.c.l.b16 %v7428
    %v7980 = vunpack.c.h.b16 %v7428
    %v7981 = vunpack.c.l.b16 %v7429
    %v7982 = vunpack.c.h.b16 %v7429
    %v7983 = vunpack.c.l.b16 %v7430
    %v7984 = vunpack.c.h.b16 %v7430
    %v7985 = vunpack.c.l.b16 %v7431
    %v7986 = vunpack.c.h.b16 %v7431
    %v7987 = vunpack.c.l.b16 %v7432
    %v7988 = vunpack.c.h.b16 %v7432
    %v7989 = vunpack.c.l.b16 %v7433
    %v7990 = vunpack.c.h.b16 %v7433
    %v7991 = vunpack.c.l.b16 %v7434
    %v7992 = vunpack.c.h.b16 %v7434
    %v7993 = vunpack.c.l.b16 %v7435
    %v7994 = vunpack.c.h.b16 %v7435
    %v7995 = vunpack.c.l.b16 %v7436
    %v7996 = vunpack.c.h.b16 %v7436
    %v7997 = vunpack.c.l.b16 %v7437
    %v7998 = vunpack.c.h.b16 %v7437
    %v7999 = vunpack.c.l.b16 %v7438
    %v8000 = vunpack.c.h.b16 %v7438
    %v8001 = vunpack.c.l.b16 %v7439
    %v8002 = vunpack.c.h.b16 %v7439
    %v8003 = vunpack.c.l.b16 %v7440
    %v8004 = vunpack.c.h.b16 %v7440
    %v8005 = vunpack.c.l.b16 %v7441
    %v8006 = vunpack.c.h.b16 %v7441
    %v8007 = vunpack.c.l.b16 %v7442
    %v8008 = vunpack.c.h.b16 %v7442
    %v8009 = vunpack.c.l.b16 %v7443
    %v8010 = vunpack.c.h.b16 %v7443
    %v8011 = vunpack.c.l.b16 %v7444
    %v8012 = vunpack.c.h.b16 %v7444
    %v8013 = vunpack.c.l.b16 %v7445
    %v8014 = vunpack.c.h.b16 %v7445
    %v8015 = vunpack.c.l.b16 %v7446
    %v8016 = vunpack.c.h.b16 %v7446
    %v8017 = vunpack.c.l.b16 %v7447
    %v8018 = vunpack.c.h.b16 %v7447
    %v8019 = vunpack.c.l.b16 %v7448
    %v8020 = vunpack.c.h.b16 %v7448
    %v8021 = vunpack.c.l.b16 %v7449
    %v8022 = vunpack.c.h.b16 %v7449
    %v8023 = vunpack.c.l.b16 %v7450
    %v8024 = vunpack.c.h.b16 %v7450
    %v8025 = vunpack.c.l.b16 %v7451
    %v8026 = vunpack.c.h.b16 %v7451
    %v8027 = vunpack.c.l.b16 %v7452
    %v8028 = vunpack.c.h.b16 %v7452
    %v8029 = vunpack.c.l.b16 %v7453
    %v8030 = vunpack.c.h.b16 %v7453
    %v8031 = vunpack.c.l.b16 %v7454
    %v8032 = vunpack.c.h.b16 %v7454
    %v8033 = vunpack.c.l.b16 %v7455
    %v8034 = vunpack.c.h.b16 %v7455
    %v8035 = vunpack.c.l.b16 %v7456
    %v8036 = vunpack.c.h.b16 %v7456
    %v8037 = vunpack.c.l.b16 %v7457
    %v8038 = vunpack.c.h.b16 %v7457
    %v8039 = vunpack.c.l.b16 %v7458
    %v8040 = vunpack.c.h.b16 %v7458
    %v8041 = vunpack.c.l.b16 %v7459
    %v8042 = vunpack.c.h.b16 %v7459
    %v8043 = vunpack.c.l.b16 %v7460
    %v8044 = vunpack.c.h.b16 %v7460
    %v8045 = vunpack.c.l.b16 %v7461
    %v8046 = vunpack.c.h.b16 %v7461
    %v8047 = vunpack.c.l.b16 %v7462
    %v8048 = vunpack.c.h.b16 %v7462
    %v8049 = vunpack.c.l.b16 %v7463
    %v8050 = vunpack.c.h.b16 %v7463
    %v8051 = vunpack.c.l.b16 %v7464
    %v8052 = vunpack.c.h.b16 %v7464
    %v8053 = vunpack.c.l.b16 %v7465
    %v8054 = vunpack.c.h.b16 %v7465
    %v8055 = vunpack.c.l.b16 %v7466
    %v8056 = vunpack.c.h.b16 %v7466
    %v8057 = vunpack.c.l.b16 %v7467
    %v8058 = vunpack.c.h.b16 %v7467
    %v8059 = vunpack.c.l.b16 %v7468
    %v8060 = vunpack.c.h.b16 %v7468
    %v8061 = vunpack.c.l.b16 %v7469
    %v8062 = vunpack.c.h.b16 %v7469
    %v8063 = vunpack.c.l.b16 %v7470
    %v8064 = vunpack.c.h.b16 %v7470
    %v8065 = vunpack.c.l.b16 %v7471
    %v8066 = vunpack.c.h.b16 %v7471
    %v8067 = vunpack.c.l.b16 %v7472
    %v8068 = vunpack.c.h.b16 %v7472
    %v8069 = vunpack.c.l.b16 %v7473
    %v8070 = vunpack.c.h.b16 %v7473
    %v8071 = vunpack.c.l.b16 %v7474
    %v8072 = vunpack.c.h.b16 %v7474
    %v8073 = vunpack.c.l.b16 %v7475
    %v8074 = vunpack.c.h.b16 %v7475
    %v8075 = vunpack.c.l.b16 %v7476
    %v8076 = vunpack.c.h.b16 %v7476
    %v8077 = vunpack.c.l.b16 %v7477
    %v8078 = vunpack.c.h.b16 %v7477
    %v8079 = vunpack.c.l.b16 %v7478
    %v8080 = vunpack.c.h.b16 %v7478
    %v8081 = vunpack.c.l.b16 %v7479
    %v8082 = vunpack.c.h.b16 %v7479
    %v8083 = vunpack.c.l.b16 %v7480
    %v8084 = vunpack.c.h.b16 %v7480
    %v8085 = vunpack.c.l.b16 %v7481
    %v8086 = vunpack.c.h.b16 %v7481
    %v8087 = vunpack.c.l.b16 %v7482
    %v8088 = vunpack.c.h.b16 %v7482
    %v8089 = vunpack.c.l.b16 %v7483
    %v8090 = vunpack.c.h.b16 %v7483
    %v8091 = vunpack.c.l.b16 %v7484
    %v8092 = vunpack.c.h.b16 %v7484
    %v8093 = vunpack.c.l.b16 %v7485
    %v8094 = vunpack.c.h.b16 %v7485
    %v8095 = vunpack.c.l.b16 %v7486
    %v8096 = vunpack.c.h.b16 %v7486
    %v8097 = vunpack.c.l.b16 %v7487
    %v8098 = vunpack.c.h.b16 %v7487
    %v8099 = vunpack.c.l.b16 %v7488
    %v8100 = vunpack.c.h.b16 %v7488
    %v8101 = vunpack.c.l.b16 %v7489
    %v8102 = vunpack.c.h.b16 %v7489
    %v8103 = vunpack.c.l.b16 %v7490
    %v8104 = vunpack.c.h.b16 %v7490
    %v8105 = vunpack.c.l.b16 %v7491
    %v8106 = vunpack.c.h.b16 %v7491
    %v8107 = vunpack.c.l.b16 %v7492
    %v8108 = vunpack.c.h.b16 %v7492
    %v8109 = vunpack.c.l.b16 %v7493
    %v8110 = vunpack.c.h.b16 %v7493
    %v8111 = vunpack.c.l.b16 %v7494
    %v8112 = vunpack.c.h.b16 %v7494
    %v8113 = vunpack.c.l.b16 %v7495
    %v8114 = vunpack.c.h.b16 %v7495
    %v8115 = vunpack.c.l.b16 %v7496
    %v8116 = vunpack.c.h.b16 %v7496
    %v8117 = vunpack.c.l.b16 %v7497
    %v8118 = vunpack.c.h.b16 %v7497
    %v8119 = vunpack.c.l.b16 %v7498
    %v8120 = vunpack.c.h.b16 %v7498
    %v8121 = vunpack.c.l.b16 %v7499
    %v8122 = vunpack.c.h.b16 %v7499
    %v8123 = vunpack.c.l.b16 %v7500
    %v8124 = vunpack.c.h.b16 %v7500
    %v8125 = vunpack.c.l.b16 %v7501
    %v8126 = vunpack.c.h.b16 %v7501
    %v8127 = vunpack.c.l.b16 %v7502
    %v8128 = vunpack.c.h.b16 %v7502
    %v8129 = vunpack.c.l.b16 %v7503
    %v8130 = vunpack.c.h.b16 %v7503
    %v8131 = vunpack.c.l.b16 %v7504
    %v8132 = vunpack.c.h.b16 %v7504
    %v8133 = vunpack.c.l.b16 %v7505
    %v8134 = vunpack.c.h.b16 %v7505
    %v8135 = vunpack.c.l.b16 %v7506
    %v8136 = vunpack.c.h.b16 %v7506
    %v8137 = vunpack.c.l.b16 %v7507
    %v8138 = vunpack.c.h.b16 %v7507
    %v8139 = vunpack.c.l.b16 %v7508
    %v8140 = vunpack.c.h.b16 %v7508
    %v8141 = vunpack.c.l.b16 %v7509
    %v8142 = vunpack.c.h.b16 %v7509
    %v8143 = vunpack.c.l.b16 %v7510
    %v8144 = vunpack.c.h.b16 %v7510
    %v8145 = vunpack.c.l.b16 %v7511
    %v8146 = vunpack.c.h.b16 %v7511
    %v8147 = vunpack.c.l.b16 %v7512
    %v8148 = vunpack.c.h.b16 %v7512
    %v8149 = vunpack.c.l.b16 %v7513
    %v8150 = vunpack.c.h.b16 %v7513
    %v8151 = vunpack.c.l.b16 %v7514
    %v8152 = vunpack.c.h.b16 %v7514
    %v8153 = vunpack.c.l.b16 %v7515
    %v8154 = vunpack.c.h.b16 %v7515
    %v8155 = vunpack.c.l.b16 %v7516
    %v8156 = vunpack.c.h.b16 %v7516
    %v8157 = vunpack.c.l.b16 %v7517
    %v8158 = vunpack.c.h.b16 %v7517
    %v8159 = vunpack.c.l.b16 %v7518
    %v8160 = vunpack.c.h.b16 %v7518
    %v8161 = vunpack.c.l.b16 %v7519
    %v8162 = vunpack.c.h.b16 %v7519
    %v8163 = vunpack.c.l.b16 %v7520
    %v8164 = vunpack.c.h.b16 %v7520
    %v8165 = vunpack.c.l.b16 %v7521
    %v8166 = vunpack.c.h.b16 %v7521
    %v8167 = vunpack.c.l.b16 %v7522
    %v8168 = vunpack.c.h.b16 %v7522
    %v8169 = vunpack.c.l.b16 %v7523
    %v8170 = vunpack.c.h.b16 %v7523
    %v8171 = vunpack.c.l.b16 %v7524
    %v8172 = vunpack.c.h.b16 %v7524
    %v8173 = vunpack.c.l.b16 %v7525
    %v8174 = vunpack.c.h.b16 %v7525
    %v8175 = vunpack.c.l.b16 %v7526
    %v8176 = vunpack.c.h.b16 %v7526
    %v8177 = vunpack.c.l.b16 %v7527
    %v8178 = vunpack.c.h.b16 %v7527
    %v8179 = vunpack.c.l.b16 %v7528
    %v8180 = vunpack.c.h.b16 %v7528
    %v8181 = vunpack.c.l.b16 %v7529
    %v8182 = vunpack.c.h.b16 %v7529
    %v8183 = vunpack.c.l.b16 %v7530
    %v8184 = vunpack.c.h.b16 %v7530
    %v8185 = vunpack.c.l.b16 %v7531
    %v8186 = vunpack.c.h.b16 %v7531
    %v8187 = vunpack.c.l.b16 %v7532
    %v8188 = vunpack.c.h.b16 %v7532
    %v8189 = vunpack.c.l.b16 %v7533
    %v8190 = vunpack.c.h.b16 %v7533
    %v8191 = vunpack.c.l.b16 %v7534
    %v8192 = vunpack.c.h.b16 %v7534
    %v8193 = vunpack.c.l.b16 %v7535
    %v8194 = vunpack.c.h.b16 %v7535
    %v8195 = vunpack.c.l.b16 %v7536
    %v8196 = vunpack.c.h.b16 %v7536
    %v8197 = vunpack.c.l.b16 %v7537
    %v8198 = vunpack.c.h.b16 %v7537
    %v8199 = vunpack.c.l.b16 %v7538
    %v8200 = vunpack.c.h.b16 %v7538
    %v8201 = vunpack.c.l.b16 %v7539
    %v8202 = vunpack.c.h.b16 %v7539
    %v8203 = vunpack.c.l.b16 %v7540
    %v8204 = vunpack.c.h.b16 %v7540
    %v8205 = vunpack.c.l.b16 %v7541
    %v8206 = vunpack.c.h.b16 %v7541
    %v8207 = vunpack.c.l.b16 %v7542
    %v8208 = vunpack.c.h.b16 %v7542
    %v8209 = vunpack.c.l.b16 %v7543
    %v8210 = vunpack.c.h.b16 %v7543
    %v8211 = vunpack.c.l.b16 %v7544
    %v8212 = vunpack.c.h.b16 %v7544
    %v8213 = vunpack.c.l.b16 %v7545
    %v8214 = vunpack.c.h.b16 %v7545
    %v8215 = vunpack.c.l.b16 %v7546
    %v8216 = vunpack.c.h.b16 %v7546
    %v8217 = vunpack.c.l.b16 %v7547
    %v8218 = vunpack.c.h.b16 %v7547
    %v8219 = vunpack.c.l.b16 %v7548
    %v8220 = vunpack.c.h.b16 %v7548
    %v8221 = vunpack.c.l.b16 %v7549
    %v8222 = vunpack.c.h.b16 %v7549
    %v8223 = vunpack.c.l.b16 %v7550
    %v8224 = vunpack.c.h.b16 %v7550
    %v8225 = vunpack.c.l.b16 %v7551
    %v8226 = vunpack.c.h.b16 %v7551
    %v8227 = vunpack.c.l.b16 %v7552
    %v8228 = vunpack.c.h.b16 %v7552
    %v8229 = vunpack.c.l.b16 %v7553
    %v8230 = vunpack.c.h.b16 %v7553
    %v8231 = vunpack.c.l.b16 %v7554
    %v8232 = vunpack.c.h.b16 %v7554
    %v8233 = vunpack.c.l.b16 %v7555
    %v8234 = vunpack.c.h.b16 %v7555
    %v8235 = vunpack.c.l.b16 %v7556
    %v8236 = vunpack.c.h.b16 %v7556
    %v8237 = vunpack.c.l.b16 %v7557
    %v8238 = vunpack.c.h.b16 %v7557
    %v8239 = vunpack.c.l.b16 %v7558
    %v8240 = vunpack.c.h.b16 %v7558
    %v8241 = vunpack.c.l.b16 %v7559
    %v8242 = vunpack.c.h.b16 %v7559
    %v8243 = vunpack.c.l.b16 %v7560
    %v8244 = vunpack.c.h.b16 %v7560
    %v8245 = vunpack.c.l.b16 %v7561
    %v8246 = vunpack.c.h.b16 %v7561
    %v8247 = vunpack.c.l.b16 %v7562
    %v8248 = vunpack.c.h.b16 %v7562
    %v8249 = vunpack.c.l.b16 %v7563
    %v8250 = vunpack.c.h.b16 %v7563
    %v8251 = vunpack.c.l.b16 %v7564
    %v8252 = vunpack.c.h.b16 %v7564
    %v8253 = vunpack.c.l.b16 %v7565
    %v8254 = vunpack.c.h.b16 %v7565
    %v8255 = vunpack.c.l.b16 %v7566
    %v8256 = vunpack.c.h.b16 %v7566
    %v8257 = vunpack.c.l.b16 %v7567
    %v8258 = vunpack.c.h.b16 %v7567
    %v8259 = vunpack.c.l.b16 %v7568
    %v8260 = vunpack.c.h.b16 %v7568
    %v8261 = vunpack.c.l.b16 %v7569
    %v8262 = vunpack.c.h.b16 %v7569
    %v8263 = vunpack.c.l.b16 %v7570
    %v8264 = vunpack.c.h.b16 %v7570
    %v8265 = vunpack.c.l.b16 %v7571
    %v8266 = vunpack.c.h.b16 %v7571
    %v8267 = vunpack.c.l.b16 %v7572
    %v8268 = vunpack.c.h.b16 %v7572
    %v8269 = vunpack.c.l.b16 %v7573
    %v8270 = vunpack.c.h.b16 %v7573
    %v8271 = vunpack.c.l.b16 %v7574
    %v8272 = vunpack.c.h.b16 %v7574
    %v8273 = vunpack.c.l.b16 %v7575
    %v8274 = vunpack.c.h.b16 %v7575
    %v8275 = vunpack.c.l.b16 %v7576
    %v8276 = vunpack.c.h.b16 %v7576
    %v8277 = vunpack.c.l.b16 %v7577
    %v8278 = vunpack.c.h.b16 %v7577
    %v8279 = vunpack.c.l.b16 %v7578
    %v8280 = vunpack.c.h.b16 %v7578
    %v8281 = vunpack.c.l.b16 %v7579
    %v8282 = vunpack.c.h.b16 %v7579
    %v8283 = vunpack.c.l.b16 %v7580
    %v8284 = vunpack.c.h.b16 %v7580
    %v8285 = vunpack.c.l.b16 %v7581
    %v8286 = vunpack.c.h.b16 %v7581
    %v8287 = vunpack.c.l.b16 %v7582
    %v8288 = vunpack.c.h.b16 %v7582
    %v8289 = vunpack.c.l.b16 %v7583
    %v8290 = vunpack.c.h.b16 %v7583
    %v8291 = vunpack.c.l.b16 %v7584
    %v8292 = vunpack.c.h.b16 %v7584
    %v8293 = vunpack.c.l.b16 %v7585
    %v8294 = vunpack.c.h.b16 %v7585
    %v8295 = vunpack.c.l.b16 %v7586
    %v8296 = vunpack.c.h.b16 %v7586
    %v8297 = vunpack.c.l.b16 %v7587
    %v8298 = vunpack.c.h.b16 %v7587
    %v8299 = vunpack.c.l.b16 %v7588
    %v8300 = vunpack.c.h.b16 %v7588
    %v8301 = vunpack.c.l.b16 %v7589
    %v8302 = vunpack.c.h.b16 %v7589
    %v8303 = vunpack.c.l.b16 %v7590
    %v8304 = vunpack.c.h.b16 %v7590
    %v8305 = vunpack.c.l.b16 %v7591
    %v8306 = vunpack.c.h.b16 %v7591
    %v8307 = vunpack.c.l.b16 %v7592
    %v8308 = vunpack.c.h.b16 %v7592
    %v8309 = vunpack.c.l.b16 %v7593
    %v8310 = vunpack.c.h.b16 %v7593
    %v8311 = vunpack.c.l.b16 %v7594
    %v8312 = vunpack.c.h.b16 %v7594
    %v8313 = vunpack.c.l.b16 %v7595
    %v8314 = vunpack.c.h.b16 %v7595
    %v8315 = vunpack.c.l.b16 %v7596
    %v8316 = vunpack.c.h.b16 %v7596
    %v8317 = vunpack.c.l.b16 %v7597
    %v8318 = vunpack.c.h.b16 %v7597
    %v8319 = vunpack.c.l.b16 %v7598
    %v8320 = vunpack.c.h.b16 %v7598
    %v8321 = vunpack.c.l.b16 %v7599
    %v8322 = vunpack.c.h.b16 %v7599
    %v8323 = vunpack.c.l.b16 %v7600
    %v8324 = vunpack.c.h.b16 %v7600
    %v8325 = vunpack.c.l.b16 %v7601
    %v8326 = vunpack.c.h.b16 %v7601
    %v8327 = vunpack.c.l.b16 %v7602
    %v8328 = vunpack.c.h.b16 %v7602
    %v8329 = vunpack.c.l.b16 %v7603
    %v8330 = vunpack.c.h.b16 %v7603
    %v8331 = vunpack.c.l.b16 %v7604
    %v8332 = vunpack.c.h.b16 %v7604
    %v8333 = vunpack.c.l.b16 %v7605
    %v8334 = vunpack.c.h.b16 %v7605
    %v8335 = vunpack.c.l.b16 %v7606
    %v8336 = vunpack.c.h.b16 %v7606
    %v8337 = vunpack.c.l.b16 %v7607
    %v8338 = vunpack.c.h.b16 %v7607
    %v8339 = vunpack.c.l.b16 %v7608
    %v8340 = vunpack.c.h.b16 %v7608
    %v8341 = vunpack.c.l.b16 %v7609
    %v8342 = vunpack.c.h.b16 %v7609
    %v8343 = vunpack.c.l.b16 %v7610
    %v8344 = vunpack.c.h.b16 %v7610
    %v8345 = vunpack.c.l.b16 %v7611
    %v8346 = vunpack.c.h.b16 %v7611
    %v8347 = vunpack.c.l.b16 %v7612
    %v8348 = vunpack.c.h.b16 %v7612
    %v8349 = vunpack.c.l.b16 %v7613
    %v8350 = vunpack.c.h.b16 %v7613
    %v8351 = vunpack.c.l.b16 %v7614
    %v8352 = vunpack.c.h.b16 %v7614
    %v8353 = vunpack.c.l.b16 %v7615
    %v8354 = vunpack.c.h.b16 %v7615
    %v8355 = vunpack.c.l.b16 %v7616
    %v8356 = vunpack.c.h.b16 %v7616
    %v8357 = vunpack.c.l.b16 %v7617
    %v8358 = vunpack.c.h.b16 %v7617
    %v8359 = vunpack.c.l.b16 %v7618
    %v8360 = vunpack.c.h.b16 %v7618
    %v8361 = vunpack.c.l.b16 %v7619
    %v8362 = vunpack.c.h.b16 %v7619
    %v8363 = vunpack.c.l.b16 %v7620
    %v8364 = vunpack.c.h.b16 %v7620
    %v8365 = vunpack.c.l.b16 %v7621
    %v8366 = vunpack.c.h.b16 %v7621
    %v8367 = vunpack.c.l.b16 %v7622
    %v8368 = vunpack.c.h.b16 %v7622
    %v8369 = vunpack.c.l.b16 %v7623
    %v8370 = vunpack.c.h.b16 %v7623
    %v8371 = vunpack.c.l.b16 %v7624
    %v8372 = vunpack.c.h.b16 %v7624
    %v8373 = vunpack.c.l.b16 %v7625
    %v8374 = vunpack.c.h.b16 %v7625
    %v8375 = vunpack.c.l.b16 %v7626
    %v8376 = vunpack.c.h.b16 %v7626
    %v8377 = vunpack.c.l.b16 %v7627
    %v8378 = vunpack.c.h.b16 %v7627
    %v8379 = vunpack.c.l.b16 %v7628
    %v8380 = vunpack.c.h.b16 %v7628
    %v8381 = vunpack.c.l.b16 %v7629
    %v8382 = vunpack.c.h.b16 %v7629
    %v8383 = vunpack.c.l.b16 %v7630
    %v8384 = vunpack.c.h.b16 %v7630
    %v8385 = vunpack.c.l.b16 %v7631
    %v8386 = vunpack.c.h.b16 %v7631
    %v8387 = vunpack.c.l.b16 %v7632
    %v8388 = vunpack.c.h.b16 %v7632
    %v8389 = vunpack.c.l.b16 %v7633
    %v8390 = vunpack.c.h.b16 %v7633
    %v8391 = vunpack.c.l.b16 %v7634
    %v8392 = vunpack.c.h.b16 %v7634
    %v8393 = vunpack.c.l.b16 %v7635
    %v8394 = vunpack.c.h.b16 %v7635
    %v8395 = vunpack.c.l.b16 %v7636
    %v8396 = vunpack.c.h.b16 %v7636
    %v8397 = vunpack.c.l.b16 %v7637
    %v8398 = vunpack.c.h.b16 %v7637
    %v8399 = vunpack.c.l.b16 %v7638
    %v8400 = vunpack.c.h.b16 %v7638
    %v8401 = vunpack.c.l.b16 %v7639
    %v8402 = vunpack.c.h.b16 %v7639
    %v8403 = vunpack.c.l.b16 %v7640
    %v8404 = vunpack.c.h.b16 %v7640
    %v8405 = vunpack.c.l.b16 %v7641
    %v8406 = vunpack.c.h.b16 %v7641
    %v8407 = vunpack.c.l.b16 %v7642
    %v8408 = vunpack.c.h.b16 %v7642
    %v8409 = vunpack.c.l.b16 %v7643
    %v8410 = vunpack.c.h.b16 %v7643
    %v8411 = vunpack.c.l.b16 %v7644
    %v8412 = vunpack.c.h.b16 %v7644
    %v8413 = vunpack.c.l.b16 %v7645
    %v8414 = vunpack.c.h.b16 %v7645
    %v8415 = vunpack.c.l.b16 %v7646
    %v8416 = vunpack.c.h.b16 %v7646
    %v8417 = vunpack.c.l.b16 %v7647
    %v8418 = vunpack.c.h.b16 %v7647
    %v8419 = vunpack.c.l.b16 %v7648
    %v8420 = vunpack.c.h.b16 %v7648
    %v8421 = vunpack.c.l.b16 %v7649
    %v8422 = vunpack.c.h.b16 %v7649
    %v8423 = vunpack.c.l.b16 %v7650
    %v8424 = vunpack.c.h.b16 %v7650
    %v8425 = vunpack.c.l.b16 %v7651
    %v8426 = vunpack.c.h.b16 %v7651
    %v8427 = vunpack.c.l.b16 %v7652
    %v8428 = vunpack.c.h.b16 %v7652
    %v8429 = vunpack.c.l.b16 %v7653
    %v8430 = vunpack.c.h.b16 %v7653
    %v8431 = vunpack.c.l.b16 %v7654
    %v8432 = vunpack.c.h.b16 %v7654
    %v8433 = vunpack.c.l.b16 %v7655
    %v8434 = vunpack.c.h.b16 %v7655
    %v8435 = vunpack.c.l.b16 %v7656
    %v8436 = vunpack.c.h.b16 %v7656
    %v8437 = vunpack.c.l.b16 %v7657
    %v8438 = vunpack.c.h.b16 %v7657
    %v8439 = vunpack.c.l.b16 %v7658
    %v8440 = vunpack.c.h.b16 %v7658
    %v8441 = vunpack.c.l.b16 %v7659
    %v8442 = vunpack.c.h.b16 %v7659
    %v8443 = vunpack.c.l.b16 %v7660
    %v8444 = vunpack.c.h.b16 %v7660
    %v8445 = vunpack.c.l.b16 %v7661
    %v8446 = vunpack.c.h.b16 %v7661
    %v8447 = vunpack.c.l.b16 %v7662
    %v8448 = vunpack.c.h.b16 %v7662
    %v8449 = vunpack.c.l.b16 %v7663
    %v8450 = vunpack.c.h.b16 %v7663
    %v8451 = vunpack.c.l.b16 %v7664
    %v8452 = vunpack.c.h.b16 %v7664
    %v8453 = vunpack.c.l.b16 %v7665
    %v8454 = vunpack.c.h.b16 %v7665
    %v8455 = vunpack.c.l.b16 %v7666
    %v8456 = vunpack.c.h.b16 %v7666
    %v8457 = vpack.c.b16 %v7949, %v7945
    %v8458 = vpack.c.b16 %v7950, %v7946
    %v8459 = vpack.c.b16 %v7951, %v7947
    %v8460 = vpack.c.b16 %v7952, %v7948
    %v8461 = vpack.c.b16 %v7957, %v7953
    %v8462 = vpack.c.b16 %v7958, %v7954
    %v8463 = vpack.c.b16 %v7959, %v7955
    %v8464 = vpack.c.b16 %v7960, %v7956
    %v8465 = vpack.c.b16 %v7965, %v7961
    %v8466 = vpack.c.b16 %v7966, %v7962
    %v8467 = vpack.c.b16 %v7967, %v7963
    %v8468 = vpack.c.b16 %v7968, %v7964
    %v8469 = vpack.c.b16 %v7973, %v7969
    %v8470 = vpack.c.b16 %v7974, %v7970
    %v8471 = vpack.c.b16 %v7975, %v7971
    %v8472 = vpack.c.b16 %v7976, %v7972
    %v8473 = vpack.c.b16 %v7981, %v7977
    %v8474 = vpack.c.b16 %v7982, %v7978
    %v8475 = vpack.c.b16 %v7983, %v7979
    %v8476 = vpack.c.b16 %v7984, %v7980
    %v8477 = vpack.c.b16 %v7989, %v7985
    %v8478 = vpack.c.b16 %v7990, %v7986
    %v8479 = vpack.c.b16 %v7991, %v7987
    %v8480 = vpack.c.b16 %v7992, %v7988
    %v8481 = vpack.c.b16 %v7997, %v7993
    %v8482 = vpack.c.b16 %v7998, %v7994
    %v8483 = vpack.c.b16 %v7999, %v7995
    %v8484 = vpack.c.b16 %v8000, %v7996
    %v8485 = vpack.c.b16 %v8005, %v8001
    %v8486 = vpack.c.b16 %v8006, %v8002
    %v8487 = vpack.c.b16 %v8007, %v8003
    %v8488 = vpack.c.b16 %v8008, %v8004
    %v8489 = vpack.c.b16 %v8013, %v8009
    %v8490 = vpack.c.b16 %v8014, %v8010
    %v8491 = vpack.c.b16 %v8015, %v8011
    %v8492 = vpack.c.b16 %v8016, %v8012
    %v8493 = vpack.c.b16 %v8021, %v8017
    %v8494 = vpack.c.b16 %v8022, %v8018
    %v8495 = vpack.c.b16 %v8023, %v8019
    %v8496 = vpack.c.b16 %v8024, %v8020
    %v8497 = vpack.c.b16 %v8029, %v8025
    %v8498 = vpack.c.b16 %v8030, %v8026
    %v8499 = vpack.c.b16 %v8031, %v8027
    %v8500 = vpack.c.b16 %v8032, %v8028
    %v8501 = vpack.c.b16 %v8037, %v8033
    %v8502 = vpack.c.b16 %v8038, %v8034
    %v8503 = vpack.c.b16 %v8039, %v8035
    %v8504 = vpack.c.b16 %v8040, %v8036
    %v8505 = vpack.c.b16 %v8045, %v8041
    %v8506 = vpack.c.b16 %v8046, %v8042
    %v8507 = vpack.c.b16 %v8047, %v8043
    %v8508 = vpack.c.b16 %v8048, %v8044
    %v8509 = vpack.c.b16 %v8053, %v8049
    %v8510 = vpack.c.b16 %v8054, %v8050
    %v8511 = vpack.c.b16 %v8055, %v8051
    %v8512 = vpack.c.b16 %v8056, %v8052
    %v8513 = vpack.c.b16 %v8061, %v8057
    %v8514 = vpack.c.b16 %v8062, %v8058
    %v8515 = vpack.c.b16 %v8063, %v8059
    %v8516 = vpack.c.b16 %v8064, %v8060
    %v8517 = vpack.c.b16 %v8069, %v8065
    %v8518 = vpack.c.b16 %v8070, %v8066
    %v8519 = vpack.c.b16 %v8071, %v8067
    %v8520 = vpack.c.b16 %v8072, %v8068
    %v8521 = vpack.c.b16 %v8077, %v8073
    %v8522 = vpack.c.b16 %v8078, %v8074
    %v8523 = vpack.c.b16 %v8079, %v8075
    %v8524 = vpack.c.b16 %v8080, %v8076
    %v8525 = vpack.c.b16 %v8085, %v8081
    %v8526 = vpack.c.b16 %v8086, %v8082
    %v8527 = vpack.c.b16 %v8087, %v8083
    %v8528 = vpack.c.b16 %v8088, %v8084
    %v8529 = vpack.c.b16 %v8093, %v8089
    %v8530 = vpack.c.b16 %v8094, %v8090
    %v8531 = vpack.c.b16 %v8095, %v8091
    %v8532 = vpack.c.b16 %v8096, %v8092
    %v8533 = vpack.c.b16 %v8101, %v8097
    %v8534 = vpack.c.b16 %v8102, %v8098
    %v8535 = vpack.c.b16 %v8103, %v8099
    %v8536 = vpack.c.b16 %v8104, %v8100
    %v8537 = vpack.c.b16 %v8109, %v8105
    %v8538 = vpack.c.b16 %v8110, %v8106
    %v8539 = vpack.c.b16 %v8111, %v8107
    %v8540 = vpack.c.b16 %v8112, %v8108
    %v8541 = vpack.c.b16 %v8117, %v8113
    %v8542 = vpack.c.b16 %v8118, %v8114
    %v8543 = vpack.c.b16 %v8119, %v8115
    %v8544 = vpack.c.b16 %v8120, %v8116
    %v8545 = vpack.c.b16 %v8125, %v8121
    %v8546 = vpack.c.b16 %v8126, %v8122
    %v8547 = vpack.c.b16 %v8127, %v8123
    %v8548 = vpack.c.b16 %v8128, %v8124
    %v8549 = vpack.c.b16 %v8133, %v8129
    %v8550 = vpack.c.b16 %v8134, %v8130
    %v8551 = vpack.c.b16 %v8135, %v8131
    %v8552 = vpack.c.b16 %v8136, %v8132
    %v8553 = vpack.c.b16 %v8141, %v8137
    %v8554 = vpack.c.b16 %v8142, %v8138
    %v8555 = vpack.c.b16 %v8143, %v8139
    %v8556 = vpack.c.b16 %v8144, %v8140
    %v8557 = vpack.c.b16 %v8149, %v8145
    %v8558 = vpack.c.b16 %v8150, %v8146
    %v8559 = vpack.c.b16 %v8151, %v8147
    %v8560 = vpack.c.b16 %v8152, %v8148
    %v8561 = vpack.c.b16 %v8157, %v8153
    %v8562 = vpack.c.b16 %v8158, %v8154
    %v8563 = vpack.c.b16 %v8159, %v8155
    %v8564 = vpack.c.b16 %v8160, %v8156
    %v8565 = vpack.c.b16 %v8165, %v8161
    %v8566 = vpack.c.b16 %v8166, %v8162
    %v8567 = vpack.c.b16 %v8167, %v8163
    %v8568 = vpack.c.b16 %v8168, %v8164
    %v8569 = vpack.c.b16 %v8173, %v8169
    %v8570 = vpack.c.b16 %v8174, %v8170
    %v8571 = vpack.c.b16 %v8175, %v8171
    %v8572 = vpack.c.b16 %v8176, %v8172
    %v8573 = vpack.c.b16 %v8181, %v8177
    %v8574 = vpack.c.b16 %v8182, %v8178
    %v8575 = vpack.c.b16 %v8183, %v8179
    %v8576 = vpack.c.b16 %v8184, %v8180
    %v8577 = vpack.c.b16 %v8189, %v8185
    %v8578 = vpack.c.b16 %v8190, %v8186
    %v8579 = vpack.c.b16 %v8191, %v8187
    %v8580 = vpack.c.b16 %v8192, %v8188
    %v8581 = vpack.c.b16 %v8197, %v8193
    %v8582 = vpack.c.b16 %v8198, %v8194
    %v8583 = vpack.c.b16 %v8199, %v8195
    %v8584 = vpack.c.b16 %v8200, %v8196
    %v8585 = vpack.c.b16 %v8205, %v8201
    %v8586 = vpack.c.b16 %v8206, %v8202
    %v8587 = vpack.c.b16 %v8207, %v8203
    %v8588 = vpack.c.b16 %v8208, %v8204
    %v8589 = vpack.c.b16 %v8213, %v8209
    %v8590 = vpack.c.b16 %v8214, %v8210
    %v8591 = vpack.c.b16 %v8215, %v8211
    %v8592 = vpack.c.b16 %v8216, %v8212
    %v8593 = vpack.c.b16 %v8221, %v8217
    %v8594 = vpack.c.b16 %v8222, %v8218
    %v8595 = vpack.c.b16 %v8223, %v8219
    %v8596 = vpack.c.b16 %v8224, %v8220
    %v8597 = vpack.c.b16 %v8229, %v8225
    %v8598 = vpack.c.b16 %v8230, %v8226
    %v8599 = vpack.c.b16 %v8231, %v8227
    %v8600 = vpack.c.b16 %v8232, %v8228
    %v8601 = vpack.c.b16 %v8237, %v8233
    %v8602 = vpack.c.b16 %v8238, %v8234
    %v8603 = vpack.c.b16 %v8239, %v8235
    %v8604 = vpack.c.b16 %v8240, %v8236
    %v8605 = vpack.c.b16 %v8245, %v8241
    %v8606 = vpack.c.b16 %v8246, %v8242
    %v8607 = vpack.c.b16 %v8247, %v8243
    %v8608 = vpack.c.b16 %v8248, %v8244
    %v8609 = vpack.c.b16 %v8253, %v8249
    %v8610 = vpack.c.b16 %v8254, %v8250
    %v8611 = vpack.c.b16 %v8255, %v8251
    %v8612 = vpack.c.b16 %v8256, %v8252
    %v8613 = vpack.c.b16 %v8261, %v8257
    %v8614 = vpack.c.b16 %v8262, %v8258
    %v8615 = vpack.c.b16 %v8263, %v8259
    %v8616 = vpack.c.b16 %v8264, %v8260
    %v8617 = vpack.c.b16 %v8269, %v8265
    %v8618 = vpack.c.b16 %v8270, %v8266
    %v8619 = vpack.c.b16 %v8271, %v8267
    %v8620 = vpack.c.b16 %v8272, %v8268
    %v8621 = vpack.c.b16 %v8277, %v8273
    %v8622 = vpack.c.b16 %v8278, %v8274
    %v8623 = vpack.c.b16 %v8279, %v8275
    %v8624 = vpack.c.b16 %v8280, %v8276
    %v8625 = vpack.c.b16 %v8285, %v8281
    %v8626 = vpack.c.b16 %v8286, %v8282
    %v8627 = vpack.c.b16 %v8287, %v8283
    %v8628 = vpack.c.b16 %v8288, %v8284
    %v8629 = vpack.c.b16 %v8293, %v8289
    %v8630 = vpack.c.b16 %v8294, %v8290
    %v8631 = vpack.c.b16 %v8295, %v8291
    %v8632 = vpack.c.b16 %v8296, %v8292
    %v8633 = vpack.c.b16 %v8301, %v8297
    %v8634 = vpack.c.b16 %v8302, %v8298
    %v8635 = vpack.c.b16 %v8303, %v8299
    %v8636 = vpack.c.b16 %v8304, %v8300
    %v8637 = vpack.c.b16 %v8309, %v8305
    %v8638 = vpack.c.b16 %v8310, %v8306
    %v8639 = vpack.c.b16 %v8311, %v8307
    %v8640 = vpack.c.b16 %v8312, %v8308
    %v8641 = vpack.c.b16 %v8317, %v8313
    %v8642 = vpack.c.b16 %v8318, %v8314
    %v8643 = vpack.c.b16 %v8319, %v8315
    %v8644 = vpack.c.b16 %v8320, %v8316
    %v8645 = vpack.c.b16 %v8325, %v8321
    %v8646 = vpack.c.b16 %v8326, %v8322
    %v8647 = vpack.c.b16 %v8327, %v8323
    %v8648 = vpack.c.b16 %v8328, %v8324
    %v8649 = vpack.c.b16 %v8333, %v8329
    %v8650 = vpack.c.b16 %v8334, %v8330
    %v8651 = vpack.c.b16 %v8335, %v8331
    %v8652 = vpack.c.b16 %v8336, %v8332
    %v8653 = vpack.c.b16 %v8341, %v8337
    %v8654 = vpack.c.b16 %v8342, %v8338
    %v8655 = vpack.c.b16 %v8343, %v8339
    %v8656 = vpack.c.b16 %v8344, %v8340
    %v8657 = vpack.c.b16 %v8349, %v8345
    %v8658 = vpack.c.b16 %v8350, %v8346
    %v8659 = vpack.c.b16 %v8351, %v8347
    %v8660 = vpack.c.b16 %v8352, %v8348
    %v8661 = vpack.c.b16 %v8357, %v8353
    %v8662 = vpack.c.b16 %v8358, %v8354
    %v8663 = vpack.c.b16 %v8359, %v8355
    %v8664 = vpack.c.b16 %v8360, %v8356
    %v8665 = vpack.c.b16 %v8365, %v8361
    %v8666 = vpack.c.b16 %v8366, %v8362
    %v8667 = vpack.c.b16 %v8367, %v8363
    %v8668 = vpack.c.b16 %v8368, %v8364
    %v8669 = vpack.c.b16 %v8373, %v8369
    %v8670 = vpack.c.b16 %v8374, %v8370
    %v8671 = vpack.c.b16 %v8375, %v8371
    %v8672 = vpack.c.b16 %v8376, %v8372
    %v8673 = vpack.c.b16 %v8381, %v8377
    %v8674 = vpack.c.b16 %v8382, %v8378
    %v8675 = vpack.c.b16 %v8383, %v8379
    %v8676 = vpack.c.b16 %v8384, %v8380
    %v8677 = vpack.c.b16 %v8389, %v8385
    %v8678 = vpack.c.b16 %v8390, %v8386
    %v8679 = vpack.c.b16 %v8391, %v8387
    %v8680 = vpack.c.b16 %v8392, %v8388
    %v8681 = vpack.c.b16 %v8397, %v8393
    %v8682 = vpack.c.b16 %v8398, %v8394
    %v8683 = vpack.c.b16 %v8399, %v8395
    %v8684 = vpack.c.b16 %v8400, %v8396
    %v8685 = vpack.c.b16 %v8405, %v8401
    %v8686 = vpack.c.b16 %v8406, %v8402
    %v8687 = vpack.c.b16 %v8407, %v8403
    %v8688 = vpack.c.b16 %v8408, %v8404
    %v8689 = vpack.c.b16 %v8413, %v8409
    %v8690 = vpack.c.b16 %v8414, %v8410
    %v8691 = vpack.c.b16 %v8415, %v8411
    %v8692 = vpack.c.b16 %v8416, %v8412
    %v8693 = vpack.c.b16 %v8421, %v8417
    %v8694 = vpack.c.b16 %v8422, %v8418
    %v8695 = vpack.c.b16 %v8423, %v8419
    %v8696 = vpack.c.b16 %v8424, %v8420
    %v8697 = vpack.c.b16 %v8429, %v8425
    %v8698 = vpack.c.b16 %v8430, %v8426
    %v8699 = vpack.c.b16 %v8431, %v8427
    %v8700 = vpack.c.b16 %v8432, %v8428
    %v8701 = vpack.c.b16 %v8437, %v8433
    %v8702 = vpack.c.b16 %v8438, %v8434
    %v8703 = vpack.c.b16 %v8439, %v8435
    %v8704 = vpack.c.b16 %v8440, %v8436
    %v8705 = vpack.c.b16 %v8445, %v8441
    %v8706 = vpack.c.b16 %v8446, %v8442
    %v8707 = vpack.c.b16 %v8447, %v8443
    %v8708 = vpack.c.b16 %v8448, %v8444
    %v8709 = vpack.c.b16 %v8453, %v8449
    %v8710 = vpack.c.b16 %v8454, %v8450
    %v8711 = vpack.c.b16 %v8455, %v8451
    %v8712 = vpack.c.b16 %v8456, %v8452
    %8969 = vmatprep.subr.bf16.mxu0 %v8458
    %8970 = vmatpush1.bf16.msra.mxu0 %v8457
    %8971 = vmatprep.subr.bf16.mxu0 %v8462
    %8972 = vmatpush1.bf16.msra.mxu0 %v8461
    %8973 = vmatprep.subr.bf16.mxu0 %v8466
    %8974 = vmatpush1.bf16.msra.mxu0 %v8465
    %8975 = vmatprep.subr.bf16.mxu0 %v8470
    %8976 = vmatpush1.bf16.msra.mxu0 %v8469
    %8977 = vmatprep.subr.bf16.mxu0 %v8474
    %8978 = vmatpush1.bf16.msra.mxu0 %v8473
    %8979 = vmatprep.subr.bf16.mxu0 %v8478
    %8980 = vmatpush1.bf16.msra.mxu0 %v8477
    %8981 = vmatprep.subr.bf16.mxu0 %v8482
    %8982 = vmatpush1.bf16.msra.mxu0 %v8481
    %8983 = vmatprep.subr.bf16.mxu0 %v8486
    %8984 = vmatpush1.bf16.msra.mxu0 %v8485
    %8985 = vmatprep.subr.bf16.mxu0 %v8490
    %8986 = vmatpush1.bf16.msra.mxu0 %v8489
    %8987 = vmatprep.subr.bf16.mxu0 %v8494
    %8988 = vmatpush1.bf16.msra.mxu0 %v8493
    %8989 = vmatprep.subr.bf16.mxu0 %v8498
    %8990 = vmatpush1.bf16.msra.mxu0 %v8497
    %8991 = vmatprep.subr.bf16.mxu0 %v8502
    %8992 = vmatpush1.bf16.msra.mxu0 %v8501
    %8993 = vmatprep.subr.bf16.mxu0 %v8506
    %8994 = vmatpush1.bf16.msra.mxu0 %v8505
    %8995 = vmatprep.subr.bf16.mxu0 %v8510
    %8996 = vmatpush1.bf16.msra.mxu0 %v8509
    %8997 = vmatprep.subr.bf16.mxu0 %v8514
    %8998 = vmatpush1.bf16.msra.mxu0 %v8513
    %8999 = vmatprep.subr.bf16.mxu0 %v8518
    %9000 = vmatpush1.bf16.msra.mxu0 %v8517
    %9001 = vmatprep.mubr.bf16.mxu0 %v7404
    %9002 = vmatmul.mubr.bf16.gmra.mrb[0].mxu0 %v7403
    %v9003 = vpop.f32.mrb[0].mxu0
    %v9004 = vadd.f32 %v7672, %v9003
    %v9005 = vpop.f32.mrb[0].mxu0
    %v9006 = vadd.f32 %v7676, %v9005
    %v9007 = vpop.f32.mrb[0].mxu0
    %v9008 = vadd.f32 %v7672, %v9007
    %v9009 = vpop.f32.mrb[0].mxu0
    %v9010 = vadd.f32 %v7676, %v9009
    %9011 = vdwg.mxu0
    %9012 = vmatprep.subr.bf16.mxu0 %v8522
    %9013 = vmatpush1.bf16.msra.mxu0 %v8521
    %9014 = vmatprep.subr.bf16.mxu0 %v8526
    %9015 = vmatpush1.bf16.msra.mxu0 %v8525
    %9016 = vmatprep.subr.bf16.mxu0 %v8530
    %9017 = vmatpush1.bf16.msra.mxu0 %v8529
    %9018 = vmatprep.subr.bf16.mxu0 %v8534
    %9019 = vmatpush1.bf16.msra.mxu0 %v8533
    %9020 = vmatprep.subr.bf16.mxu0 %v8538
    %9021 = vmatpush1.bf16.msra.mxu0 %v8537
    %9022 = vmatprep.subr.bf16.mxu0 %v8542
    %9023 = vmatpush1.bf16.msra.mxu0 %v8541
    %9024 = vmatprep.subr.bf16.mxu0 %v8546
    %9025 = vmatpush1.bf16.msra.mxu0 %v8545
    %9026 = vmatprep.subr.bf16.mxu0 %v8550
    %9027 = vmatpush1.bf16.msra.mxu0 %v8549
    %9028 = vmatprep.subr.bf16.mxu0 %v8554
    %9029 = vmatpush1.bf16.msra.mxu0 %v8553
    %9030 = vmatprep.subr.bf16.mxu0 %v8558
    %9031 = vmatpush1.bf16.msra.mxu0 %v8557
    %9032 = vmatprep.subr.bf16.mxu0 %v8562
    %9033 = vmatpush1.bf16.msra.mxu0 %v8561
    %9034 = vmatprep.subr.bf16.mxu0 %v8566
    %9035 = vmatpush1.bf16.msra.mxu0 %v8565
    %9036 = vmatprep.subr.bf16.mxu0 %v8570
    %9037 = vmatpush1.bf16.msra.mxu0 %v8569
    %9038 = vmatprep.subr.bf16.mxu0 %v8574
    %9039 = vmatpush1.bf16.msra.mxu0 %v8573
    %9040 = vmatprep.subr.bf16.mxu0 %v8578
    %9041 = vmatpush1.bf16.msra.mxu0 %v8577
    %9042 = vmatprep.subr.bf16.mxu0 %v8582
    %9043 = vmatpush1.bf16.msra.mxu0 %v8581
    %9044 = vmatprep.mubr.bf16.mxu0 %v7406
    %9045 = vmatmul.mubr.bf16.gmra.mrb[0].mxu0 %v7405
    %v9046 = vpop.f32.mrb[0].mxu0
    %v9047 = vadd.f32 %v9004, %v9046
    %v9048 = vpop.f32.mrb[0].mxu0
    %v9049 = vadd.f32 %v9006, %v9048
    %v9050 = vpop.f32.mrb[0].mxu0
    %v9051 = vadd.f32 %v9008, %v9050
    %v9052 = vpop.f32.mrb[0].mxu0
    %v9053 = vadd.f32 %v9010, %v9052
    %9054 = vdwg.mxu0
    %9055 = vmatprep.subr.bf16.mxu0 %v8586
    %9056 = vmatpush1.bf16.msra.mxu0 %v8585
    %9057 = vmatprep.subr.bf16.mxu0 %v8590
    %9058 = vmatpush1.bf16.msra.mxu0 %v8589
    %9059 = vmatprep.subr.bf16.mxu0 %v8594
    %9060 = vmatpush1.bf16.msra.mxu0 %v8593
    %9061 = vmatprep.subr.bf16.mxu0 %v8598
    %9062 = vmatpush1.bf16.msra.mxu0 %v8597
    %9063 = vmatprep.subr.bf16.mxu0 %v8602
    %9064 = vmatpush1.bf16.msra.mxu0 %v8601
    %9065 = vmatprep.subr.bf16.mxu0 %v8606
    %9066 = vmatpush1.bf16.msra.mxu0 %v8605
    %9067 = vmatprep.subr.bf16.mxu0 %v8610
    %9068 = vmatpush1.bf16.msra.mxu0 %v8609
    %9069 = vmatprep.subr.bf16.mxu0 %v8614
    %9070 = vmatpush1.bf16.msra.mxu0 %v8613
    %9071 = vmatprep.subr.bf16.mxu0 %v8618
    %9072 = vmatpush1.bf16.msra.mxu0 %v8617
    %9073 = vmatprep.subr.bf16.mxu0 %v8622
    %9074 = vmatpush1.bf16.msra.mxu0 %v8621
    %9075 = vmatprep.subr.bf16.mxu0 %v8626
    %9076 = vmatpush1.bf16.msra.mxu0 %v8625
    %9077 = vmatprep.subr.bf16.mxu0 %v8630
    %9078 = vmatpush1.bf16.msra.mxu0 %v8629
    %9079 = vmatprep.subr.bf16.mxu0 %v8634
    %9080 = vmatpush1.bf16.msra.mxu0 %v8633
    %9081 = vmatprep.subr.bf16.mxu0 %v8638
    %9082 = vmatpush1.bf16.msra.mxu0 %v8637
    %9083 = vmatprep.subr.bf16.mxu0 %v8642
    %9084 = vmatpush1.bf16.msra.mxu0 %v8641
    %9085 = vmatprep.subr.bf16.mxu0 %v8646
    %9086 = vmatpush1.bf16.msra.mxu0 %v8645
    %9087 = vmatprep.mubr.bf16.mxu0 %v7408
    %9088 = vmatmul.mubr.bf16.gmra.mrb[0].mxu0 %v7407
    %v9089 = vpop.f32.mrb[0].mxu0
    %v9090 = vadd.f32 %v9047, %v9089
    %v9091 = vpop.f32.mrb[0].mxu0
    %v9092 = vadd.f32 %v9049, %v9091
    %v9093 = vpop.f32.mrb[0].mxu0
    %v9094 = vadd.f32 %v9051, %v9093
    %v9095 = vpop.f32.mrb[0].mxu0
    %v9096 = vadd.f32 %v9053, %v9095
    %9097 = vdwg.mxu0
    %9098 = vmatprep.subr.bf16.mxu0 %v8650
    %9099 = vmatpush1.bf16.msra.mxu0 %v8649
    %9100 = vmatprep.subr.bf16.mxu0 %v8654
    %9101 = vmatpush1.bf16.msra.mxu0 %v8653
    %9102 = vmatprep.subr.bf16.mxu0 %v8658
    %9103 = vmatpush1.bf16.msra.mxu0 %v8657
    %9104 = vmatprep.subr.bf16.mxu0 %v8662
    %9105 = vmatpush1.bf16.msra.mxu0 %v8661
    %9106 = vmatprep.subr.bf16.mxu0 %v8666
    %9107 = vmatpush1.bf16.msra.mxu0 %v8665
    %9108 = vmatprep.subr.bf16.mxu0 %v8670
    %9109 = vmatpush1.bf16.msra.mxu0 %v8669
    %9110 = vmatprep.subr.bf16.mxu0 %v8674
    %9111 = vmatpush1.bf16.msra.mxu0 %v8673
    %9112 = vmatprep.subr.bf16.mxu0 %v8678
    %9113 = vmatpush1.bf16.msra.mxu0 %v8677
    %9114 = vmatprep.subr.bf16.mxu0 %v8682
    %9115 = vmatpush1.bf16.msra.mxu0 %v8681
    %9116 = vmatprep.subr.bf16.mxu0 %v8686
    %9117 = vmatpush1.bf16.msra.mxu0 %v8685
    %9118 = vmatprep.subr.bf16.mxu0 %v8690
    %9119 = vmatpush1.bf16.msra.mxu0 %v8689
    %9120 = vmatprep.subr.bf16.mxu0 %v8694
    %9121 = vmatpush1.bf16.msra.mxu0 %v8693
    %9122 = vmatprep.subr.bf16.mxu0 %v8698
    %9123 = vmatpush1.bf16.msra.mxu0 %v8697
    %9124 = vmatprep.subr.bf16.mxu0 %v8702
    %9125 = vmatpush1.bf16.msra.mxu0 %v8701
    %9126 = vmatprep.subr.bf16.mxu0 %v8706
    %9127 = vmatpush1.bf16.msra.mxu0 %v8705
    %9128 = vmatprep.subr.bf16.mxu0 %v8710
    %9129 = vmatpush1.bf16.msra.mxu0 %v8709
    %9130 = vmatprep.mubr.bf16.mxu0 %v7410
    %9131 = vmatmul.mubr.bf16.gmra.mrb[0].mxu0 %v7409
    %v9132 = vpop.f32.mrb[0].mxu0
    %v9133 = vadd.f32 %v9090, %v9132
    %v9134 = vpop.f32.mrb[0].mxu0
    %v9135 = vadd.f32 %v9092, %v9134
    %v9136 = vpop.f32.mrb[0].mxu0
    %v9137 = vadd.f32 %v9094, %v9136
    %v9138 = vpop.f32.mrb[0].mxu0
    %v9139 = vadd.f32 %v9096, %v9138
    %9140 = vdwg.mxu0
    %9141 = vmatprep.subr.bf16.mxu0 %v8460
    %9142 = vmatpush1.bf16.msra.mxu0 %v8459
    %9143 = vmatprep.subr.bf16.mxu0 %v8464
    %9144 = vmatpush1.bf16.msra.mxu0 %v8463
    %9145 = vmatprep.subr.bf16.mxu0 %v8468
    %9146 = vmatpush1.bf16.msra.mxu0 %v8467
    %9147 = vmatprep.subr.bf16.mxu0 %v8472
    %9148 = vmatpush1.bf16.msra.mxu0 %v8471
    %9149 = vmatprep.subr.bf16.mxu0 %v8476
    %9150 = vmatpush1.bf16.msra.mxu0 %v8475
    %9151 = vmatprep.subr.bf16.mxu0 %v8480
    %9152 = vmatpush1.bf16.msra.mxu0 %v8479
    %9153 = vmatprep.subr.bf16.mxu0 %v8484
    %9154 = vmatpush1.bf16.msra.mxu0 %v8483
    %9155 = vmatprep.subr.bf16.mxu0 %v8488
    %9156 = vmatpush1.bf16.msra.mxu0 %v8487
    %9157 = vmatprep.subr.bf16.mxu0 %v8492
    %9158 = vmatpush1.bf16.msra.mxu0 %v8491
    %9159 = vmatprep.subr.bf16.mxu0 %v8496
    %9160 = vmatpush1.bf16.msra.mxu0 %v8495
    %9161 = vmatprep.subr.bf16.mxu0 %v8500
    %9162 = vmatpush1.bf16.msra.mxu0 %v8499
    %9163 = vmatprep.subr.bf16.mxu0 %v8504
    %9164 = vmatpush1.bf16.msra.mxu0 %v8503
    %9165 = vmatprep.subr.bf16.mxu0 %v8508
    %9166 = vmatpush1.bf16.msra.mxu0 %v8507
    %9167 = vmatprep.subr.bf16.mxu0 %v8512
    %9168 = vmatpush1.bf16.msra.mxu0 %v8511
    %9169 = vmatprep.subr.bf16.mxu0 %v8516
    %9170 = vmatpush1.bf16.msra.mxu0 %v8515
    %9171 = vmatprep.subr.bf16.mxu0 %v8520
    %9172 = vmatpush1.bf16.msra.mxu0 %v8519
    %9173 = vmatprep.mubr.bf16.mxu0 %v7404
    %9174 = vmatmul.mubr.bf16.gmra.mrb[0].mxu0 %v7403
    %v9175 = vpop.f32.mrb[0].mxu0
    %v9176 = vadd.f32 %v7680, %v9175
    %v9177 = vpop.f32.mrb[0].mxu0
    %v9178 = vadd.f32 %v7684, %v9177
    %v9179 = vpop.f32.mrb[0].mxu0
    %v9180 = vadd.f32 %v7680, %v9179
    %v9181 = vpop.f32.mrb[0].mxu0
    %v9182 = vadd.f32 %v7684, %v9181
    %9183 = vdwg.mxu0
    %9184 = vmatprep.subr.bf16.mxu0 %v8524
    %9185 = vmatpush1.bf16.msra.mxu0 %v8523
    %9186 = vmatprep.subr.bf16.mxu0 %v8528
    %9187 = vmatpush1.bf16.msra.mxu0 %v8527
    %9188 = vmatprep.subr.bf16.mxu0 %v8532
    %9189 = vmatpush1.bf16.msra.mxu0 %v8531
    %9190 = vmatprep.subr.bf16.mxu0 %v8536
    %9191 = vmatpush1.bf16.msra.mxu0 %v8535
    %9192 = vmatprep.subr.bf16.mxu0 %v8540
    %9193 = vmatpush1.bf16.msra.mxu0 %v8539
    %9194 = vmatprep.subr.bf16.mxu0 %v8544
    %9195 = vmatpush1.bf16.msra.mxu0 %v8543
    %9196 = vmatprep.subr.bf16.mxu0 %v8548
    %9197 = vmatpush1.bf16.msra.mxu0 %v8547
    %9198 = vmatprep.subr.bf16.mxu0 %v8552
    %9199 = vmatpush1.bf16.msra.mxu0 %v8551
    %9200 = vmatprep.subr.bf16.mxu0 %v8556
    %9201 = vmatpush1.bf16.msra.mxu0 %v8555
    %9202 = vmatprep.subr.bf16.mxu0 %v8560
    %9203 = vmatpush1.bf16.msra.mxu0 %v8559
    %9204 = vmatprep.subr.bf16.mxu0 %v8564
    %9205 = vmatpush1.bf16.msra.mxu0 %v8563
    %9206 = vmatprep.subr.bf16.mxu0 %v8568
    %9207 = vmatpush1.bf16.msra.mxu0 %v8567
    %9208 = vmatprep.subr.bf16.mxu0 %v8572
    %9209 = vmatpush1.bf16.msra.mxu0 %v8571
    %9210 = vmatprep.subr.bf16.mxu0 %v8576
    %9211 = vmatpush1.bf16.msra.mxu0 %v8575
    %9212 = vmatprep.subr.bf16.mxu0 %v8580
    %9213 = vmatpush1.bf16.msra.mxu0 %v8579
    %9214 = vmatprep.subr.bf16.mxu0 %v8584
    %9215 = vmatpush1.bf16.msra.mxu0 %v8583
    %9216 = vmatprep.mubr.bf16.mxu0 %v7406
    %9217 = vmatmul.mubr.bf16.gmra.mrb[0].mxu0 %v7405
    %v9218 = vpop.f32.mrb[0].mxu0
    %v9219 = vadd.f32 %v9176, %v9218
    %v9220 = vpop.f32.mrb[0].mxu0
    %v9221 = vadd.f32 %v9178, %v9220
    %v9222 = vpop.f32.mrb[0].mxu0
    %v9223 = vadd.f32 %v9180, %v9222
    %v9224 = vpop.f32.mrb[0].mxu0
    %v9225 = vadd.f32 %v9182, %v9224
    %9226 = vdwg.mxu0
    %9227 = vmatprep.subr.bf16.mxu0 %v8588
    %9228 = vmatpush1.bf16.msra.mxu0 %v8587
    %9229 = vmatprep.subr.bf16.mxu0 %v8592
    %9230 = vmatpush1.bf16.msra.mxu0 %v8591
    %9231 = vmatprep.subr.bf16.mxu0 %v8596
    %9232 = vmatpush1.bf16.msra.mxu0 %v8595
    %9233 = vmatprep.subr.bf16.mxu0 %v8600
    %9234 = vmatpush1.bf16.msra.mxu0 %v8599
    %9235 = vmatprep.subr.bf16.mxu0 %v8604
    %9236 = vmatpush1.bf16.msra.mxu0 %v8603
    %9237 = vmatprep.subr.bf16.mxu0 %v8608
    %9238 = vmatpush1.bf16.msra.mxu0 %v8607
    %9239 = vmatprep.subr.bf16.mxu0 %v8612
    %9240 = vmatpush1.bf16.msra.mxu0 %v8611
    %9241 = vmatprep.subr.bf16.mxu0 %v8616
    %9242 = vmatpush1.bf16.msra.mxu0 %v8615
    %9243 = vmatprep.subr.bf16.mxu0 %v8620
    %9244 = vmatpush1.bf16.msra.mxu0 %v8619
    %9245 = vmatprep.subr.bf16.mxu0 %v8624
    %9246 = vmatpush1.bf16.msra.mxu0 %v8623
    %9247 = vmatprep.subr.bf16.mxu0 %v8628
    %9248 = vmatpush1.bf16.msra.mxu0 %v8627
    %9249 = vmatprep.subr.bf16.mxu0 %v8632
    %9250 = vmatpush1.bf16.msra.mxu0 %v8631
    %9251 = vmatprep.subr.bf16.mxu0 %v8636
    %9252 = vmatpush1.bf16.msra.mxu0 %v8635
    %9253 = vmatprep.subr.bf16.mxu0 %v8640
    %9254 = vmatpush1.bf16.msra.mxu0 %v8639
    %9255 = vmatprep.subr.bf16.mxu0 %v8644
    %9256 = vmatpush1.bf16.msra.mxu0 %v8643
    %9257 = vmatprep.subr.bf16.mxu0 %v8648
    %9258 = vmatpush1.bf16.msra.mxu0 %v8647
    %9259 = vmatprep.mubr.bf16.mxu0 %v7408
    %9260 = vmatmul.mubr.bf16.gmra.mrb[0].mxu0 %v7407
    %v9261 = vpop.f32.mrb[0].mxu0
    %v9262 = vadd.f32 %v9219, %v9261
    %v9263 = vpop.f32.mrb[0].mxu0
    %v9264 = vadd.f32 %v9221, %v9263
    %v9265 = vpop.f32.mrb[0].mxu0
    %v9266 = vadd.f32 %v9223, %v9265
    %v9267 = vpop.f32.mrb[0].mxu0
    %v9268 = vadd.f32 %v9225, %v9267
    %9269 = vdwg.mxu0
    %9270 = vmatprep.subr.bf16.mxu0 %v8652
    %9271 = vmatpush1.bf16.msra.mxu0 %v8651
    %9272 = vmatprep.subr.bf16.mxu0 %v8656
    %9273 = vmatpush1.bf16.msra.mxu0 %v8655
    %9274 = vmatprep.subr.bf16.mxu0 %v8660
    %9275 = vmatpush1.bf16.msra.mxu0 %v8659
    %9276 = vmatprep.subr.bf16.mxu0 %v8664
    %9277 = vmatpush1.bf16.msra.mxu0 %v8663
    %9278 = vmatprep.subr.bf16.mxu0 %v8668
    %9279 = vmatpush1.bf16.msra.mxu0 %v8667
    %9280 = vmatprep.subr.bf16.mxu0 %v8672
    %9281 = vmatpush1.bf16.msra.mxu0 %v8671
    %9282 = vmatprep.subr.bf16.mxu0 %v8676
    %9283 = vmatpush1.bf16.msra.mxu0 %v8675
    %9284 = vmatprep.subr.bf16.mxu0 %v8680
    %9285 = vmatpush1.bf16.msra.mxu0 %v8679
    %9286 = vmatprep.subr.bf16.mxu0 %v8684
    %9287 = vmatpush1.bf16.msra.mxu0 %v8683
    %9288 = vmatprep.subr.bf16.mxu0 %v8688
    %9289 = vmatpush1.bf16.msra.mxu0 %v8687
    %9290 = vmatprep.subr.bf16.mxu0 %v8692
    %9291 = vmatpush1.bf16.msra.mxu0 %v8691
    %9292 = vmatprep.subr.bf16.mxu0 %v8696
    %9293 = vmatpush1.bf16.msra.mxu0 %v8695
    %9294 = vmatprep.subr.bf16.mxu0 %v8700
    %9295 = vmatpush1.bf16.msra.mxu0 %v8699
    %9296 = vmatprep.subr.bf16.mxu0 %v8704
    %9297 = vmatpush1.bf16.msra.mxu0 %v8703
    %9298 = vmatprep.subr.bf16.mxu0 %v8708
    %9299 = vmatpush1.bf16.msra.mxu0 %v8707
    %9300 = vmatprep.subr.bf16.mxu0 %v8712
    %9301 = vmatpush1.bf16.msra.mxu0 %v8711
    %9302 = vmatprep.mubr.bf16.mxu0 %v7410
    %9303 = vmatmul.mubr.bf16.gmra.mrb[0].mxu0 %v7409
    %v9304 = vpop.f32.mrb[0].mxu0
    %v9305 = vadd.f32 %v9262, %v9304
    %v9306 = vpop.f32.mrb[0].mxu0
    %v9307 = vadd.f32 %v9264, %v9306
    %v9308 = vpop.f32.mrb[0].mxu0
    %v9309 = vadd.f32 %v9266, %v9308
    %v9310 = vpop.f32.mrb[0].mxu0
    %v9311 = vadd.f32 %v9268, %v9310
    %9312 = vdwg.mxu0
    %v9313 = vmax.f32 %v9133, 0.0
    %v9314 = vmax.f32 %v9135, 0.0
    %v9315 = vmax.f32 %v9305, 0.0
    %v9316 = vmax.f32 %v9307, 0.0
    %v9317 = vmax.f32 %v9137, 0.0
    %v9318 = vmax.f32 %v9139, 0.0
    %v9319 = vmax.f32 %v9309, 0.0
    %v9320 = vmax.f32 %v9311, 0.0
    %v9321 = vpack.c.bf16 %v9317, %v9313
    %v9322 = vpack.c.bf16 %v9318, %v9314
    %v9323 = vpack.c.bf16 %v9319, %v9315
    %v9324 = vpack.c.bf16 %v9320, %v9316
    %v9325 = vld [vmem:[#allocation4] sm:$0xf]
    %v9326 = vld [vmem:[#allocation4 + $0x4] sm:$0xf]
    %v9327 = vld [vmem:[#allocation4 + $0x8] sm:$0xf]
    %v9328 = vld [vmem:[#allocation4 + $0xc] sm:$0xf]
    %v9329 = vld [vmem:[#allocation4 + $0x10] sm:$0xf]
    %v9330 = vld [vmem:[#allocation4 + $0x14] sm:$0xf]
    %v9331 = vld [vmem:[#allocation4 + $0x18] sm:$0xf]
    %v9332 = vld [vmem:[#allocation4 + $0x1c] sm:$0xf]
    %v9333 = vld [vmem:[#allocation4 + $0x20] sm:$0xf]
    %v9334 = vld [vmem:[#allocation4 + $0x24] sm:$0xf]
    %v9335 = vld [vmem:[#allocation4 + $0x28] sm:$0xf]
    %v9336 = vld [vmem:[#allocation4 + $0x2c] sm:$0xf]
    %v9337 = vld [vmem:[#allocation4 + $0x30] sm:$0xf]
    %v9338 = vld [vmem:[#allocation4 + $0x34] sm:$0xf]
    %v9339 = vld [vmem:[#allocation4 + $0x38] sm:$0xf]
    %v9340 = vld [vmem:[#allocation4 + $0x3c] sm:$0xf]
    %v9341 = vld [vmem:[#allocation4 + $0x40] sm:$0xf]
    %v9342 = vld [vmem:[#allocation4 + $0x44] sm:$0xf]
    %v9343 = vld [vmem:[#allocation4 + $0x48] sm:$0xf]
    %v9344 = vld [vmem:[#allocation4 + $0x4c] sm:$0xf]
    %v9345 = vld [vmem:[#allocation4 + $0x50] sm:$0xf]
    %v9346 = vld [vmem:[#allocation4 + $0x54] sm:$0xf]
    %v9347 = vld [vmem:[#allocation4 + $0x58] sm:$0xf]
    %v9348 = vld [vmem:[#allocation4 + $0x5c] sm:$0xf]
    %v9349 = vld [vmem:[#allocation4 + $0x60] sm:$0xf]
    %v9350 = vld [vmem:[#allocation4 + $0x64] sm:$0xf]
    %v9351 = vld [vmem:[#allocation4 + $0x68] sm:$0xf]
    %v9352 = vld [vmem:[#allocation4 + $0x6c] sm:$0xf]
    %v9353 = vld [vmem:[#allocation4 + $0x70] sm:$0xf]
    %v9354 = vld [vmem:[#allocation4 + $0x74] sm:$0xf]
    %v9355 = vld [vmem:[#allocation4 + $0x78] sm:$0xf]
    %v9356 = vld [vmem:[#allocation4 + $0x7c] sm:$0xf]
    %v9357 = vld [vmem:[#allocation4 + $0x80] sm:$0xf]
    %v9358 = vld [vmem:[#allocation4 + $0x84] sm:$0xf]
    %v9359 = vld [vmem:[#allocation4 + $0x88] sm:$0xf]
    %v9360 = vld [vmem:[#allocation4 + $0x8c] sm:$0xf]
    %v9361 = vld [vmem:[#allocation4 + $0x90] sm:$0xf]
    %v9362 = vld [vmem:[#allocation4 + $0x94] sm:$0xf]
    %v9363 = vld [vmem:[#allocation4 + $0x98] sm:$0xf]
    %v9364 = vld [vmem:[#allocation4 + $0x9c] sm:$0xf]
    %v9365 = vld [vmem:[#allocation4 + $0xa0] sm:$0xf]
    %v9366 = vld [vmem:[#allocation4 + $0xa4] sm:$0xf]
    %v9367 = vld [vmem:[#allocation4 + $0xa8] sm:$0xf]
    %v9368 = vld [vmem:[#allocation4 + $0xac] sm:$0xf]
    %v9369 = vld [vmem:[#allocation4 + $0xb0] sm:$0xf]
    %v9370 = vld [vmem:[#allocation4 + $0xb4] sm:$0xf]
    %v9371 = vld [vmem:[#allocation4 + $0xb8] sm:$0xf]
    %v9372 = vld [vmem:[#allocation4 + $0xbc] sm:$0xf]
    %v9373 = vld [vmem:[#allocation4 + $0xc0] sm:$0xf]
    %v9374 = vld [vmem:[#allocation4 + $0xc4] sm:$0xf]
    %v9375 = vld [vmem:[#allocation4 + $0xc8] sm:$0xf]
    %v9376 = vld [vmem:[#allocation4 + $0xcc] sm:$0xf]
    %v9377 = vld [vmem:[#allocation4 + $0xd0] sm:$0xf]
    %v9378 = vld [vmem:[#allocation4 + $0xd4] sm:$0xf]
    %v9379 = vld [vmem:[#allocation4 + $0xd8] sm:$0xf]
    %v9380 = vld [vmem:[#allocation4 + $0xdc] sm:$0xf]
    %v9381 = vld [vmem:[#allocation4 + $0xe0] sm:$0xf]
    %v9382 = vld [vmem:[#allocation4 + $0xe4] sm:$0xf]
    %v9383 = vld [vmem:[#allocation4 + $0xe8] sm:$0xf]
    %v9384 = vld [vmem:[#allocation4 + $0xec] sm:$0xf]
    %v9385 = vld [vmem:[#allocation4 + $0xf0] sm:$0xf]
    %v9386 = vld [vmem:[#allocation4 + $0xf4] sm:$0xf]
    %v9387 = vld [vmem:[#allocation4 + $0xf8] sm:$0xf]
    %v9388 = vld [vmem:[#allocation4 + $0xfc] sm:$0xf]
    %v9389 = vld [vmem:[%s8] sm:$0x1]
    %v9391 = vlaneseq
    %v9392 = vshrl.u32 %v9391, 7
    %v9393 = vsub.s32 0, %v9392
    %v9394 = vrot.slane %v9389, %v9393
    %v9460 = vunpack.c.l.b16 %v9325
    %v9461 = vunpack.c.l.b16 %v9326
    %v9462 = vunpack.c.l.b16 %v9327
    %v9463 = vunpack.c.l.b16 %v9328
    %v9464 = vunpack.c.l.b16 %v9329
    %v9465 = vunpack.c.l.b16 %v9330
    %v9466 = vunpack.c.l.b16 %v9331
    %v9467 = vunpack.c.l.b16 %v9332
    %v9468 = vunpack.c.l.b16 %v9333
    %v9469 = vunpack.c.l.b16 %v9334
    %v9470 = vunpack.c.l.b16 %v9335
    %v9471 = vunpack.c.l.b16 %v9336
    %v9472 = vunpack.c.l.b16 %v9337
    %v9473 = vunpack.c.l.b16 %v9338
    %v9474 = vunpack.c.l.b16 %v9339
    %v9475 = vunpack.c.l.b16 %v9340
    %v9476 = vunpack.c.l.b16 %v9341
    %v9477 = vunpack.c.l.b16 %v9342
    %v9478 = vunpack.c.l.b16 %v9343
    %v9479 = vunpack.c.l.b16 %v9344
    %v9480 = vunpack.c.l.b16 %v9345
    %v9481 = vunpack.c.l.b16 %v9346
    %v9482 = vunpack.c.l.b16 %v9347
    %v9483 = vunpack.c.l.b16 %v9348
    %v9484 = vunpack.c.l.b16 %v9349
    %v9485 = vunpack.c.l.b16 %v9350
    %v9486 = vunpack.c.l.b16 %v9351
    %v9487 = vunpack.c.l.b16 %v9352
    %v9488 = vunpack.c.l.b16 %v9353
    %v9489 = vunpack.c.l.b16 %v9354
    %v9490 = vunpack.c.l.b16 %v9355
    %v9491 = vunpack.c.l.b16 %v9356
    %v9492 = vunpack.c.l.b16 %v9357
    %v9493 = vunpack.c.l.b16 %v9358
    %v9494 = vunpack.c.l.b16 %v9359
    %v9495 = vunpack.c.l.b16 %v9360
    %v9496 = vunpack.c.l.b16 %v9361
    %v9497 = vunpack.c.l.b16 %v9362
    %v9498 = vunpack.c.l.b16 %v9363
    %v9499 = vunpack.c.l.b16 %v9364
    %v9500 = vunpack.c.l.b16 %v9365
    %v9501 = vunpack.c.l.b16 %v9366
    %v9502 = vunpack.c.l.b16 %v9367
    %v9503 = vunpack.c.l.b16 %v9368
    %v9504 = vunpack.c.l.b16 %v9369
    %v9505 = vunpack.c.l.b16 %v9370
    %v9506 = vunpack.c.l.b16 %v9371
    %v9507 = vunpack.c.l.b16 %v9372
    %v9508 = vunpack.c.l.b16 %v9373
    %v9509 = vunpack.c.l.b16 %v9374
    %v9510 = vunpack.c.l.b16 %v9375
    %v9511 = vunpack.c.l.b16 %v9376
    %v9512 = vunpack.c.l.b16 %v9377
    %v9513 = vunpack.c.l.b16 %v9378
    %v9514 = vunpack.c.l.b16 %v9379
    %v9515 = vunpack.c.l.b16 %v9380
    %v9516 = vunpack.c.l.b16 %v9381
    %v9517 = vunpack.c.l.b16 %v9382
    %v9518 = vunpack.c.l.b16 %v9383
    %v9519 = vunpack.c.l.b16 %v9384
    %v9520 = vunpack.c.l.b16 %v9385
    %v9521 = vunpack.c.l.b16 %v9386
    %v9522 = vunpack.c.l.b16 %v9387
    %v9523 = vunpack.c.l.b16 %v9388
    %v9524 = vpack.c.b16 %v9461, %v9460
    %v9525 = vpack.c.b16 %v9463, %v9462
    %v9526 = vpack.c.b16 %v9465, %v9464
    %v9527 = vpack.c.b16 %v9467, %v9466
    %v9528 = vpack.c.b16 %v9469, %v9468
    %v9529 = vpack.c.b16 %v9471, %v9470
    %v9530 = vpack.c.b16 %v9473, %v9472
    %v9531 = vpack.c.b16 %v9475, %v9474
    %v9532 = vpack.c.b16 %v9477, %v9476
    %v9533 = vpack.c.b16 %v9479, %v9478
    %v9534 = vpack.c.b16 %v9481, %v9480
    %v9535 = vpack.c.b16 %v9483, %v9482
    %v9536 = vpack.c.b16 %v9485, %v9484
    %v9537 = vpack.c.b16 %v9487, %v9486
    %v9538 = vpack.c.b16 %v9489, %v9488
    %v9539 = vpack.c.b16 %v9491, %v9490
    %v9540 = vpack.c.b16 %v9493, %v9492
    %v9541 = vpack.c.b16 %v9495, %v9494
    %v9542 = vpack.c.b16 %v9497, %v9496
    %v9543 = vpack.c.b16 %v9499, %v9498
    %v9544 = vpack.c.b16 %v9501, %v9500
    %v9545 = vpack.c.b16 %v9503, %v9502
    %v9546 = vpack.c.b16 %v9505, %v9504
    %v9547 = vpack.c.b16 %v9507, %v9506
    %v9548 = vpack.c.b16 %v9509, %v9508
    %v9549 = vpack.c.b16 %v9511, %v9510
    %v9550 = vpack.c.b16 %v9513, %v9512
    %v9551 = vpack.c.b16 %v9515, %v9514
    %v9552 = vpack.c.b16 %v9517, %v9516
    %v9553 = vpack.c.b16 %v9519, %v9518
    %v9554 = vpack.c.b16 %v9521, %v9520
    %v9555 = vpack.c.b16 %v9523, %v9522
    %9588 = vmatprep.subr.bf16.mxu0 0
    %9589 = vmatpush1.bf16.msra.mxu0 %v9524
    %9590 = vmatprep.subr.bf16.mxu0 0
    %9591 = vmatpush1.bf16.msra.mxu0 %v9525
    %9592 = vmatprep.subr.bf16.mxu0 0
    %9593 = vmatpush1.bf16.msra.mxu0 %v9526
    %9594 = vmatprep.subr.bf16.mxu0 0
    %9595 = vmatpush1.bf16.msra.mxu0 %v9527
    %9596 = vmatprep.subr.bf16.mxu0 0
    %9597 = vmatpush1.bf16.msra.mxu0 %v9528
    %9598 = vmatprep.subr.bf16.mxu0 0
    %9599 = vmatpush1.bf16.msra.mxu0 %v9529
    %9600 = vmatprep.subr.bf16.mxu0 0
    %9601 = vmatpush1.bf16.msra.mxu0 %v9530
    %9602 = vmatprep.subr.bf16.mxu0 0
    %9603 = vmatpush1.bf16.msra.mxu0 %v9531
    %9604 = vmatprep.subr.bf16.mxu0 0
    %9605 = vmatpush1.bf16.msra.mxu0 %v9532
    %9606 = vmatprep.subr.bf16.mxu0 0
    %9607 = vmatpush1.bf16.msra.mxu0 %v9533
    %9608 = vmatprep.subr.bf16.mxu0 0
    %9609 = vmatpush1.bf16.msra.mxu0 %v9534
    %9610 = vmatprep.subr.bf16.mxu0 0
    %9611 = vmatpush1.bf16.msra.mxu0 %v9535
    %9612 = vmatprep.subr.bf16.mxu0 0
    %9613 = vmatpush1.bf16.msra.mxu0 %v9536
    %9614 = vmatprep.subr.bf16.mxu0 0
    %9615 = vmatpush1.bf16.msra.mxu0 %v9537
    %9616 = vmatprep.subr.bf16.mxu0 0
    %9617 = vmatpush1.bf16.msra.mxu0 %v9538
    %9618 = vmatprep.subr.bf16.mxu0 0
    %9619 = vmatpush1.bf16.msra.mxu0 %v9539
    %9620 = vmatprep.mubr.bf16.mxu0 %v9322
    %9621 = vmatmul.mubr.bf16.gmra.mrb[0].mxu0 %v9321
    %v9622 = vpop.f32.mrb[0].mxu0
    %v9623 = vadd.f32 %v9394, %v9622
    %v9624 = vpop.f32.mrb[0].mxu0
    %v9625 = vpop.f32.mrb[0].mxu0
    %v9626 = vadd.f32 %v9394, %v9625
    %v9627 = vpop.f32.mrb[0].mxu0
    %9628 = vdwg.mxu0
    %9629 = vmatprep.subr.bf16.mxu0 0
    %9630 = vmatpush1.bf16.msra.mxu0 %v9540
    %9631 = vmatprep.subr.bf16.mxu0 0
    %9632 = vmatpush1.bf16.msra.mxu0 %v9541
    %9633 = vmatprep.subr.bf16.mxu0 0
    %9634 = vmatpush1.bf16.msra.mxu0 %v9542
    %9635 = vmatprep.subr.bf16.mxu0 0
    %9636 = vmatpush1.bf16.msra.mxu0 %v9543
    %9637 = vmatprep.subr.bf16.mxu0 0
    %9638 = vmatpush1.bf16.msra.mxu0 %v9544
    %9639 = vmatprep.subr.bf16.mxu0 0
    %9640 = vmatpush1.bf16.msra.mxu0 %v9545
    %9641 = vmatprep.subr.bf16.mxu0 0
    %9642 = vmatpush1.bf16.msra.mxu0 %v9546
    %9643 = vmatprep.subr.bf16.mxu0 0
    %9644 = vmatpush1.bf16.msra.mxu0 %v9547
    %9645 = vmatprep.subr.bf16.mxu0 0
    %9646 = vmatpush1.bf16.msra.mxu0 %v9548
    %9647 = vmatprep.subr.bf16.mxu0 0
    %9648 = vmatpush1.bf16.msra.mxu0 %v9549
    %9649 = vmatprep.subr.bf16.mxu0 0
    %9650 = vmatpush1.bf16.msra.mxu0 %v9550
    %9651 = vmatprep.subr.bf16.mxu0 0
    %9652 = vmatpush1.bf16.msra.mxu0 %v9551
    %9653 = vmatprep.subr.bf16.mxu0 0
    %9654 = vmatpush1.bf16.msra.mxu0 %v9552
    %9655 = vmatprep.subr.bf16.mxu0 0
    %9656 = vmatpush1.bf16.msra.mxu0 %v9553
    %9657 = vmatprep.subr.bf16.mxu0 0
    %9658 = vmatpush1.bf16.msra.mxu0 %v9554
    %9659 = vmatprep.subr.bf16.mxu0 0
    %9660 = vmatpush1.bf16.msra.mxu0 %v9555
    %9661 = vmatprep.mubr.bf16.mxu0 %v9324
    %9662 = vmatmul.mubr.bf16.gmra.mrb[0].mxu0 %v9323
    %v9663 = vpop.f32.mrb[0].mxu0
    %v9664 = vadd.f32 %v9623, %v9663
    %v9665 = vpop.f32.mrb[0].mxu0
    %v9666 = vpop.f32.mrb[0].mxu0
    %v9667 = vadd.f32 %v9626, %v9666
    %v9668 = vpop.f32.mrb[0].mxu0
    %9669 = vdwg.mxu0
    %9670 = vst [vmem:[%s11] sm:$0xff] %v9664
    %9671 = vst [vmem:[%s11 + $0x8] sm:$0xff] %v9667
    // Predicated region
    $region46: #{net_large_margin_forward.1} parent=1 // pred_check
      _
    $region47: #{net_large_margin_forward.1} parent=1 // pred_check_branch
      %9673 = sbr.rel (0) target = $region49
    $region48: #{net_large_margin_forward.1} parent=1 // pred_region
      _
    $region49: #{net_large_margin_forward.1} parent=1 // pred_fallthru
      _
    // Predicated region
    $region50: #{net_large_margin_forward.1} parent=1 // pred_check
      _
    $region51: #{net_large_margin_forward.1} parent=1 // pred_check_branch
      %9675 = sbr.rel (0) target = $region53
    $region52: #{net_large_margin_forward.1} parent=1 // pred_region
      _
    $region53: #{net_large_margin_forward.1} parent=1 // pred_fallthru
      _
    // Predicated region
    $region54: #{net_large_margin_forward.1} parent=1 // pred_check
      _
    $region55: #{net_large_margin_forward.1} parent=1 // pred_check_branch
      %9677 = sbr.rel (0) target = $region57
    $region56: #{net_large_margin_forward.1} parent=1 // pred_region
      _
    $region57: #{net_large_margin_forward.1} parent=1 // pred_fallthru
      _
    // Predicated region
    $region58: #{net_large_margin_forward.1} parent=1 // pred_check
      _
    $region59: #{net_large_margin_forward.1} parent=1 // pred_check_branch
      %9679 = sbr.rel (0) target = $region61
    $region60: #{net_large_margin_forward.1} parent=1 // pred_region
      _
    $region61: #{net_large_margin_forward.1} parent=1 // pred_fallthru
      _
    // Predicated region
    $region62: #{net_large_margin_forward.1} parent=1 // pred_check
      _
    $region63: #{net_large_margin_forward.1} parent=1 // pred_check_branch
      %9681 = sbr.rel (0) target = $region65
    $region64: #{net_large_margin_forward.1} parent=1 // pred_region
      _
    $region65: #{net_large_margin_forward.1} parent=1 // pred_fallthru
      _
    // Predicated region
    $region66: #{net_large_margin_forward.1} parent=1 // pred_check
      _
    $region67: #{net_large_margin_forward.1} parent=1 // pred_check_branch
      %9683 = sbr.rel (0) target = $region69
    $region68: #{net_large_margin_forward.1} parent=1 // pred_region
      _
    $region69: #{net_large_margin_forward.1} parent=1 // pred_fallthru
      _
    %9684 = vsyncpa [#allocation3], 1
    %9685 = vsyncpa [#allocation5], 1

</llo_original>
